<compile_context>
chip_gen: v7x
topology: tpu7x:2x2x1
jax: 0.10.0
libtpu: 0.0.40
codegen_flags: <defaults>
</compile_context>

<pallas_src>
import jax
import jax.numpy as jnp
from jax.experimental import pallas as pl
from jax.experimental.pallas import tpu as pltpu

HIDDEN = 128
NUM_LAYERS = 5
INPUT_SIZE = 80
PAD_IN = 128      # input feature dim padded to lane width (== HIDDEN so layers share shapes)
PAD_B = 8         # batch padded to sublane width


# --------------------------------------------------------------------------
# Fused kernel: 5 LSTM layers + head, everything resident in VMEM, no grid.
# --------------------------------------------------------------------------
def fused_lstm_head_kernel(x_ref,        # (T, Bp, 128)   zero-padded input, time-major
                           wih_ref,      # (L, 128, 4H)   W_ih^T per layer (layer-0 rows 80..127 are 0)
                           whh_ref,      # (L, H, 4H)     W_hh^T per layer
                           b_ref,        # (L, 1, 4H)     b_ih + b_hh per layer
                           h0_ref,       # (L, Bp, H)
                           c0_ref,       # (L, Bp, H)
                           w1_ref,       # (H, 32)
                           b1_ref,       # (1, 32)
                           w2_ref,       # (32, 2)
                           b2_ref,       # (1, 2)
                           out_ref,      # (Bp, 2)
                           hn_ref,       # (L, Bp, H)
                           cn_ref):      # (L, Bp, H)
    T, Bp, _ = x_ref.shape
    H = HIDDEN

    # (T, Bp, 128) -> (T*Bp, 128); Bp==8, lanes==128 so this is tile-preserving.
    seq = x_ref[...].reshape(T * Bp, PAD_IN)

    h = None
    for l in range(NUM_LAYERS):
        # Batched input projection for all timesteps (off the serial critical path).
        gx = (jnp.dot(seq, wih_ref[l], preferred_element_type=jnp.float32)
              + b_ref[l])                                   # (T*Bp, 4H)

        h = h0_ref[l]                                       # (Bp, H)
        c = c0_ref[l]
        ys = []
        for t in range(T):                                  # fully unrolled recurrence
            g = gx[t * Bp:(t + 1) * Bp, :] + jnp.dot(
                h, whh_ref[l], preferred_element_type=jnp.float32)   # (Bp, 4H)
            i_g = jax.nn.sigmoid(g[:, 0 * H:1 * H])
            f_g = jax.nn.sigmoid(g[:, 1 * H:2 * H])
            g_g = jnp.tanh(g[:, 2 * H:3 * H])
            o_g = jax.nn.sigmoid(g[:, 3 * H:4 * H])
            c = f_g * c + i_g * g_g
            h = o_g * jnp.tanh(c)
            ys.append(h)

        # Final-state outputs written once per layer (not per timestep).
        hn_ref[l] = h
        cn_ref[l] = c

        # Sequence for the next layer (H == PAD_IN == 128, shapes stay uniform).
        seq = jnp.concatenate(ys, axis=0)                   # (T*Bp, H)

    # Fused head on the last timestep of the last layer: tanh -> FC -> ReLU -> FC.
    z = jnp.tanh(h)
    z = jnp.maximum(
        jnp.dot(z, w1_ref[...], preferred_element_type=jnp.float32) + b1_ref[...],
        0.0)
    out_ref[...] = (jnp.dot(z, w2_ref[...], preferred_element_type=jnp.float32)
                    + b2_ref[...])


# --------------------------------------------------------------------------
# Parameter initialization (deterministic, PyTorch-style uniform(-1/sqrt(H), 1/sqrt(H)))
# --------------------------------------------------------------------------
def init_params(key, input_size=INPUT_SIZE, hidden=HIDDEN, num_layers=NUM_LAYERS):
    params = {"lstm": []}
    bound = 1.0 / jnp.sqrt(hidden)
    for layer in range(num_layers):
        in_sz = input_size if layer == 0 else hidden
        key, k1, k2, k3, k4 = jax.random.split(key, 5)
        wih = jax.random.uniform(k1, (4 * hidden, in_sz), jnp.float32, -bound, bound)
        whh = jax.random.uniform(k2, (4 * hidden, hidden), jnp.float32, -bound, bound)
        bih = jax.random.uniform(k3, (4 * hidden,), jnp.float32, -bound, bound)
        bhh = jax.random.uniform(k4, (4 * hidden,), jnp.float32, -bound, bound)
        params["lstm"].append({
            "wih_t": wih.T,                              # (I, 4H)
            "whh_t": whh.T,                              # (H, 4H)
            "bias": (bih + bhh).reshape(1, 4 * hidden),  # (1, 4H)
        })
    b1f = 1.0 / jnp.sqrt(hidden)
    b2f = 1.0 / jnp.sqrt(32.0)
    key, k1, k2, k3, k4 = jax.random.split(key, 5)
    params["fc1_w_t"] = jax.random.uniform(k1, (hidden, 32), jnp.float32, -b1f, b1f)
    params["fc1_b"] = jax.random.uniform(k2, (1, 32), jnp.float32, -b1f, b1f)
    params["fc2_w_t"] = jax.random.uniform(k3, (32, 2), jnp.float32, -b2f, b2f)
    params["fc2_b"] = jax.random.uniform(k4, (1, 2), jnp.float32, -b2f, b2f)
    return params


# --------------------------------------------------------------------------
# Full forward pass (= MyModule.forward, eval mode)
# --------------------------------------------------------------------------
@jax.jit
def my_module_forward(params, x, h0=None, c0=None):
    """x: (B, T, 80) batch_first, like PyTorch. Returns (out (B,2), hn (L,B,H), cn (L,B,H))."""
    B, T, _ = x.shape
    if h0 is None:
        h0 = jnp.zeros((NUM_LAYERS, B, HIDDEN), jnp.float32)
    if c0 is None:
        c0 = jnp.zeros((NUM_LAYERS, B, HIDDEN), jnp.float32)

    # Time-major + zero-pad batch -> 8 sublanes and input 80 -> 128 lanes (exact).
    xt = jnp.transpose(x, (1, 0, 2)).astype(jnp.float32)          # (T, B, 80)
    xp = jnp.pad(xt, ((0, 0), (0, PAD_B - B), (0, PAD_IN - INPUT_SIZE)))
    h0p = jnp.pad(h0.astype(jnp.float32), ((0, 0), (0, PAD_B - B), (0, 0)))
    c0p = jnp.pad(c0.astype(jnp.float32), ((0, 0), (0, PAD_B - B), (0, 0)))

    # Stack per-layer weights into uniform shapes; layer-0 W_ih^T is zero-padded 80 -> 128.
    wih_l = []
    for l in range(NUM_LAYERS):
        w = params["lstm"][l]["wih_t"]                            # (I_l, 4H)
        wih_l.append(jnp.pad(w, ((0, PAD_IN - w.shape[0]), (0, 0))))
    wih_s = jnp.stack(wih_l, 0)                                   # (L, 128, 4H)
    whh_s = jnp.stack([params["lstm"][l]["whh_t"] for l in range(NUM_LAYERS)], 0)
    b_s = jnp.stack([params["lstm"][l]["bias"] for l in range(NUM_LAYERS)], 0)   # (L, 1, 4H)

    out_shapes = (
        jax.ShapeDtypeStruct((PAD_B, 2), jnp.float32),
        jax.ShapeDtypeStruct((NUM_LAYERS, PAD_B, HIDDEN), jnp.float32),
        jax.ShapeDtypeStruct((NUM_LAYERS, PAD_B, HIDDEN), jnp.float32),
    )
    # No grid: every operand is a single full-array VMEM block (everything fits).
    out_p, hn_p, cn_p = pl.pallas_call(
        fused_lstm_head_kernel,
        out_shape=out_shapes,
        compiler_params=pltpu.CompilerParams(vmem_limit_bytes=32 * 1024 * 1024),
    )(xp, wih_s, whh_s, b_s, h0p, c0p,
      params["fc1_w_t"], params["fc1_b"], params["fc2_w_t"], params["fc2_b"])

    return out_p[:B], hn_p[:, :B], cn_p[:, :B]


# --------------------------------------------------------------------------
# Pure-JAX reference for verification
# --------------------------------------------------------------------------
def reference_forward(params, x):
    B, T, _ = x.shape
    seq = jnp.transpose(x, (1, 0, 2)).astype(jnp.float32)
    hns, cns = [], []
    for layer in range(NUM_LAYERS):
        p = params["lstm"][layer]
        h = jnp.zeros((B, HIDDEN), jnp.float32)
        c = jnp.zeros((B, HIDDEN), jnp.float32)
        ys = []
        for t in range(T):
            g = seq[t] @ p["wih_t"] + h @ p["whh_t"] + p["bias"]
            i = jax.nn.sigmoid(g[:, 0 * HIDDEN:1 * HIDDEN])
            f = jax.nn.sigmoid(g[:, 1 * HIDDEN:2 * HIDDEN])
            gg = jnp.tanh(g[:, 2 * HIDDEN:3 * HIDDEN])
            o = jax.nn.sigmoid(g[:, 3 * HIDDEN:4 * HIDDEN])
            c = f * c + i * gg
            h = o * jnp.tanh(c)
            ys.append(h)
        seq = jnp.stack(ys, 0)
        hns.append(h)
        cns.append(c)
    z = jnp.tanh(seq[-1])
    z = jnp.maximum(z @ params["fc1_w_t"] + params["fc1_b"], 0.0)
    z = z @ params["fc2_w_t"] + params["fc2_b"]
    return z, jnp.stack(hns, 0), jnp.stack(cns, 0)


if __name__ == "__main__":
    key = jax.random.PRNGKey(0)
    pkey, xkey = jax.random.split(key)
    params = init_params(pkey)

    B, T = 2, 8
    x = jax.random.normal(xkey, (B, T, INPUT_SIZE), jnp.float32)

    out, hn, cn = my_module_forward(params, x)
    out, hn, cn = jax.block_until_ready((out, hn, cn))

    assert out.shape == (B, 2)
    assert hn.shape == (NUM_LAYERS, B, HIDDEN)
    assert cn.shape == (NUM_LAYERS, B, HIDDEN)

    ref_out, ref_hn, ref_cn = reference_forward(params, x)
    assert jnp.allclose(out, ref_out, atol=1e-4, rtol=1e-4)
    assert jnp.allclose(hn, ref_hn, atol=1e-4, rtol=1e-4)
    assert jnp.allclose(cn, ref_cn, atol=1e-4, rtol=1e-4)

    print("KERNEL_OK")
</pallas_src>

<mosaic_0001>
module attributes {stable_mosaic.version = 11 : i64} {
  func.func @fused_lstm_head_kernel(%arg0: memref<8x8x128xf32, #tpu.memory_space<vmem>>, %arg1: memref<5x128x512xf32, #tpu.memory_space<vmem>>, %arg2: memref<5x128x512xf32, #tpu.memory_space<vmem>>, %arg3: memref<5x1x512xf32, #tpu.memory_space<vmem>>, %arg4: memref<5x8x128xf32, #tpu.memory_space<vmem>>, %arg5: memref<5x8x128xf32, #tpu.memory_space<vmem>>, %arg6: memref<128x32xf32, #tpu.memory_space<vmem>>, %arg7: memref<1x32xf32, #tpu.memory_space<vmem>>, %arg8: memref<32x2xf32, #tpu.memory_space<vmem>>, %arg9: memref<1x2xf32, #tpu.memory_space<vmem>>, %arg10: memref<8x2xf32, #tpu.memory_space<vmem>>, %arg11: memref<5x8x128xf32, #tpu.memory_space<vmem>>, %arg12: memref<5x8x128xf32, #tpu.memory_space<vmem>>) attributes {dimension_semantics = [], scalar_prefetch = 0 : i64, scratch_operands = 0 : i64, tpu.core_type = #tpu.core_type<tc>} {
    %c0 = arith.constant 0 : index
    %c0_0 = arith.constant 0 : index
    %c0_1 = arith.constant 0 : index
    %0 = vector.load %arg0[%c0, %c0_0, %c0_1] : memref<8x8x128xf32, #tpu.memory_space<vmem>>, vector<8x8x128xf32>
    %1 = vector.shape_cast %0 : vector<8x8x128xf32> to vector<64x128xf32>
    %c0_2 = arith.constant 0 : index
    %c0_3 = arith.constant 0 : index
    %c0_4 = arith.constant 0 : index
    %2 = vector.load %arg1[%c0_2, %c0_3, %c0_4] : memref<5x128x512xf32, #tpu.memory_space<vmem>>, vector<1x128x512xf32>
    %3 = vector.shape_cast %2 : vector<1x128x512xf32> to vector<128x512xf32>
    %cst = arith.constant dense<0.000000e+00> : vector<64x512xf32>
    %4 = tpu.matmul %1, %3, %cst {dimension_numbers = #tpu.dot_dimension_numbers<[1], [0], [0], [1], [0, 0, 1, 1], [], []>} : vector<64x128xf32>, vector<128x512xf32>, vector<64x512xf32> -> vector<64x512xf32>
    %c0_5 = arith.constant 0 : index
    %c0_6 = arith.constant 0 : index
    %c0_7 = arith.constant 0 : index
    %5 = vector.load %arg3[%c0_5, %c0_6, %c0_7] : memref<5x1x512xf32, #tpu.memory_space<vmem>>, vector<1x1x512xf32>
    %6 = vector.shape_cast %5 : vector<1x1x512xf32> to vector<1x512xf32>
    %7 = vector.broadcast %6 : vector<1x512xf32> to vector<64x512xf32>
    %8 = arith.addf %4, %7 : vector<64x512xf32>
    %c0_8 = arith.constant 0 : index
    %c0_9 = arith.constant 0 : index
    %c0_10 = arith.constant 0 : index
    %9 = vector.load %arg4[%c0_8, %c0_9, %c0_10] : memref<5x8x128xf32, #tpu.memory_space<vmem>>, vector<1x8x128xf32>
    %10 = vector.shape_cast %9 : vector<1x8x128xf32> to vector<8x128xf32>
    %c0_11 = arith.constant 0 : index
    %c0_12 = arith.constant 0 : index
    %c0_13 = arith.constant 0 : index
    %11 = vector.load %arg5[%c0_11, %c0_12, %c0_13] : memref<5x8x128xf32, #tpu.memory_space<vmem>>, vector<1x8x128xf32>
    %12 = vector.shape_cast %11 : vector<1x8x128xf32> to vector<8x128xf32>
    %13 = vector.extract_strided_slice %8 {offsets = [0, 0], sizes = [8, 512], strides = [1, 1]} : vector<64x512xf32> to vector<8x512xf32>
    %c0_14 = arith.constant 0 : index
    %c0_15 = arith.constant 0 : index
    %c0_16 = arith.constant 0 : index
    %14 = vector.load %arg2[%c0_14, %c0_15, %c0_16] : memref<5x128x512xf32, #tpu.memory_space<vmem>>, vector<1x128x512xf32>
    %15 = vector.shape_cast %14 : vector<1x128x512xf32> to vector<128x512xf32>
    %cst_17 = arith.constant dense<0.000000e+00> : vector<8x512xf32>
    %16 = tpu.matmul %10, %15, %cst_17 {dimension_numbers = #tpu.dot_dimension_numbers<[1], [0], [0], [1], [0, 0, 1, 1], [], []>} : vector<8x128xf32>, vector<128x512xf32>, vector<8x512xf32> -> vector<8x512xf32>
    %17 = arith.addf %13, %16 : vector<8x512xf32>
    %18 = vector.extract_strided_slice %17 {offsets = [0, 0], sizes = [8, 128], strides = [1, 1]} : vector<8x512xf32> to vector<8x128xf32>
    %19 = arith.negf %18 : vector<8x128xf32>
    %20 = math.exp %19 : vector<8x128xf32>
    %cst_18 = arith.constant 1.000000e+00 : f32
    %21 = vector.broadcast %cst_18 : f32 to vector<8x128xf32>
    %22 = arith.addf %21, %20 : vector<8x128xf32>
    %23 = arith.divf %21, %22 : vector<8x128xf32>
    %24 = vector.extract_strided_slice %17 {offsets = [0, 128], sizes = [8, 128], strides = [1, 1]} : vector<8x512xf32> to vector<8x128xf32>
    %25 = arith.negf %24 : vector<8x128xf32>
    %26 = math.exp %25 : vector<8x128xf32>
    %cst_19 = arith.constant 1.000000e+00 : f32
    %27 = vector.broadcast %cst_19 : f32 to vector<8x128xf32>
    %28 = arith.addf %27, %26 : vector<8x128xf32>
    %29 = arith.divf %27, %28 : vector<8x128xf32>
    %30 = vector.extract_strided_slice %17 {offsets = [0, 256], sizes = [8, 128], strides = [1, 1]} : vector<8x512xf32> to vector<8x128xf32>
    %31 = math.tanh %30 : vector<8x128xf32>
    %32 = vector.extract_strided_slice %17 {offsets = [0, 384], sizes = [8, 128], strides = [1, 1]} : vector<8x512xf32> to vector<8x128xf32>
    %33 = arith.negf %32 : vector<8x128xf32>
    %34 = math.exp %33 : vector<8x128xf32>
    %cst_20 = arith.constant 1.000000e+00 : f32
    %35 = vector.broadcast %cst_20 : f32 to vector<8x128xf32>
    %36 = arith.addf %35, %34 : vector<8x128xf32>
    %37 = arith.divf %35, %36 : vector<8x128xf32>
    %38 = arith.mulf %29, %12 : vector<8x128xf32>
    %39 = arith.mulf %23, %31 : vector<8x128xf32>
    %40 = arith.addf %38, %39 : vector<8x128xf32>
    %41 = math.tanh %40 : vector<8x128xf32>
    %42 = arith.mulf %37, %41 : vector<8x128xf32>
    %43 = vector.extract_strided_slice %8 {offsets = [8, 0], sizes = [8, 512], strides = [1, 1]} : vector<64x512xf32> to vector<8x512xf32>
    %c0_21 = arith.constant 0 : index
    %c0_22 = arith.constant 0 : index
    %c0_23 = arith.constant 0 : index
    %44 = vector.load %arg2[%c0_21, %c0_22, %c0_23] : memref<5x128x512xf32, #tpu.memory_space<vmem>>, vector<1x128x512xf32>
    %45 = vector.shape_cast %44 : vector<1x128x512xf32> to vector<128x512xf32>
    %cst_24 = arith.constant dense<0.000000e+00> : vector<8x512xf32>
    %46 = tpu.matmul %42, %45, %cst_24 {dimension_numbers = #tpu.dot_dimension_numbers<[1], [0], [0], [1], [0, 0, 1, 1], [], []>} : vector<8x128xf32>, vector<128x512xf32>, vector<8x512xf32> -> vector<8x512xf32>
    %47 = arith.addf %43, %46 : vector<8x512xf32>
    %48 = vector.extract_strided_slice %47 {offsets = [0, 0], sizes = [8, 128], strides = [1, 1]} : vector<8x512xf32> to vector<8x128xf32>
    %49 = arith.negf %48 : vector<8x128xf32>
    %50 = math.exp %49 : vector<8x128xf32>
    %cst_25 = arith.constant 1.000000e+00 : f32
    %51 = vector.broadcast %cst_25 : f32 to vector<8x128xf32>
    %52 = arith.addf %51, %50 : vector<8x128xf32>
    %53 = arith.divf %51, %52 : vector<8x128xf32>
    %54 = vector.extract_strided_slice %47 {offsets = [0, 128], sizes = [8, 128], strides = [1, 1]} : vector<8x512xf32> to vector<8x128xf32>
    %55 = arith.negf %54 : vector<8x128xf32>
    %56 = math.exp %55 : vector<8x128xf32>
    %cst_26 = arith.constant 1.000000e+00 : f32
    %57 = vector.broadcast %cst_26 : f32 to vector<8x128xf32>
    %58 = arith.addf %57, %56 : vector<8x128xf32>
    %59 = arith.divf %57, %58 : vector<8x128xf32>
    %60 = vector.extract_strided_slice %47 {offsets = [0, 256], sizes = [8, 128], strides = [1, 1]} : vector<8x512xf32> to vector<8x128xf32>
    %61 = math.tanh %60 : vector<8x128xf32>
    %62 = vector.extract_strided_slice %47 {offsets = [0, 384], sizes = [8, 128], strides = [1, 1]} : vector<8x512xf32> to vector<8x128xf32>
    %63 = arith.negf %62 : vector<8x128xf32>
    %64 = math.exp %63 : vector<8x128xf32>
    %cst_27 = arith.constant 1.000000e+00 : f32
    %65 = vector.broadcast %cst_27 : f32 to vector<8x128xf32>
    %66 = arith.addf %65, %64 : vector<8x128xf32>
    %67 = arith.divf %65, %66 : vector<8x128xf32>
    %68 = arith.mulf %59, %40 : vector<8x128xf32>
    %69 = arith.mulf %53, %61 : vector<8x128xf32>
    %70 = arith.addf %68, %69 : vector<8x128xf32>
    %71 = math.tanh %70 : vector<8x128xf32>
    %72 = arith.mulf %67, %71 : vector<8x128xf32>
    %73 = vector.extract_strided_slice %8 {offsets = [16, 0], sizes = [8, 512], strides = [1, 1]} : vector<64x512xf32> to vector<8x512xf32>
    %c0_28 = arith.constant 0 : index
    %c0_29 = arith.constant 0 : index
    %c0_30 = arith.constant 0 : index
    %74 = vector.load %arg2[%c0_28, %c0_29, %c0_30] : memref<5x128x512xf32, #tpu.memory_space<vmem>>, vector<1x128x512xf32>
    %75 = vector.shape_cast %74 : vector<1x128x512xf32> to vector<128x512xf32>
    %cst_31 = arith.constant dense<0.000000e+00> : vector<8x512xf32>
    %76 = tpu.matmul %72, %75, %cst_31 {dimension_numbers = #tpu.dot_dimension_numbers<[1], [0], [0], [1], [0, 0, 1, 1], [], []>} : vector<8x128xf32>, vector<128x512xf32>, vector<8x512xf32> -> vector<8x512xf32>
    %77 = arith.addf %73, %76 : vector<8x512xf32>
    %78 = vector.extract_strided_slice %77 {offsets = [0, 0], sizes = [8, 128], strides = [1, 1]} : vector<8x512xf32> to vector<8x128xf32>
    %79 = arith.negf %78 : vector<8x128xf32>
    %80 = math.exp %79 : vector<8x128xf32>
    %cst_32 = arith.constant 1.000000e+00 : f32
    %81 = vector.broadcast %cst_32 : f32 to vector<8x128xf32>
    %82 = arith.addf %81, %80 : vector<8x128xf32>
    %83 = arith.divf %81, %82 : vector<8x128xf32>
    %84 = vector.extract_strided_slice %77 {offsets = [0, 128], sizes = [8, 128], strides = [1, 1]} : vector<8x512xf32> to vector<8x128xf32>
    %85 = arith.negf %84 : vector<8x128xf32>
    %86 = math.exp %85 : vector<8x128xf32>
    %cst_33 = arith.constant 1.000000e+00 : f32
    %87 = vector.broadcast %cst_33 : f32 to vector<8x128xf32>
    %88 = arith.addf %87, %86 : vector<8x128xf32>
    %89 = arith.divf %87, %88 : vector<8x128xf32>
    %90 = vector.extract_strided_slice %77 {offsets = [0, 256], sizes = [8, 128], strides = [1, 1]} : vector<8x512xf32> to vector<8x128xf32>
    %91 = math.tanh %90 : vector<8x128xf32>
    %92 = vector.extract_strided_slice %77 {offsets = [0, 384], sizes = [8, 128], strides = [1, 1]} : vector<8x512xf32> to vector<8x128xf32>
    %93 = arith.negf %92 : vector<8x128xf32>
    %94 = math.exp %93 : vector<8x128xf32>
    %cst_34 = arith.constant 1.000000e+00 : f32
    %95 = vector.broadcast %cst_34 : f32 to vector<8x128xf32>
    %96 = arith.addf %95, %94 : vector<8x128xf32>
    %97 = arith.divf %95, %96 : vector<8x128xf32>
    %98 = arith.mulf %89, %70 : vector<8x128xf32>
    %99 = arith.mulf %83, %91 : vector<8x128xf32>
    %100 = arith.addf %98, %99 : vector<8x128xf32>
    %101 = math.tanh %100 : vector<8x128xf32>
    %102 = arith.mulf %97, %101 : vector<8x128xf32>
    %103 = vector.extract_strided_slice %8 {offsets = [24, 0], sizes = [8, 512], strides = [1, 1]} : vector<64x512xf32> to vector<8x512xf32>
    %c0_35 = arith.constant 0 : index
    %c0_36 = arith.constant 0 : index
    %c0_37 = arith.constant 0 : index
    %104 = vector.load %arg2[%c0_35, %c0_36, %c0_37] : memref<5x128x512xf32, #tpu.memory_space<vmem>>, vector<1x128x512xf32>
    %105 = vector.shape_cast %104 : vector<1x128x512xf32> to vector<128x512xf32>
    %cst_38 = arith.constant dense<0.000000e+00> : vector<8x512xf32>
    %106 = tpu.matmul %102, %105, %cst_38 {dimension_numbers = #tpu.dot_dimension_numbers<[1], [0], [0], [1], [0, 0, 1, 1], [], []>} : vector<8x128xf32>, vector<128x512xf32>, vector<8x512xf32> -> vector<8x512xf32>
    %107 = arith.addf %103, %106 : vector<8x512xf32>
    %108 = vector.extract_strided_slice %107 {offsets = [0, 0], sizes = [8, 128], strides = [1, 1]} : vector<8x512xf32> to vector<8x128xf32>
    %109 = arith.negf %108 : vector<8x128xf32>
    %110 = math.exp %109 : vector<8x128xf32>
    %cst_39 = arith.constant 1.000000e+00 : f32
    %111 = vector.broadcast %cst_39 : f32 to vector<8x128xf32>
    %112 = arith.addf %111, %110 : vector<8x128xf32>
    %113 = arith.divf %111, %112 : vector<8x128xf32>
    %114 = vector.extract_strided_slice %107 {offsets = [0, 128], sizes = [8, 128], strides = [1, 1]} : vector<8x512xf32> to vector<8x128xf32>
    %115 = arith.negf %114 : vector<8x128xf32>
    %116 = math.exp %115 : vector<8x128xf32>
    %cst_40 = arith.constant 1.000000e+00 : f32
    %117 = vector.broadcast %cst_40 : f32 to vector<8x128xf32>
    %118 = arith.addf %117, %116 : vector<8x128xf32>
    %119 = arith.divf %117, %118 : vector<8x128xf32>
    %120 = vector.extract_strided_slice %107 {offsets = [0, 256], sizes = [8, 128], strides = [1, 1]} : vector<8x512xf32> to vector<8x128xf32>
    %121 = math.tanh %120 : vector<8x128xf32>
    %122 = vector.extract_strided_slice %107 {offsets = [0, 384], sizes = [8, 128], strides = [1, 1]} : vector<8x512xf32> to vector<8x128xf32>
    %123 = arith.negf %122 : vector<8x128xf32>
    %124 = math.exp %123 : vector<8x128xf32>
    %cst_41 = arith.constant 1.000000e+00 : f32
    %125 = vector.broadcast %cst_41 : f32 to vector<8x128xf32>
    %126 = arith.addf %125, %124 : vector<8x128xf32>
    %127 = arith.divf %125, %126 : vector<8x128xf32>
    %128 = arith.mulf %119, %100 : vector<8x128xf32>
    %129 = arith.mulf %113, %121 : vector<8x128xf32>
    %130 = arith.addf %128, %129 : vector<8x128xf32>
    %131 = math.tanh %130 : vector<8x128xf32>
    %132 = arith.mulf %127, %131 : vector<8x128xf32>
    %133 = vector.extract_strided_slice %8 {offsets = [32, 0], sizes = [8, 512], strides = [1, 1]} : vector<64x512xf32> to vector<8x512xf32>
    %c0_42 = arith.constant 0 : index
    %c0_43 = arith.constant 0 : index
    %c0_44 = arith.constant 0 : index
    %134 = vector.load %arg2[%c0_42, %c0_43, %c0_44] : memref<5x128x512xf32, #tpu.memory_space<vmem>>, vector<1x128x512xf32>
    %135 = vector.shape_cast %134 : vector<1x128x512xf32> to vector<128x512xf32>
    %cst_45 = arith.constant dense<0.000000e+00> : vector<8x512xf32>
    %136 = tpu.matmul %132, %135, %cst_45 {dimension_numbers = #tpu.dot_dimension_numbers<[1], [0], [0], [1], [0, 0, 1, 1], [], []>} : vector<8x128xf32>, vector<128x512xf32>, vector<8x512xf32> -> vector<8x512xf32>
    %137 = arith.addf %133, %136 : vector<8x512xf32>
    %138 = vector.extract_strided_slice %137 {offsets = [0, 0], sizes = [8, 128], strides = [1, 1]} : vector<8x512xf32> to vector<8x128xf32>
    %139 = arith.negf %138 : vector<8x128xf32>
    %140 = math.exp %139 : vector<8x128xf32>
    %cst_46 = arith.constant 1.000000e+00 : f32
    %141 = vector.broadcast %cst_46 : f32 to vector<8x128xf32>
    %142 = arith.addf %141, %140 : vector<8x128xf32>
    %143 = arith.divf %141, %142 : vector<8x128xf32>
    %144 = vector.extract_strided_slice %137 {offsets = [0, 128], sizes = [8, 128], strides = [1, 1]} : vector<8x512xf32> to vector<8x128xf32>
    %145 = arith.negf %144 : vector<8x128xf32>
    %146 = math.exp %145 : vector<8x128xf32>
    %cst_47 = arith.constant 1.000000e+00 : f32
    %147 = vector.broadcast %cst_47 : f32 to vector<8x128xf32>
    %148 = arith.addf %147, %146 : vector<8x128xf32>
    %149 = arith.divf %147, %148 : vector<8x128xf32>
    %150 = vector.extract_strided_slice %137 {offsets = [0, 256], sizes = [8, 128], strides = [1, 1]} : vector<8x512xf32> to vector<8x128xf32>
    %151 = math.tanh %150 : vector<8x128xf32>
    %152 = vector.extract_strided_slice %137 {offsets = [0, 384], sizes = [8, 128], strides = [1, 1]} : vector<8x512xf32> to vector<8x128xf32>
    %153 = arith.negf %152 : vector<8x128xf32>
    %154 = math.exp %153 : vector<8x128xf32>
    %cst_48 = arith.constant 1.000000e+00 : f32
    %155 = vector.broadcast %cst_48 : f32 to vector<8x128xf32>
    %156 = arith.addf %155, %154 : vector<8x128xf32>
    %157 = arith.divf %155, %156 : vector<8x128xf32>
    %158 = arith.mulf %149, %130 : vector<8x128xf32>
    %159 = arith.mulf %143, %151 : vector<8x128xf32>
    %160 = arith.addf %158, %159 : vector<8x128xf32>
    %161 = math.tanh %160 : vector<8x128xf32>
    %162 = arith.mulf %157, %161 : vector<8x128xf32>
    %163 = vector.extract_strided_slice %8 {offsets = [40, 0], sizes = [8, 512], strides = [1, 1]} : vector<64x512xf32> to vector<8x512xf32>
    %c0_49 = arith.constant 0 : index
    %c0_50 = arith.constant 0 : index
    %c0_51 = arith.constant 0 : index
    %164 = vector.load %arg2[%c0_49, %c0_50, %c0_51] : memref<5x128x512xf32, #tpu.memory_space<vmem>>, vector<1x128x512xf32>
    %165 = vector.shape_cast %164 : vector<1x128x512xf32> to vector<128x512xf32>
    %cst_52 = arith.constant dense<0.000000e+00> : vector<8x512xf32>
    %166 = tpu.matmul %162, %165, %cst_52 {dimension_numbers = #tpu.dot_dimension_numbers<[1], [0], [0], [1], [0, 0, 1, 1], [], []>} : vector<8x128xf32>, vector<128x512xf32>, vector<8x512xf32> -> vector<8x512xf32>
    %167 = arith.addf %163, %166 : vector<8x512xf32>
    %168 = vector.extract_strided_slice %167 {offsets = [0, 0], sizes = [8, 128], strides = [1, 1]} : vector<8x512xf32> to vector<8x128xf32>
    %169 = arith.negf %168 : vector<8x128xf32>
    %170 = math.exp %169 : vector<8x128xf32>
    %cst_53 = arith.constant 1.000000e+00 : f32
    %171 = vector.broadcast %cst_53 : f32 to vector<8x128xf32>
    %172 = arith.addf %171, %170 : vector<8x128xf32>
    %173 = arith.divf %171, %172 : vector<8x128xf32>
    %174 = vector.extract_strided_slice %167 {offsets = [0, 128], sizes = [8, 128], strides = [1, 1]} : vector<8x512xf32> to vector<8x128xf32>
    %175 = arith.negf %174 : vector<8x128xf32>
    %176 = math.exp %175 : vector<8x128xf32>
    %cst_54 = arith.constant 1.000000e+00 : f32
    %177 = vector.broadcast %cst_54 : f32 to vector<8x128xf32>
    %178 = arith.addf %177, %176 : vector<8x128xf32>
    %179 = arith.divf %177, %178 : vector<8x128xf32>
    %180 = vector.extract_strided_slice %167 {offsets = [0, 256], sizes = [8, 128], strides = [1, 1]} : vector<8x512xf32> to vector<8x128xf32>
    %181 = math.tanh %180 : vector<8x128xf32>
    %182 = vector.extract_strided_slice %167 {offsets = [0, 384], sizes = [8, 128], strides = [1, 1]} : vector<8x512xf32> to vector<8x128xf32>
    %183 = arith.negf %182 : vector<8x128xf32>
    %184 = math.exp %183 : vector<8x128xf32>
    %cst_55 = arith.constant 1.000000e+00 : f32
    %185 = vector.broadcast %cst_55 : f32 to vector<8x128xf32>
    %186 = arith.addf %185, %184 : vector<8x128xf32>
    %187 = arith.divf %185, %186 : vector<8x128xf32>
    %188 = arith.mulf %179, %160 : vector<8x128xf32>
    %189 = arith.mulf %173, %181 : vector<8x128xf32>
    %190 = arith.addf %188, %189 : vector<8x128xf32>
    %191 = math.tanh %190 : vector<8x128xf32>
    %192 = arith.mulf %187, %191 : vector<8x128xf32>
    %193 = vector.extract_strided_slice %8 {offsets = [48, 0], sizes = [8, 512], strides = [1, 1]} : vector<64x512xf32> to vector<8x512xf32>
    %c0_56 = arith.constant 0 : index
    %c0_57 = arith.constant 0 : index
    %c0_58 = arith.constant 0 : index
    %194 = vector.load %arg2[%c0_56, %c0_57, %c0_58] : memref<5x128x512xf32, #tpu.memory_space<vmem>>, vector<1x128x512xf32>
    %195 = vector.shape_cast %194 : vector<1x128x512xf32> to vector<128x512xf32>
    %cst_59 = arith.constant dense<0.000000e+00> : vector<8x512xf32>
    %196 = tpu.matmul %192, %195, %cst_59 {dimension_numbers = #tpu.dot_dimension_numbers<[1], [0], [0], [1], [0, 0, 1, 1], [], []>} : vector<8x128xf32>, vector<128x512xf32>, vector<8x512xf32> -> vector<8x512xf32>
    %197 = arith.addf %193, %196 : vector<8x512xf32>
    %198 = vector.extract_strided_slice %197 {offsets = [0, 0], sizes = [8, 128], strides = [1, 1]} : vector<8x512xf32> to vector<8x128xf32>
    %199 = arith.negf %198 : vector<8x128xf32>
    %200 = math.exp %199 : vector<8x128xf32>
    %cst_60 = arith.constant 1.000000e+00 : f32
    %201 = vector.broadcast %cst_60 : f32 to vector<8x128xf32>
    %202 = arith.addf %201, %200 : vector<8x128xf32>
    %203 = arith.divf %201, %202 : vector<8x128xf32>
    %204 = vector.extract_strided_slice %197 {offsets = [0, 128], sizes = [8, 128], strides = [1, 1]} : vector<8x512xf32> to vector<8x128xf32>
    %205 = arith.negf %204 : vector<8x128xf32>
    %206 = math.exp %205 : vector<8x128xf32>
    %cst_61 = arith.constant 1.000000e+00 : f32
    %207 = vector.broadcast %cst_61 : f32 to vector<8x128xf32>
    %208 = arith.addf %207, %206 : vector<8x128xf32>
    %209 = arith.divf %207, %208 : vector<8x128xf32>
    %210 = vector.extract_strided_slice %197 {offsets = [0, 256], sizes = [8, 128], strides = [1, 1]} : vector<8x512xf32> to vector<8x128xf32>
    %211 = math.tanh %210 : vector<8x128xf32>
    %212 = vector.extract_strided_slice %197 {offsets = [0, 384], sizes = [8, 128], strides = [1, 1]} : vector<8x512xf32> to vector<8x128xf32>
    %213 = arith.negf %212 : vector<8x128xf32>
    %214 = math.exp %213 : vector<8x128xf32>
    %cst_62 = arith.constant 1.000000e+00 : f32
    %215 = vector.broadcast %cst_62 : f32 to vector<8x128xf32>
    %216 = arith.addf %215, %214 : vector<8x128xf32>
    %217 = arith.divf %215, %216 : vector<8x128xf32>
    %218 = arith.mulf %209, %190 : vector<8x128xf32>
    %219 = arith.mulf %203, %211 : vector<8x128xf32>
    %220 = arith.addf %218, %219 : vector<8x128xf32>
    %221 = math.tanh %220 : vector<8x128xf32>
    %222 = arith.mulf %217, %221 : vector<8x128xf32>
    %223 = vector.extract_strided_slice %8 {offsets = [56, 0], sizes = [8, 512], strides = [1, 1]} : vector<64x512xf32> to vector<8x512xf32>
    %c0_63 = arith.constant 0 : index
    %c0_64 = arith.constant 0 : index
    %c0_65 = arith.constant 0 : index
    %224 = vector.load %arg2[%c0_63, %c0_64, %c0_65] : memref<5x128x512xf32, #tpu.memory_space<vmem>>, vector<1x128x512xf32>
    %225 = vector.shape_cast %224 : vector<1x128x512xf32> to vector<128x512xf32>
    %cst_66 = arith.constant dense<0.000000e+00> : vector<8x512xf32>
    %226 = tpu.matmul %222, %225, %cst_66 {dimension_numbers = #tpu.dot_dimension_numbers<[1], [0], [0], [1], [0, 0, 1, 1], [], []>} : vector<8x128xf32>, vector<128x512xf32>, vector<8x512xf32> -> vector<8x512xf32>
    %227 = arith.addf %223, %226 : vector<8x512xf32>
    %228 = vector.extract_strided_slice %227 {offsets = [0, 0], sizes = [8, 128], strides = [1, 1]} : vector<8x512xf32> to vector<8x128xf32>
    %229 = arith.negf %228 : vector<8x128xf32>
    %230 = math.exp %229 : vector<8x128xf32>
    %cst_67 = arith.constant 1.000000e+00 : f32
    %231 = vector.broadcast %cst_67 : f32 to vector<8x128xf32>
    %232 = arith.addf %231, %230 : vector<8x128xf32>
    %233 = arith.divf %231, %232 : vector<8x128xf32>
    %234 = vector.extract_strided_slice %227 {offsets = [0, 128], sizes = [8, 128], strides = [1, 1]} : vector<8x512xf32> to vector<8x128xf32>
    %235 = arith.negf %234 : vector<8x128xf32>
    %236 = math.exp %235 : vector<8x128xf32>
    %cst_68 = arith.constant 1.000000e+00 : f32
    %237 = vector.broadcast %cst_68 : f32 to vector<8x128xf32>
    %238 = arith.addf %237, %236 : vector<8x128xf32>
    %239 = arith.divf %237, %238 : vector<8x128xf32>
    %240 = vector.extract_strided_slice %227 {offsets = [0, 256], sizes = [8, 128], strides = [1, 1]} : vector<8x512xf32> to vector<8x128xf32>
    %241 = math.tanh %240 : vector<8x128xf32>
    %242 = vector.extract_strided_slice %227 {offsets = [0, 384], sizes = [8, 128], strides = [1, 1]} : vector<8x512xf32> to vector<8x128xf32>
    %243 = arith.negf %242 : vector<8x128xf32>
    %244 = math.exp %243 : vector<8x128xf32>
    %cst_69 = arith.constant 1.000000e+00 : f32
    %245 = vector.broadcast %cst_69 : f32 to vector<8x128xf32>
    %246 = arith.addf %245, %244 : vector<8x128xf32>
    %247 = arith.divf %245, %246 : vector<8x128xf32>
    %248 = arith.mulf %239, %220 : vector<8x128xf32>
    %249 = arith.mulf %233, %241 : vector<8x128xf32>
    %250 = arith.addf %248, %249 : vector<8x128xf32>
    %251 = math.tanh %250 : vector<8x128xf32>
    %252 = arith.mulf %247, %251 : vector<8x128xf32>
    %c0_70 = arith.constant 0 : index
    %c0_71 = arith.constant 0 : index
    %c0_72 = arith.constant 0 : index
    %253 = vector.load %arg11[%c0_70, %c0_71, %c0_72] : memref<5x8x128xf32, #tpu.memory_space<vmem>>, vector<1x8x128xf32>
    %254 = vector.shape_cast %253 : vector<1x8x128xf32> to vector<8x128xf32>
    %255 = vector.shape_cast %252 : vector<8x128xf32> to vector<1x8x128xf32>
    tpu.vector_store %arg11[%c0_70, %c0_71, %c0_72], %255 {strides = array<i32>} : memref<5x8x128xf32, #tpu.memory_space<vmem>>, vector<1x8x128xf32>,
    %c0_73 = arith.constant 0 : index
    %c0_74 = arith.constant 0 : index
    %c0_75 = arith.constant 0 : index
    %256 = vector.load %arg12[%c0_73, %c0_74, %c0_75] : memref<5x8x128xf32, #tpu.memory_space<vmem>>, vector<1x8x128xf32>
    %257 = vector.shape_cast %256 : vector<1x8x128xf32> to vector<8x128xf32>
    %258 = vector.shape_cast %250 : vector<8x128xf32> to vector<1x8x128xf32>
    tpu.vector_store %arg12[%c0_73, %c0_74, %c0_75], %258 {strides = array<i32>} : memref<5x8x128xf32, #tpu.memory_space<vmem>>, vector<1x8x128xf32>,
    %259 = tpu.concatenate %42, %72, %102, %132, %162, %192, %222, %252 in 0 : vector<8x128xf32>, vector<8x128xf32>, vector<8x128xf32>, vector<8x128xf32>, vector<8x128xf32>, vector<8x128xf32>, vector<8x128xf32>, vector<8x128xf32> -> vector<64x128xf32>
    %c1 = arith.constant 1 : index
    %c0_76 = arith.constant 0 : index
    %c0_77 = arith.constant 0 : index
    %260 = vector.load %arg1[%c1, %c0_76, %c0_77] : memref<5x128x512xf32, #tpu.memory_space<vmem>>, vector<1x128x512xf32>
    %261 = vector.shape_cast %260 : vector<1x128x512xf32> to vector<128x512xf32>
    %cst_78 = arith.constant dense<0.000000e+00> : vector<64x512xf32>
    %262 = tpu.matmul %259, %261, %cst_78 {dimension_numbers = #tpu.dot_dimension_numbers<[1], [0], [0], [1], [0, 0, 1, 1], [], []>} : vector<64x128xf32>, vector<128x512xf32>, vector<64x512xf32> -> vector<64x512xf32>
    %c1_79 = arith.constant 1 : index
    %c0_80 = arith.constant 0 : index
    %c0_81 = arith.constant 0 : index
    %263 = vector.load %arg3[%c1_79, %c0_80, %c0_81] : memref<5x1x512xf32, #tpu.memory_space<vmem>>, vector<1x1x512xf32>
    %264 = vector.shape_cast %263 : vector<1x1x512xf32> to vector<1x512xf32>
    %265 = vector.broadcast %264 : vector<1x512xf32> to vector<64x512xf32>
    %266 = arith.addf %262, %265 : vector<64x512xf32>
    %c1_82 = arith.constant 1 : index
    %c0_83 = arith.constant 0 : index
    %c0_84 = arith.constant 0 : index
    %267 = vector.load %arg4[%c1_82, %c0_83, %c0_84] : memref<5x8x128xf32, #tpu.memory_space<vmem>>, vector<1x8x128xf32>
    %268 = vector.shape_cast %267 : vector<1x8x128xf32> to vector<8x128xf32>
    %c1_85 = arith.constant 1 : index
    %c0_86 = arith.constant 0 : index
    %c0_87 = arith.constant 0 : index
    %269 = vector.load %arg5[%c1_85, %c0_86, %c0_87] : memref<5x8x128xf32, #tpu.memory_space<vmem>>, vector<1x8x128xf32>
    %270 = vector.shape_cast %269 : vector<1x8x128xf32> to vector<8x128xf32>
    %271 = vector.extract_strided_slice %266 {offsets = [0, 0], sizes = [8, 512], strides = [1, 1]} : vector<64x512xf32> to vector<8x512xf32>
    %c1_88 = arith.constant 1 : index
    %c0_89 = arith.constant 0 : index
    %c0_90 = arith.constant 0 : index
    %272 = vector.load %arg2[%c1_88, %c0_89, %c0_90] : memref<5x128x512xf32, #tpu.memory_space<vmem>>, vector<1x128x512xf32>
    %273 = vector.shape_cast %272 : vector<1x128x512xf32> to vector<128x512xf32>
    %cst_91 = arith.constant dense<0.000000e+00> : vector<8x512xf32>
    %274 = tpu.matmul %268, %273, %cst_91 {dimension_numbers = #tpu.dot_dimension_numbers<[1], [0], [0], [1], [0, 0, 1, 1], [], []>} : vector<8x128xf32>, vector<128x512xf32>, vector<8x512xf32> -> vector<8x512xf32>
    %275 = arith.addf %271, %274 : vector<8x512xf32>
    %276 = vector.extract_strided_slice %275 {offsets = [0, 0], sizes = [8, 128], strides = [1, 1]} : vector<8x512xf32> to vector<8x128xf32>
    %277 = arith.negf %276 : vector<8x128xf32>
    %278 = math.exp %277 : vector<8x128xf32>
    %cst_92 = arith.constant 1.000000e+00 : f32
    %279 = vector.broadcast %cst_92 : f32 to vector<8x128xf32>
    %280 = arith.addf %279, %278 : vector<8x128xf32>
    %281 = arith.divf %279, %280 : vector<8x128xf32>
    %282 = vector.extract_strided_slice %275 {offsets = [0, 128], sizes = [8, 128], strides = [1, 1]} : vector<8x512xf32> to vector<8x128xf32>
    %283 = arith.negf %282 : vector<8x128xf32>
    %284 = math.exp %283 : vector<8x128xf32>
    %cst_93 = arith.constant 1.000000e+00 : f32
    %285 = vector.broadcast %cst_93 : f32 to vector<8x128xf32>
    %286 = arith.addf %285, %284 : vector<8x128xf32>
    %287 = arith.divf %285, %286 : vector<8x128xf32>
    %288 = vector.extract_strided_slice %275 {offsets = [0, 256], sizes = [8, 128], strides = [1, 1]} : vector<8x512xf32> to vector<8x128xf32>
    %289 = math.tanh %288 : vector<8x128xf32>
    %290 = vector.extract_strided_slice %275 {offsets = [0, 384], sizes = [8, 128], strides = [1, 1]} : vector<8x512xf32> to vector<8x128xf32>
    %291 = arith.negf %290 : vector<8x128xf32>
    %292 = math.exp %291 : vector<8x128xf32>
    %cst_94 = arith.constant 1.000000e+00 : f32
    %293 = vector.broadcast %cst_94 : f32 to vector<8x128xf32>
    %294 = arith.addf %293, %292 : vector<8x128xf32>
    %295 = arith.divf %293, %294 : vector<8x128xf32>
    %296 = arith.mulf %287, %270 : vector<8x128xf32>
    %297 = arith.mulf %281, %289 : vector<8x128xf32>
    %298 = arith.addf %296, %297 : vector<8x128xf32>
    %299 = math.tanh %298 : vector<8x128xf32>
    %300 = arith.mulf %295, %299 : vector<8x128xf32>
    %301 = vector.extract_strided_slice %266 {offsets = [8, 0], sizes = [8, 512], strides = [1, 1]} : vector<64x512xf32> to vector<8x512xf32>
    %c1_95 = arith.constant 1 : index
    %c0_96 = arith.constant 0 : index
    %c0_97 = arith.constant 0 : index
    %302 = vector.load %arg2[%c1_95, %c0_96, %c0_97] : memref<5x128x512xf32, #tpu.memory_space<vmem>>, vector<1x128x512xf32>
    %303 = vector.shape_cast %302 : vector<1x128x512xf32> to vector<128x512xf32>
    %cst_98 = arith.constant dense<0.000000e+00> : vector<8x512xf32>
    %304 = tpu.matmul %300, %303, %cst_98 {dimension_numbers = #tpu.dot_dimension_numbers<[1], [0], [0], [1], [0, 0, 1, 1], [], []>} : vector<8x128xf32>, vector<128x512xf32>, vector<8x512xf32> -> vector<8x512xf32>
    %305 = arith.addf %301, %304 : vector<8x512xf32>
    %306 = vector.extract_strided_slice %305 {offsets = [0, 0], sizes = [8, 128], strides = [1, 1]} : vector<8x512xf32> to vector<8x128xf32>
    %307 = arith.negf %306 : vector<8x128xf32>
    %308 = math.exp %307 : vector<8x128xf32>
    %cst_99 = arith.constant 1.000000e+00 : f32
    %309 = vector.broadcast %cst_99 : f32 to vector<8x128xf32>
    %310 = arith.addf %309, %308 : vector<8x128xf32>
    %311 = arith.divf %309, %310 : vector<8x128xf32>
    %312 = vector.extract_strided_slice %305 {offsets = [0, 128], sizes = [8, 128], strides = [1, 1]} : vector<8x512xf32> to vector<8x128xf32>
    %313 = arith.negf %312 : vector<8x128xf32>
    %314 = math.exp %313 : vector<8x128xf32>
    %cst_100 = arith.constant 1.000000e+00 : f32
    %315 = vector.broadcast %cst_100 : f32 to vector<8x128xf32>
    %316 = arith.addf %315, %314 : vector<8x128xf32>
    %317 = arith.divf %315, %316 : vector<8x128xf32>
    %318 = vector.extract_strided_slice %305 {offsets = [0, 256], sizes = [8, 128], strides = [1, 1]} : vector<8x512xf32> to vector<8x128xf32>
    %319 = math.tanh %318 : vector<8x128xf32>
    %320 = vector.extract_strided_slice %305 {offsets = [0, 384], sizes = [8, 128], strides = [1, 1]} : vector<8x512xf32> to vector<8x128xf32>
    %321 = arith.negf %320 : vector<8x128xf32>
    %322 = math.exp %321 : vector<8x128xf32>
    %cst_101 = arith.constant 1.000000e+00 : f32
    %323 = vector.broadcast %cst_101 : f32 to vector<8x128xf32>
    %324 = arith.addf %323, %322 : vector<8x128xf32>
    %325 = arith.divf %323, %324 : vector<8x128xf32>
    %326 = arith.mulf %317, %298 : vector<8x128xf32>
    %327 = arith.mulf %311, %319 : vector<8x128xf32>
    %328 = arith.addf %326, %327 : vector<8x128xf32>
    %329 = math.tanh %328 : vector<8x128xf32>
    %330 = arith.mulf %325, %329 : vector<8x128xf32>
    %331 = vector.extract_strided_slice %266 {offsets = [16, 0], sizes = [8, 512], strides = [1, 1]} : vector<64x512xf32> to vector<8x512xf32>
    %c1_102 = arith.constant 1 : index
    %c0_103 = arith.constant 0 : index
    %c0_104 = arith.constant 0 : index
    %332 = vector.load %arg2[%c1_102, %c0_103, %c0_104] : memref<5x128x512xf32, #tpu.memory_space<vmem>>, vector<1x128x512xf32>
    %333 = vector.shape_cast %332 : vector<1x128x512xf32> to vector<128x512xf32>
    %cst_105 = arith.constant dense<0.000000e+00> : vector<8x512xf32>
    %334 = tpu.matmul %330, %333, %cst_105 {dimension_numbers = #tpu.dot_dimension_numbers<[1], [0], [0], [1], [0, 0, 1, 1], [], []>} : vector<8x128xf32>, vector<128x512xf32>, vector<8x512xf32> -> vector<8x512xf32>
    %335 = arith.addf %331, %334 : vector<8x512xf32>
    %336 = vector.extract_strided_slice %335 {offsets = [0, 0], sizes = [8, 128], strides = [1, 1]} : vector<8x512xf32> to vector<8x128xf32>
    %337 = arith.negf %336 : vector<8x128xf32>
    %338 = math.exp %337 : vector<8x128xf32>
    %cst_106 = arith.constant 1.000000e+00 : f32
    %339 = vector.broadcast %cst_106 : f32 to vector<8x128xf32>
    %340 = arith.addf %339, %338 : vector<8x128xf32>
    %341 = arith.divf %339, %340 : vector<8x128xf32>
    %342 = vector.extract_strided_slice %335 {offsets = [0, 128], sizes = [8, 128], strides = [1, 1]} : vector<8x512xf32> to vector<8x128xf32>
    %343 = arith.negf %342 : vector<8x128xf32>
    %344 = math.exp %343 : vector<8x128xf32>
    %cst_107 = arith.constant 1.000000e+00 : f32
    %345 = vector.broadcast %cst_107 : f32 to vector<8x128xf32>
    %346 = arith.addf %345, %344 : vector<8x128xf32>
    %347 = arith.divf %345, %346 : vector<8x128xf32>
    %348 = vector.extract_strided_slice %335 {offsets = [0, 256], sizes = [8, 128], strides = [1, 1]} : vector<8x512xf32> to vector<8x128xf32>
    %349 = math.tanh %348 : vector<8x128xf32>
    %350 = vector.extract_strided_slice %335 {offsets = [0, 384], sizes = [8, 128], strides = [1, 1]} : vector<8x512xf32> to vector<8x128xf32>
    %351 = arith.negf %350 : vector<8x128xf32>
    %352 = math.exp %351 : vector<8x128xf32>
    %cst_108 = arith.constant 1.000000e+00 : f32
    %353 = vector.broadcast %cst_108 : f32 to vector<8x128xf32>
    %354 = arith.addf %353, %352 : vector<8x128xf32>
    %355 = arith.divf %353, %354 : vector<8x128xf32>
    %356 = arith.mulf %347, %328 : vector<8x128xf32>
    %357 = arith.mulf %341, %349 : vector<8x128xf32>
    %358 = arith.addf %356, %357 : vector<8x128xf32>
    %359 = math.tanh %358 : vector<8x128xf32>
    %360 = arith.mulf %355, %359 : vector<8x128xf32>
    %361 = vector.extract_strided_slice %266 {offsets = [24, 0], sizes = [8, 512], strides = [1, 1]} : vector<64x512xf32> to vector<8x512xf32>
    %c1_109 = arith.constant 1 : index
    %c0_110 = arith.constant 0 : index
    %c0_111 = arith.constant 0 : index
    %362 = vector.load %arg2[%c1_109, %c0_110, %c0_111] : memref<5x128x512xf32, #tpu.memory_space<vmem>>, vector<1x128x512xf32>
    %363 = vector.shape_cast %362 : vector<1x128x512xf32> to vector<128x512xf32>
    %cst_112 = arith.constant dense<0.000000e+00> : vector<8x512xf32>
    %364 = tpu.matmul %360, %363, %cst_112 {dimension_numbers = #tpu.dot_dimension_numbers<[1], [0], [0], [1], [0, 0, 1, 1], [], []>} : vector<8x128xf32>, vector<128x512xf32>, vector<8x512xf32> -> vector<8x512xf32>
    %365 = arith.addf %361, %364 : vector<8x512xf32>
    %366 = vector.extract_strided_slice %365 {offsets = [0, 0], sizes = [8, 128], strides = [1, 1]} : vector<8x512xf32> to vector<8x128xf32>
    %367 = arith.negf %366 : vector<8x128xf32>
    %368 = math.exp %367 : vector<8x128xf32>
    %cst_113 = arith.constant 1.000000e+00 : f32
    %369 = vector.broadcast %cst_113 : f32 to vector<8x128xf32>
    %370 = arith.addf %369, %368 : vector<8x128xf32>
    %371 = arith.divf %369, %370 : vector<8x128xf32>
    %372 = vector.extract_strided_slice %365 {offsets = [0, 128], sizes = [8, 128], strides = [1, 1]} : vector<8x512xf32> to vector<8x128xf32>
    %373 = arith.negf %372 : vector<8x128xf32>
    %374 = math.exp %373 : vector<8x128xf32>
    %cst_114 = arith.constant 1.000000e+00 : f32
    %375 = vector.broadcast %cst_114 : f32 to vector<8x128xf32>
    %376 = arith.addf %375, %374 : vector<8x128xf32>
    %377 = arith.divf %375, %376 : vector<8x128xf32>
    %378 = vector.extract_strided_slice %365 {offsets = [0, 256], sizes = [8, 128], strides = [1, 1]} : vector<8x512xf32> to vector<8x128xf32>
    %379 = math.tanh %378 : vector<8x128xf32>
    %380 = vector.extract_strided_slice %365 {offsets = [0, 384], sizes = [8, 128], strides = [1, 1]} : vector<8x512xf32> to vector<8x128xf32>
    %381 = arith.negf %380 : vector<8x128xf32>
    %382 = math.exp %381 : vector<8x128xf32>
    %cst_115 = arith.constant 1.000000e+00 : f32
    %383 = vector.broadcast %cst_115 : f32 to vector<8x128xf32>
    %384 = arith.addf %383, %382 : vector<8x128xf32>
    %385 = arith.divf %383, %384 : vector<8x128xf32>
    %386 = arith.mulf %377, %358 : vector<8x128xf32>
    %387 = arith.mulf %371, %379 : vector<8x128xf32>
    %388 = arith.addf %386, %387 : vector<8x128xf32>
    %389 = math.tanh %388 : vector<8x128xf32>
    %390 = arith.mulf %385, %389 : vector<8x128xf32>
    %391 = vector.extract_strided_slice %266 {offsets = [32, 0], sizes = [8, 512], strides = [1, 1]} : vector<64x512xf32> to vector<8x512xf32>
    %c1_116 = arith.constant 1 : index
    %c0_117 = arith.constant 0 : index
    %c0_118 = arith.constant 0 : index
    %392 = vector.load %arg2[%c1_116, %c0_117, %c0_118] : memref<5x128x512xf32, #tpu.memory_space<vmem>>, vector<1x128x512xf32>
    %393 = vector.shape_cast %392 : vector<1x128x512xf32> to vector<128x512xf32>
    %cst_119 = arith.constant dense<0.000000e+00> : vector<8x512xf32>
    %394 = tpu.matmul %390, %393, %cst_119 {dimension_numbers = #tpu.dot_dimension_numbers<[1], [0], [0], [1], [0, 0, 1, 1], [], []>} : vector<8x128xf32>, vector<128x512xf32>, vector<8x512xf32> -> vector<8x512xf32>
    %395 = arith.addf %391, %394 : vector<8x512xf32>
    %396 = vector.extract_strided_slice %395 {offsets = [0, 0], sizes = [8, 128], strides = [1, 1]} : vector<8x512xf32> to vector<8x128xf32>
    %397 = arith.negf %396 : vector<8x128xf32>
    %398 = math.exp %397 : vector<8x128xf32>
    %cst_120 = arith.constant 1.000000e+00 : f32
    %399 = vector.broadcast %cst_120 : f32 to vector<8x128xf32>
    %400 = arith.addf %399, %398 : vector<8x128xf32>
    %401 = arith.divf %399, %400 : vector<8x128xf32>
    %402 = vector.extract_strided_slice %395 {offsets = [0, 128], sizes = [8, 128], strides = [1, 1]} : vector<8x512xf32> to vector<8x128xf32>
    %403 = arith.negf %402 : vector<8x128xf32>
    %404 = math.exp %403 : vector<8x128xf32>
    %cst_121 = arith.constant 1.000000e+00 : f32
    %405 = vector.broadcast %cst_121 : f32 to vector<8x128xf32>
    %406 = arith.addf %405, %404 : vector<8x128xf32>
    %407 = arith.divf %405, %406 : vector<8x128xf32>
    %408 = vector.extract_strided_slice %395 {offsets = [0, 256], sizes = [8, 128], strides = [1, 1]} : vector<8x512xf32> to vector<8x128xf32>
    %409 = math.tanh %408 : vector<8x128xf32>
    %410 = vector.extract_strided_slice %395 {offsets = [0, 384], sizes = [8, 128], strides = [1, 1]} : vector<8x512xf32> to vector<8x128xf32>
    %411 = arith.negf %410 : vector<8x128xf32>
    %412 = math.exp %411 : vector<8x128xf32>
    %cst_122 = arith.constant 1.000000e+00 : f32
    %413 = vector.broadcast %cst_122 : f32 to vector<8x128xf32>
    %414 = arith.addf %413, %412 : vector<8x128xf32>
    %415 = arith.divf %413, %414 : vector<8x128xf32>
    %416 = arith.mulf %407, %388 : vector<8x128xf32>
    %417 = arith.mulf %401, %409 : vector<8x128xf32>
    %418 = arith.addf %416, %417 : vector<8x128xf32>
    %419 = math.tanh %418 : vector<8x128xf32>
    %420 = arith.mulf %415, %419 : vector<8x128xf32>
    %421 = vector.extract_strided_slice %266 {offsets = [40, 0], sizes = [8, 512], strides = [1, 1]} : vector<64x512xf32> to vector<8x512xf32>
    %c1_123 = arith.constant 1 : index
    %c0_124 = arith.constant 0 : index
    %c0_125 = arith.constant 0 : index
    %422 = vector.load %arg2[%c1_123, %c0_124, %c0_125] : memref<5x128x512xf32, #tpu.memory_space<vmem>>, vector<1x128x512xf32>
    %423 = vector.shape_cast %422 : vector<1x128x512xf32> to vector<128x512xf32>
    %cst_126 = arith.constant dense<0.000000e+00> : vector<8x512xf32>
    %424 = tpu.matmul %420, %423, %cst_126 {dimension_numbers = #tpu.dot_dimension_numbers<[1], [0], [0], [1], [0, 0, 1, 1], [], []>} : vector<8x128xf32>, vector<128x512xf32>, vector<8x512xf32> -> vector<8x512xf32>
    %425 = arith.addf %421, %424 : vector<8x512xf32>
    %426 = vector.extract_strided_slice %425 {offsets = [0, 0], sizes = [8, 128], strides = [1, 1]} : vector<8x512xf32> to vector<8x128xf32>
    %427 = arith.negf %426 : vector<8x128xf32>
    %428 = math.exp %427 : vector<8x128xf32>
    %cst_127 = arith.constant 1.000000e+00 : f32
    %429 = vector.broadcast %cst_127 : f32 to vector<8x128xf32>
    %430 = arith.addf %429, %428 : vector<8x128xf32>
    %431 = arith.divf %429, %430 : vector<8x128xf32>
    %432 = vector.extract_strided_slice %425 {offsets = [0, 128], sizes = [8, 128], strides = [1, 1]} : vector<8x512xf32> to vector<8x128xf32>
    %433 = arith.negf %432 : vector<8x128xf32>
    %434 = math.exp %433 : vector<8x128xf32>
    %cst_128 = arith.constant 1.000000e+00 : f32
    %435 = vector.broadcast %cst_128 : f32 to vector<8x128xf32>
    %436 = arith.addf %435, %434 : vector<8x128xf32>
    %437 = arith.divf %435, %436 : vector<8x128xf32>
    %438 = vector.extract_strided_slice %425 {offsets = [0, 256], sizes = [8, 128], strides = [1, 1]} : vector<8x512xf32> to vector<8x128xf32>
    %439 = math.tanh %438 : vector<8x128xf32>
    %440 = vector.extract_strided_slice %425 {offsets = [0, 384], sizes = [8, 128], strides = [1, 1]} : vector<8x512xf32> to vector<8x128xf32>
    %441 = arith.negf %440 : vector<8x128xf32>
    %442 = math.exp %441 : vector<8x128xf32>
    %cst_129 = arith.constant 1.000000e+00 : f32
    %443 = vector.broadcast %cst_129 : f32 to vector<8x128xf32>
    %444 = arith.addf %443, %442 : vector<8x128xf32>
    %445 = arith.divf %443, %444 : vector<8x128xf32>
    %446 = arith.mulf %437, %418 : vector<8x128xf32>
    %447 = arith.mulf %431, %439 : vector<8x128xf32>
    %448 = arith.addf %446, %447 : vector<8x128xf32>
    %449 = math.tanh %448 : vector<8x128xf32>
    %450 = arith.mulf %445, %449 : vector<8x128xf32>
    %451 = vector.extract_strided_slice %266 {offsets = [48, 0], sizes = [8, 512], strides = [1, 1]} : vector<64x512xf32> to vector<8x512xf32>
    %c1_130 = arith.constant 1 : index
    %c0_131 = arith.constant 0 : index
    %c0_132 = arith.constant 0 : index
    %452 = vector.load %arg2[%c1_130, %c0_131, %c0_132] : memref<5x128x512xf32, #tpu.memory_space<vmem>>, vector<1x128x512xf32>
    %453 = vector.shape_cast %452 : vector<1x128x512xf32> to vector<128x512xf32>
    %cst_133 = arith.constant dense<0.000000e+00> : vector<8x512xf32>
    %454 = tpu.matmul %450, %453, %cst_133 {dimension_numbers = #tpu.dot_dimension_numbers<[1], [0], [0], [1], [0, 0, 1, 1], [], []>} : vector<8x128xf32>, vector<128x512xf32>, vector<8x512xf32> -> vector<8x512xf32>
    %455 = arith.addf %451, %454 : vector<8x512xf32>
    %456 = vector.extract_strided_slice %455 {offsets = [0, 0], sizes = [8, 128], strides = [1, 1]} : vector<8x512xf32> to vector<8x128xf32>
    %457 = arith.negf %456 : vector<8x128xf32>
    %458 = math.exp %457 : vector<8x128xf32>
    %cst_134 = arith.constant 1.000000e+00 : f32
    %459 = vector.broadcast %cst_134 : f32 to vector<8x128xf32>
    %460 = arith.addf %459, %458 : vector<8x128xf32>
    %461 = arith.divf %459, %460 : vector<8x128xf32>
    %462 = vector.extract_strided_slice %455 {offsets = [0, 128], sizes = [8, 128], strides = [1, 1]} : vector<8x512xf32> to vector<8x128xf32>
    %463 = arith.negf %462 : vector<8x128xf32>
    %464 = math.exp %463 : vector<8x128xf32>
    %cst_135 = arith.constant 1.000000e+00 : f32
    %465 = vector.broadcast %cst_135 : f32 to vector<8x128xf32>
    %466 = arith.addf %465, %464 : vector<8x128xf32>
    %467 = arith.divf %465, %466 : vector<8x128xf32>
    %468 = vector.extract_strided_slice %455 {offsets = [0, 256], sizes = [8, 128], strides = [1, 1]} : vector<8x512xf32> to vector<8x128xf32>
    %469 = math.tanh %468 : vector<8x128xf32>
    %470 = vector.extract_strided_slice %455 {offsets = [0, 384], sizes = [8, 128], strides = [1, 1]} : vector<8x512xf32> to vector<8x128xf32>
    %471 = arith.negf %470 : vector<8x128xf32>
    %472 = math.exp %471 : vector<8x128xf32>
    %cst_136 = arith.constant 1.000000e+00 : f32
    %473 = vector.broadcast %cst_136 : f32 to vector<8x128xf32>
    %474 = arith.addf %473, %472 : vector<8x128xf32>
    %475 = arith.divf %473, %474 : vector<8x128xf32>
    %476 = arith.mulf %467, %448 : vector<8x128xf32>
    %477 = arith.mulf %461, %469 : vector<8x128xf32>
    %478 = arith.addf %476, %477 : vector<8x128xf32>
    %479 = math.tanh %478 : vector<8x128xf32>
    %480 = arith.mulf %475, %479 : vector<8x128xf32>
    %481 = vector.extract_strided_slice %266 {offsets = [56, 0], sizes = [8, 512], strides = [1, 1]} : vector<64x512xf32> to vector<8x512xf32>
    %c1_137 = arith.constant 1 : index
    %c0_138 = arith.constant 0 : index
    %c0_139 = arith.constant 0 : index
    %482 = vector.load %arg2[%c1_137, %c0_138, %c0_139] : memref<5x128x512xf32, #tpu.memory_space<vmem>>, vector<1x128x512xf32>
    %483 = vector.shape_cast %482 : vector<1x128x512xf32> to vector<128x512xf32>
    %cst_140 = arith.constant dense<0.000000e+00> : vector<8x512xf32>
    %484 = tpu.matmul %480, %483, %cst_140 {dimension_numbers = #tpu.dot_dimension_numbers<[1], [0], [0], [1], [0, 0, 1, 1], [], []>} : vector<8x128xf32>, vector<128x512xf32>, vector<8x512xf32> -> vector<8x512xf32>
    %485 = arith.addf %481, %484 : vector<8x512xf32>
    %486 = vector.extract_strided_slice %485 {offsets = [0, 0], sizes = [8, 128], strides = [1, 1]} : vector<8x512xf32> to vector<8x128xf32>
    %487 = arith.negf %486 : vector<8x128xf32>
    %488 = math.exp %487 : vector<8x128xf32>
    %cst_141 = arith.constant 1.000000e+00 : f32
    %489 = vector.broadcast %cst_141 : f32 to vector<8x128xf32>
    %490 = arith.addf %489, %488 : vector<8x128xf32>
    %491 = arith.divf %489, %490 : vector<8x128xf32>
    %492 = vector.extract_strided_slice %485 {offsets = [0, 128], sizes = [8, 128], strides = [1, 1]} : vector<8x512xf32> to vector<8x128xf32>
    %493 = arith.negf %492 : vector<8x128xf32>
    %494 = math.exp %493 : vector<8x128xf32>
    %cst_142 = arith.constant 1.000000e+00 : f32
    %495 = vector.broadcast %cst_142 : f32 to vector<8x128xf32>
    %496 = arith.addf %495, %494 : vector<8x128xf32>
    %497 = arith.divf %495, %496 : vector<8x128xf32>
    %498 = vector.extract_strided_slice %485 {offsets = [0, 256], sizes = [8, 128], strides = [1, 1]} : vector<8x512xf32> to vector<8x128xf32>
    %499 = math.tanh %498 : vector<8x128xf32>
    %500 = vector.extract_strided_slice %485 {offsets = [0, 384], sizes = [8, 128], strides = [1, 1]} : vector<8x512xf32> to vector<8x128xf32>
    %501 = arith.negf %500 : vector<8x128xf32>
    %502 = math.exp %501 : vector<8x128xf32>
    %cst_143 = arith.constant 1.000000e+00 : f32
    %503 = vector.broadcast %cst_143 : f32 to vector<8x128xf32>
    %504 = arith.addf %503, %502 : vector<8x128xf32>
    %505 = arith.divf %503, %504 : vector<8x128xf32>
    %506 = arith.mulf %497, %478 : vector<8x128xf32>
    %507 = arith.mulf %491, %499 : vector<8x128xf32>
    %508 = arith.addf %506, %507 : vector<8x128xf32>
    %509 = math.tanh %508 : vector<8x128xf32>
    %510 = arith.mulf %505, %509 : vector<8x128xf32>
    %c1_144 = arith.constant 1 : index
    %c0_145 = arith.constant 0 : index
    %c0_146 = arith.constant 0 : index
    %511 = vector.load %arg11[%c1_144, %c0_145, %c0_146] : memref<5x8x128xf32, #tpu.memory_space<vmem>>, vector<1x8x128xf32>
    %512 = vector.shape_cast %511 : vector<1x8x128xf32> to vector<8x128xf32>
    %513 = vector.shape_cast %510 : vector<8x128xf32> to vector<1x8x128xf32>
    tpu.vector_store %arg11[%c1_144, %c0_145, %c0_146], %513 {strides = array<i32>} : memref<5x8x128xf32, #tpu.memory_space<vmem>>, vector<1x8x128xf32>,
    %c1_147 = arith.constant 1 : index
    %c0_148 = arith.constant 0 : index
    %c0_149 = arith.constant 0 : index
    %514 = vector.load %arg12[%c1_147, %c0_148, %c0_149] : memref<5x8x128xf32, #tpu.memory_space<vmem>>, vector<1x8x128xf32>
    %515 = vector.shape_cast %514 : vector<1x8x128xf32> to vector<8x128xf32>
    %516 = vector.shape_cast %508 : vector<8x128xf32> to vector<1x8x128xf32>
    tpu.vector_store %arg12[%c1_147, %c0_148, %c0_149], %516 {strides = array<i32>} : memref<5x8x128xf32, #tpu.memory_space<vmem>>, vector<1x8x128xf32>,
    %517 = tpu.concatenate %300, %330, %360, %390, %420, %450, %480, %510 in 0 : vector<8x128xf32>, vector<8x128xf32>, vector<8x128xf32>, vector<8x128xf32>, vector<8x128xf32>, vector<8x128xf32>, vector<8x128xf32>, vector<8x128xf32> -> vector<64x128xf32>
    %c2 = arith.constant 2 : index
    %c0_150 = arith.constant 0 : index
    %c0_151 = arith.constant 0 : index
    %518 = vector.load %arg1[%c2, %c0_150, %c0_151] : memref<5x128x512xf32, #tpu.memory_space<vmem>>, vector<1x128x512xf32>
    %519 = vector.shape_cast %518 : vector<1x128x512xf32> to vector<128x512xf32>
    %cst_152 = arith.constant dense<0.000000e+00> : vector<64x512xf32>
    %520 = tpu.matmul %517, %519, %cst_152 {dimension_numbers = #tpu.dot_dimension_numbers<[1], [0], [0], [1], [0, 0, 1, 1], [], []>} : vector<64x128xf32>, vector<128x512xf32>, vector<64x512xf32> -> vector<64x512xf32>
    %c2_153 = arith.constant 2 : index
    %c0_154 = arith.constant 0 : index
    %c0_155 = arith.constant 0 : index
    %521 = vector.load %arg3[%c2_153, %c0_154, %c0_155] : memref<5x1x512xf32, #tpu.memory_space<vmem>>, vector<1x1x512xf32>
    %522 = vector.shape_cast %521 : vector<1x1x512xf32> to vector<1x512xf32>
    %523 = vector.broadcast %522 : vector<1x512xf32> to vector<64x512xf32>
    %524 = arith.addf %520, %523 : vector<64x512xf32>
    %c2_156 = arith.constant 2 : index
    %c0_157 = arith.constant 0 : index
    %c0_158 = arith.constant 0 : index
    %525 = vector.load %arg4[%c2_156, %c0_157, %c0_158] : memref<5x8x128xf32, #tpu.memory_space<vmem>>, vector<1x8x128xf32>
    %526 = vector.shape_cast %525 : vector<1x8x128xf32> to vector<8x128xf32>
    %c2_159 = arith.constant 2 : index
    %c0_160 = arith.constant 0 : index
    %c0_161 = arith.constant 0 : index
    %527 = vector.load %arg5[%c2_159, %c0_160, %c0_161] : memref<5x8x128xf32, #tpu.memory_space<vmem>>, vector<1x8x128xf32>
    %528 = vector.shape_cast %527 : vector<1x8x128xf32> to vector<8x128xf32>
    %529 = vector.extract_strided_slice %524 {offsets = [0, 0], sizes = [8, 512], strides = [1, 1]} : vector<64x512xf32> to vector<8x512xf32>
    %c2_162 = arith.constant 2 : index
    %c0_163 = arith.constant 0 : index
    %c0_164 = arith.constant 0 : index
    %530 = vector.load %arg2[%c2_162, %c0_163, %c0_164] : memref<5x128x512xf32, #tpu.memory_space<vmem>>, vector<1x128x512xf32>
    %531 = vector.shape_cast %530 : vector<1x128x512xf32> to vector<128x512xf32>
    %cst_165 = arith.constant dense<0.000000e+00> : vector<8x512xf32>
    %532 = tpu.matmul %526, %531, %cst_165 {dimension_numbers = #tpu.dot_dimension_numbers<[1], [0], [0], [1], [0, 0, 1, 1], [], []>} : vector<8x128xf32>, vector<128x512xf32>, vector<8x512xf32> -> vector<8x512xf32>
    %533 = arith.addf %529, %532 : vector<8x512xf32>
    %534 = vector.extract_strided_slice %533 {offsets = [0, 0], sizes = [8, 128], strides = [1, 1]} : vector<8x512xf32> to vector<8x128xf32>
    %535 = arith.negf %534 : vector<8x128xf32>
    %536 = math.exp %535 : vector<8x128xf32>
    %cst_166 = arith.constant 1.000000e+00 : f32
    %537 = vector.broadcast %cst_166 : f32 to vector<8x128xf32>
    %538 = arith.addf %537, %536 : vector<8x128xf32>
    %539 = arith.divf %537, %538 : vector<8x128xf32>
    %540 = vector.extract_strided_slice %533 {offsets = [0, 128], sizes = [8, 128], strides = [1, 1]} : vector<8x512xf32> to vector<8x128xf32>
    %541 = arith.negf %540 : vector<8x128xf32>
    %542 = math.exp %541 : vector<8x128xf32>
    %cst_167 = arith.constant 1.000000e+00 : f32
    %543 = vector.broadcast %cst_167 : f32 to vector<8x128xf32>
    %544 = arith.addf %543, %542 : vector<8x128xf32>
    %545 = arith.divf %543, %544 : vector<8x128xf32>
    %546 = vector.extract_strided_slice %533 {offsets = [0, 256], sizes = [8, 128], strides = [1, 1]} : vector<8x512xf32> to vector<8x128xf32>
    %547 = math.tanh %546 : vector<8x128xf32>
    %548 = vector.extract_strided_slice %533 {offsets = [0, 384], sizes = [8, 128], strides = [1, 1]} : vector<8x512xf32> to vector<8x128xf32>
    %549 = arith.negf %548 : vector<8x128xf32>
    %550 = math.exp %549 : vector<8x128xf32>
    %cst_168 = arith.constant 1.000000e+00 : f32
    %551 = vector.broadcast %cst_168 : f32 to vector<8x128xf32>
    %552 = arith.addf %551, %550 : vector<8x128xf32>
    %553 = arith.divf %551, %552 : vector<8x128xf32>
    %554 = arith.mulf %545, %528 : vector<8x128xf32>
    %555 = arith.mulf %539, %547 : vector<8x128xf32>
    %556 = arith.addf %554, %555 : vector<8x128xf32>
    %557 = math.tanh %556 : vector<8x128xf32>
    %558 = arith.mulf %553, %557 : vector<8x128xf32>
    %559 = vector.extract_strided_slice %524 {offsets = [8, 0], sizes = [8, 512], strides = [1, 1]} : vector<64x512xf32> to vector<8x512xf32>
    %c2_169 = arith.constant 2 : index
    %c0_170 = arith.constant 0 : index
    %c0_171 = arith.constant 0 : index
    %560 = vector.load %arg2[%c2_169, %c0_170, %c0_171] : memref<5x128x512xf32, #tpu.memory_space<vmem>>, vector<1x128x512xf32>
    %561 = vector.shape_cast %560 : vector<1x128x512xf32> to vector<128x512xf32>
    %cst_172 = arith.constant dense<0.000000e+00> : vector<8x512xf32>
    %562 = tpu.matmul %558, %561, %cst_172 {dimension_numbers = #tpu.dot_dimension_numbers<[1], [0], [0], [1], [0, 0, 1, 1], [], []>} : vector<8x128xf32>, vector<128x512xf32>, vector<8x512xf32> -> vector<8x512xf32>
    %563 = arith.addf %559, %562 : vector<8x512xf32>
    %564 = vector.extract_strided_slice %563 {offsets = [0, 0], sizes = [8, 128], strides = [1, 1]} : vector<8x512xf32> to vector<8x128xf32>
    %565 = arith.negf %564 : vector<8x128xf32>
    %566 = math.exp %565 : vector<8x128xf32>
    %cst_173 = arith.constant 1.000000e+00 : f32
    %567 = vector.broadcast %cst_173 : f32 to vector<8x128xf32>
    %568 = arith.addf %567, %566 : vector<8x128xf32>
    %569 = arith.divf %567, %568 : vector<8x128xf32>
    %570 = vector.extract_strided_slice %563 {offsets = [0, 128], sizes = [8, 128], strides = [1, 1]} : vector<8x512xf32> to vector<8x128xf32>
    %571 = arith.negf %570 : vector<8x128xf32>
    %572 = math.exp %571 : vector<8x128xf32>
    %cst_174 = arith.constant 1.000000e+00 : f32
    %573 = vector.broadcast %cst_174 : f32 to vector<8x128xf32>
    %574 = arith.addf %573, %572 : vector<8x128xf32>
    %575 = arith.divf %573, %574 : vector<8x128xf32>
    %576 = vector.extract_strided_slice %563 {offsets = [0, 256], sizes = [8, 128], strides = [1, 1]} : vector<8x512xf32> to vector<8x128xf32>
    %577 = math.tanh %576 : vector<8x128xf32>
    %578 = vector.extract_strided_slice %563 {offsets = [0, 384], sizes = [8, 128], strides = [1, 1]} : vector<8x512xf32> to vector<8x128xf32>
    %579 = arith.negf %578 : vector<8x128xf32>
    %580 = math.exp %579 : vector<8x128xf32>
    %cst_175 = arith.constant 1.000000e+00 : f32
    %581 = vector.broadcast %cst_175 : f32 to vector<8x128xf32>
    %582 = arith.addf %581, %580 : vector<8x128xf32>
    %583 = arith.divf %581, %582 : vector<8x128xf32>
    %584 = arith.mulf %575, %556 : vector<8x128xf32>
    %585 = arith.mulf %569, %577 : vector<8x128xf32>
    %586 = arith.addf %584, %585 : vector<8x128xf32>
    %587 = math.tanh %586 : vector<8x128xf32>
    %588 = arith.mulf %583, %587 : vector<8x128xf32>
    %589 = vector.extract_strided_slice %524 {offsets = [16, 0], sizes = [8, 512], strides = [1, 1]} : vector<64x512xf32> to vector<8x512xf32>
    %c2_176 = arith.constant 2 : index
    %c0_177 = arith.constant 0 : index
    %c0_178 = arith.constant 0 : index
    %590 = vector.load %arg2[%c2_176, %c0_177, %c0_178] : memref<5x128x512xf32, #tpu.memory_space<vmem>>, vector<1x128x512xf32>
    %591 = vector.shape_cast %590 : vector<1x128x512xf32> to vector<128x512xf32>
    %cst_179 = arith.constant dense<0.000000e+00> : vector<8x512xf32>
    %592 = tpu.matmul %588, %591, %cst_179 {dimension_numbers = #tpu.dot_dimension_numbers<[1], [0], [0], [1], [0, 0, 1, 1], [], []>} : vector<8x128xf32>, vector<128x512xf32>, vector<8x512xf32> -> vector<8x512xf32>
    %593 = arith.addf %589, %592 : vector<8x512xf32>
    %594 = vector.extract_strided_slice %593 {offsets = [0, 0], sizes = [8, 128], strides = [1, 1]} : vector<8x512xf32> to vector<8x128xf32>
    %595 = arith.negf %594 : vector<8x128xf32>
    %596 = math.exp %595 : vector<8x128xf32>
    %cst_180 = arith.constant 1.000000e+00 : f32
    %597 = vector.broadcast %cst_180 : f32 to vector<8x128xf32>
    %598 = arith.addf %597, %596 : vector<8x128xf32>
    %599 = arith.divf %597, %598 : vector<8x128xf32>
    %600 = vector.extract_strided_slice %593 {offsets = [0, 128], sizes = [8, 128], strides = [1, 1]} : vector<8x512xf32> to vector<8x128xf32>
    %601 = arith.negf %600 : vector<8x128xf32>
    %602 = math.exp %601 : vector<8x128xf32>
    %cst_181 = arith.constant 1.000000e+00 : f32
    %603 = vector.broadcast %cst_181 : f32 to vector<8x128xf32>
    %604 = arith.addf %603, %602 : vector<8x128xf32>
    %605 = arith.divf %603, %604 : vector<8x128xf32>
    %606 = vector.extract_strided_slice %593 {offsets = [0, 256], sizes = [8, 128], strides = [1, 1]} : vector<8x512xf32> to vector<8x128xf32>
    %607 = math.tanh %606 : vector<8x128xf32>
    %608 = vector.extract_strided_slice %593 {offsets = [0, 384], sizes = [8, 128], strides = [1, 1]} : vector<8x512xf32> to vector<8x128xf32>
    %609 = arith.negf %608 : vector<8x128xf32>
    %610 = math.exp %609 : vector<8x128xf32>
    %cst_182 = arith.constant 1.000000e+00 : f32
    %611 = vector.broadcast %cst_182 : f32 to vector<8x128xf32>
    %612 = arith.addf %611, %610 : vector<8x128xf32>
    %613 = arith.divf %611, %612 : vector<8x128xf32>
    %614 = arith.mulf %605, %586 : vector<8x128xf32>
    %615 = arith.mulf %599, %607 : vector<8x128xf32>
    %616 = arith.addf %614, %615 : vector<8x128xf32>
    %617 = math.tanh %616 : vector<8x128xf32>
    %618 = arith.mulf %613, %617 : vector<8x128xf32>
    %619 = vector.extract_strided_slice %524 {offsets = [24, 0], sizes = [8, 512], strides = [1, 1]} : vector<64x512xf32> to vector<8x512xf32>
    %c2_183 = arith.constant 2 : index
    %c0_184 = arith.constant 0 : index
    %c0_185 = arith.constant 0 : index
    %620 = vector.load %arg2[%c2_183, %c0_184, %c0_185] : memref<5x128x512xf32, #tpu.memory_space<vmem>>, vector<1x128x512xf32>
    %621 = vector.shape_cast %620 : vector<1x128x512xf32> to vector<128x512xf32>
    %cst_186 = arith.constant dense<0.000000e+00> : vector<8x512xf32>
    %622 = tpu.matmul %618, %621, %cst_186 {dimension_numbers = #tpu.dot_dimension_numbers<[1], [0], [0], [1], [0, 0, 1, 1], [], []>} : vector<8x128xf32>, vector<128x512xf32>, vector<8x512xf32> -> vector<8x512xf32>
    %623 = arith.addf %619, %622 : vector<8x512xf32>
    %624 = vector.extract_strided_slice %623 {offsets = [0, 0], sizes = [8, 128], strides = [1, 1]} : vector<8x512xf32> to vector<8x128xf32>
    %625 = arith.negf %624 : vector<8x128xf32>
    %626 = math.exp %625 : vector<8x128xf32>
    %cst_187 = arith.constant 1.000000e+00 : f32
    %627 = vector.broadcast %cst_187 : f32 to vector<8x128xf32>
    %628 = arith.addf %627, %626 : vector<8x128xf32>
    %629 = arith.divf %627, %628 : vector<8x128xf32>
    %630 = vector.extract_strided_slice %623 {offsets = [0, 128], sizes = [8, 128], strides = [1, 1]} : vector<8x512xf32> to vector<8x128xf32>
    %631 = arith.negf %630 : vector<8x128xf32>
    %632 = math.exp %631 : vector<8x128xf32>
    %cst_188 = arith.constant 1.000000e+00 : f32
    %633 = vector.broadcast %cst_188 : f32 to vector<8x128xf32>
    %634 = arith.addf %633, %632 : vector<8x128xf32>
    %635 = arith.divf %633, %634 : vector<8x128xf32>
    %636 = vector.extract_strided_slice %623 {offsets = [0, 256], sizes = [8, 128], strides = [1, 1]} : vector<8x512xf32> to vector<8x128xf32>
    %637 = math.tanh %636 : vector<8x128xf32>
    %638 = vector.extract_strided_slice %623 {offsets = [0, 384], sizes = [8, 128], strides = [1, 1]} : vector<8x512xf32> to vector<8x128xf32>
    %639 = arith.negf %638 : vector<8x128xf32>
    %640 = math.exp %639 : vector<8x128xf32>
    %cst_189 = arith.constant 1.000000e+00 : f32
    %641 = vector.broadcast %cst_189 : f32 to vector<8x128xf32>
    %642 = arith.addf %641, %640 : vector<8x128xf32>
    %643 = arith.divf %641, %642 : vector<8x128xf32>
    %644 = arith.mulf %635, %616 : vector<8x128xf32>
    %645 = arith.mulf %629, %637 : vector<8x128xf32>
    %646 = arith.addf %644, %645 : vector<8x128xf32>
    %647 = math.tanh %646 : vector<8x128xf32>
    %648 = arith.mulf %643, %647 : vector<8x128xf32>
    %649 = vector.extract_strided_slice %524 {offsets = [32, 0], sizes = [8, 512], strides = [1, 1]} : vector<64x512xf32> to vector<8x512xf32>
    %c2_190 = arith.constant 2 : index
    %c0_191 = arith.constant 0 : index
    %c0_192 = arith.constant 0 : index
    %650 = vector.load %arg2[%c2_190, %c0_191, %c0_192] : memref<5x128x512xf32, #tpu.memory_space<vmem>>, vector<1x128x512xf32>
    %651 = vector.shape_cast %650 : vector<1x128x512xf32> to vector<128x512xf32>
    %cst_193 = arith.constant dense<0.000000e+00> : vector<8x512xf32>
    %652 = tpu.matmul %648, %651, %cst_193 {dimension_numbers = #tpu.dot_dimension_numbers<[1], [0], [0], [1], [0, 0, 1, 1], [], []>} : vector<8x128xf32>, vector<128x512xf32>, vector<8x512xf32> -> vector<8x512xf32>
    %653 = arith.addf %649, %652 : vector<8x512xf32>
    %654 = vector.extract_strided_slice %653 {offsets = [0, 0], sizes = [8, 128], strides = [1, 1]} : vector<8x512xf32> to vector<8x128xf32>
    %655 = arith.negf %654 : vector<8x128xf32>
    %656 = math.exp %655 : vector<8x128xf32>
    %cst_194 = arith.constant 1.000000e+00 : f32
    %657 = vector.broadcast %cst_194 : f32 to vector<8x128xf32>
    %658 = arith.addf %657, %656 : vector<8x128xf32>
    %659 = arith.divf %657, %658 : vector<8x128xf32>
    %660 = vector.extract_strided_slice %653 {offsets = [0, 128], sizes = [8, 128], strides = [1, 1]} : vector<8x512xf32> to vector<8x128xf32>
    %661 = arith.negf %660 : vector<8x128xf32>
    %662 = math.exp %661 : vector<8x128xf32>
    %cst_195 = arith.constant 1.000000e+00 : f32
    %663 = vector.broadcast %cst_195 : f32 to vector<8x128xf32>
    %664 = arith.addf %663, %662 : vector<8x128xf32>
    %665 = arith.divf %663, %664 : vector<8x128xf32>
    %666 = vector.extract_strided_slice %653 {offsets = [0, 256], sizes = [8, 128], strides = [1, 1]} : vector<8x512xf32> to vector<8x128xf32>
    %667 = math.tanh %666 : vector<8x128xf32>
    %668 = vector.extract_strided_slice %653 {offsets = [0, 384], sizes = [8, 128], strides = [1, 1]} : vector<8x512xf32> to vector<8x128xf32>
    %669 = arith.negf %668 : vector<8x128xf32>
    %670 = math.exp %669 : vector<8x128xf32>
    %cst_196 = arith.constant 1.000000e+00 : f32
    %671 = vector.broadcast %cst_196 : f32 to vector<8x128xf32>
    %672 = arith.addf %671, %670 : vector<8x128xf32>
    %673 = arith.divf %671, %672 : vector<8x128xf32>
    %674 = arith.mulf %665, %646 : vector<8x128xf32>
    %675 = arith.mulf %659, %667 : vector<8x128xf32>
    %676 = arith.addf %674, %675 : vector<8x128xf32>
    %677 = math.tanh %676 : vector<8x128xf32>
    %678 = arith.mulf %673, %677 : vector<8x128xf32>
    %679 = vector.extract_strided_slice %524 {offsets = [40, 0], sizes = [8, 512], strides = [1, 1]} : vector<64x512xf32> to vector<8x512xf32>
    %c2_197 = arith.constant 2 : index
    %c0_198 = arith.constant 0 : index
    %c0_199 = arith.constant 0 : index
    %680 = vector.load %arg2[%c2_197, %c0_198, %c0_199] : memref<5x128x512xf32, #tpu.memory_space<vmem>>, vector<1x128x512xf32>
    %681 = vector.shape_cast %680 : vector<1x128x512xf32> to vector<128x512xf32>
    %cst_200 = arith.constant dense<0.000000e+00> : vector<8x512xf32>
    %682 = tpu.matmul %678, %681, %cst_200 {dimension_numbers = #tpu.dot_dimension_numbers<[1], [0], [0], [1], [0, 0, 1, 1], [], []>} : vector<8x128xf32>, vector<128x512xf32>, vector<8x512xf32> -> vector<8x512xf32>
    %683 = arith.addf %679, %682 : vector<8x512xf32>
    %684 = vector.extract_strided_slice %683 {offsets = [0, 0], sizes = [8, 128], strides = [1, 1]} : vector<8x512xf32> to vector<8x128xf32>
    %685 = arith.negf %684 : vector<8x128xf32>
    %686 = math.exp %685 : vector<8x128xf32>
    %cst_201 = arith.constant 1.000000e+00 : f32
    %687 = vector.broadcast %cst_201 : f32 to vector<8x128xf32>
    %688 = arith.addf %687, %686 : vector<8x128xf32>
    %689 = arith.divf %687, %688 : vector<8x128xf32>
    %690 = vector.extract_strided_slice %683 {offsets = [0, 128], sizes = [8, 128], strides = [1, 1]} : vector<8x512xf32> to vector<8x128xf32>
    %691 = arith.negf %690 : vector<8x128xf32>
    %692 = math.exp %691 : vector<8x128xf32>
    %cst_202 = arith.constant 1.000000e+00 : f32
    %693 = vector.broadcast %cst_202 : f32 to vector<8x128xf32>
    %694 = arith.addf %693, %692 : vector<8x128xf32>
    %695 = arith.divf %693, %694 : vector<8x128xf32>
    %696 = vector.extract_strided_slice %683 {offsets = [0, 256], sizes = [8, 128], strides = [1, 1]} : vector<8x512xf32> to vector<8x128xf32>
    %697 = math.tanh %696 : vector<8x128xf32>
    %698 = vector.extract_strided_slice %683 {offsets = [0, 384], sizes = [8, 128], strides = [1, 1]} : vector<8x512xf32> to vector<8x128xf32>
    %699 = arith.negf %698 : vector<8x128xf32>
    %700 = math.exp %699 : vector<8x128xf32>
    %cst_203 = arith.constant 1.000000e+00 : f32
    %701 = vector.broadcast %cst_203 : f32 to vector<8x128xf32>
    %702 = arith.addf %701, %700 : vector<8x128xf32>
    %703 = arith.divf %701, %702 : vector<8x128xf32>
    %704 = arith.mulf %695, %676 : vector<8x128xf32>
    %705 = arith.mulf %689, %697 : vector<8x128xf32>
    %706 = arith.addf %704, %705 : vector<8x128xf32>
    %707 = math.tanh %706 : vector<8x128xf32>
    %708 = arith.mulf %703, %707 : vector<8x128xf32>
    %709 = vector.extract_strided_slice %524 {offsets = [48, 0], sizes = [8, 512], strides = [1, 1]} : vector<64x512xf32> to vector<8x512xf32>
    %c2_204 = arith.constant 2 : index
    %c0_205 = arith.constant 0 : index
    %c0_206 = arith.constant 0 : index
    %710 = vector.load %arg2[%c2_204, %c0_205, %c0_206] : memref<5x128x512xf32, #tpu.memory_space<vmem>>, vector<1x128x512xf32>
    %711 = vector.shape_cast %710 : vector<1x128x512xf32> to vector<128x512xf32>
    %cst_207 = arith.constant dense<0.000000e+00> : vector<8x512xf32>
    %712 = tpu.matmul %708, %711, %cst_207 {dimension_numbers = #tpu.dot_dimension_numbers<[1], [0], [0], [1], [0, 0, 1, 1], [], []>} : vector<8x128xf32>, vector<128x512xf32>, vector<8x512xf32> -> vector<8x512xf32>
    %713 = arith.addf %709, %712 : vector<8x512xf32>
    %714 = vector.extract_strided_slice %713 {offsets = [0, 0], sizes = [8, 128], strides = [1, 1]} : vector<8x512xf32> to vector<8x128xf32>
    %715 = arith.negf %714 : vector<8x128xf32>
    %716 = math.exp %715 : vector<8x128xf32>
    %cst_208 = arith.constant 1.000000e+00 : f32
    %717 = vector.broadcast %cst_208 : f32 to vector<8x128xf32>
    %718 = arith.addf %717, %716 : vector<8x128xf32>
    %719 = arith.divf %717, %718 : vector<8x128xf32>
    %720 = vector.extract_strided_slice %713 {offsets = [0, 128], sizes = [8, 128], strides = [1, 1]} : vector<8x512xf32> to vector<8x128xf32>
    %721 = arith.negf %720 : vector<8x128xf32>
    %722 = math.exp %721 : vector<8x128xf32>
    %cst_209 = arith.constant 1.000000e+00 : f32
    %723 = vector.broadcast %cst_209 : f32 to vector<8x128xf32>
    %724 = arith.addf %723, %722 : vector<8x128xf32>
    %725 = arith.divf %723, %724 : vector<8x128xf32>
    %726 = vector.extract_strided_slice %713 {offsets = [0, 256], sizes = [8, 128], strides = [1, 1]} : vector<8x512xf32> to vector<8x128xf32>
    %727 = math.tanh %726 : vector<8x128xf32>
    %728 = vector.extract_strided_slice %713 {offsets = [0, 384], sizes = [8, 128], strides = [1, 1]} : vector<8x512xf32> to vector<8x128xf32>
    %729 = arith.negf %728 : vector<8x128xf32>
    %730 = math.exp %729 : vector<8x128xf32>
    %cst_210 = arith.constant 1.000000e+00 : f32
    %731 = vector.broadcast %cst_210 : f32 to vector<8x128xf32>
    %732 = arith.addf %731, %730 : vector<8x128xf32>
    %733 = arith.divf %731, %732 : vector<8x128xf32>
    %734 = arith.mulf %725, %706 : vector<8x128xf32>
    %735 = arith.mulf %719, %727 : vector<8x128xf32>
    %736 = arith.addf %734, %735 : vector<8x128xf32>
    %737 = math.tanh %736 : vector<8x128xf32>
    %738 = arith.mulf %733, %737 : vector<8x128xf32>
    %739 = vector.extract_strided_slice %524 {offsets = [56, 0], sizes = [8, 512], strides = [1, 1]} : vector<64x512xf32> to vector<8x512xf32>
    %c2_211 = arith.constant 2 : index
    %c0_212 = arith.constant 0 : index
    %c0_213 = arith.constant 0 : index
    %740 = vector.load %arg2[%c2_211, %c0_212, %c0_213] : memref<5x128x512xf32, #tpu.memory_space<vmem>>, vector<1x128x512xf32>
    %741 = vector.shape_cast %740 : vector<1x128x512xf32> to vector<128x512xf32>
    %cst_214 = arith.constant dense<0.000000e+00> : vector<8x512xf32>
    %742 = tpu.matmul %738, %741, %cst_214 {dimension_numbers = #tpu.dot_dimension_numbers<[1], [0], [0], [1], [0, 0, 1, 1], [], []>} : vector<8x128xf32>, vector<128x512xf32>, vector<8x512xf32> -> vector<8x512xf32>
    %743 = arith.addf %739, %742 : vector<8x512xf32>
    %744 = vector.extract_strided_slice %743 {offsets = [0, 0], sizes = [8, 128], strides = [1, 1]} : vector<8x512xf32> to vector<8x128xf32>
    %745 = arith.negf %744 : vector<8x128xf32>
    %746 = math.exp %745 : vector<8x128xf32>
    %cst_215 = arith.constant 1.000000e+00 : f32
    %747 = vector.broadcast %cst_215 : f32 to vector<8x128xf32>
    %748 = arith.addf %747, %746 : vector<8x128xf32>
    %749 = arith.divf %747, %748 : vector<8x128xf32>
    %750 = vector.extract_strided_slice %743 {offsets = [0, 128], sizes = [8, 128], strides = [1, 1]} : vector<8x512xf32> to vector<8x128xf32>
    %751 = arith.negf %750 : vector<8x128xf32>
    %752 = math.exp %751 : vector<8x128xf32>
    %cst_216 = arith.constant 1.000000e+00 : f32
    %753 = vector.broadcast %cst_216 : f32 to vector<8x128xf32>
    %754 = arith.addf %753, %752 : vector<8x128xf32>
    %755 = arith.divf %753, %754 : vector<8x128xf32>
    %756 = vector.extract_strided_slice %743 {offsets = [0, 256], sizes = [8, 128], strides = [1, 1]} : vector<8x512xf32> to vector<8x128xf32>
    %757 = math.tanh %756 : vector<8x128xf32>
    %758 = vector.extract_strided_slice %743 {offsets = [0, 384], sizes = [8, 128], strides = [1, 1]} : vector<8x512xf32> to vector<8x128xf32>
    %759 = arith.negf %758 : vector<8x128xf32>
    %760 = math.exp %759 : vector<8x128xf32>
    %cst_217 = arith.constant 1.000000e+00 : f32
    %761 = vector.broadcast %cst_217 : f32 to vector<8x128xf32>
    %762 = arith.addf %761, %760 : vector<8x128xf32>
    %763 = arith.divf %761, %762 : vector<8x128xf32>
    %764 = arith.mulf %755, %736 : vector<8x128xf32>
    %765 = arith.mulf %749, %757 : vector<8x128xf32>
    %766 = arith.addf %764, %765 : vector<8x128xf32>
    %767 = math.tanh %766 : vector<8x128xf32>
    %768 = arith.mulf %763, %767 : vector<8x128xf32>
    %c2_218 = arith.constant 2 : index
    %c0_219 = arith.constant 0 : index
    %c0_220 = arith.constant 0 : index
    %769 = vector.load %arg11[%c2_218, %c0_219, %c0_220] : memref<5x8x128xf32, #tpu.memory_space<vmem>>, vector<1x8x128xf32>
    %770 = vector.shape_cast %769 : vector<1x8x128xf32> to vector<8x128xf32>
    %771 = vector.shape_cast %768 : vector<8x128xf32> to vector<1x8x128xf32>
    tpu.vector_store %arg11[%c2_218, %c0_219, %c0_220], %771 {strides = array<i32>} : memref<5x8x128xf32, #tpu.memory_space<vmem>>, vector<1x8x128xf32>,
    %c2_221 = arith.constant 2 : index
    %c0_222 = arith.constant 0 : index
    %c0_223 = arith.constant 0 : index
    %772 = vector.load %arg12[%c2_221, %c0_222, %c0_223] : memref<5x8x128xf32, #tpu.memory_space<vmem>>, vector<1x8x128xf32>
    %773 = vector.shape_cast %772 : vector<1x8x128xf32> to vector<8x128xf32>
    %774 = vector.shape_cast %766 : vector<8x128xf32> to vector<1x8x128xf32>
    tpu.vector_store %arg12[%c2_221, %c0_222, %c0_223], %774 {strides = array<i32>} : memref<5x8x128xf32, #tpu.memory_space<vmem>>, vector<1x8x128xf32>,
    %775 = tpu.concatenate %558, %588, %618, %648, %678, %708, %738, %768 in 0 : vector<8x128xf32>, vector<8x128xf32>, vector<8x128xf32>, vector<8x128xf32>, vector<8x128xf32>, vector<8x128xf32>, vector<8x128xf32>, vector<8x128xf32> -> vector<64x128xf32>
    %c3 = arith.constant 3 : index
    %c0_224 = arith.constant 0 : index
    %c0_225 = arith.constant 0 : index
    %776 = vector.load %arg1[%c3, %c0_224, %c0_225] : memref<5x128x512xf32, #tpu.memory_space<vmem>>, vector<1x128x512xf32>
    %777 = vector.shape_cast %776 : vector<1x128x512xf32> to vector<128x512xf32>
    %cst_226 = arith.constant dense<0.000000e+00> : vector<64x512xf32>
    %778 = tpu.matmul %775, %777, %cst_226 {dimension_numbers = #tpu.dot_dimension_numbers<[1], [0], [0], [1], [0, 0, 1, 1], [], []>} : vector<64x128xf32>, vector<128x512xf32>, vector<64x512xf32> -> vector<64x512xf32>
    %c3_227 = arith.constant 3 : index
    %c0_228 = arith.constant 0 : index
    %c0_229 = arith.constant 0 : index
    %779 = vector.load %arg3[%c3_227, %c0_228, %c0_229] : memref<5x1x512xf32, #tpu.memory_space<vmem>>, vector<1x1x512xf32>
    %780 = vector.shape_cast %779 : vector<1x1x512xf32> to vector<1x512xf32>
    %781 = vector.broadcast %780 : vector<1x512xf32> to vector<64x512xf32>
    %782 = arith.addf %778, %781 : vector<64x512xf32>
    %c3_230 = arith.constant 3 : index
    %c0_231 = arith.constant 0 : index
    %c0_232 = arith.constant 0 : index
    %783 = vector.load %arg4[%c3_230, %c0_231, %c0_232] : memref<5x8x128xf32, #tpu.memory_space<vmem>>, vector<1x8x128xf32>
    %784 = vector.shape_cast %783 : vector<1x8x128xf32> to vector<8x128xf32>
    %c3_233 = arith.constant 3 : index
    %c0_234 = arith.constant 0 : index
    %c0_235 = arith.constant 0 : index
    %785 = vector.load %arg5[%c3_233, %c0_234, %c0_235] : memref<5x8x128xf32, #tpu.memory_space<vmem>>, vector<1x8x128xf32>
    %786 = vector.shape_cast %785 : vector<1x8x128xf32> to vector<8x128xf32>
    %787 = vector.extract_strided_slice %782 {offsets = [0, 0], sizes = [8, 512], strides = [1, 1]} : vector<64x512xf32> to vector<8x512xf32>
    %c3_236 = arith.constant 3 : index
    %c0_237 = arith.constant 0 : index
    %c0_238 = arith.constant 0 : index
    %788 = vector.load %arg2[%c3_236, %c0_237, %c0_238] : memref<5x128x512xf32, #tpu.memory_space<vmem>>, vector<1x128x512xf32>
    %789 = vector.shape_cast %788 : vector<1x128x512xf32> to vector<128x512xf32>
    %cst_239 = arith.constant dense<0.000000e+00> : vector<8x512xf32>
    %790 = tpu.matmul %784, %789, %cst_239 {dimension_numbers = #tpu.dot_dimension_numbers<[1], [0], [0], [1], [0, 0, 1, 1], [], []>} : vector<8x128xf32>, vector<128x512xf32>, vector<8x512xf32> -> vector<8x512xf32>
    %791 = arith.addf %787, %790 : vector<8x512xf32>
    %792 = vector.extract_strided_slice %791 {offsets = [0, 0], sizes = [8, 128], strides = [1, 1]} : vector<8x512xf32> to vector<8x128xf32>
    %793 = arith.negf %792 : vector<8x128xf32>
    %794 = math.exp %793 : vector<8x128xf32>
    %cst_240 = arith.constant 1.000000e+00 : f32
    %795 = vector.broadcast %cst_240 : f32 to vector<8x128xf32>
    %796 = arith.addf %795, %794 : vector<8x128xf32>
    %797 = arith.divf %795, %796 : vector<8x128xf32>
    %798 = vector.extract_strided_slice %791 {offsets = [0, 128], sizes = [8, 128], strides = [1, 1]} : vector<8x512xf32> to vector<8x128xf32>
    %799 = arith.negf %798 : vector<8x128xf32>
    %800 = math.exp %799 : vector<8x128xf32>
    %cst_241 = arith.constant 1.000000e+00 : f32
    %801 = vector.broadcast %cst_241 : f32 to vector<8x128xf32>
    %802 = arith.addf %801, %800 : vector<8x128xf32>
    %803 = arith.divf %801, %802 : vector<8x128xf32>
    %804 = vector.extract_strided_slice %791 {offsets = [0, 256], sizes = [8, 128], strides = [1, 1]} : vector<8x512xf32> to vector<8x128xf32>
    %805 = math.tanh %804 : vector<8x128xf32>
    %806 = vector.extract_strided_slice %791 {offsets = [0, 384], sizes = [8, 128], strides = [1, 1]} : vector<8x512xf32> to vector<8x128xf32>
    %807 = arith.negf %806 : vector<8x128xf32>
    %808 = math.exp %807 : vector<8x128xf32>
    %cst_242 = arith.constant 1.000000e+00 : f32
    %809 = vector.broadcast %cst_242 : f32 to vector<8x128xf32>
    %810 = arith.addf %809, %808 : vector<8x128xf32>
    %811 = arith.divf %809, %810 : vector<8x128xf32>
    %812 = arith.mulf %803, %786 : vector<8x128xf32>
    %813 = arith.mulf %797, %805 : vector<8x128xf32>
    %814 = arith.addf %812, %813 : vector<8x128xf32>
    %815 = math.tanh %814 : vector<8x128xf32>
    %816 = arith.mulf %811, %815 : vector<8x128xf32>
    %817 = vector.extract_strided_slice %782 {offsets = [8, 0], sizes = [8, 512], strides = [1, 1]} : vector<64x512xf32> to vector<8x512xf32>
    %c3_243 = arith.constant 3 : index
    %c0_244 = arith.constant 0 : index
    %c0_245 = arith.constant 0 : index
    %818 = vector.load %arg2[%c3_243, %c0_244, %c0_245] : memref<5x128x512xf32, #tpu.memory_space<vmem>>, vector<1x128x512xf32>
    %819 = vector.shape_cast %818 : vector<1x128x512xf32> to vector<128x512xf32>
    %cst_246 = arith.constant dense<0.000000e+00> : vector<8x512xf32>
    %820 = tpu.matmul %816, %819, %cst_246 {dimension_numbers = #tpu.dot_dimension_numbers<[1], [0], [0], [1], [0, 0, 1, 1], [], []>} : vector<8x128xf32>, vector<128x512xf32>, vector<8x512xf32> -> vector<8x512xf32>
    %821 = arith.addf %817, %820 : vector<8x512xf32>
    %822 = vector.extract_strided_slice %821 {offsets = [0, 0], sizes = [8, 128], strides = [1, 1]} : vector<8x512xf32> to vector<8x128xf32>
    %823 = arith.negf %822 : vector<8x128xf32>
    %824 = math.exp %823 : vector<8x128xf32>
    %cst_247 = arith.constant 1.000000e+00 : f32
    %825 = vector.broadcast %cst_247 : f32 to vector<8x128xf32>
    %826 = arith.addf %825, %824 : vector<8x128xf32>
    %827 = arith.divf %825, %826 : vector<8x128xf32>
    %828 = vector.extract_strided_slice %821 {offsets = [0, 128], sizes = [8, 128], strides = [1, 1]} : vector<8x512xf32> to vector<8x128xf32>
    %829 = arith.negf %828 : vector<8x128xf32>
    %830 = math.exp %829 : vector<8x128xf32>
    %cst_248 = arith.constant 1.000000e+00 : f32
    %831 = vector.broadcast %cst_248 : f32 to vector<8x128xf32>
    %832 = arith.addf %831, %830 : vector<8x128xf32>
    %833 = arith.divf %831, %832 : vector<8x128xf32>
    %834 = vector.extract_strided_slice %821 {offsets = [0, 256], sizes = [8, 128], strides = [1, 1]} : vector<8x512xf32> to vector<8x128xf32>
    %835 = math.tanh %834 : vector<8x128xf32>
    %836 = vector.extract_strided_slice %821 {offsets = [0, 384], sizes = [8, 128], strides = [1, 1]} : vector<8x512xf32> to vector<8x128xf32>
    %837 = arith.negf %836 : vector<8x128xf32>
    %838 = math.exp %837 : vector<8x128xf32>
    %cst_249 = arith.constant 1.000000e+00 : f32
    %839 = vector.broadcast %cst_249 : f32 to vector<8x128xf32>
    %840 = arith.addf %839, %838 : vector<8x128xf32>
    %841 = arith.divf %839, %840 : vector<8x128xf32>
    %842 = arith.mulf %833, %814 : vector<8x128xf32>
    %843 = arith.mulf %827, %835 : vector<8x128xf32>
    %844 = arith.addf %842, %843 : vector<8x128xf32>
    %845 = math.tanh %844 : vector<8x128xf32>
    %846 = arith.mulf %841, %845 : vector<8x128xf32>
    %847 = vector.extract_strided_slice %782 {offsets = [16, 0], sizes = [8, 512], strides = [1, 1]} : vector<64x512xf32> to vector<8x512xf32>
    %c3_250 = arith.constant 3 : index
    %c0_251 = arith.constant 0 : index
    %c0_252 = arith.constant 0 : index
    %848 = vector.load %arg2[%c3_250, %c0_251, %c0_252] : memref<5x128x512xf32, #tpu.memory_space<vmem>>, vector<1x128x512xf32>
    %849 = vector.shape_cast %848 : vector<1x128x512xf32> to vector<128x512xf32>
    %cst_253 = arith.constant dense<0.000000e+00> : vector<8x512xf32>
    %850 = tpu.matmul %846, %849, %cst_253 {dimension_numbers = #tpu.dot_dimension_numbers<[1], [0], [0], [1], [0, 0, 1, 1], [], []>} : vector<8x128xf32>, vector<128x512xf32>, vector<8x512xf32> -> vector<8x512xf32>
    %851 = arith.addf %847, %850 : vector<8x512xf32>
    %852 = vector.extract_strided_slice %851 {offsets = [0, 0], sizes = [8, 128], strides = [1, 1]} : vector<8x512xf32> to vector<8x128xf32>
    %853 = arith.negf %852 : vector<8x128xf32>
    %854 = math.exp %853 : vector<8x128xf32>
    %cst_254 = arith.constant 1.000000e+00 : f32
    %855 = vector.broadcast %cst_254 : f32 to vector<8x128xf32>
    %856 = arith.addf %855, %854 : vector<8x128xf32>
    %857 = arith.divf %855, %856 : vector<8x128xf32>
    %858 = vector.extract_strided_slice %851 {offsets = [0, 128], sizes = [8, 128], strides = [1, 1]} : vector<8x512xf32> to vector<8x128xf32>
    %859 = arith.negf %858 : vector<8x128xf32>
    %860 = math.exp %859 : vector<8x128xf32>
    %cst_255 = arith.constant 1.000000e+00 : f32
    %861 = vector.broadcast %cst_255 : f32 to vector<8x128xf32>
    %862 = arith.addf %861, %860 : vector<8x128xf32>
    %863 = arith.divf %861, %862 : vector<8x128xf32>
    %864 = vector.extract_strided_slice %851 {offsets = [0, 256], sizes = [8, 128], strides = [1, 1]} : vector<8x512xf32> to vector<8x128xf32>
    %865 = math.tanh %864 : vector<8x128xf32>
    %866 = vector.extract_strided_slice %851 {offsets = [0, 384], sizes = [8, 128], strides = [1, 1]} : vector<8x512xf32> to vector<8x128xf32>
    %867 = arith.negf %866 : vector<8x128xf32>
    %868 = math.exp %867 : vector<8x128xf32>
    %cst_256 = arith.constant 1.000000e+00 : f32
    %869 = vector.broadcast %cst_256 : f32 to vector<8x128xf32>
    %870 = arith.addf %869, %868 : vector<8x128xf32>
    %871 = arith.divf %869, %870 : vector<8x128xf32>
    %872 = arith.mulf %863, %844 : vector<8x128xf32>
    %873 = arith.mulf %857, %865 : vector<8x128xf32>
    %874 = arith.addf %872, %873 : vector<8x128xf32>
    %875 = math.tanh %874 : vector<8x128xf32>
    %876 = arith.mulf %871, %875 : vector<8x128xf32>
    %877 = vector.extract_strided_slice %782 {offsets = [24, 0], sizes = [8, 512], strides = [1, 1]} : vector<64x512xf32> to vector<8x512xf32>
    %c3_257 = arith.constant 3 : index
    %c0_258 = arith.constant 0 : index
    %c0_259 = arith.constant 0 : index
    %878 = vector.load %arg2[%c3_257, %c0_258, %c0_259] : memref<5x128x512xf32, #tpu.memory_space<vmem>>, vector<1x128x512xf32>
    %879 = vector.shape_cast %878 : vector<1x128x512xf32> to vector<128x512xf32>
    %cst_260 = arith.constant dense<0.000000e+00> : vector<8x512xf32>
    %880 = tpu.matmul %876, %879, %cst_260 {dimension_numbers = #tpu.dot_dimension_numbers<[1], [0], [0], [1], [0, 0, 1, 1], [], []>} : vector<8x128xf32>, vector<128x512xf32>, vector<8x512xf32> -> vector<8x512xf32>
    %881 = arith.addf %877, %880 : vector<8x512xf32>
    %882 = vector.extract_strided_slice %881 {offsets = [0, 0], sizes = [8, 128], strides = [1, 1]} : vector<8x512xf32> to vector<8x128xf32>
    %883 = arith.negf %882 : vector<8x128xf32>
    %884 = math.exp %883 : vector<8x128xf32>
    %cst_261 = arith.constant 1.000000e+00 : f32
    %885 = vector.broadcast %cst_261 : f32 to vector<8x128xf32>
    %886 = arith.addf %885, %884 : vector<8x128xf32>
    %887 = arith.divf %885, %886 : vector<8x128xf32>
    %888 = vector.extract_strided_slice %881 {offsets = [0, 128], sizes = [8, 128], strides = [1, 1]} : vector<8x512xf32> to vector<8x128xf32>
    %889 = arith.negf %888 : vector<8x128xf32>
    %890 = math.exp %889 : vector<8x128xf32>
    %cst_262 = arith.constant 1.000000e+00 : f32
    %891 = vector.broadcast %cst_262 : f32 to vector<8x128xf32>
    %892 = arith.addf %891, %890 : vector<8x128xf32>
    %893 = arith.divf %891, %892 : vector<8x128xf32>
    %894 = vector.extract_strided_slice %881 {offsets = [0, 256], sizes = [8, 128], strides = [1, 1]} : vector<8x512xf32> to vector<8x128xf32>
    %895 = math.tanh %894 : vector<8x128xf32>
    %896 = vector.extract_strided_slice %881 {offsets = [0, 384], sizes = [8, 128], strides = [1, 1]} : vector<8x512xf32> to vector<8x128xf32>
    %897 = arith.negf %896 : vector<8x128xf32>
    %898 = math.exp %897 : vector<8x128xf32>
    %cst_263 = arith.constant 1.000000e+00 : f32
    %899 = vector.broadcast %cst_263 : f32 to vector<8x128xf32>
    %900 = arith.addf %899, %898 : vector<8x128xf32>
    %901 = arith.divf %899, %900 : vector<8x128xf32>
    %902 = arith.mulf %893, %874 : vector<8x128xf32>
    %903 = arith.mulf %887, %895 : vector<8x128xf32>
    %904 = arith.addf %902, %903 : vector<8x128xf32>
    %905 = math.tanh %904 : vector<8x128xf32>
    %906 = arith.mulf %901, %905 : vector<8x128xf32>
    %907 = vector.extract_strided_slice %782 {offsets = [32, 0], sizes = [8, 512], strides = [1, 1]} : vector<64x512xf32> to vector<8x512xf32>
    %c3_264 = arith.constant 3 : index
    %c0_265 = arith.constant 0 : index
    %c0_266 = arith.constant 0 : index
    %908 = vector.load %arg2[%c3_264, %c0_265, %c0_266] : memref<5x128x512xf32, #tpu.memory_space<vmem>>, vector<1x128x512xf32>
    %909 = vector.shape_cast %908 : vector<1x128x512xf32> to vector<128x512xf32>
    %cst_267 = arith.constant dense<0.000000e+00> : vector<8x512xf32>
    %910 = tpu.matmul %906, %909, %cst_267 {dimension_numbers = #tpu.dot_dimension_numbers<[1], [0], [0], [1], [0, 0, 1, 1], [], []>} : vector<8x128xf32>, vector<128x512xf32>, vector<8x512xf32> -> vector<8x512xf32>
    %911 = arith.addf %907, %910 : vector<8x512xf32>
    %912 = vector.extract_strided_slice %911 {offsets = [0, 0], sizes = [8, 128], strides = [1, 1]} : vector<8x512xf32> to vector<8x128xf32>
    %913 = arith.negf %912 : vector<8x128xf32>
    %914 = math.exp %913 : vector<8x128xf32>
    %cst_268 = arith.constant 1.000000e+00 : f32
    %915 = vector.broadcast %cst_268 : f32 to vector<8x128xf32>
    %916 = arith.addf %915, %914 : vector<8x128xf32>
    %917 = arith.divf %915, %916 : vector<8x128xf32>
    %918 = vector.extract_strided_slice %911 {offsets = [0, 128], sizes = [8, 128], strides = [1, 1]} : vector<8x512xf32> to vector<8x128xf32>
    %919 = arith.negf %918 : vector<8x128xf32>
    %920 = math.exp %919 : vector<8x128xf32>
    %cst_269 = arith.constant 1.000000e+00 : f32
    %921 = vector.broadcast %cst_269 : f32 to vector<8x128xf32>
    %922 = arith.addf %921, %920 : vector<8x128xf32>
    %923 = arith.divf %921, %922 : vector<8x128xf32>
    %924 = vector.extract_strided_slice %911 {offsets = [0, 256], sizes = [8, 128], strides = [1, 1]} : vector<8x512xf32> to vector<8x128xf32>
    %925 = math.tanh %924 : vector<8x128xf32>
    %926 = vector.extract_strided_slice %911 {offsets = [0, 384], sizes = [8, 128], strides = [1, 1]} : vector<8x512xf32> to vector<8x128xf32>
    %927 = arith.negf %926 : vector<8x128xf32>
    %928 = math.exp %927 : vector<8x128xf32>
    %cst_270 = arith.constant 1.000000e+00 : f32
    %929 = vector.broadcast %cst_270 : f32 to vector<8x128xf32>
    %930 = arith.addf %929, %928 : vector<8x128xf32>
    %931 = arith.divf %929, %930 : vector<8x128xf32>
    %932 = arith.mulf %923, %904 : vector<8x128xf32>
    %933 = arith.mulf %917, %925 : vector<8x128xf32>
    %934 = arith.addf %932, %933 : vector<8x128xf32>
    %935 = math.tanh %934 : vector<8x128xf32>
    %936 = arith.mulf %931, %935 : vector<8x128xf32>
    %937 = vector.extract_strided_slice %782 {offsets = [40, 0], sizes = [8, 512], strides = [1, 1]} : vector<64x512xf32> to vector<8x512xf32>
    %c3_271 = arith.constant 3 : index
    %c0_272 = arith.constant 0 : index
    %c0_273 = arith.constant 0 : index
    %938 = vector.load %arg2[%c3_271, %c0_272, %c0_273] : memref<5x128x512xf32, #tpu.memory_space<vmem>>, vector<1x128x512xf32>
    %939 = vector.shape_cast %938 : vector<1x128x512xf32> to vector<128x512xf32>
    %cst_274 = arith.constant dense<0.000000e+00> : vector<8x512xf32>
    %940 = tpu.matmul %936, %939, %cst_274 {dimension_numbers = #tpu.dot_dimension_numbers<[1], [0], [0], [1], [0, 0, 1, 1], [], []>} : vector<8x128xf32>, vector<128x512xf32>, vector<8x512xf32> -> vector<8x512xf32>
    %941 = arith.addf %937, %940 : vector<8x512xf32>
    %942 = vector.extract_strided_slice %941 {offsets = [0, 0], sizes = [8, 128], strides = [1, 1]} : vector<8x512xf32> to vector<8x128xf32>
    %943 = arith.negf %942 : vector<8x128xf32>
    %944 = math.exp %943 : vector<8x128xf32>
    %cst_275 = arith.constant 1.000000e+00 : f32
    %945 = vector.broadcast %cst_275 : f32 to vector<8x128xf32>
    %946 = arith.addf %945, %944 : vector<8x128xf32>
    %947 = arith.divf %945, %946 : vector<8x128xf32>
    %948 = vector.extract_strided_slice %941 {offsets = [0, 128], sizes = [8, 128], strides = [1, 1]} : vector<8x512xf32> to vector<8x128xf32>
    %949 = arith.negf %948 : vector<8x128xf32>
    %950 = math.exp %949 : vector<8x128xf32>
    %cst_276 = arith.constant 1.000000e+00 : f32
    %951 = vector.broadcast %cst_276 : f32 to vector<8x128xf32>
    %952 = arith.addf %951, %950 : vector<8x128xf32>
    %953 = arith.divf %951, %952 : vector<8x128xf32>
    %954 = vector.extract_strided_slice %941 {offsets = [0, 256], sizes = [8, 128], strides = [1, 1]} : vector<8x512xf32> to vector<8x128xf32>
    %955 = math.tanh %954 : vector<8x128xf32>
    %956 = vector.extract_strided_slice %941 {offsets = [0, 384], sizes = [8, 128], strides = [1, 1]} : vector<8x512xf32> to vector<8x128xf32>
    %957 = arith.negf %956 : vector<8x128xf32>
    %958 = math.exp %957 : vector<8x128xf32>
    %cst_277 = arith.constant 1.000000e+00 : f32
    %959 = vector.broadcast %cst_277 : f32 to vector<8x128xf32>
    %960 = arith.addf %959, %958 : vector<8x128xf32>
    %961 = arith.divf %959, %960 : vector<8x128xf32>
    %962 = arith.mulf %953, %934 : vector<8x128xf32>
    %963 = arith.mulf %947, %955 : vector<8x128xf32>
    %964 = arith.addf %962, %963 : vector<8x128xf32>
    %965 = math.tanh %964 : vector<8x128xf32>
    %966 = arith.mulf %961, %965 : vector<8x128xf32>
    %967 = vector.extract_strided_slice %782 {offsets = [48, 0], sizes = [8, 512], strides = [1, 1]} : vector<64x512xf32> to vector<8x512xf32>
    %c3_278 = arith.constant 3 : index
    %c0_279 = arith.constant 0 : index
    %c0_280 = arith.constant 0 : index
    %968 = vector.load %arg2[%c3_278, %c0_279, %c0_280] : memref<5x128x512xf32, #tpu.memory_space<vmem>>, vector<1x128x512xf32>
    %969 = vector.shape_cast %968 : vector<1x128x512xf32> to vector<128x512xf32>
    %cst_281 = arith.constant dense<0.000000e+00> : vector<8x512xf32>
    %970 = tpu.matmul %966, %969, %cst_281 {dimension_numbers = #tpu.dot_dimension_numbers<[1], [0], [0], [1], [0, 0, 1, 1], [], []>} : vector<8x128xf32>, vector<128x512xf32>, vector<8x512xf32> -> vector<8x512xf32>
    %971 = arith.addf %967, %970 : vector<8x512xf32>
    %972 = vector.extract_strided_slice %971 {offsets = [0, 0], sizes = [8, 128], strides = [1, 1]} : vector<8x512xf32> to vector<8x128xf32>
    %973 = arith.negf %972 : vector<8x128xf32>
    %974 = math.exp %973 : vector<8x128xf32>
    %cst_282 = arith.constant 1.000000e+00 : f32
    %975 = vector.broadcast %cst_282 : f32 to vector<8x128xf32>
    %976 = arith.addf %975, %974 : vector<8x128xf32>
    %977 = arith.divf %975, %976 : vector<8x128xf32>
    %978 = vector.extract_strided_slice %971 {offsets = [0, 128], sizes = [8, 128], strides = [1, 1]} : vector<8x512xf32> to vector<8x128xf32>
    %979 = arith.negf %978 : vector<8x128xf32>
    %980 = math.exp %979 : vector<8x128xf32>
    %cst_283 = arith.constant 1.000000e+00 : f32
    %981 = vector.broadcast %cst_283 : f32 to vector<8x128xf32>
    %982 = arith.addf %981, %980 : vector<8x128xf32>
    %983 = arith.divf %981, %982 : vector<8x128xf32>
    %984 = vector.extract_strided_slice %971 {offsets = [0, 256], sizes = [8, 128], strides = [1, 1]} : vector<8x512xf32> to vector<8x128xf32>
    %985 = math.tanh %984 : vector<8x128xf32>
    %986 = vector.extract_strided_slice %971 {offsets = [0, 384], sizes = [8, 128], strides = [1, 1]} : vector<8x512xf32> to vector<8x128xf32>
    %987 = arith.negf %986 : vector<8x128xf32>
    %988 = math.exp %987 : vector<8x128xf32>
    %cst_284 = arith.constant 1.000000e+00 : f32
    %989 = vector.broadcast %cst_284 : f32 to vector<8x128xf32>
    %990 = arith.addf %989, %988 : vector<8x128xf32>
    %991 = arith.divf %989, %990 : vector<8x128xf32>
    %992 = arith.mulf %983, %964 : vector<8x128xf32>
    %993 = arith.mulf %977, %985 : vector<8x128xf32>
    %994 = arith.addf %992, %993 : vector<8x128xf32>
    %995 = math.tanh %994 : vector<8x128xf32>
    %996 = arith.mulf %991, %995 : vector<8x128xf32>
    %997 = vector.extract_strided_slice %782 {offsets = [56, 0], sizes = [8, 512], strides = [1, 1]} : vector<64x512xf32> to vector<8x512xf32>
    %c3_285 = arith.constant 3 : index
    %c0_286 = arith.constant 0 : index
    %c0_287 = arith.constant 0 : index
    %998 = vector.load %arg2[%c3_285, %c0_286, %c0_287] : memref<5x128x512xf32, #tpu.memory_space<vmem>>, vector<1x128x512xf32>
    %999 = vector.shape_cast %998 : vector<1x128x512xf32> to vector<128x512xf32>
    %cst_288 = arith.constant dense<0.000000e+00> : vector<8x512xf32>
    %1000 = tpu.matmul %996, %999, %cst_288 {dimension_numbers = #tpu.dot_dimension_numbers<[1], [0], [0], [1], [0, 0, 1, 1], [], []>} : vector<8x128xf32>, vector<128x512xf32>, vector<8x512xf32> -> vector<8x512xf32>
    %1001 = arith.addf %997, %1000 : vector<8x512xf32>
    %1002 = vector.extract_strided_slice %1001 {offsets = [0, 0], sizes = [8, 128], strides = [1, 1]} : vector<8x512xf32> to vector<8x128xf32>
    %1003 = arith.negf %1002 : vector<8x128xf32>
    %1004 = math.exp %1003 : vector<8x128xf32>
    %cst_289 = arith.constant 1.000000e+00 : f32
    %1005 = vector.broadcast %cst_289 : f32 to vector<8x128xf32>
    %1006 = arith.addf %1005, %1004 : vector<8x128xf32>
    %1007 = arith.divf %1005, %1006 : vector<8x128xf32>
    %1008 = vector.extract_strided_slice %1001 {offsets = [0, 128], sizes = [8, 128], strides = [1, 1]} : vector<8x512xf32> to vector<8x128xf32>
    %1009 = arith.negf %1008 : vector<8x128xf32>
    %1010 = math.exp %1009 : vector<8x128xf32>
    %cst_290 = arith.constant 1.000000e+00 : f32
    %1011 = vector.broadcast %cst_290 : f32 to vector<8x128xf32>
    %1012 = arith.addf %1011, %1010 : vector<8x128xf32>
    %1013 = arith.divf %1011, %1012 : vector<8x128xf32>
    %1014 = vector.extract_strided_slice %1001 {offsets = [0, 256], sizes = [8, 128], strides = [1, 1]} : vector<8x512xf32> to vector<8x128xf32>
    %1015 = math.tanh %1014 : vector<8x128xf32>
    %1016 = vector.extract_strided_slice %1001 {offsets = [0, 384], sizes = [8, 128], strides = [1, 1]} : vector<8x512xf32> to vector<8x128xf32>
    %1017 = arith.negf %1016 : vector<8x128xf32>
    %1018 = math.exp %1017 : vector<8x128xf32>
    %cst_291 = arith.constant 1.000000e+00 : f32
    %1019 = vector.broadcast %cst_291 : f32 to vector<8x128xf32>
    %1020 = arith.addf %1019, %1018 : vector<8x128xf32>
    %1021 = arith.divf %1019, %1020 : vector<8x128xf32>
    %1022 = arith.mulf %1013, %994 : vector<8x128xf32>
    %1023 = arith.mulf %1007, %1015 : vector<8x128xf32>
    %1024 = arith.addf %1022, %1023 : vector<8x128xf32>
    %1025 = math.tanh %1024 : vector<8x128xf32>
    %1026 = arith.mulf %1021, %1025 : vector<8x128xf32>
    %c3_292 = arith.constant 3 : index
    %c0_293 = arith.constant 0 : index
    %c0_294 = arith.constant 0 : index
    %1027 = vector.load %arg11[%c3_292, %c0_293, %c0_294] : memref<5x8x128xf32, #tpu.memory_space<vmem>>, vector<1x8x128xf32>
    %1028 = vector.shape_cast %1027 : vector<1x8x128xf32> to vector<8x128xf32>
    %1029 = vector.shape_cast %1026 : vector<8x128xf32> to vector<1x8x128xf32>
    tpu.vector_store %arg11[%c3_292, %c0_293, %c0_294], %1029 {strides = array<i32>} : memref<5x8x128xf32, #tpu.memory_space<vmem>>, vector<1x8x128xf32>,
    %c3_295 = arith.constant 3 : index
    %c0_296 = arith.constant 0 : index
    %c0_297 = arith.constant 0 : index
    %1030 = vector.load %arg12[%c3_295, %c0_296, %c0_297] : memref<5x8x128xf32, #tpu.memory_space<vmem>>, vector<1x8x128xf32>
    %1031 = vector.shape_cast %1030 : vector<1x8x128xf32> to vector<8x128xf32>
    %1032 = vector.shape_cast %1024 : vector<8x128xf32> to vector<1x8x128xf32>
    tpu.vector_store %arg12[%c3_295, %c0_296, %c0_297], %1032 {strides = array<i32>} : memref<5x8x128xf32, #tpu.memory_space<vmem>>, vector<1x8x128xf32>,
    %1033 = tpu.concatenate %816, %846, %876, %906, %936, %966, %996, %1026 in 0 : vector<8x128xf32>, vector<8x128xf32>, vector<8x128xf32>, vector<8x128xf32>, vector<8x128xf32>, vector<8x128xf32>, vector<8x128xf32>, vector<8x128xf32> -> vector<64x128xf32>
    %c4 = arith.constant 4 : index
    %c0_298 = arith.constant 0 : index
    %c0_299 = arith.constant 0 : index
    %1034 = vector.load %arg1[%c4, %c0_298, %c0_299] : memref<5x128x512xf32, #tpu.memory_space<vmem>>, vector<1x128x512xf32>
    %1035 = vector.shape_cast %1034 : vector<1x128x512xf32> to vector<128x512xf32>
    %cst_300 = arith.constant dense<0.000000e+00> : vector<64x512xf32>
    %1036 = tpu.matmul %1033, %1035, %cst_300 {dimension_numbers = #tpu.dot_dimension_numbers<[1], [0], [0], [1], [0, 0, 1, 1], [], []>} : vector<64x128xf32>, vector<128x512xf32>, vector<64x512xf32> -> vector<64x512xf32>
    %c4_301 = arith.constant 4 : index
    %c0_302 = arith.constant 0 : index
    %c0_303 = arith.constant 0 : index
    %1037 = vector.load %arg3[%c4_301, %c0_302, %c0_303] : memref<5x1x512xf32, #tpu.memory_space<vmem>>, vector<1x1x512xf32>
    %1038 = vector.shape_cast %1037 : vector<1x1x512xf32> to vector<1x512xf32>
    %1039 = vector.broadcast %1038 : vector<1x512xf32> to vector<64x512xf32>
    %1040 = arith.addf %1036, %1039 : vector<64x512xf32>
    %c4_304 = arith.constant 4 : index
    %c0_305 = arith.constant 0 : index
    %c0_306 = arith.constant 0 : index
    %1041 = vector.load %arg4[%c4_304, %c0_305, %c0_306] : memref<5x8x128xf32, #tpu.memory_space<vmem>>, vector<1x8x128xf32>
    %1042 = vector.shape_cast %1041 : vector<1x8x128xf32> to vector<8x128xf32>
    %c4_307 = arith.constant 4 : index
    %c0_308 = arith.constant 0 : index
    %c0_309 = arith.constant 0 : index
    %1043 = vector.load %arg5[%c4_307, %c0_308, %c0_309] : memref<5x8x128xf32, #tpu.memory_space<vmem>>, vector<1x8x128xf32>
    %1044 = vector.shape_cast %1043 : vector<1x8x128xf32> to vector<8x128xf32>
    %1045 = vector.extract_strided_slice %1040 {offsets = [0, 0], sizes = [8, 512], strides = [1, 1]} : vector<64x512xf32> to vector<8x512xf32>
    %c4_310 = arith.constant 4 : index
    %c0_311 = arith.constant 0 : index
    %c0_312 = arith.constant 0 : index
    %1046 = vector.load %arg2[%c4_310, %c0_311, %c0_312] : memref<5x128x512xf32, #tpu.memory_space<vmem>>, vector<1x128x512xf32>
    %1047 = vector.shape_cast %1046 : vector<1x128x512xf32> to vector<128x512xf32>
    %cst_313 = arith.constant dense<0.000000e+00> : vector<8x512xf32>
    %1048 = tpu.matmul %1042, %1047, %cst_313 {dimension_numbers = #tpu.dot_dimension_numbers<[1], [0], [0], [1], [0, 0, 1, 1], [], []>} : vector<8x128xf32>, vector<128x512xf32>, vector<8x512xf32> -> vector<8x512xf32>
    %1049 = arith.addf %1045, %1048 : vector<8x512xf32>
    %1050 = vector.extract_strided_slice %1049 {offsets = [0, 0], sizes = [8, 128], strides = [1, 1]} : vector<8x512xf32> to vector<8x128xf32>
    %1051 = arith.negf %1050 : vector<8x128xf32>
    %1052 = math.exp %1051 : vector<8x128xf32>
    %cst_314 = arith.constant 1.000000e+00 : f32
    %1053 = vector.broadcast %cst_314 : f32 to vector<8x128xf32>
    %1054 = arith.addf %1053, %1052 : vector<8x128xf32>
    %1055 = arith.divf %1053, %1054 : vector<8x128xf32>
    %1056 = vector.extract_strided_slice %1049 {offsets = [0, 128], sizes = [8, 128], strides = [1, 1]} : vector<8x512xf32> to vector<8x128xf32>
    %1057 = arith.negf %1056 : vector<8x128xf32>
    %1058 = math.exp %1057 : vector<8x128xf32>
    %cst_315 = arith.constant 1.000000e+00 : f32
    %1059 = vector.broadcast %cst_315 : f32 to vector<8x128xf32>
    %1060 = arith.addf %1059, %1058 : vector<8x128xf32>
    %1061 = arith.divf %1059, %1060 : vector<8x128xf32>
    %1062 = vector.extract_strided_slice %1049 {offsets = [0, 256], sizes = [8, 128], strides = [1, 1]} : vector<8x512xf32> to vector<8x128xf32>
    %1063 = math.tanh %1062 : vector<8x128xf32>
    %1064 = vector.extract_strided_slice %1049 {offsets = [0, 384], sizes = [8, 128], strides = [1, 1]} : vector<8x512xf32> to vector<8x128xf32>
    %1065 = arith.negf %1064 : vector<8x128xf32>
    %1066 = math.exp %1065 : vector<8x128xf32>
    %cst_316 = arith.constant 1.000000e+00 : f32
    %1067 = vector.broadcast %cst_316 : f32 to vector<8x128xf32>
    %1068 = arith.addf %1067, %1066 : vector<8x128xf32>
    %1069 = arith.divf %1067, %1068 : vector<8x128xf32>
    %1070 = arith.mulf %1061, %1044 : vector<8x128xf32>
    %1071 = arith.mulf %1055, %1063 : vector<8x128xf32>
    %1072 = arith.addf %1070, %1071 : vector<8x128xf32>
    %1073 = math.tanh %1072 : vector<8x128xf32>
    %1074 = arith.mulf %1069, %1073 : vector<8x128xf32>
    %1075 = vector.extract_strided_slice %1040 {offsets = [8, 0], sizes = [8, 512], strides = [1, 1]} : vector<64x512xf32> to vector<8x512xf32>
    %c4_317 = arith.constant 4 : index
    %c0_318 = arith.constant 0 : index
    %c0_319 = arith.constant 0 : index
    %1076 = vector.load %arg2[%c4_317, %c0_318, %c0_319] : memref<5x128x512xf32, #tpu.memory_space<vmem>>, vector<1x128x512xf32>
    %1077 = vector.shape_cast %1076 : vector<1x128x512xf32> to vector<128x512xf32>
    %cst_320 = arith.constant dense<0.000000e+00> : vector<8x512xf32>
    %1078 = tpu.matmul %1074, %1077, %cst_320 {dimension_numbers = #tpu.dot_dimension_numbers<[1], [0], [0], [1], [0, 0, 1, 1], [], []>} : vector<8x128xf32>, vector<128x512xf32>, vector<8x512xf32> -> vector<8x512xf32>
    %1079 = arith.addf %1075, %1078 : vector<8x512xf32>
    %1080 = vector.extract_strided_slice %1079 {offsets = [0, 0], sizes = [8, 128], strides = [1, 1]} : vector<8x512xf32> to vector<8x128xf32>
    %1081 = arith.negf %1080 : vector<8x128xf32>
    %1082 = math.exp %1081 : vector<8x128xf32>
    %cst_321 = arith.constant 1.000000e+00 : f32
    %1083 = vector.broadcast %cst_321 : f32 to vector<8x128xf32>
    %1084 = arith.addf %1083, %1082 : vector<8x128xf32>
    %1085 = arith.divf %1083, %1084 : vector<8x128xf32>
    %1086 = vector.extract_strided_slice %1079 {offsets = [0, 128], sizes = [8, 128], strides = [1, 1]} : vector<8x512xf32> to vector<8x128xf32>
    %1087 = arith.negf %1086 : vector<8x128xf32>
    %1088 = math.exp %1087 : vector<8x128xf32>
    %cst_322 = arith.constant 1.000000e+00 : f32
    %1089 = vector.broadcast %cst_322 : f32 to vector<8x128xf32>
    %1090 = arith.addf %1089, %1088 : vector<8x128xf32>
    %1091 = arith.divf %1089, %1090 : vector<8x128xf32>
    %1092 = vector.extract_strided_slice %1079 {offsets = [0, 256], sizes = [8, 128], strides = [1, 1]} : vector<8x512xf32> to vector<8x128xf32>
    %1093 = math.tanh %1092 : vector<8x128xf32>
    %1094 = vector.extract_strided_slice %1079 {offsets = [0, 384], sizes = [8, 128], strides = [1, 1]} : vector<8x512xf32> to vector<8x128xf32>
    %1095 = arith.negf %1094 : vector<8x128xf32>
    %1096 = math.exp %1095 : vector<8x128xf32>
    %cst_323 = arith.constant 1.000000e+00 : f32
    %1097 = vector.broadcast %cst_323 : f32 to vector<8x128xf32>
    %1098 = arith.addf %1097, %1096 : vector<8x128xf32>
    %1099 = arith.divf %1097, %1098 : vector<8x128xf32>
    %1100 = arith.mulf %1091, %1072 : vector<8x128xf32>
    %1101 = arith.mulf %1085, %1093 : vector<8x128xf32>
    %1102 = arith.addf %1100, %1101 : vector<8x128xf32>
    %1103 = math.tanh %1102 : vector<8x128xf32>
    %1104 = arith.mulf %1099, %1103 : vector<8x128xf32>
    %1105 = vector.extract_strided_slice %1040 {offsets = [16, 0], sizes = [8, 512], strides = [1, 1]} : vector<64x512xf32> to vector<8x512xf32>
    %c4_324 = arith.constant 4 : index
    %c0_325 = arith.constant 0 : index
    %c0_326 = arith.constant 0 : index
    %1106 = vector.load %arg2[%c4_324, %c0_325, %c0_326] : memref<5x128x512xf32, #tpu.memory_space<vmem>>, vector<1x128x512xf32>
    %1107 = vector.shape_cast %1106 : vector<1x128x512xf32> to vector<128x512xf32>
    %cst_327 = arith.constant dense<0.000000e+00> : vector<8x512xf32>
    %1108 = tpu.matmul %1104, %1107, %cst_327 {dimension_numbers = #tpu.dot_dimension_numbers<[1], [0], [0], [1], [0, 0, 1, 1], [], []>} : vector<8x128xf32>, vector<128x512xf32>, vector<8x512xf32> -> vector<8x512xf32>
    %1109 = arith.addf %1105, %1108 : vector<8x512xf32>
    %1110 = vector.extract_strided_slice %1109 {offsets = [0, 0], sizes = [8, 128], strides = [1, 1]} : vector<8x512xf32> to vector<8x128xf32>
    %1111 = arith.negf %1110 : vector<8x128xf32>
    %1112 = math.exp %1111 : vector<8x128xf32>
    %cst_328 = arith.constant 1.000000e+00 : f32
    %1113 = vector.broadcast %cst_328 : f32 to vector<8x128xf32>
    %1114 = arith.addf %1113, %1112 : vector<8x128xf32>
    %1115 = arith.divf %1113, %1114 : vector<8x128xf32>
    %1116 = vector.extract_strided_slice %1109 {offsets = [0, 128], sizes = [8, 128], strides = [1, 1]} : vector<8x512xf32> to vector<8x128xf32>
    %1117 = arith.negf %1116 : vector<8x128xf32>
    %1118 = math.exp %1117 : vector<8x128xf32>
    %cst_329 = arith.constant 1.000000e+00 : f32
    %1119 = vector.broadcast %cst_329 : f32 to vector<8x128xf32>
    %1120 = arith.addf %1119, %1118 : vector<8x128xf32>
    %1121 = arith.divf %1119, %1120 : vector<8x128xf32>
    %1122 = vector.extract_strided_slice %1109 {offsets = [0, 256], sizes = [8, 128], strides = [1, 1]} : vector<8x512xf32> to vector<8x128xf32>
    %1123 = math.tanh %1122 : vector<8x128xf32>
    %1124 = vector.extract_strided_slice %1109 {offsets = [0, 384], sizes = [8, 128], strides = [1, 1]} : vector<8x512xf32> to vector<8x128xf32>
    %1125 = arith.negf %1124 : vector<8x128xf32>
    %1126 = math.exp %1125 : vector<8x128xf32>
    %cst_330 = arith.constant 1.000000e+00 : f32
    %1127 = vector.broadcast %cst_330 : f32 to vector<8x128xf32>
    %1128 = arith.addf %1127, %1126 : vector<8x128xf32>
    %1129 = arith.divf %1127, %1128 : vector<8x128xf32>
    %1130 = arith.mulf %1121, %1102 : vector<8x128xf32>
    %1131 = arith.mulf %1115, %1123 : vector<8x128xf32>
    %1132 = arith.addf %1130, %1131 : vector<8x128xf32>
    %1133 = math.tanh %1132 : vector<8x128xf32>
    %1134 = arith.mulf %1129, %1133 : vector<8x128xf32>
    %1135 = vector.extract_strided_slice %1040 {offsets = [24, 0], sizes = [8, 512], strides = [1, 1]} : vector<64x512xf32> to vector<8x512xf32>
    %c4_331 = arith.constant 4 : index
    %c0_332 = arith.constant 0 : index
    %c0_333 = arith.constant 0 : index
    %1136 = vector.load %arg2[%c4_331, %c0_332, %c0_333] : memref<5x128x512xf32, #tpu.memory_space<vmem>>, vector<1x128x512xf32>
    %1137 = vector.shape_cast %1136 : vector<1x128x512xf32> to vector<128x512xf32>
    %cst_334 = arith.constant dense<0.000000e+00> : vector<8x512xf32>
    %1138 = tpu.matmul %1134, %1137, %cst_334 {dimension_numbers = #tpu.dot_dimension_numbers<[1], [0], [0], [1], [0, 0, 1, 1], [], []>} : vector<8x128xf32>, vector<128x512xf32>, vector<8x512xf32> -> vector<8x512xf32>
    %1139 = arith.addf %1135, %1138 : vector<8x512xf32>
    %1140 = vector.extract_strided_slice %1139 {offsets = [0, 0], sizes = [8, 128], strides = [1, 1]} : vector<8x512xf32> to vector<8x128xf32>
    %1141 = arith.negf %1140 : vector<8x128xf32>
    %1142 = math.exp %1141 : vector<8x128xf32>
    %cst_335 = arith.constant 1.000000e+00 : f32
    %1143 = vector.broadcast %cst_335 : f32 to vector<8x128xf32>
    %1144 = arith.addf %1143, %1142 : vector<8x128xf32>
    %1145 = arith.divf %1143, %1144 : vector<8x128xf32>
    %1146 = vector.extract_strided_slice %1139 {offsets = [0, 128], sizes = [8, 128], strides = [1, 1]} : vector<8x512xf32> to vector<8x128xf32>
    %1147 = arith.negf %1146 : vector<8x128xf32>
    %1148 = math.exp %1147 : vector<8x128xf32>
    %cst_336 = arith.constant 1.000000e+00 : f32
    %1149 = vector.broadcast %cst_336 : f32 to vector<8x128xf32>
    %1150 = arith.addf %1149, %1148 : vector<8x128xf32>
    %1151 = arith.divf %1149, %1150 : vector<8x128xf32>
    %1152 = vector.extract_strided_slice %1139 {offsets = [0, 256], sizes = [8, 128], strides = [1, 1]} : vector<8x512xf32> to vector<8x128xf32>
    %1153 = math.tanh %1152 : vector<8x128xf32>
    %1154 = vector.extract_strided_slice %1139 {offsets = [0, 384], sizes = [8, 128], strides = [1, 1]} : vector<8x512xf32> to vector<8x128xf32>
    %1155 = arith.negf %1154 : vector<8x128xf32>
    %1156 = math.exp %1155 : vector<8x128xf32>
    %cst_337 = arith.constant 1.000000e+00 : f32
    %1157 = vector.broadcast %cst_337 : f32 to vector<8x128xf32>
    %1158 = arith.addf %1157, %1156 : vector<8x128xf32>
    %1159 = arith.divf %1157, %1158 : vector<8x128xf32>
    %1160 = arith.mulf %1151, %1132 : vector<8x128xf32>
    %1161 = arith.mulf %1145, %1153 : vector<8x128xf32>
    %1162 = arith.addf %1160, %1161 : vector<8x128xf32>
    %1163 = math.tanh %1162 : vector<8x128xf32>
    %1164 = arith.mulf %1159, %1163 : vector<8x128xf32>
    %1165 = vector.extract_strided_slice %1040 {offsets = [32, 0], sizes = [8, 512], strides = [1, 1]} : vector<64x512xf32> to vector<8x512xf32>
    %c4_338 = arith.constant 4 : index
    %c0_339 = arith.constant 0 : index
    %c0_340 = arith.constant 0 : index
    %1166 = vector.load %arg2[%c4_338, %c0_339, %c0_340] : memref<5x128x512xf32, #tpu.memory_space<vmem>>, vector<1x128x512xf32>
    %1167 = vector.shape_cast %1166 : vector<1x128x512xf32> to vector<128x512xf32>
    %cst_341 = arith.constant dense<0.000000e+00> : vector<8x512xf32>
    %1168 = tpu.matmul %1164, %1167, %cst_341 {dimension_numbers = #tpu.dot_dimension_numbers<[1], [0], [0], [1], [0, 0, 1, 1], [], []>} : vector<8x128xf32>, vector<128x512xf32>, vector<8x512xf32> -> vector<8x512xf32>
    %1169 = arith.addf %1165, %1168 : vector<8x512xf32>
    %1170 = vector.extract_strided_slice %1169 {offsets = [0, 0], sizes = [8, 128], strides = [1, 1]} : vector<8x512xf32> to vector<8x128xf32>
    %1171 = arith.negf %1170 : vector<8x128xf32>
    %1172 = math.exp %1171 : vector<8x128xf32>
    %cst_342 = arith.constant 1.000000e+00 : f32
    %1173 = vector.broadcast %cst_342 : f32 to vector<8x128xf32>
    %1174 = arith.addf %1173, %1172 : vector<8x128xf32>
    %1175 = arith.divf %1173, %1174 : vector<8x128xf32>
    %1176 = vector.extract_strided_slice %1169 {offsets = [0, 128], sizes = [8, 128], strides = [1, 1]} : vector<8x512xf32> to vector<8x128xf32>
    %1177 = arith.negf %1176 : vector<8x128xf32>
    %1178 = math.exp %1177 : vector<8x128xf32>
    %cst_343 = arith.constant 1.000000e+00 : f32
    %1179 = vector.broadcast %cst_343 : f32 to vector<8x128xf32>
    %1180 = arith.addf %1179, %1178 : vector<8x128xf32>
    %1181 = arith.divf %1179, %1180 : vector<8x128xf32>
    %1182 = vector.extract_strided_slice %1169 {offsets = [0, 256], sizes = [8, 128], strides = [1, 1]} : vector<8x512xf32> to vector<8x128xf32>
    %1183 = math.tanh %1182 : vector<8x128xf32>
    %1184 = vector.extract_strided_slice %1169 {offsets = [0, 384], sizes = [8, 128], strides = [1, 1]} : vector<8x512xf32> to vector<8x128xf32>
    %1185 = arith.negf %1184 : vector<8x128xf32>
    %1186 = math.exp %1185 : vector<8x128xf32>
    %cst_344 = arith.constant 1.000000e+00 : f32
    %1187 = vector.broadcast %cst_344 : f32 to vector<8x128xf32>
    %1188 = arith.addf %1187, %1186 : vector<8x128xf32>
    %1189 = arith.divf %1187, %1188 : vector<8x128xf32>
    %1190 = arith.mulf %1181, %1162 : vector<8x128xf32>
    %1191 = arith.mulf %1175, %1183 : vector<8x128xf32>
    %1192 = arith.addf %1190, %1191 : vector<8x128xf32>
    %1193 = math.tanh %1192 : vector<8x128xf32>
    %1194 = arith.mulf %1189, %1193 : vector<8x128xf32>
    %1195 = vector.extract_strided_slice %1040 {offsets = [40, 0], sizes = [8, 512], strides = [1, 1]} : vector<64x512xf32> to vector<8x512xf32>
    %c4_345 = arith.constant 4 : index
    %c0_346 = arith.constant 0 : index
    %c0_347 = arith.constant 0 : index
    %1196 = vector.load %arg2[%c4_345, %c0_346, %c0_347] : memref<5x128x512xf32, #tpu.memory_space<vmem>>, vector<1x128x512xf32>
    %1197 = vector.shape_cast %1196 : vector<1x128x512xf32> to vector<128x512xf32>
    %cst_348 = arith.constant dense<0.000000e+00> : vector<8x512xf32>
    %1198 = tpu.matmul %1194, %1197, %cst_348 {dimension_numbers = #tpu.dot_dimension_numbers<[1], [0], [0], [1], [0, 0, 1, 1], [], []>} : vector<8x128xf32>, vector<128x512xf32>, vector<8x512xf32> -> vector<8x512xf32>
    %1199 = arith.addf %1195, %1198 : vector<8x512xf32>
    %1200 = vector.extract_strided_slice %1199 {offsets = [0, 0], sizes = [8, 128], strides = [1, 1]} : vector<8x512xf32> to vector<8x128xf32>
    %1201 = arith.negf %1200 : vector<8x128xf32>
    %1202 = math.exp %1201 : vector<8x128xf32>
    %cst_349 = arith.constant 1.000000e+00 : f32
    %1203 = vector.broadcast %cst_349 : f32 to vector<8x128xf32>
    %1204 = arith.addf %1203, %1202 : vector<8x128xf32>
    %1205 = arith.divf %1203, %1204 : vector<8x128xf32>
    %1206 = vector.extract_strided_slice %1199 {offsets = [0, 128], sizes = [8, 128], strides = [1, 1]} : vector<8x512xf32> to vector<8x128xf32>
    %1207 = arith.negf %1206 : vector<8x128xf32>
    %1208 = math.exp %1207 : vector<8x128xf32>
    %cst_350 = arith.constant 1.000000e+00 : f32
    %1209 = vector.broadcast %cst_350 : f32 to vector<8x128xf32>
    %1210 = arith.addf %1209, %1208 : vector<8x128xf32>
    %1211 = arith.divf %1209, %1210 : vector<8x128xf32>
    %1212 = vector.extract_strided_slice %1199 {offsets = [0, 256], sizes = [8, 128], strides = [1, 1]} : vector<8x512xf32> to vector<8x128xf32>
    %1213 = math.tanh %1212 : vector<8x128xf32>
    %1214 = vector.extract_strided_slice %1199 {offsets = [0, 384], sizes = [8, 128], strides = [1, 1]} : vector<8x512xf32> to vector<8x128xf32>
    %1215 = arith.negf %1214 : vector<8x128xf32>
    %1216 = math.exp %1215 : vector<8x128xf32>
    %cst_351 = arith.constant 1.000000e+00 : f32
    %1217 = vector.broadcast %cst_351 : f32 to vector<8x128xf32>
    %1218 = arith.addf %1217, %1216 : vector<8x128xf32>
    %1219 = arith.divf %1217, %1218 : vector<8x128xf32>
    %1220 = arith.mulf %1211, %1192 : vector<8x128xf32>
    %1221 = arith.mulf %1205, %1213 : vector<8x128xf32>
    %1222 = arith.addf %1220, %1221 : vector<8x128xf32>
    %1223 = math.tanh %1222 : vector<8x128xf32>
    %1224 = arith.mulf %1219, %1223 : vector<8x128xf32>
    %1225 = vector.extract_strided_slice %1040 {offsets = [48, 0], sizes = [8, 512], strides = [1, 1]} : vector<64x512xf32> to vector<8x512xf32>
    %c4_352 = arith.constant 4 : index
    %c0_353 = arith.constant 0 : index
    %c0_354 = arith.constant 0 : index
    %1226 = vector.load %arg2[%c4_352, %c0_353, %c0_354] : memref<5x128x512xf32, #tpu.memory_space<vmem>>, vector<1x128x512xf32>
    %1227 = vector.shape_cast %1226 : vector<1x128x512xf32> to vector<128x512xf32>
    %cst_355 = arith.constant dense<0.000000e+00> : vector<8x512xf32>
    %1228 = tpu.matmul %1224, %1227, %cst_355 {dimension_numbers = #tpu.dot_dimension_numbers<[1], [0], [0], [1], [0, 0, 1, 1], [], []>} : vector<8x128xf32>, vector<128x512xf32>, vector<8x512xf32> -> vector<8x512xf32>
    %1229 = arith.addf %1225, %1228 : vector<8x512xf32>
    %1230 = vector.extract_strided_slice %1229 {offsets = [0, 0], sizes = [8, 128], strides = [1, 1]} : vector<8x512xf32> to vector<8x128xf32>
    %1231 = arith.negf %1230 : vector<8x128xf32>
    %1232 = math.exp %1231 : vector<8x128xf32>
    %cst_356 = arith.constant 1.000000e+00 : f32
    %1233 = vector.broadcast %cst_356 : f32 to vector<8x128xf32>
    %1234 = arith.addf %1233, %1232 : vector<8x128xf32>
    %1235 = arith.divf %1233, %1234 : vector<8x128xf32>
    %1236 = vector.extract_strided_slice %1229 {offsets = [0, 128], sizes = [8, 128], strides = [1, 1]} : vector<8x512xf32> to vector<8x128xf32>
    %1237 = arith.negf %1236 : vector<8x128xf32>
    %1238 = math.exp %1237 : vector<8x128xf32>
    %cst_357 = arith.constant 1.000000e+00 : f32
    %1239 = vector.broadcast %cst_357 : f32 to vector<8x128xf32>
    %1240 = arith.addf %1239, %1238 : vector<8x128xf32>
    %1241 = arith.divf %1239, %1240 : vector<8x128xf32>
    %1242 = vector.extract_strided_slice %1229 {offsets = [0, 256], sizes = [8, 128], strides = [1, 1]} : vector<8x512xf32> to vector<8x128xf32>
    %1243 = math.tanh %1242 : vector<8x128xf32>
    %1244 = vector.extract_strided_slice %1229 {offsets = [0, 384], sizes = [8, 128], strides = [1, 1]} : vector<8x512xf32> to vector<8x128xf32>
    %1245 = arith.negf %1244 : vector<8x128xf32>
    %1246 = math.exp %1245 : vector<8x128xf32>
    %cst_358 = arith.constant 1.000000e+00 : f32
    %1247 = vector.broadcast %cst_358 : f32 to vector<8x128xf32>
    %1248 = arith.addf %1247, %1246 : vector<8x128xf32>
    %1249 = arith.divf %1247, %1248 : vector<8x128xf32>
    %1250 = arith.mulf %1241, %1222 : vector<8x128xf32>
    %1251 = arith.mulf %1235, %1243 : vector<8x128xf32>
    %1252 = arith.addf %1250, %1251 : vector<8x128xf32>
    %1253 = math.tanh %1252 : vector<8x128xf32>
    %1254 = arith.mulf %1249, %1253 : vector<8x128xf32>
    %1255 = vector.extract_strided_slice %1040 {offsets = [56, 0], sizes = [8, 512], strides = [1, 1]} : vector<64x512xf32> to vector<8x512xf32>
    %c4_359 = arith.constant 4 : index
    %c0_360 = arith.constant 0 : index
    %c0_361 = arith.constant 0 : index
    %1256 = vector.load %arg2[%c4_359, %c0_360, %c0_361] : memref<5x128x512xf32, #tpu.memory_space<vmem>>, vector<1x128x512xf32>
    %1257 = vector.shape_cast %1256 : vector<1x128x512xf32> to vector<128x512xf32>
    %cst_362 = arith.constant dense<0.000000e+00> : vector<8x512xf32>
    %1258 = tpu.matmul %1254, %1257, %cst_362 {dimension_numbers = #tpu.dot_dimension_numbers<[1], [0], [0], [1], [0, 0, 1, 1], [], []>} : vector<8x128xf32>, vector<128x512xf32>, vector<8x512xf32> -> vector<8x512xf32>
    %1259 = arith.addf %1255, %1258 : vector<8x512xf32>
    %1260 = vector.extract_strided_slice %1259 {offsets = [0, 0], sizes = [8, 128], strides = [1, 1]} : vector<8x512xf32> to vector<8x128xf32>
    %1261 = arith.negf %1260 : vector<8x128xf32>
    %1262 = math.exp %1261 : vector<8x128xf32>
    %cst_363 = arith.constant 1.000000e+00 : f32
    %1263 = vector.broadcast %cst_363 : f32 to vector<8x128xf32>
    %1264 = arith.addf %1263, %1262 : vector<8x128xf32>
    %1265 = arith.divf %1263, %1264 : vector<8x128xf32>
    %1266 = vector.extract_strided_slice %1259 {offsets = [0, 128], sizes = [8, 128], strides = [1, 1]} : vector<8x512xf32> to vector<8x128xf32>
    %1267 = arith.negf %1266 : vector<8x128xf32>
    %1268 = math.exp %1267 : vector<8x128xf32>
    %cst_364 = arith.constant 1.000000e+00 : f32
    %1269 = vector.broadcast %cst_364 : f32 to vector<8x128xf32>
    %1270 = arith.addf %1269, %1268 : vector<8x128xf32>
    %1271 = arith.divf %1269, %1270 : vector<8x128xf32>
    %1272 = vector.extract_strided_slice %1259 {offsets = [0, 256], sizes = [8, 128], strides = [1, 1]} : vector<8x512xf32> to vector<8x128xf32>
    %1273 = math.tanh %1272 : vector<8x128xf32>
    %1274 = vector.extract_strided_slice %1259 {offsets = [0, 384], sizes = [8, 128], strides = [1, 1]} : vector<8x512xf32> to vector<8x128xf32>
    %1275 = arith.negf %1274 : vector<8x128xf32>
    %1276 = math.exp %1275 : vector<8x128xf32>
    %cst_365 = arith.constant 1.000000e+00 : f32
    %1277 = vector.broadcast %cst_365 : f32 to vector<8x128xf32>
    %1278 = arith.addf %1277, %1276 : vector<8x128xf32>
    %1279 = arith.divf %1277, %1278 : vector<8x128xf32>
    %1280 = arith.mulf %1271, %1252 : vector<8x128xf32>
    %1281 = arith.mulf %1265, %1273 : vector<8x128xf32>
    %1282 = arith.addf %1280, %1281 : vector<8x128xf32>
    %1283 = math.tanh %1282 : vector<8x128xf32>
    %1284 = arith.mulf %1279, %1283 : vector<8x128xf32>
    %c4_366 = arith.constant 4 : index
    %c0_367 = arith.constant 0 : index
    %c0_368 = arith.constant 0 : index
    %1285 = vector.load %arg11[%c4_366, %c0_367, %c0_368] : memref<5x8x128xf32, #tpu.memory_space<vmem>>, vector<1x8x128xf32>
    %1286 = vector.shape_cast %1285 : vector<1x8x128xf32> to vector<8x128xf32>
    %1287 = vector.shape_cast %1284 : vector<8x128xf32> to vector<1x8x128xf32>
    tpu.vector_store %arg11[%c4_366, %c0_367, %c0_368], %1287 {strides = array<i32>} : memref<5x8x128xf32, #tpu.memory_space<vmem>>, vector<1x8x128xf32>,
    %c4_369 = arith.constant 4 : index
    %c0_370 = arith.constant 0 : index
    %c0_371 = arith.constant 0 : index
    %1288 = vector.load %arg12[%c4_369, %c0_370, %c0_371] : memref<5x8x128xf32, #tpu.memory_space<vmem>>, vector<1x8x128xf32>
    %1289 = vector.shape_cast %1288 : vector<1x8x128xf32> to vector<8x128xf32>
    %1290 = vector.shape_cast %1282 : vector<8x128xf32> to vector<1x8x128xf32>
    tpu.vector_store %arg12[%c4_369, %c0_370, %c0_371], %1290 {strides = array<i32>} : memref<5x8x128xf32, #tpu.memory_space<vmem>>, vector<1x8x128xf32>,
    %1291 = math.tanh %1284 : vector<8x128xf32>
    %c0_372 = arith.constant 0 : index
    %c0_373 = arith.constant 0 : index
    %1292 = vector.load %arg6[%c0_372, %c0_373] : memref<128x32xf32, #tpu.memory_space<vmem>>, vector<128x32xf32>
    %cst_374 = arith.constant dense<0.000000e+00> : vector<8x32xf32>
    %1293 = tpu.matmul %1291, %1292, %cst_374 {dimension_numbers = #tpu.dot_dimension_numbers<[1], [0], [0], [1], [0, 0, 1, 1], [], []>} : vector<8x128xf32>, vector<128x32xf32>, vector<8x32xf32> -> vector<8x32xf32>
    %c0_375 = arith.constant 0 : index
    %c0_376 = arith.constant 0 : index
    %1294 = vector.load %arg7[%c0_375, %c0_376] : memref<1x32xf32, #tpu.memory_space<vmem>>, vector<1x32xf32>
    %1295 = vector.broadcast %1294 : vector<1x32xf32> to vector<8x32xf32>
    %1296 = arith.addf %1293, %1295 : vector<8x32xf32>
    %cst_377 = arith.constant 0.000000e+00 : f32
    %1297 = vector.broadcast %cst_377 : f32 to vector<8x32xf32>
    %1298 = arith.maximumf %1296, %1297 : vector<8x32xf32>
    %c0_378 = arith.constant 0 : index
    %c0_379 = arith.constant 0 : index
    %1299 = vector.load %arg8[%c0_378, %c0_379] : memref<32x2xf32, #tpu.memory_space<vmem>>, vector<32x2xf32>
    %cst_380 = arith.constant dense<0.000000e+00> : vector<8x2xf32>
    %1300 = tpu.matmul %1298, %1299, %cst_380 {dimension_numbers = #tpu.dot_dimension_numbers<[1], [0], [0], [1], [0, 0, 1, 1], [], []>} : vector<8x32xf32>, vector<32x2xf32>, vector<8x2xf32> -> vector<8x2xf32>
    %c0_381 = arith.constant 0 : index
    %c0_382 = arith.constant 0 : index
    %1301 = vector.load %arg9[%c0_381, %c0_382] : memref<1x2xf32, #tpu.memory_space<vmem>>, vector<1x2xf32>
    %1302 = vector.broadcast %1301 : vector<1x2xf32> to vector<8x2xf32>
    %1303 = arith.addf %1300, %1302 : vector<8x2xf32>
    %c0_383 = arith.constant 0 : index
    %c0_384 = arith.constant 0 : index
    %1304 = vector.load %arg10[%c0_383, %c0_384] : memref<8x2xf32, #tpu.memory_space<vmem>>, vector<8x2xf32>
    tpu.vector_store %arg10[%c0_383, %c0_384], %1303 {strides = array<i32>} : memref<8x2xf32, #tpu.memory_space<vmem>>, vector<8x2xf32>,
    return
  }
}

</mosaic_0001>

<llo_original>
// kernel: my_module_forward.1
$region0: #{my_module_forward.1}
  #allocation0 [shape = 'u32[]', space=smem, size = 0x4, offset = 0x4, fixed_abs, tag = 'smem constant byte address 0x4 - core index']
  #allocation1 [shape = 'u32[144,128]{1,0:T(1,128)}', space=vmem, size = 0x12000, scoped, tag = 'internal scratch']
  %s0 = inlined_call_operand.vmem [shape: f32[8,8,128], index: 0, kind: input, shape index: {}]
  %s1 = inlined_call_operand.vmem [shape: f32[5,128,512], index: 1, kind: input, shape index: {}]
  %s2 = inlined_call_operand.vmem [shape: f32[5,128,512], index: 2, kind: input, shape index: {}]
  %s3 = inlined_call_operand.vmem [shape: f32[5,1,512], index: 3, kind: input, shape index: {}]
  %s4 = inlined_call_operand.vmem [shape: f32[5,8,128], index: 4, kind: input, shape index: {}, may-alias: {4,5}]
  %s5 = inlined_call_operand.vmem [shape: f32[5,8,128], index: 5, kind: input, shape index: {}, may-alias: {4,5}]
  %s6 = inlined_call_operand.vmem [shape: f32[128,32], index: 6, kind: input, shape index: {}]
  %s7 = inlined_call_operand.vmem [shape: f32[1,32], index: 7, kind: input, shape index: {}]
  %s8 = inlined_call_operand.vmem [shape: f32[32,2], index: 8, kind: input, shape index: {}]
  %s9 = inlined_call_operand.vmem [shape: f32[1,2], index: 9, kind: input, shape index: {}]
  %s10 = inlined_call_operand.vmem [shape: f32[8,2], index: 10, kind: output, shape index: {0}]
  %s11 = inlined_call_operand.vmem [shape: f32[5,8,128], index: 11, kind: output, shape index: {1}]
  %s12 = inlined_call_operand.vmem [shape: f32[5,8,128], index: 12, kind: output, shape index: {2}]
  %13 = xla_tuple %s10, %s11, %s12
  %s14 = sld [smem:[#allocation0]]
  $region66: #{my_module_forward.1} parent=0
    _
  %s16 = ssub.s32 1, %s14
  %s17 = scalar_select 0, %s16, %s14
  // Predicated region
  $region2: #{my_module_forward.1} parent=0 // pred_check
    _
  $region3: #{my_module_forward.1} parent=0 // pred_check_branch
    %19 = sbr.rel (0) target = $region5
  $region4: #{my_module_forward.1} parent=0 // pred_region
    _
  $region5: #{my_module_forward.1} parent=0 // pred_fallthru
    _
  // Predicated region
  $region6: #{my_module_forward.1} parent=0 // pred_check
    _
  $region7: #{my_module_forward.1} parent=0 // pred_check_branch
    %21 = sbr.rel (0) target = $region9
  $region8: #{my_module_forward.1} parent=0 // pred_region
    _
  $region9: #{my_module_forward.1} parent=0 // pred_fallthru
    _
  // Predicated region
  $region10: #{my_module_forward.1} parent=0 // pred_check
    _
  $region11: #{my_module_forward.1} parent=0 // pred_check_branch
    %23 = sbr.rel (0) target = $region13
  $region12: #{my_module_forward.1} parent=0 // pred_region
    _
  $region13: #{my_module_forward.1} parent=0 // pred_fallthru
    _
  // Predicated region
  $region14: #{my_module_forward.1} parent=0 // pred_check
    _
  $region15: #{my_module_forward.1} parent=0 // pred_check_branch
    %25 = sbr.rel (0) target = $region17
  $region16: #{my_module_forward.1} parent=0 // pred_region
    _
  $region17: #{my_module_forward.1} parent=0 // pred_fallthru
    _
  // Predicated region
  $region18: #{my_module_forward.1} parent=0 // pred_check
    _
  $region19: #{my_module_forward.1} parent=0 // pred_check_branch
    %27 = sbr.rel (0) target = $region21
  $region20: #{my_module_forward.1} parent=0 // pred_region
    _
  $region21: #{my_module_forward.1} parent=0 // pred_fallthru
    _
  // Predicated region
  $region22: #{my_module_forward.1} parent=0 // pred_check
    _
  $region23: #{my_module_forward.1} parent=0 // pred_check_branch
    %29 = sbr.rel (0) target = $region25
  $region24: #{my_module_forward.1} parent=0 // pred_region
    _
  $region25: #{my_module_forward.1} parent=0 // pred_fallthru
    _
  // Predicated region
  $region26: #{my_module_forward.1} parent=0 // pred_check
    _
  $region27: #{my_module_forward.1} parent=0 // pred_check_branch
    %31 = sbr.rel (0) target = $region29
  $region28: #{my_module_forward.1} parent=0 // pred_region
    _
  $region29: #{my_module_forward.1} parent=0 // pred_fallthru
    _
  // Predicated region
  $region30: #{my_module_forward.1} parent=0 // pred_check
    _
  $region31: #{my_module_forward.1} parent=0 // pred_check_branch
    %33 = sbr.rel (0) target = $region33
  $region32: #{my_module_forward.1} parent=0 // pred_region
    _
  $region33: #{my_module_forward.1} parent=0 // pred_fallthru
    _
  // Predicated region
  $region34: #{my_module_forward.1} parent=0 // pred_check
    _
  $region35: #{my_module_forward.1} parent=0 // pred_check_branch
    %35 = sbr.rel (0) target = $region37
  $region36: #{my_module_forward.1} parent=0 // pred_region
    _
  $region37: #{my_module_forward.1} parent=0 // pred_fallthru
    _
  // Predicated region
  $region38: #{my_module_forward.1} parent=0 // pred_check
    _
  $region39: #{my_module_forward.1} parent=0 // pred_check_branch
    %37 = sbr.rel (0) target = $region41
  $region40: #{my_module_forward.1} parent=0 // pred_region
    _
  $region41: #{my_module_forward.1} parent=0 // pred_fallthru
    _
  %v38 = vld [vmem:[%s0] sm:$0xff]
  %v39 = vld [vmem:[%s0 + $0x8] sm:$0xff]
  %v40 = vld [vmem:[%s0 + $0x10] sm:$0xff]
  %v41 = vld [vmem:[%s0 + $0x18] sm:$0xff]
  %v42 = vld [vmem:[%s0 + $0x20] sm:$0xff]
  %v43 = vld [vmem:[%s0 + $0x28] sm:$0xff]
  %v44 = vld [vmem:[%s0 + $0x30] sm:$0xff]
  %v45 = vld [vmem:[%s0 + $0x38] sm:$0xff]
  %v46 = vld [vmem:[%s1] sm:$0xff]
  %v47 = vld [vmem:[%s1 + $0x8] sm:$0xff]
  %v48 = vld [vmem:[%s1 + $0x10] sm:$0xff]
  %v49 = vld [vmem:[%s1 + $0x18] sm:$0xff]
  %v50 = vld [vmem:[%s1 + $0x20] sm:$0xff]
  %v51 = vld [vmem:[%s1 + $0x28] sm:$0xff]
  %v52 = vld [vmem:[%s1 + $0x30] sm:$0xff]
  %v53 = vld [vmem:[%s1 + $0x38] sm:$0xff]
  %v54 = vld [vmem:[%s1 + $0x40] sm:$0xff]
  %v55 = vld [vmem:[%s1 + $0x48] sm:$0xff]
  %v56 = vld [vmem:[%s1 + $0x50] sm:$0xff]
  %v57 = vld [vmem:[%s1 + $0x58] sm:$0xff]
  %v58 = vld [vmem:[%s1 + $0x60] sm:$0xff]
  %v59 = vld [vmem:[%s1 + $0x68] sm:$0xff]
  %v60 = vld [vmem:[%s1 + $0x70] sm:$0xff]
  %v61 = vld [vmem:[%s1 + $0x78] sm:$0xff]
  %v62 = vld [vmem:[%s1 + $0x80] sm:$0xff]
  %v63 = vld [vmem:[%s1 + $0x88] sm:$0xff]
  %v64 = vld [vmem:[%s1 + $0x90] sm:$0xff]
  %v65 = vld [vmem:[%s1 + $0x98] sm:$0xff]
  %v66 = vld [vmem:[%s1 + $0xa0] sm:$0xff]
  %v67 = vld [vmem:[%s1 + $0xa8] sm:$0xff]
  %v68 = vld [vmem:[%s1 + $0xb0] sm:$0xff]
  %v69 = vld [vmem:[%s1 + $0xb8] sm:$0xff]
  %v70 = vld [vmem:[%s1 + $0xc0] sm:$0xff]
  %v71 = vld [vmem:[%s1 + $0xc8] sm:$0xff]
  %v72 = vld [vmem:[%s1 + $0xd0] sm:$0xff]
  %v73 = vld [vmem:[%s1 + $0xd8] sm:$0xff]
  %v74 = vld [vmem:[%s1 + $0xe0] sm:$0xff]
  %v75 = vld [vmem:[%s1 + $0xe8] sm:$0xff]
  %v76 = vld [vmem:[%s1 + $0xf0] sm:$0xff]
  %v77 = vld [vmem:[%s1 + $0xf8] sm:$0xff]
  %v78 = vld [vmem:[%s1 + $0x100] sm:$0xff]
  %v79 = vld [vmem:[%s1 + $0x108] sm:$0xff]
  %v80 = vld [vmem:[%s1 + $0x110] sm:$0xff]
  %v81 = vld [vmem:[%s1 + $0x118] sm:$0xff]
  %v82 = vld [vmem:[%s1 + $0x120] sm:$0xff]
  %v83 = vld [vmem:[%s1 + $0x128] sm:$0xff]
  %v84 = vld [vmem:[%s1 + $0x130] sm:$0xff]
  %v85 = vld [vmem:[%s1 + $0x138] sm:$0xff]
  %v86 = vld [vmem:[%s1 + $0x140] sm:$0xff]
  %v87 = vld [vmem:[%s1 + $0x148] sm:$0xff]
  %v88 = vld [vmem:[%s1 + $0x150] sm:$0xff]
  %v89 = vld [vmem:[%s1 + $0x158] sm:$0xff]
  %v90 = vld [vmem:[%s1 + $0x160] sm:$0xff]
  %v91 = vld [vmem:[%s1 + $0x168] sm:$0xff]
  %v92 = vld [vmem:[%s1 + $0x170] sm:$0xff]
  %v93 = vld [vmem:[%s1 + $0x178] sm:$0xff]
  %v94 = vld [vmem:[%s1 + $0x180] sm:$0xff]
  %v95 = vld [vmem:[%s1 + $0x188] sm:$0xff]
  %v96 = vld [vmem:[%s1 + $0x190] sm:$0xff]
  %v97 = vld [vmem:[%s1 + $0x198] sm:$0xff]
  %v98 = vld [vmem:[%s1 + $0x1a0] sm:$0xff]
  %v99 = vld [vmem:[%s1 + $0x1a8] sm:$0xff]
  %v100 = vld [vmem:[%s1 + $0x1b0] sm:$0xff]
  %v101 = vld [vmem:[%s1 + $0x1b8] sm:$0xff]
  %v102 = vld [vmem:[%s1 + $0x1c0] sm:$0xff]
  %v103 = vld [vmem:[%s1 + $0x1c8] sm:$0xff]
  %v104 = vld [vmem:[%s1 + $0x1d0] sm:$0xff]
  %v105 = vld [vmem:[%s1 + $0x1d8] sm:$0xff]
  %v106 = vld [vmem:[%s1 + $0x1e0] sm:$0xff]
  %v107 = vld [vmem:[%s1 + $0x1e8] sm:$0xff]
  %v108 = vld [vmem:[%s1 + $0x1f0] sm:$0xff]
  %v109 = vld [vmem:[%s1 + $0x1f8] sm:$0xff]
  %v110 = vld [vmem:[%s3] sm:$0xf]
  %v112 = vlaneseq
  %v113 = vshrl.u32 %v112, 7
  %v114 = vsub.s32 0, %v113
  %v115 = vrot.slane %v110, %v114
  %v116 = vlaneseq
  %v117 = vshrl.u32 %v116, 7
  %v118 = vsub.s32 1, %v117
  %v119 = vrot.slane %v110, %v118
  %v120 = vlaneseq
  %v121 = vshrl.u32 %v120, 7
  %v122 = vsub.s32 2, %v121
  %v123 = vrot.slane %v110, %v122
  %v124 = vlaneseq
  %v125 = vshrl.u32 %v124, 7
  %v126 = vsub.s32 3, %v125
  %v127 = vrot.slane %v110, %v126
  %132 = vmatprep.subr.mxu0 %v47
  %133 = vmatpush1.msra.mxu0 %v46
  %134 = vmatprep.subr.mxu0 %v51
  %135 = vmatpush1.msra.mxu0 %v50
  %136 = vmatprep.subr.mxu0 %v55
  %137 = vmatpush1.msra.mxu0 %v54
  %138 = vmatprep.subr.mxu0 %v59
  %139 = vmatpush1.msra.mxu0 %v58
  %140 = vmatprep.subr.mxu0 %v63
  %141 = vmatpush1.msra.mxu0 %v62
  %142 = vmatprep.subr.mxu0 %v67
  %143 = vmatpush1.msra.mxu0 %v66
  %144 = vmatprep.subr.mxu0 %v71
  %145 = vmatpush1.msra.mxu0 %v70
  %146 = vmatprep.subr.mxu0 %v75
  %147 = vmatpush1.msra.mxu0 %v74
  %148 = vmatprep.subr.mxu0 %v79
  %149 = vmatpush1.msra.mxu0 %v78
  %150 = vmatprep.subr.mxu0 %v83
  %151 = vmatpush1.msra.mxu0 %v82
  %152 = vmatprep.subr.mxu0 %v87
  %153 = vmatpush1.msra.mxu0 %v86
  %154 = vmatprep.subr.mxu0 %v91
  %155 = vmatpush1.msra.mxu0 %v90
  %156 = vmatprep.subr.mxu0 %v95
  %157 = vmatpush1.msra.mxu0 %v94
  %158 = vmatprep.subr.mxu0 %v99
  %159 = vmatpush1.msra.mxu0 %v98
  %160 = vmatprep.subr.mxu0 %v103
  %161 = vmatpush1.msra.mxu0 %v102
  %162 = vmatprep.subr.mxu0 %v107
  %163 = vmatpush1.msra.mxu0 %v106
  %164 = vmatprep.subr.mxu0 0.0
  %165 = vmatpush1.msra.mxu0 0.0
  %166 = vmatprep.subr.mxu0 0.0
  %167 = vmatpush1.msra.mxu0 0.0
  %168 = vmatprep.subr.mxu0 0.0
  %169 = vmatpush1.msra.mxu0 0.0
  %170 = vmatprep.subr.mxu0 0.0
  %171 = vmatpush1.msra.mxu0 0.0
  %172 = vmatprep.subr.mxu0 0.0
  %173 = vmatpush1.msra.mxu0 0.0
  %174 = vmatprep.subr.mxu0 0.0
  %175 = vmatpush1.msra.mxu0 0.0
  %176 = vmatprep.subr.mxu0 0.0
  %177 = vmatpush1.msra.mxu0 0.0
  %178 = vmatprep.subr.mxu0 0.0
  %179 = vmatpush1.msra.mxu0 0.0
  %180 = vmatprep.subr.mxu0 0.0
  %181 = vmatpush1.msra.mxu0 0.0
  %182 = vmatprep.subr.mxu0 0.0
  %183 = vmatpush1.msra.mxu0 0.0
  %184 = vmatprep.subr.mxu0 0.0
  %185 = vmatpush1.msra.mxu0 0.0
  %186 = vmatprep.subr.mxu0 0.0
  %187 = vmatpush1.msra.mxu0 0.0
  %188 = vmatprep.subr.mxu0 0.0
  %189 = vmatpush1.msra.mxu0 0.0
  %190 = vmatprep.subr.mxu0 0.0
  %191 = vmatpush1.msra.mxu0 0.0
  %192 = vmatprep.subr.mxu0 0.0
  %193 = vmatpush1.msra.mxu0 0.0
  %194 = vmatprep.subr.mxu0 0.0
  %195 = vmatpush1.msra.mxu0 0.0
  %196 = vmatprep.mubr.f32.mxu0 0.0
  %197 = vmatmul.mubr.f32.gmra.mrb[0].mxu0 %v38
  %v198 = vpop.f32.mrb[0].mxu0
  %v199 = vadd.f32 %v115, %v198
  %v200 = vpop.f32.mrb[0].mxu0
  %v201 = vadd.f32 %v119, %v200
  %202 = vmatprep.mubr.f32.mxu0 0.0
  %203 = vmatmul.mubr.f32.gmra.mrb[0].mxu0 %v39
  %v204 = vpop.f32.mrb[0].mxu0
  %v205 = vadd.f32 %v115, %v204
  %v206 = vpop.f32.mrb[0].mxu0
  %v207 = vadd.f32 %v119, %v206
  %208 = vmatprep.mubr.f32.mxu0 0.0
  %209 = vmatmul.mubr.f32.gmra.mrb[0].mxu0 %v40
  %v210 = vpop.f32.mrb[0].mxu0
  %v211 = vadd.f32 %v115, %v210
  %v212 = vpop.f32.mrb[0].mxu0
  %v213 = vadd.f32 %v119, %v212
  %214 = vmatprep.mubr.f32.mxu0 0.0
  %215 = vmatmul.mubr.f32.gmra.mrb[0].mxu0 %v41
  %v216 = vpop.f32.mrb[0].mxu0
  %v217 = vadd.f32 %v115, %v216
  %v218 = vpop.f32.mrb[0].mxu0
  %v219 = vadd.f32 %v119, %v218
  %220 = vmatprep.mubr.f32.mxu0 0.0
  %221 = vmatmul.mubr.f32.gmra.mrb[0].mxu0 %v42
  %v222 = vpop.f32.mrb[0].mxu0
  %v223 = vadd.f32 %v115, %v222
  %v224 = vpop.f32.mrb[0].mxu0
  %v225 = vadd.f32 %v119, %v224
  %226 = vmatprep.mubr.f32.mxu0 0.0
  %227 = vmatmul.mubr.f32.gmra.mrb[0].mxu0 %v43
  %v228 = vpop.f32.mrb[0].mxu0
  %v229 = vadd.f32 %v115, %v228
  %v230 = vpop.f32.mrb[0].mxu0
  %v231 = vadd.f32 %v119, %v230
  %232 = vmatprep.mubr.f32.mxu0 0.0
  %233 = vmatmul.mubr.f32.gmra.mrb[0].mxu0 %v44
  %v234 = vpop.f32.mrb[0].mxu0
  %v235 = vadd.f32 %v115, %v234
  %v236 = vpop.f32.mrb[0].mxu0
  %v237 = vadd.f32 %v119, %v236
  %238 = vmatprep.mubr.f32.mxu0 0.0
  %239 = vmatmul.mubr.f32.gmra.mrb[0].mxu0 %v45
  %v240 = vpop.f32.mrb[0].mxu0
  %v241 = vadd.f32 %v115, %v240
  %v242 = vpop.f32.mrb[0].mxu0
  %v243 = vadd.f32 %v119, %v242
  %244 = vdwg.mxu0
  %245 = vmatprep.subr.mxu0 %v49
  %246 = vmatpush1.msra.mxu0 %v48
  %247 = vmatprep.subr.mxu0 %v53
  %248 = vmatpush1.msra.mxu0 %v52
  %249 = vmatprep.subr.mxu0 %v57
  %250 = vmatpush1.msra.mxu0 %v56
  %251 = vmatprep.subr.mxu0 %v61
  %252 = vmatpush1.msra.mxu0 %v60
  %253 = vmatprep.subr.mxu0 %v65
  %254 = vmatpush1.msra.mxu0 %v64
  %255 = vmatprep.subr.mxu0 %v69
  %256 = vmatpush1.msra.mxu0 %v68
  %257 = vmatprep.subr.mxu0 %v73
  %258 = vmatpush1.msra.mxu0 %v72
  %259 = vmatprep.subr.mxu0 %v77
  %260 = vmatpush1.msra.mxu0 %v76
  %261 = vmatprep.subr.mxu0 %v81
  %262 = vmatpush1.msra.mxu0 %v80
  %263 = vmatprep.subr.mxu0 %v85
  %264 = vmatpush1.msra.mxu0 %v84
  %265 = vmatprep.subr.mxu0 %v89
  %266 = vmatpush1.msra.mxu0 %v88
  %267 = vmatprep.subr.mxu0 %v93
  %268 = vmatpush1.msra.mxu0 %v92
  %269 = vmatprep.subr.mxu0 %v97
  %270 = vmatpush1.msra.mxu0 %v96
  %271 = vmatprep.subr.mxu0 %v101
  %272 = vmatpush1.msra.mxu0 %v100
  %273 = vmatprep.subr.mxu0 %v105
  %274 = vmatpush1.msra.mxu0 %v104
  %275 = vmatprep.subr.mxu0 %v109
  %276 = vmatpush1.msra.mxu0 %v108
  %277 = vmatprep.subr.mxu0 0.0
  %278 = vmatpush1.msra.mxu0 0.0
  %279 = vmatprep.subr.mxu0 0.0
  %280 = vmatpush1.msra.mxu0 0.0
  %281 = vmatprep.subr.mxu0 0.0
  %282 = vmatpush1.msra.mxu0 0.0
  %283 = vmatprep.subr.mxu0 0.0
  %284 = vmatpush1.msra.mxu0 0.0
  %285 = vmatprep.subr.mxu0 0.0
  %286 = vmatpush1.msra.mxu0 0.0
  %287 = vmatprep.subr.mxu0 0.0
  %288 = vmatpush1.msra.mxu0 0.0
  %289 = vmatprep.subr.mxu0 0.0
  %290 = vmatpush1.msra.mxu0 0.0
  %291 = vmatprep.subr.mxu0 0.0
  %292 = vmatpush1.msra.mxu0 0.0
  %293 = vmatprep.subr.mxu0 0.0
  %294 = vmatpush1.msra.mxu0 0.0
  %295 = vmatprep.subr.mxu0 0.0
  %296 = vmatpush1.msra.mxu0 0.0
  %297 = vmatprep.subr.mxu0 0.0
  %298 = vmatpush1.msra.mxu0 0.0
  %299 = vmatprep.subr.mxu0 0.0
  %300 = vmatpush1.msra.mxu0 0.0
  %301 = vmatprep.subr.mxu0 0.0
  %302 = vmatpush1.msra.mxu0 0.0
  %303 = vmatprep.subr.mxu0 0.0
  %304 = vmatpush1.msra.mxu0 0.0
  %305 = vmatprep.subr.mxu0 0.0
  %306 = vmatpush1.msra.mxu0 0.0
  %307 = vmatprep.subr.mxu0 0.0
  %308 = vmatpush1.msra.mxu0 0.0
  %309 = vmatprep.mubr.f32.mxu0 0.0
  %310 = vmatmul.mubr.f32.gmra.mrb[0].mxu0 %v38
  %v311 = vpop.f32.mrb[0].mxu0
  %v312 = vadd.f32 %v123, %v311
  %v313 = vpop.f32.mrb[0].mxu0
  %v314 = vadd.f32 %v127, %v313
  %315 = vmatprep.mubr.f32.mxu0 0.0
  %316 = vmatmul.mubr.f32.gmra.mrb[0].mxu0 %v39
  %v317 = vpop.f32.mrb[0].mxu0
  %v318 = vadd.f32 %v123, %v317
  %v319 = vpop.f32.mrb[0].mxu0
  %v320 = vadd.f32 %v127, %v319
  %321 = vmatprep.mubr.f32.mxu0 0.0
  %322 = vmatmul.mubr.f32.gmra.mrb[0].mxu0 %v40
  %v323 = vpop.f32.mrb[0].mxu0
  %v324 = vadd.f32 %v123, %v323
  %v325 = vpop.f32.mrb[0].mxu0
  %v326 = vadd.f32 %v127, %v325
  %327 = vmatprep.mubr.f32.mxu0 0.0
  %328 = vmatmul.mubr.f32.gmra.mrb[0].mxu0 %v41
  %v329 = vpop.f32.mrb[0].mxu0
  %v330 = vadd.f32 %v123, %v329
  %v331 = vpop.f32.mrb[0].mxu0
  %v332 = vadd.f32 %v127, %v331
  %333 = vmatprep.mubr.f32.mxu0 0.0
  %334 = vmatmul.mubr.f32.gmra.mrb[0].mxu0 %v42
  %v335 = vpop.f32.mrb[0].mxu0
  %v336 = vadd.f32 %v123, %v335
  %v337 = vpop.f32.mrb[0].mxu0
  %v338 = vadd.f32 %v127, %v337
  %339 = vmatprep.mubr.f32.mxu0 0.0
  %340 = vmatmul.mubr.f32.gmra.mrb[0].mxu0 %v43
  %v341 = vpop.f32.mrb[0].mxu0
  %v342 = vadd.f32 %v123, %v341
  %v343 = vpop.f32.mrb[0].mxu0
  %v344 = vadd.f32 %v127, %v343
  %345 = vmatprep.mubr.f32.mxu0 0.0
  %346 = vmatmul.mubr.f32.gmra.mrb[0].mxu0 %v44
  %v347 = vpop.f32.mrb[0].mxu0
  %v348 = vadd.f32 %v123, %v347
  %v349 = vpop.f32.mrb[0].mxu0
  %v350 = vadd.f32 %v127, %v349
  %351 = vmatprep.mubr.f32.mxu0 0.0
  %352 = vmatmul.mubr.f32.gmra.mrb[0].mxu0 %v45
  %v353 = vpop.f32.mrb[0].mxu0
  %v354 = vadd.f32 %v123, %v353
  %v355 = vpop.f32.mrb[0].mxu0
  %v356 = vadd.f32 %v127, %v355
  %357 = vdwg.mxu0
  %v358 = vld [vmem:[%s4] sm:$0xff]
  %v359 = vld [vmem:[%s5] sm:$0xff]
  %v360 = vld [vmem:[%s2] sm:$0xff]
  %v361 = vld [vmem:[%s2 + $0x8] sm:$0xff]
  %v362 = vld [vmem:[%s2 + $0x10] sm:$0xff]
  %v363 = vld [vmem:[%s2 + $0x18] sm:$0xff]
  %v364 = vld [vmem:[%s2 + $0x20] sm:$0xff]
  %v365 = vld [vmem:[%s2 + $0x28] sm:$0xff]
  %v366 = vld [vmem:[%s2 + $0x30] sm:$0xff]
  %v367 = vld [vmem:[%s2 + $0x38] sm:$0xff]
  %v368 = vld [vmem:[%s2 + $0x40] sm:$0xff]
  %v369 = vld [vmem:[%s2 + $0x48] sm:$0xff]
  %v370 = vld [vmem:[%s2 + $0x50] sm:$0xff]
  %v371 = vld [vmem:[%s2 + $0x58] sm:$0xff]
  %v372 = vld [vmem:[%s2 + $0x60] sm:$0xff]
  %v373 = vld [vmem:[%s2 + $0x68] sm:$0xff]
  %v374 = vld [vmem:[%s2 + $0x70] sm:$0xff]
  %v375 = vld [vmem:[%s2 + $0x78] sm:$0xff]
  %v376 = vld [vmem:[%s2 + $0x80] sm:$0xff]
  %v377 = vld [vmem:[%s2 + $0x88] sm:$0xff]
  %v378 = vld [vmem:[%s2 + $0x90] sm:$0xff]
  %v379 = vld [vmem:[%s2 + $0x98] sm:$0xff]
  %v380 = vld [vmem:[%s2 + $0xa0] sm:$0xff]
  %v381 = vld [vmem:[%s2 + $0xa8] sm:$0xff]
  %v382 = vld [vmem:[%s2 + $0xb0] sm:$0xff]
  %v383 = vld [vmem:[%s2 + $0xb8] sm:$0xff]
  %v384 = vld [vmem:[%s2 + $0xc0] sm:$0xff]
  %v385 = vld [vmem:[%s2 + $0xc8] sm:$0xff]
  %v386 = vld [vmem:[%s2 + $0xd0] sm:$0xff]
  %v387 = vld [vmem:[%s2 + $0xd8] sm:$0xff]
  %v388 = vld [vmem:[%s2 + $0xe0] sm:$0xff]
  %v389 = vld [vmem:[%s2 + $0xe8] sm:$0xff]
  %v390 = vld [vmem:[%s2 + $0xf0] sm:$0xff]
  %v391 = vld [vmem:[%s2 + $0xf8] sm:$0xff]
  %v392 = vld [vmem:[%s2 + $0x100] sm:$0xff]
  %v393 = vld [vmem:[%s2 + $0x108] sm:$0xff]
  %v394 = vld [vmem:[%s2 + $0x110] sm:$0xff]
  %v395 = vld [vmem:[%s2 + $0x118] sm:$0xff]
  %v396 = vld [vmem:[%s2 + $0x120] sm:$0xff]
  %v397 = vld [vmem:[%s2 + $0x128] sm:$0xff]
  %v398 = vld [vmem:[%s2 + $0x130] sm:$0xff]
  %v399 = vld [vmem:[%s2 + $0x138] sm:$0xff]
  %v400 = vld [vmem:[%s2 + $0x140] sm:$0xff]
  %v401 = vld [vmem:[%s2 + $0x148] sm:$0xff]
  %v402 = vld [vmem:[%s2 + $0x150] sm:$0xff]
  %v403 = vld [vmem:[%s2 + $0x158] sm:$0xff]
  %v404 = vld [vmem:[%s2 + $0x160] sm:$0xff]
  %v405 = vld [vmem:[%s2 + $0x168] sm:$0xff]
  %v406 = vld [vmem:[%s2 + $0x170] sm:$0xff]
  %v407 = vld [vmem:[%s2 + $0x178] sm:$0xff]
  %v408 = vld [vmem:[%s2 + $0x180] sm:$0xff]
  %v409 = vld [vmem:[%s2 + $0x188] sm:$0xff]
  %v410 = vld [vmem:[%s2 + $0x190] sm:$0xff]
  %v411 = vld [vmem:[%s2 + $0x198] sm:$0xff]
  %v412 = vld [vmem:[%s2 + $0x1a0] sm:$0xff]
  %v413 = vld [vmem:[%s2 + $0x1a8] sm:$0xff]
  %v414 = vld [vmem:[%s2 + $0x1b0] sm:$0xff]
  %v415 = vld [vmem:[%s2 + $0x1b8] sm:$0xff]
  %v416 = vld [vmem:[%s2 + $0x1c0] sm:$0xff]
  %v417 = vld [vmem:[%s2 + $0x1c8] sm:$0xff]
  %v418 = vld [vmem:[%s2 + $0x1d0] sm:$0xff]
  %v419 = vld [vmem:[%s2 + $0x1d8] sm:$0xff]
  %v420 = vld [vmem:[%s2 + $0x1e0] sm:$0xff]
  %v421 = vld [vmem:[%s2 + $0x1e8] sm:$0xff]
  %v422 = vld [vmem:[%s2 + $0x1f0] sm:$0xff]
  %v423 = vld [vmem:[%s2 + $0x1f8] sm:$0xff]
  %424 = vmatprep.subr.mxu0 %v361
  %425 = vmatpush1.msra.mxu0 %v360
  %426 = vmatprep.subr.mxu0 %v365
  %427 = vmatpush1.msra.mxu0 %v364
  %428 = vmatprep.subr.mxu0 %v369
  %429 = vmatpush1.msra.mxu0 %v368
  %430 = vmatprep.subr.mxu0 %v373
  %431 = vmatpush1.msra.mxu0 %v372
  %432 = vmatprep.subr.mxu0 %v377
  %433 = vmatpush1.msra.mxu0 %v376
  %434 = vmatprep.subr.mxu0 %v381
  %435 = vmatpush1.msra.mxu0 %v380
  %436 = vmatprep.subr.mxu0 %v385
  %437 = vmatpush1.msra.mxu0 %v384
  %438 = vmatprep.subr.mxu0 %v389
  %439 = vmatpush1.msra.mxu0 %v388
  %440 = vmatprep.subr.mxu0 %v393
  %441 = vmatpush1.msra.mxu0 %v392
  %442 = vmatprep.subr.mxu0 %v397
  %443 = vmatpush1.msra.mxu0 %v396
  %444 = vmatprep.subr.mxu0 %v401
  %445 = vmatpush1.msra.mxu0 %v400
  %446 = vmatprep.subr.mxu0 %v405
  %447 = vmatpush1.msra.mxu0 %v404
  %448 = vmatprep.subr.mxu0 %v409
  %449 = vmatpush1.msra.mxu0 %v408
  %450 = vmatprep.subr.mxu0 %v413
  %451 = vmatpush1.msra.mxu0 %v412
  %452 = vmatprep.subr.mxu0 %v417
  %453 = vmatpush1.msra.mxu0 %v416
  %454 = vmatprep.subr.mxu0 %v421
  %455 = vmatpush1.msra.mxu0 %v420
  %456 = vmatprep.subr.mxu0 0.0
  %457 = vmatpush1.msra.mxu0 0.0
  %458 = vmatprep.subr.mxu0 0.0
  %459 = vmatpush1.msra.mxu0 0.0
  %460 = vmatprep.subr.mxu0 0.0
  %461 = vmatpush1.msra.mxu0 0.0
  %462 = vmatprep.subr.mxu0 0.0
  %463 = vmatpush1.msra.mxu0 0.0
  %464 = vmatprep.subr.mxu0 0.0
  %465 = vmatpush1.msra.mxu0 0.0
  %466 = vmatprep.subr.mxu0 0.0
  %467 = vmatpush1.msra.mxu0 0.0
  %468 = vmatprep.subr.mxu0 0.0
  %469 = vmatpush1.msra.mxu0 0.0
  %470 = vmatprep.subr.mxu0 0.0
  %471 = vmatpush1.msra.mxu0 0.0
  %472 = vmatprep.subr.mxu0 0.0
  %473 = vmatpush1.msra.mxu0 0.0
  %474 = vmatprep.subr.mxu0 0.0
  %475 = vmatpush1.msra.mxu0 0.0
  %476 = vmatprep.subr.mxu0 0.0
  %477 = vmatpush1.msra.mxu0 0.0
  %478 = vmatprep.subr.mxu0 0.0
  %479 = vmatpush1.msra.mxu0 0.0
  %480 = vmatprep.subr.mxu0 0.0
  %481 = vmatpush1.msra.mxu0 0.0
  %482 = vmatprep.subr.mxu0 0.0
  %483 = vmatpush1.msra.mxu0 0.0
  %484 = vmatprep.subr.mxu0 0.0
  %485 = vmatpush1.msra.mxu0 0.0
  %486 = vmatprep.subr.mxu0 0.0
  %487 = vmatpush1.msra.mxu0 0.0
  %488 = vmatprep.mubr.f32.mxu0 0.0
  %489 = vmatmul.mubr.f32.gmra.mrb[0].mxu0 %v358
  %v490 = vpop.f32.mrb[0].mxu0
  %v491 = vadd.f32 0.0, %v490
  %v492 = vpop.f32.mrb[0].mxu0
  %v493 = vadd.f32 0.0, %v492
  %494 = vdwg.mxu0
  %495 = vmatprep.subr.mxu0 %v363
  %496 = vmatpush1.msra.mxu0 %v362
  %497 = vmatprep.subr.mxu0 %v367
  %498 = vmatpush1.msra.mxu0 %v366
  %499 = vmatprep.subr.mxu0 %v371
  %500 = vmatpush1.msra.mxu0 %v370
  %501 = vmatprep.subr.mxu0 %v375
  %502 = vmatpush1.msra.mxu0 %v374
  %503 = vmatprep.subr.mxu0 %v379
  %504 = vmatpush1.msra.mxu0 %v378
  %505 = vmatprep.subr.mxu0 %v383
  %506 = vmatpush1.msra.mxu0 %v382
  %507 = vmatprep.subr.mxu0 %v387
  %508 = vmatpush1.msra.mxu0 %v386
  %509 = vmatprep.subr.mxu0 %v391
  %510 = vmatpush1.msra.mxu0 %v390
  %511 = vmatprep.subr.mxu0 %v395
  %512 = vmatpush1.msra.mxu0 %v394
  %513 = vmatprep.subr.mxu0 %v399
  %514 = vmatpush1.msra.mxu0 %v398
  %515 = vmatprep.subr.mxu0 %v403
  %516 = vmatpush1.msra.mxu0 %v402
  %517 = vmatprep.subr.mxu0 %v407
  %518 = vmatpush1.msra.mxu0 %v406
  %519 = vmatprep.subr.mxu0 %v411
  %520 = vmatpush1.msra.mxu0 %v410
  %521 = vmatprep.subr.mxu0 %v415
  %522 = vmatpush1.msra.mxu0 %v414
  %523 = vmatprep.subr.mxu0 %v419
  %524 = vmatpush1.msra.mxu0 %v418
  %525 = vmatprep.subr.mxu0 %v423
  %526 = vmatpush1.msra.mxu0 %v422
  %527 = vmatprep.subr.mxu0 0.0
  %528 = vmatpush1.msra.mxu0 0.0
  %529 = vmatprep.subr.mxu0 0.0
  %530 = vmatpush1.msra.mxu0 0.0
  %531 = vmatprep.subr.mxu0 0.0
  %532 = vmatpush1.msra.mxu0 0.0
  %533 = vmatprep.subr.mxu0 0.0
  %534 = vmatpush1.msra.mxu0 0.0
  %535 = vmatprep.subr.mxu0 0.0
  %536 = vmatpush1.msra.mxu0 0.0
  %537 = vmatprep.subr.mxu0 0.0
  %538 = vmatpush1.msra.mxu0 0.0
  %539 = vmatprep.subr.mxu0 0.0
  %540 = vmatpush1.msra.mxu0 0.0
  %541 = vmatprep.subr.mxu0 0.0
  %542 = vmatpush1.msra.mxu0 0.0
  %543 = vmatprep.subr.mxu0 0.0
  %544 = vmatpush1.msra.mxu0 0.0
  %545 = vmatprep.subr.mxu0 0.0
  %546 = vmatpush1.msra.mxu0 0.0
  %547 = vmatprep.subr.mxu0 0.0
  %548 = vmatpush1.msra.mxu0 0.0
  %549 = vmatprep.subr.mxu0 0.0
  %550 = vmatpush1.msra.mxu0 0.0
  %551 = vmatprep.subr.mxu0 0.0
  %552 = vmatpush1.msra.mxu0 0.0
  %553 = vmatprep.subr.mxu0 0.0
  %554 = vmatpush1.msra.mxu0 0.0
  %555 = vmatprep.subr.mxu0 0.0
  %556 = vmatpush1.msra.mxu0 0.0
  %557 = vmatprep.subr.mxu0 0.0
  %558 = vmatpush1.msra.mxu0 0.0
  %559 = vmatprep.mubr.f32.mxu0 0.0
  %560 = vmatmul.mubr.f32.gmra.mrb[0].mxu0 %v358
  %v561 = vpop.f32.mrb[0].mxu0
  %v562 = vadd.f32 0.0, %v561
  %v563 = vpop.f32.mrb[0].mxu0
  %v564 = vadd.f32 0.0, %v563
  %565 = vdwg.mxu0
  %v566 = vadd.f32 %v199, %v491
  %v567 = vadd.f32 %v201, %v493
  %v568 = vadd.f32 %v312, %v562
  %v569 = vadd.f32 %v314, %v564
  %v570 = vxor.u32 %v566, 2147483648
  %v571 = vmul.f32 %v570, 1.442695
  %v572 = vpow.pop %v571
  %v573 = vadd.f32 %v572, 1.0
  %v574 = vrcp.pop %v573
  %v575 = vmul.f32 1.0, %v574
  %v576 = vxor.u32 %v567, 2147483648
  %v577 = vmul.f32 %v576, 1.442695
  %v578 = vpow.pop %v577
  %v579 = vadd.f32 %v578, 1.0
  %v580 = vrcp.pop %v579
  %v581 = vmul.f32 1.0, %v580
  %v582 = vtanh.pop %v568
  %v583 = vxor.u32 %v569, 2147483648
  %v584 = vmul.f32 %v583, 1.442695
  %v585 = vpow.pop %v584
  %v586 = vadd.f32 %v585, 1.0
  %v587 = vrcp.pop %v586
  %v588 = vmul.f32 1.0, %v587
  %v589 = vmul.f32 %v581, %v359
  %v590 = vmul.f32 %v575, %v582
  %v591 = vadd.f32 %v589, %v590
  %v592 = vtanh.pop %v591
  %v593 = vmul.f32 %v588, %v592
  %594 = vmatprep.subr.mxu0 %v361
  %595 = vmatpush1.msra.mxu0 %v360
  %596 = vmatprep.subr.mxu0 %v365
  %597 = vmatpush1.msra.mxu0 %v364
  %598 = vmatprep.subr.mxu0 %v369
  %599 = vmatpush1.msra.mxu0 %v368
  %600 = vmatprep.subr.mxu0 %v373
  %601 = vmatpush1.msra.mxu0 %v372
  %602 = vmatprep.subr.mxu0 %v377
  %603 = vmatpush1.msra.mxu0 %v376
  %604 = vmatprep.subr.mxu0 %v381
  %605 = vmatpush1.msra.mxu0 %v380
  %606 = vmatprep.subr.mxu0 %v385
  %607 = vmatpush1.msra.mxu0 %v384
  %608 = vmatprep.subr.mxu0 %v389
  %609 = vmatpush1.msra.mxu0 %v388
  %610 = vmatprep.subr.mxu0 %v393
  %611 = vmatpush1.msra.mxu0 %v392
  %612 = vmatprep.subr.mxu0 %v397
  %613 = vmatpush1.msra.mxu0 %v396
  %614 = vmatprep.subr.mxu0 %v401
  %615 = vmatpush1.msra.mxu0 %v400
  %616 = vmatprep.subr.mxu0 %v405
  %617 = vmatpush1.msra.mxu0 %v404
  %618 = vmatprep.subr.mxu0 %v409
  %619 = vmatpush1.msra.mxu0 %v408
  %620 = vmatprep.subr.mxu0 %v413
  %621 = vmatpush1.msra.mxu0 %v412
  %622 = vmatprep.subr.mxu0 %v417
  %623 = vmatpush1.msra.mxu0 %v416
  %624 = vmatprep.subr.mxu0 %v421
  %625 = vmatpush1.msra.mxu0 %v420
  %626 = vmatprep.subr.mxu0 0.0
  %627 = vmatpush1.msra.mxu0 0.0
  %628 = vmatprep.subr.mxu0 0.0
  %629 = vmatpush1.msra.mxu0 0.0
  %630 = vmatprep.subr.mxu0 0.0
  %631 = vmatpush1.msra.mxu0 0.0
  %632 = vmatprep.subr.mxu0 0.0
  %633 = vmatpush1.msra.mxu0 0.0
  %634 = vmatprep.subr.mxu0 0.0
  %635 = vmatpush1.msra.mxu0 0.0
  %636 = vmatprep.subr.mxu0 0.0
  %637 = vmatpush1.msra.mxu0 0.0
  %638 = vmatprep.subr.mxu0 0.0
  %639 = vmatpush1.msra.mxu0 0.0
  %640 = vmatprep.subr.mxu0 0.0
  %641 = vmatpush1.msra.mxu0 0.0
  %642 = vmatprep.subr.mxu0 0.0
  %643 = vmatpush1.msra.mxu0 0.0
  %644 = vmatprep.subr.mxu0 0.0
  %645 = vmatpush1.msra.mxu0 0.0
  %646 = vmatprep.subr.mxu0 0.0
  %647 = vmatpush1.msra.mxu0 0.0
  %648 = vmatprep.subr.mxu0 0.0
  %649 = vmatpush1.msra.mxu0 0.0
  %650 = vmatprep.subr.mxu0 0.0
  %651 = vmatpush1.msra.mxu0 0.0
  %652 = vmatprep.subr.mxu0 0.0
  %653 = vmatpush1.msra.mxu0 0.0
  %654 = vmatprep.subr.mxu0 0.0
  %655 = vmatpush1.msra.mxu0 0.0
  %656 = vmatprep.subr.mxu0 0.0
  %657 = vmatpush1.msra.mxu0 0.0
  %658 = vmatprep.mubr.f32.mxu0 0.0
  %659 = vmatmul.mubr.f32.gmra.mrb[0].mxu0 %v593
  %v660 = vpop.f32.mrb[0].mxu0
  %v661 = vadd.f32 0.0, %v660
  %v662 = vpop.f32.mrb[0].mxu0
  %v663 = vadd.f32 0.0, %v662
  %664 = vdwg.mxu0
  %665 = vmatprep.subr.mxu0 %v363
  %666 = vmatpush1.msra.mxu0 %v362
  %667 = vmatprep.subr.mxu0 %v367
  %668 = vmatpush1.msra.mxu0 %v366
  %669 = vmatprep.subr.mxu0 %v371
  %670 = vmatpush1.msra.mxu0 %v370
  %671 = vmatprep.subr.mxu0 %v375
  %672 = vmatpush1.msra.mxu0 %v374
  %673 = vmatprep.subr.mxu0 %v379
  %674 = vmatpush1.msra.mxu0 %v378
  %675 = vmatprep.subr.mxu0 %v383
  %676 = vmatpush1.msra.mxu0 %v382
  %677 = vmatprep.subr.mxu0 %v387
  %678 = vmatpush1.msra.mxu0 %v386
  %679 = vmatprep.subr.mxu0 %v391
  %680 = vmatpush1.msra.mxu0 %v390
  %681 = vmatprep.subr.mxu0 %v395
  %682 = vmatpush1.msra.mxu0 %v394
  %683 = vmatprep.subr.mxu0 %v399
  %684 = vmatpush1.msra.mxu0 %v398
  %685 = vmatprep.subr.mxu0 %v403
  %686 = vmatpush1.msra.mxu0 %v402
  %687 = vmatprep.subr.mxu0 %v407
  %688 = vmatpush1.msra.mxu0 %v406
  %689 = vmatprep.subr.mxu0 %v411
  %690 = vmatpush1.msra.mxu0 %v410
  %691 = vmatprep.subr.mxu0 %v415
  %692 = vmatpush1.msra.mxu0 %v414
  %693 = vmatprep.subr.mxu0 %v419
  %694 = vmatpush1.msra.mxu0 %v418
  %695 = vmatprep.subr.mxu0 %v423
  %696 = vmatpush1.msra.mxu0 %v422
  %697 = vmatprep.subr.mxu0 0.0
  %698 = vmatpush1.msra.mxu0 0.0
  %699 = vmatprep.subr.mxu0 0.0
  %700 = vmatpush1.msra.mxu0 0.0
  %701 = vmatprep.subr.mxu0 0.0
  %702 = vmatpush1.msra.mxu0 0.0
  %703 = vmatprep.subr.mxu0 0.0
  %704 = vmatpush1.msra.mxu0 0.0
  %705 = vmatprep.subr.mxu0 0.0
  %706 = vmatpush1.msra.mxu0 0.0
  %707 = vmatprep.subr.mxu0 0.0
  %708 = vmatpush1.msra.mxu0 0.0
  %709 = vmatprep.subr.mxu0 0.0
  %710 = vmatpush1.msra.mxu0 0.0
  %711 = vmatprep.subr.mxu0 0.0
  %712 = vmatpush1.msra.mxu0 0.0
  %713 = vmatprep.subr.mxu0 0.0
  %714 = vmatpush1.msra.mxu0 0.0
  %715 = vmatprep.subr.mxu0 0.0
  %716 = vmatpush1.msra.mxu0 0.0
  %717 = vmatprep.subr.mxu0 0.0
  %718 = vmatpush1.msra.mxu0 0.0
  %719 = vmatprep.subr.mxu0 0.0
  %720 = vmatpush1.msra.mxu0 0.0
  %721 = vmatprep.subr.mxu0 0.0
  %722 = vmatpush1.msra.mxu0 0.0
  %723 = vmatprep.subr.mxu0 0.0
  %724 = vmatpush1.msra.mxu0 0.0
  %725 = vmatprep.subr.mxu0 0.0
  %726 = vmatpush1.msra.mxu0 0.0
  %727 = vmatprep.subr.mxu0 0.0
  %728 = vmatpush1.msra.mxu0 0.0
  %729 = vmatprep.mubr.f32.mxu0 0.0
  %730 = vmatmul.mubr.f32.gmra.mrb[0].mxu0 %v593
  %v731 = vpop.f32.mrb[0].mxu0
  %v732 = vadd.f32 0.0, %v731
  %v733 = vpop.f32.mrb[0].mxu0
  %v734 = vadd.f32 0.0, %v733
  %735 = vdwg.mxu0
  %v736 = vadd.f32 %v205, %v661
  %v737 = vadd.f32 %v207, %v663
  %v738 = vadd.f32 %v318, %v732
  %v739 = vadd.f32 %v320, %v734
  %v740 = vxor.u32 %v736, 2147483648
  %v741 = vmul.f32 %v740, 1.442695
  %v742 = vpow.pop %v741
  %v743 = vadd.f32 %v742, 1.0
  %v744 = vrcp.pop %v743
  %v745 = vmul.f32 1.0, %v744
  %v746 = vxor.u32 %v737, 2147483648
  %v747 = vmul.f32 %v746, 1.442695
  %v748 = vpow.pop %v747
  %v749 = vadd.f32 %v748, 1.0
  %v750 = vrcp.pop %v749
  %v751 = vmul.f32 1.0, %v750
  %v752 = vtanh.pop %v738
  %v753 = vxor.u32 %v739, 2147483648
  %v754 = vmul.f32 %v753, 1.442695
  %v755 = vpow.pop %v754
  %v756 = vadd.f32 %v755, 1.0
  %v757 = vrcp.pop %v756
  %v758 = vmul.f32 1.0, %v757
  %v759 = vmul.f32 %v751, %v591
  %v760 = vmul.f32 %v745, %v752
  %v761 = vadd.f32 %v759, %v760
  %v762 = vtanh.pop %v761
  %v763 = vmul.f32 %v758, %v762
  %764 = vmatprep.subr.mxu0 %v361
  %765 = vmatpush1.msra.mxu0 %v360
  %766 = vmatprep.subr.mxu0 %v365
  %767 = vmatpush1.msra.mxu0 %v364
  %768 = vmatprep.subr.mxu0 %v369
  %769 = vmatpush1.msra.mxu0 %v368
  %770 = vmatprep.subr.mxu0 %v373
  %771 = vmatpush1.msra.mxu0 %v372
  %772 = vmatprep.subr.mxu0 %v377
  %773 = vmatpush1.msra.mxu0 %v376
  %774 = vmatprep.subr.mxu0 %v381
  %775 = vmatpush1.msra.mxu0 %v380
  %776 = vmatprep.subr.mxu0 %v385
  %777 = vmatpush1.msra.mxu0 %v384
  %778 = vmatprep.subr.mxu0 %v389
  %779 = vmatpush1.msra.mxu0 %v388
  %780 = vmatprep.subr.mxu0 %v393
  %781 = vmatpush1.msra.mxu0 %v392
  %782 = vmatprep.subr.mxu0 %v397
  %783 = vmatpush1.msra.mxu0 %v396
  %784 = vmatprep.subr.mxu0 %v401
  %785 = vmatpush1.msra.mxu0 %v400
  %786 = vmatprep.subr.mxu0 %v405
  %787 = vmatpush1.msra.mxu0 %v404
  %788 = vmatprep.subr.mxu0 %v409
  %789 = vmatpush1.msra.mxu0 %v408
  %790 = vmatprep.subr.mxu0 %v413
  %791 = vmatpush1.msra.mxu0 %v412
  %792 = vmatprep.subr.mxu0 %v417
  %793 = vmatpush1.msra.mxu0 %v416
  %794 = vmatprep.subr.mxu0 %v421
  %795 = vmatpush1.msra.mxu0 %v420
  %796 = vmatprep.subr.mxu0 0.0
  %797 = vmatpush1.msra.mxu0 0.0
  %798 = vmatprep.subr.mxu0 0.0
  %799 = vmatpush1.msra.mxu0 0.0
  %800 = vmatprep.subr.mxu0 0.0
  %801 = vmatpush1.msra.mxu0 0.0
  %802 = vmatprep.subr.mxu0 0.0
  %803 = vmatpush1.msra.mxu0 0.0
  %804 = vmatprep.subr.mxu0 0.0
  %805 = vmatpush1.msra.mxu0 0.0
  %806 = vmatprep.subr.mxu0 0.0
  %807 = vmatpush1.msra.mxu0 0.0
  %808 = vmatprep.subr.mxu0 0.0
  %809 = vmatpush1.msra.mxu0 0.0
  %810 = vmatprep.subr.mxu0 0.0
  %811 = vmatpush1.msra.mxu0 0.0
  %812 = vmatprep.subr.mxu0 0.0
  %813 = vmatpush1.msra.mxu0 0.0
  %814 = vmatprep.subr.mxu0 0.0
  %815 = vmatpush1.msra.mxu0 0.0
  %816 = vmatprep.subr.mxu0 0.0
  %817 = vmatpush1.msra.mxu0 0.0
  %818 = vmatprep.subr.mxu0 0.0
  %819 = vmatpush1.msra.mxu0 0.0
  %820 = vmatprep.subr.mxu0 0.0
  %821 = vmatpush1.msra.mxu0 0.0
  %822 = vmatprep.subr.mxu0 0.0
  %823 = vmatpush1.msra.mxu0 0.0
  %824 = vmatprep.subr.mxu0 0.0
  %825 = vmatpush1.msra.mxu0 0.0
  %826 = vmatprep.subr.mxu0 0.0
  %827 = vmatpush1.msra.mxu0 0.0
  %828 = vmatprep.mubr.f32.mxu0 0.0
  %829 = vmatmul.mubr.f32.gmra.mrb[0].mxu0 %v763
  %v830 = vpop.f32.mrb[0].mxu0
  %v831 = vadd.f32 0.0, %v830
  %v832 = vpop.f32.mrb[0].mxu0
  %v833 = vadd.f32 0.0, %v832
  %834 = vdwg.mxu0
  %835 = vmatprep.subr.mxu0 %v363
  %836 = vmatpush1.msra.mxu0 %v362
  %837 = vmatprep.subr.mxu0 %v367
  %838 = vmatpush1.msra.mxu0 %v366
  %839 = vmatprep.subr.mxu0 %v371
  %840 = vmatpush1.msra.mxu0 %v370
  %841 = vmatprep.subr.mxu0 %v375
  %842 = vmatpush1.msra.mxu0 %v374
  %843 = vmatprep.subr.mxu0 %v379
  %844 = vmatpush1.msra.mxu0 %v378
  %845 = vmatprep.subr.mxu0 %v383
  %846 = vmatpush1.msra.mxu0 %v382
  %847 = vmatprep.subr.mxu0 %v387
  %848 = vmatpush1.msra.mxu0 %v386
  %849 = vmatprep.subr.mxu0 %v391
  %850 = vmatpush1.msra.mxu0 %v390
  %851 = vmatprep.subr.mxu0 %v395
  %852 = vmatpush1.msra.mxu0 %v394
  %853 = vmatprep.subr.mxu0 %v399
  %854 = vmatpush1.msra.mxu0 %v398
  %855 = vmatprep.subr.mxu0 %v403
  %856 = vmatpush1.msra.mxu0 %v402
  %857 = vmatprep.subr.mxu0 %v407
  %858 = vmatpush1.msra.mxu0 %v406
  %859 = vmatprep.subr.mxu0 %v411
  %860 = vmatpush1.msra.mxu0 %v410
  %861 = vmatprep.subr.mxu0 %v415
  %862 = vmatpush1.msra.mxu0 %v414
  %863 = vmatprep.subr.mxu0 %v419
  %864 = vmatpush1.msra.mxu0 %v418
  %865 = vmatprep.subr.mxu0 %v423
  %866 = vmatpush1.msra.mxu0 %v422
  %867 = vmatprep.subr.mxu0 0.0
  %868 = vmatpush1.msra.mxu0 0.0
  %869 = vmatprep.subr.mxu0 0.0
  %870 = vmatpush1.msra.mxu0 0.0
  %871 = vmatprep.subr.mxu0 0.0
  %872 = vmatpush1.msra.mxu0 0.0
  %873 = vmatprep.subr.mxu0 0.0
  %874 = vmatpush1.msra.mxu0 0.0
  %875 = vmatprep.subr.mxu0 0.0
  %876 = vmatpush1.msra.mxu0 0.0
  %877 = vmatprep.subr.mxu0 0.0
  %878 = vmatpush1.msra.mxu0 0.0
  %879 = vmatprep.subr.mxu0 0.0
  %880 = vmatpush1.msra.mxu0 0.0
  %881 = vmatprep.subr.mxu0 0.0
  %882 = vmatpush1.msra.mxu0 0.0
  %883 = vmatprep.subr.mxu0 0.0
  %884 = vmatpush1.msra.mxu0 0.0
  %885 = vmatprep.subr.mxu0 0.0
  %886 = vmatpush1.msra.mxu0 0.0
  %887 = vmatprep.subr.mxu0 0.0
  %888 = vmatpush1.msra.mxu0 0.0
  %889 = vmatprep.subr.mxu0 0.0
  %890 = vmatpush1.msra.mxu0 0.0
  %891 = vmatprep.subr.mxu0 0.0
  %892 = vmatpush1.msra.mxu0 0.0
  %893 = vmatprep.subr.mxu0 0.0
  %894 = vmatpush1.msra.mxu0 0.0
  %895 = vmatprep.subr.mxu0 0.0
  %896 = vmatpush1.msra.mxu0 0.0
  %897 = vmatprep.subr.mxu0 0.0
  %898 = vmatpush1.msra.mxu0 0.0
  %899 = vmatprep.mubr.f32.mxu0 0.0
  %900 = vmatmul.mubr.f32.gmra.mrb[0].mxu0 %v763
  %v901 = vpop.f32.mrb[0].mxu0
  %v902 = vadd.f32 0.0, %v901
  %v903 = vpop.f32.mrb[0].mxu0
  %v904 = vadd.f32 0.0, %v903
  %905 = vdwg.mxu0
  %v906 = vadd.f32 %v211, %v831
  %v907 = vadd.f32 %v213, %v833
  %v908 = vadd.f32 %v324, %v902
  %v909 = vadd.f32 %v326, %v904
  %v910 = vxor.u32 %v906, 2147483648
  %v911 = vmul.f32 %v910, 1.442695
  %v912 = vpow.pop %v911
  %v913 = vadd.f32 %v912, 1.0
  %v914 = vrcp.pop %v913
  %v915 = vmul.f32 1.0, %v914
  %v916 = vxor.u32 %v907, 2147483648
  %v917 = vmul.f32 %v916, 1.442695
  %v918 = vpow.pop %v917
  %v919 = vadd.f32 %v918, 1.0
  %v920 = vrcp.pop %v919
  %v921 = vmul.f32 1.0, %v920
  %v922 = vtanh.pop %v908
  %v923 = vxor.u32 %v909, 2147483648
  %v924 = vmul.f32 %v923, 1.442695
  %v925 = vpow.pop %v924
  %v926 = vadd.f32 %v925, 1.0
  %v927 = vrcp.pop %v926
  %v928 = vmul.f32 1.0, %v927
  %v929 = vmul.f32 %v921, %v761
  %v930 = vmul.f32 %v915, %v922
  %v931 = vadd.f32 %v929, %v930
  %v932 = vtanh.pop %v931
  %v933 = vmul.f32 %v928, %v932
  %934 = vmatprep.subr.mxu0 %v361
  %935 = vmatpush1.msra.mxu0 %v360
  %936 = vmatprep.subr.mxu0 %v365
  %937 = vmatpush1.msra.mxu0 %v364
  %938 = vmatprep.subr.mxu0 %v369
  %939 = vmatpush1.msra.mxu0 %v368
  %940 = vmatprep.subr.mxu0 %v373
  %941 = vmatpush1.msra.mxu0 %v372
  %942 = vmatprep.subr.mxu0 %v377
  %943 = vmatpush1.msra.mxu0 %v376
  %944 = vmatprep.subr.mxu0 %v381
  %945 = vmatpush1.msra.mxu0 %v380
  %946 = vmatprep.subr.mxu0 %v385
  %947 = vmatpush1.msra.mxu0 %v384
  %948 = vmatprep.subr.mxu0 %v389
  %949 = vmatpush1.msra.mxu0 %v388
  %950 = vmatprep.subr.mxu0 %v393
  %951 = vmatpush1.msra.mxu0 %v392
  %952 = vmatprep.subr.mxu0 %v397
  %953 = vmatpush1.msra.mxu0 %v396
  %954 = vmatprep.subr.mxu0 %v401
  %955 = vmatpush1.msra.mxu0 %v400
  %956 = vmatprep.subr.mxu0 %v405
  %957 = vmatpush1.msra.mxu0 %v404
  %958 = vmatprep.subr.mxu0 %v409
  %959 = vmatpush1.msra.mxu0 %v408
  %960 = vmatprep.subr.mxu0 %v413
  %961 = vmatpush1.msra.mxu0 %v412
  %962 = vmatprep.subr.mxu0 %v417
  %963 = vmatpush1.msra.mxu0 %v416
  %964 = vmatprep.subr.mxu0 %v421
  %965 = vmatpush1.msra.mxu0 %v420
  %966 = vmatprep.subr.mxu0 0.0
  %967 = vmatpush1.msra.mxu0 0.0
  %968 = vmatprep.subr.mxu0 0.0
  %969 = vmatpush1.msra.mxu0 0.0
  %970 = vmatprep.subr.mxu0 0.0
  %971 = vmatpush1.msra.mxu0 0.0
  %972 = vmatprep.subr.mxu0 0.0
  %973 = vmatpush1.msra.mxu0 0.0
  %974 = vmatprep.subr.mxu0 0.0
  %975 = vmatpush1.msra.mxu0 0.0
  %976 = vmatprep.subr.mxu0 0.0
  %977 = vmatpush1.msra.mxu0 0.0
  %978 = vmatprep.subr.mxu0 0.0
  %979 = vmatpush1.msra.mxu0 0.0
  %980 = vmatprep.subr.mxu0 0.0
  %981 = vmatpush1.msra.mxu0 0.0
  %982 = vmatprep.subr.mxu0 0.0
  %983 = vmatpush1.msra.mxu0 0.0
  %984 = vmatprep.subr.mxu0 0.0
  %985 = vmatpush1.msra.mxu0 0.0
  %986 = vmatprep.subr.mxu0 0.0
  %987 = vmatpush1.msra.mxu0 0.0
  %988 = vmatprep.subr.mxu0 0.0
  %989 = vmatpush1.msra.mxu0 0.0
  %990 = vmatprep.subr.mxu0 0.0
  %991 = vmatpush1.msra.mxu0 0.0
  %992 = vmatprep.subr.mxu0 0.0
  %993 = vmatpush1.msra.mxu0 0.0
  %994 = vmatprep.subr.mxu0 0.0
  %995 = vmatpush1.msra.mxu0 0.0
  %996 = vmatprep.subr.mxu0 0.0
  %997 = vmatpush1.msra.mxu0 0.0
  %998 = vmatprep.mubr.f32.mxu0 0.0
  %999 = vmatmul.mubr.f32.gmra.mrb[0].mxu0 %v933
  %v1000 = vpop.f32.mrb[0].mxu0
  %v1001 = vadd.f32 0.0, %v1000
  %v1002 = vpop.f32.mrb[0].mxu0
  %v1003 = vadd.f32 0.0, %v1002
  %1004 = vdwg.mxu0
  %1005 = vmatprep.subr.mxu0 %v363
  %1006 = vmatpush1.msra.mxu0 %v362
  %1007 = vmatprep.subr.mxu0 %v367
  %1008 = vmatpush1.msra.mxu0 %v366
  %1009 = vmatprep.subr.mxu0 %v371
  %1010 = vmatpush1.msra.mxu0 %v370
  %1011 = vmatprep.subr.mxu0 %v375
  %1012 = vmatpush1.msra.mxu0 %v374
  %1013 = vmatprep.subr.mxu0 %v379
  %1014 = vmatpush1.msra.mxu0 %v378
  %1015 = vmatprep.subr.mxu0 %v383
  %1016 = vmatpush1.msra.mxu0 %v382
  %1017 = vmatprep.subr.mxu0 %v387
  %1018 = vmatpush1.msra.mxu0 %v386
  %1019 = vmatprep.subr.mxu0 %v391
  %1020 = vmatpush1.msra.mxu0 %v390
  %1021 = vmatprep.subr.mxu0 %v395
  %1022 = vmatpush1.msra.mxu0 %v394
  %1023 = vmatprep.subr.mxu0 %v399
  %1024 = vmatpush1.msra.mxu0 %v398
  %1025 = vmatprep.subr.mxu0 %v403
  %1026 = vmatpush1.msra.mxu0 %v402
  %1027 = vmatprep.subr.mxu0 %v407
  %1028 = vmatpush1.msra.mxu0 %v406
  %1029 = vmatprep.subr.mxu0 %v411
  %1030 = vmatpush1.msra.mxu0 %v410
  %1031 = vmatprep.subr.mxu0 %v415
  %1032 = vmatpush1.msra.mxu0 %v414
  %1033 = vmatprep.subr.mxu0 %v419
  %1034 = vmatpush1.msra.mxu0 %v418
  %1035 = vmatprep.subr.mxu0 %v423
  %1036 = vmatpush1.msra.mxu0 %v422
  %1037 = vmatprep.subr.mxu0 0.0
  %1038 = vmatpush1.msra.mxu0 0.0
  %1039 = vmatprep.subr.mxu0 0.0
  %1040 = vmatpush1.msra.mxu0 0.0
  %1041 = vmatprep.subr.mxu0 0.0
  %1042 = vmatpush1.msra.mxu0 0.0
  %1043 = vmatprep.subr.mxu0 0.0
  %1044 = vmatpush1.msra.mxu0 0.0
  %1045 = vmatprep.subr.mxu0 0.0
  %1046 = vmatpush1.msra.mxu0 0.0
  %1047 = vmatprep.subr.mxu0 0.0
  %1048 = vmatpush1.msra.mxu0 0.0
  %1049 = vmatprep.subr.mxu0 0.0
  %1050 = vmatpush1.msra.mxu0 0.0
  %1051 = vmatprep.subr.mxu0 0.0
  %1052 = vmatpush1.msra.mxu0 0.0
  %1053 = vmatprep.subr.mxu0 0.0
  %1054 = vmatpush1.msra.mxu0 0.0
  %1055 = vmatprep.subr.mxu0 0.0
  %1056 = vmatpush1.msra.mxu0 0.0
  %1057 = vmatprep.subr.mxu0 0.0
  %1058 = vmatpush1.msra.mxu0 0.0
  %1059 = vmatprep.subr.mxu0 0.0
  %1060 = vmatpush1.msra.mxu0 0.0
  %1061 = vmatprep.subr.mxu0 0.0
  %1062 = vmatpush1.msra.mxu0 0.0
  %1063 = vmatprep.subr.mxu0 0.0
  %1064 = vmatpush1.msra.mxu0 0.0
  %1065 = vmatprep.subr.mxu0 0.0
  %1066 = vmatpush1.msra.mxu0 0.0
  %1067 = vmatprep.subr.mxu0 0.0
  %1068 = vmatpush1.msra.mxu0 0.0
  %1069 = vmatprep.mubr.f32.mxu0 0.0
  %1070 = vmatmul.mubr.f32.gmra.mrb[0].mxu0 %v933
  %v1071 = vpop.f32.mrb[0].mxu0
  %v1072 = vadd.f32 0.0, %v1071
  %v1073 = vpop.f32.mrb[0].mxu0
  %v1074 = vadd.f32 0.0, %v1073
  %1075 = vdwg.mxu0
  %v1076 = vadd.f32 %v217, %v1001
  %v1077 = vadd.f32 %v219, %v1003
  %v1078 = vadd.f32 %v330, %v1072
  %v1079 = vadd.f32 %v332, %v1074
  %v1080 = vxor.u32 %v1076, 2147483648
  %v1081 = vmul.f32 %v1080, 1.442695
  %v1082 = vpow.pop %v1081
  %v1083 = vadd.f32 %v1082, 1.0
  %v1084 = vrcp.pop %v1083
  %v1085 = vmul.f32 1.0, %v1084
  %v1086 = vxor.u32 %v1077, 2147483648
  %v1087 = vmul.f32 %v1086, 1.442695
  %v1088 = vpow.pop %v1087
  %v1089 = vadd.f32 %v1088, 1.0
  %v1090 = vrcp.pop %v1089
  %v1091 = vmul.f32 1.0, %v1090
  %v1092 = vtanh.pop %v1078
  %v1093 = vxor.u32 %v1079, 2147483648
  %v1094 = vmul.f32 %v1093, 1.442695
  %v1095 = vpow.pop %v1094
  %v1096 = vadd.f32 %v1095, 1.0
  %v1097 = vrcp.pop %v1096
  %v1098 = vmul.f32 1.0, %v1097
  %v1099 = vmul.f32 %v1091, %v931
  %v1100 = vmul.f32 %v1085, %v1092
  %v1101 = vadd.f32 %v1099, %v1100
  %v1102 = vtanh.pop %v1101
  %v1103 = vmul.f32 %v1098, %v1102
  %1104 = vmatprep.subr.mxu0 %v361
  %1105 = vmatpush1.msra.mxu0 %v360
  %1106 = vmatprep.subr.mxu0 %v365
  %1107 = vmatpush1.msra.mxu0 %v364
  %1108 = vmatprep.subr.mxu0 %v369
  %1109 = vmatpush1.msra.mxu0 %v368
  %1110 = vmatprep.subr.mxu0 %v373
  %1111 = vmatpush1.msra.mxu0 %v372
  %1112 = vmatprep.subr.mxu0 %v377
  %1113 = vmatpush1.msra.mxu0 %v376
  %1114 = vmatprep.subr.mxu0 %v381
  %1115 = vmatpush1.msra.mxu0 %v380
  %1116 = vmatprep.subr.mxu0 %v385
  %1117 = vmatpush1.msra.mxu0 %v384
  %1118 = vmatprep.subr.mxu0 %v389
  %1119 = vmatpush1.msra.mxu0 %v388
  %1120 = vmatprep.subr.mxu0 %v393
  %1121 = vmatpush1.msra.mxu0 %v392
  %1122 = vmatprep.subr.mxu0 %v397
  %1123 = vmatpush1.msra.mxu0 %v396
  %1124 = vmatprep.subr.mxu0 %v401
  %1125 = vmatpush1.msra.mxu0 %v400
  %1126 = vmatprep.subr.mxu0 %v405
  %1127 = vmatpush1.msra.mxu0 %v404
  %1128 = vmatprep.subr.mxu0 %v409
  %1129 = vmatpush1.msra.mxu0 %v408
  %1130 = vmatprep.subr.mxu0 %v413
  %1131 = vmatpush1.msra.mxu0 %v412
  %1132 = vmatprep.subr.mxu0 %v417
  %1133 = vmatpush1.msra.mxu0 %v416
  %1134 = vmatprep.subr.mxu0 %v421
  %1135 = vmatpush1.msra.mxu0 %v420
  %1136 = vmatprep.subr.mxu0 0.0
  %1137 = vmatpush1.msra.mxu0 0.0
  %1138 = vmatprep.subr.mxu0 0.0
  %1139 = vmatpush1.msra.mxu0 0.0
  %1140 = vmatprep.subr.mxu0 0.0
  %1141 = vmatpush1.msra.mxu0 0.0
  %1142 = vmatprep.subr.mxu0 0.0
  %1143 = vmatpush1.msra.mxu0 0.0
  %1144 = vmatprep.subr.mxu0 0.0
  %1145 = vmatpush1.msra.mxu0 0.0
  %1146 = vmatprep.subr.mxu0 0.0
  %1147 = vmatpush1.msra.mxu0 0.0
  %1148 = vmatprep.subr.mxu0 0.0
  %1149 = vmatpush1.msra.mxu0 0.0
  %1150 = vmatprep.subr.mxu0 0.0
  %1151 = vmatpush1.msra.mxu0 0.0
  %1152 = vmatprep.subr.mxu0 0.0
  %1153 = vmatpush1.msra.mxu0 0.0
  %1154 = vmatprep.subr.mxu0 0.0
  %1155 = vmatpush1.msra.mxu0 0.0
  %1156 = vmatprep.subr.mxu0 0.0
  %1157 = vmatpush1.msra.mxu0 0.0
  %1158 = vmatprep.subr.mxu0 0.0
  %1159 = vmatpush1.msra.mxu0 0.0
  %1160 = vmatprep.subr.mxu0 0.0
  %1161 = vmatpush1.msra.mxu0 0.0
  %1162 = vmatprep.subr.mxu0 0.0
  %1163 = vmatpush1.msra.mxu0 0.0
  %1164 = vmatprep.subr.mxu0 0.0
  %1165 = vmatpush1.msra.mxu0 0.0
  %1166 = vmatprep.subr.mxu0 0.0
  %1167 = vmatpush1.msra.mxu0 0.0
  %1168 = vmatprep.mubr.f32.mxu0 0.0
  %1169 = vmatmul.mubr.f32.gmra.mrb[0].mxu0 %v1103
  %v1170 = vpop.f32.mrb[0].mxu0
  %v1171 = vadd.f32 0.0, %v1170
  %v1172 = vpop.f32.mrb[0].mxu0
  %v1173 = vadd.f32 0.0, %v1172
  %1174 = vdwg.mxu0
  %1175 = vmatprep.subr.mxu0 %v363
  %1176 = vmatpush1.msra.mxu0 %v362
  %1177 = vmatprep.subr.mxu0 %v367
  %1178 = vmatpush1.msra.mxu0 %v366
  %1179 = vmatprep.subr.mxu0 %v371
  %1180 = vmatpush1.msra.mxu0 %v370
  %1181 = vmatprep.subr.mxu0 %v375
  %1182 = vmatpush1.msra.mxu0 %v374
  %1183 = vmatprep.subr.mxu0 %v379
  %1184 = vmatpush1.msra.mxu0 %v378
  %1185 = vmatprep.subr.mxu0 %v383
  %1186 = vmatpush1.msra.mxu0 %v382
  %1187 = vmatprep.subr.mxu0 %v387
  %1188 = vmatpush1.msra.mxu0 %v386
  %1189 = vmatprep.subr.mxu0 %v391
  %1190 = vmatpush1.msra.mxu0 %v390
  %1191 = vmatprep.subr.mxu0 %v395
  %1192 = vmatpush1.msra.mxu0 %v394
  %1193 = vmatprep.subr.mxu0 %v399
  %1194 = vmatpush1.msra.mxu0 %v398
  %1195 = vmatprep.subr.mxu0 %v403
  %1196 = vmatpush1.msra.mxu0 %v402
  %1197 = vmatprep.subr.mxu0 %v407
  %1198 = vmatpush1.msra.mxu0 %v406
  %1199 = vmatprep.subr.mxu0 %v411
  %1200 = vmatpush1.msra.mxu0 %v410
  %1201 = vmatprep.subr.mxu0 %v415
  %1202 = vmatpush1.msra.mxu0 %v414
  %1203 = vmatprep.subr.mxu0 %v419
  %1204 = vmatpush1.msra.mxu0 %v418
  %1205 = vmatprep.subr.mxu0 %v423
  %1206 = vmatpush1.msra.mxu0 %v422
  %1207 = vmatprep.subr.mxu0 0.0
  %1208 = vmatpush1.msra.mxu0 0.0
  %1209 = vmatprep.subr.mxu0 0.0
  %1210 = vmatpush1.msra.mxu0 0.0
  %1211 = vmatprep.subr.mxu0 0.0
  %1212 = vmatpush1.msra.mxu0 0.0
  %1213 = vmatprep.subr.mxu0 0.0
  %1214 = vmatpush1.msra.mxu0 0.0
  %1215 = vmatprep.subr.mxu0 0.0
  %1216 = vmatpush1.msra.mxu0 0.0
  %1217 = vmatprep.subr.mxu0 0.0
  %1218 = vmatpush1.msra.mxu0 0.0
  %1219 = vmatprep.subr.mxu0 0.0
  %1220 = vmatpush1.msra.mxu0 0.0
  %1221 = vmatprep.subr.mxu0 0.0
  %1222 = vmatpush1.msra.mxu0 0.0
  %1223 = vmatprep.subr.mxu0 0.0
  %1224 = vmatpush1.msra.mxu0 0.0
  %1225 = vmatprep.subr.mxu0 0.0
  %1226 = vmatpush1.msra.mxu0 0.0
  %1227 = vmatprep.subr.mxu0 0.0
  %1228 = vmatpush1.msra.mxu0 0.0
  %1229 = vmatprep.subr.mxu0 0.0
  %1230 = vmatpush1.msra.mxu0 0.0
  %1231 = vmatprep.subr.mxu0 0.0
  %1232 = vmatpush1.msra.mxu0 0.0
  %1233 = vmatprep.subr.mxu0 0.0
  %1234 = vmatpush1.msra.mxu0 0.0
  %1235 = vmatprep.subr.mxu0 0.0
  %1236 = vmatpush1.msra.mxu0 0.0
  %1237 = vmatprep.subr.mxu0 0.0
  %1238 = vmatpush1.msra.mxu0 0.0
  %1239 = vmatprep.mubr.f32.mxu0 0.0
  %1240 = vmatmul.mubr.f32.gmra.mrb[0].mxu0 %v1103
  %v1241 = vpop.f32.mrb[0].mxu0
  %v1242 = vadd.f32 0.0, %v1241
  %v1243 = vpop.f32.mrb[0].mxu0
  %v1244 = vadd.f32 0.0, %v1243
  %1245 = vdwg.mxu0
  %v1246 = vadd.f32 %v223, %v1171
  %v1247 = vadd.f32 %v225, %v1173
  %v1248 = vadd.f32 %v336, %v1242
  %v1249 = vadd.f32 %v338, %v1244
  %v1250 = vxor.u32 %v1246, 2147483648
  %v1251 = vmul.f32 %v1250, 1.442695
  %v1252 = vpow.pop %v1251
  %v1253 = vadd.f32 %v1252, 1.0
  %v1254 = vrcp.pop %v1253
  %v1255 = vmul.f32 1.0, %v1254
  %v1256 = vxor.u32 %v1247, 2147483648
  %v1257 = vmul.f32 %v1256, 1.442695
  %v1258 = vpow.pop %v1257
  %v1259 = vadd.f32 %v1258, 1.0
  %v1260 = vrcp.pop %v1259
  %v1261 = vmul.f32 1.0, %v1260
  %v1262 = vtanh.pop %v1248
  %v1263 = vxor.u32 %v1249, 2147483648
  %v1264 = vmul.f32 %v1263, 1.442695
  %v1265 = vpow.pop %v1264
  %v1266 = vadd.f32 %v1265, 1.0
  %v1267 = vrcp.pop %v1266
  %v1268 = vmul.f32 1.0, %v1267
  %v1269 = vmul.f32 %v1261, %v1101
  %v1270 = vmul.f32 %v1255, %v1262
  %v1271 = vadd.f32 %v1269, %v1270
  %v1272 = vtanh.pop %v1271
  %v1273 = vmul.f32 %v1268, %v1272
  %1274 = vmatprep.subr.mxu0 %v361
  %1275 = vmatpush1.msra.mxu0 %v360
  %1276 = vmatprep.subr.mxu0 %v365
  %1277 = vmatpush1.msra.mxu0 %v364
  %1278 = vmatprep.subr.mxu0 %v369
  %1279 = vmatpush1.msra.mxu0 %v368
  %1280 = vmatprep.subr.mxu0 %v373
  %1281 = vmatpush1.msra.mxu0 %v372
  %1282 = vmatprep.subr.mxu0 %v377
  %1283 = vmatpush1.msra.mxu0 %v376
  %1284 = vmatprep.subr.mxu0 %v381
  %1285 = vmatpush1.msra.mxu0 %v380
  %1286 = vmatprep.subr.mxu0 %v385
  %1287 = vmatpush1.msra.mxu0 %v384
  %1288 = vmatprep.subr.mxu0 %v389
  %1289 = vmatpush1.msra.mxu0 %v388
  %1290 = vmatprep.subr.mxu0 %v393
  %1291 = vmatpush1.msra.mxu0 %v392
  %1292 = vmatprep.subr.mxu0 %v397
  %1293 = vmatpush1.msra.mxu0 %v396
  %1294 = vmatprep.subr.mxu0 %v401
  %1295 = vmatpush1.msra.mxu0 %v400
  %1296 = vmatprep.subr.mxu0 %v405
  %1297 = vmatpush1.msra.mxu0 %v404
  %1298 = vmatprep.subr.mxu0 %v409
  %1299 = vmatpush1.msra.mxu0 %v408
  %1300 = vmatprep.subr.mxu0 %v413
  %1301 = vmatpush1.msra.mxu0 %v412
  %1302 = vmatprep.subr.mxu0 %v417
  %1303 = vmatpush1.msra.mxu0 %v416
  %1304 = vmatprep.subr.mxu0 %v421
  %1305 = vmatpush1.msra.mxu0 %v420
  %1306 = vmatprep.subr.mxu0 0.0
  %1307 = vmatpush1.msra.mxu0 0.0
  %1308 = vmatprep.subr.mxu0 0.0
  %1309 = vmatpush1.msra.mxu0 0.0
  %1310 = vmatprep.subr.mxu0 0.0
  %1311 = vmatpush1.msra.mxu0 0.0
  %1312 = vmatprep.subr.mxu0 0.0
  %1313 = vmatpush1.msra.mxu0 0.0
  %1314 = vmatprep.subr.mxu0 0.0
  %1315 = vmatpush1.msra.mxu0 0.0
  %1316 = vmatprep.subr.mxu0 0.0
  %1317 = vmatpush1.msra.mxu0 0.0
  %1318 = vmatprep.subr.mxu0 0.0
  %1319 = vmatpush1.msra.mxu0 0.0
  %1320 = vmatprep.subr.mxu0 0.0
  %1321 = vmatpush1.msra.mxu0 0.0
  %1322 = vmatprep.subr.mxu0 0.0
  %1323 = vmatpush1.msra.mxu0 0.0
  %1324 = vmatprep.subr.mxu0 0.0
  %1325 = vmatpush1.msra.mxu0 0.0
  %1326 = vmatprep.subr.mxu0 0.0
  %1327 = vmatpush1.msra.mxu0 0.0
  %1328 = vmatprep.subr.mxu0 0.0
  %1329 = vmatpush1.msra.mxu0 0.0
  %1330 = vmatprep.subr.mxu0 0.0
  %1331 = vmatpush1.msra.mxu0 0.0
  %1332 = vmatprep.subr.mxu0 0.0
  %1333 = vmatpush1.msra.mxu0 0.0
  %1334 = vmatprep.subr.mxu0 0.0
  %1335 = vmatpush1.msra.mxu0 0.0
  %1336 = vmatprep.subr.mxu0 0.0
  %1337 = vmatpush1.msra.mxu0 0.0
  %1338 = vmatprep.mubr.f32.mxu0 0.0
  %1339 = vmatmul.mubr.f32.gmra.mrb[0].mxu0 %v1273
  %v1340 = vpop.f32.mrb[0].mxu0
  %v1341 = vadd.f32 0.0, %v1340
  %v1342 = vpop.f32.mrb[0].mxu0
  %v1343 = vadd.f32 0.0, %v1342
  %1344 = vdwg.mxu0
  %1345 = vmatprep.subr.mxu0 %v363
  %1346 = vmatpush1.msra.mxu0 %v362
  %1347 = vmatprep.subr.mxu0 %v367
  %1348 = vmatpush1.msra.mxu0 %v366
  %1349 = vmatprep.subr.mxu0 %v371
  %1350 = vmatpush1.msra.mxu0 %v370
  %1351 = vmatprep.subr.mxu0 %v375
  %1352 = vmatpush1.msra.mxu0 %v374
  %1353 = vmatprep.subr.mxu0 %v379
  %1354 = vmatpush1.msra.mxu0 %v378
  %1355 = vmatprep.subr.mxu0 %v383
  %1356 = vmatpush1.msra.mxu0 %v382
  %1357 = vmatprep.subr.mxu0 %v387
  %1358 = vmatpush1.msra.mxu0 %v386
  %1359 = vmatprep.subr.mxu0 %v391
  %1360 = vmatpush1.msra.mxu0 %v390
  %1361 = vmatprep.subr.mxu0 %v395
  %1362 = vmatpush1.msra.mxu0 %v394
  %1363 = vmatprep.subr.mxu0 %v399
  %1364 = vmatpush1.msra.mxu0 %v398
  %1365 = vmatprep.subr.mxu0 %v403
  %1366 = vmatpush1.msra.mxu0 %v402
  %1367 = vmatprep.subr.mxu0 %v407
  %1368 = vmatpush1.msra.mxu0 %v406
  %1369 = vmatprep.subr.mxu0 %v411
  %1370 = vmatpush1.msra.mxu0 %v410
  %1371 = vmatprep.subr.mxu0 %v415
  %1372 = vmatpush1.msra.mxu0 %v414
  %1373 = vmatprep.subr.mxu0 %v419
  %1374 = vmatpush1.msra.mxu0 %v418
  %1375 = vmatprep.subr.mxu0 %v423
  %1376 = vmatpush1.msra.mxu0 %v422
  %1377 = vmatprep.subr.mxu0 0.0
  %1378 = vmatpush1.msra.mxu0 0.0
  %1379 = vmatprep.subr.mxu0 0.0
  %1380 = vmatpush1.msra.mxu0 0.0
  %1381 = vmatprep.subr.mxu0 0.0
  %1382 = vmatpush1.msra.mxu0 0.0
  %1383 = vmatprep.subr.mxu0 0.0
  %1384 = vmatpush1.msra.mxu0 0.0
  %1385 = vmatprep.subr.mxu0 0.0
  %1386 = vmatpush1.msra.mxu0 0.0
  %1387 = vmatprep.subr.mxu0 0.0
  %1388 = vmatpush1.msra.mxu0 0.0
  %1389 = vmatprep.subr.mxu0 0.0
  %1390 = vmatpush1.msra.mxu0 0.0
  %1391 = vmatprep.subr.mxu0 0.0
  %1392 = vmatpush1.msra.mxu0 0.0
  %1393 = vmatprep.subr.mxu0 0.0
  %1394 = vmatpush1.msra.mxu0 0.0
  %1395 = vmatprep.subr.mxu0 0.0
  %1396 = vmatpush1.msra.mxu0 0.0
  %1397 = vmatprep.subr.mxu0 0.0
  %1398 = vmatpush1.msra.mxu0 0.0
  %1399 = vmatprep.subr.mxu0 0.0
  %1400 = vmatpush1.msra.mxu0 0.0
  %1401 = vmatprep.subr.mxu0 0.0
  %1402 = vmatpush1.msra.mxu0 0.0
  %1403 = vmatprep.subr.mxu0 0.0
  %1404 = vmatpush1.msra.mxu0 0.0
  %1405 = vmatprep.subr.mxu0 0.0
  %1406 = vmatpush1.msra.mxu0 0.0
  %1407 = vmatprep.subr.mxu0 0.0
  %1408 = vmatpush1.msra.mxu0 0.0
  %1409 = vmatprep.mubr.f32.mxu0 0.0
  %1410 = vmatmul.mubr.f32.gmra.mrb[0].mxu0 %v1273
  %v1411 = vpop.f32.mrb[0].mxu0
  %v1412 = vadd.f32 0.0, %v1411
  %v1413 = vpop.f32.mrb[0].mxu0
  %v1414 = vadd.f32 0.0, %v1413
  %1415 = vdwg.mxu0
  %v1416 = vadd.f32 %v229, %v1341
  %v1417 = vadd.f32 %v231, %v1343
  %v1418 = vadd.f32 %v342, %v1412
  %v1419 = vadd.f32 %v344, %v1414
  %v1420 = vxor.u32 %v1416, 2147483648
  %v1421 = vmul.f32 %v1420, 1.442695
  %v1422 = vpow.pop %v1421
  %v1423 = vadd.f32 %v1422, 1.0
  %v1424 = vrcp.pop %v1423
  %v1425 = vmul.f32 1.0, %v1424
  %v1426 = vxor.u32 %v1417, 2147483648
  %v1427 = vmul.f32 %v1426, 1.442695
  %v1428 = vpow.pop %v1427
  %v1429 = vadd.f32 %v1428, 1.0
  %v1430 = vrcp.pop %v1429
  %v1431 = vmul.f32 1.0, %v1430
  %v1432 = vtanh.pop %v1418
  %v1433 = vxor.u32 %v1419, 2147483648
  %v1434 = vmul.f32 %v1433, 1.442695
  %v1435 = vpow.pop %v1434
  %v1436 = vadd.f32 %v1435, 1.0
  %v1437 = vrcp.pop %v1436
  %v1438 = vmul.f32 1.0, %v1437
  %v1439 = vmul.f32 %v1431, %v1271
  %v1440 = vmul.f32 %v1425, %v1432
  %v1441 = vadd.f32 %v1439, %v1440
  %v1442 = vtanh.pop %v1441
  %v1443 = vmul.f32 %v1438, %v1442
  %1444 = vmatprep.subr.mxu0 %v361
  %1445 = vmatpush1.msra.mxu0 %v360
  %1446 = vmatprep.subr.mxu0 %v365
  %1447 = vmatpush1.msra.mxu0 %v364
  %1448 = vmatprep.subr.mxu0 %v369
  %1449 = vmatpush1.msra.mxu0 %v368
  %1450 = vmatprep.subr.mxu0 %v373
  %1451 = vmatpush1.msra.mxu0 %v372
  %1452 = vmatprep.subr.mxu0 %v377
  %1453 = vmatpush1.msra.mxu0 %v376
  %1454 = vmatprep.subr.mxu0 %v381
  %1455 = vmatpush1.msra.mxu0 %v380
  %1456 = vmatprep.subr.mxu0 %v385
  %1457 = vmatpush1.msra.mxu0 %v384
  %1458 = vmatprep.subr.mxu0 %v389
  %1459 = vmatpush1.msra.mxu0 %v388
  %1460 = vmatprep.subr.mxu0 %v393
  %1461 = vmatpush1.msra.mxu0 %v392
  %1462 = vmatprep.subr.mxu0 %v397
  %1463 = vmatpush1.msra.mxu0 %v396
  %1464 = vmatprep.subr.mxu0 %v401
  %1465 = vmatpush1.msra.mxu0 %v400
  %1466 = vmatprep.subr.mxu0 %v405
  %1467 = vmatpush1.msra.mxu0 %v404
  %1468 = vmatprep.subr.mxu0 %v409
  %1469 = vmatpush1.msra.mxu0 %v408
  %1470 = vmatprep.subr.mxu0 %v413
  %1471 = vmatpush1.msra.mxu0 %v412
  %1472 = vmatprep.subr.mxu0 %v417
  %1473 = vmatpush1.msra.mxu0 %v416
  %1474 = vmatprep.subr.mxu0 %v421
  %1475 = vmatpush1.msra.mxu0 %v420
  %1476 = vmatprep.subr.mxu0 0.0
  %1477 = vmatpush1.msra.mxu0 0.0
  %1478 = vmatprep.subr.mxu0 0.0
  %1479 = vmatpush1.msra.mxu0 0.0
  %1480 = vmatprep.subr.mxu0 0.0
  %1481 = vmatpush1.msra.mxu0 0.0
  %1482 = vmatprep.subr.mxu0 0.0
  %1483 = vmatpush1.msra.mxu0 0.0
  %1484 = vmatprep.subr.mxu0 0.0
  %1485 = vmatpush1.msra.mxu0 0.0
  %1486 = vmatprep.subr.mxu0 0.0
  %1487 = vmatpush1.msra.mxu0 0.0
  %1488 = vmatprep.subr.mxu0 0.0
  %1489 = vmatpush1.msra.mxu0 0.0
  %1490 = vmatprep.subr.mxu0 0.0
  %1491 = vmatpush1.msra.mxu0 0.0
  %1492 = vmatprep.subr.mxu0 0.0
  %1493 = vmatpush1.msra.mxu0 0.0
  %1494 = vmatprep.subr.mxu0 0.0
  %1495 = vmatpush1.msra.mxu0 0.0
  %1496 = vmatprep.subr.mxu0 0.0
  %1497 = vmatpush1.msra.mxu0 0.0
  %1498 = vmatprep.subr.mxu0 0.0
  %1499 = vmatpush1.msra.mxu0 0.0
  %1500 = vmatprep.subr.mxu0 0.0
  %1501 = vmatpush1.msra.mxu0 0.0
  %1502 = vmatprep.subr.mxu0 0.0
  %1503 = vmatpush1.msra.mxu0 0.0
  %1504 = vmatprep.subr.mxu0 0.0
  %1505 = vmatpush1.msra.mxu0 0.0
  %1506 = vmatprep.subr.mxu0 0.0
  %1507 = vmatpush1.msra.mxu0 0.0
  %1508 = vmatprep.mubr.f32.mxu0 0.0
  %1509 = vmatmul.mubr.f32.gmra.mrb[0].mxu0 %v1443
  %v1510 = vpop.f32.mrb[0].mxu0
  %v1511 = vadd.f32 0.0, %v1510
  %v1512 = vpop.f32.mrb[0].mxu0
  %v1513 = vadd.f32 0.0, %v1512
  %1514 = vdwg.mxu0
  %1515 = vmatprep.subr.mxu0 %v363
  %1516 = vmatpush1.msra.mxu0 %v362
  %1517 = vmatprep.subr.mxu0 %v367
  %1518 = vmatpush1.msra.mxu0 %v366
  %1519 = vmatprep.subr.mxu0 %v371
  %1520 = vmatpush1.msra.mxu0 %v370
  %1521 = vmatprep.subr.mxu0 %v375
  %1522 = vmatpush1.msra.mxu0 %v374
  %1523 = vmatprep.subr.mxu0 %v379
  %1524 = vmatpush1.msra.mxu0 %v378
  %1525 = vmatprep.subr.mxu0 %v383
  %1526 = vmatpush1.msra.mxu0 %v382
  %1527 = vmatprep.subr.mxu0 %v387
  %1528 = vmatpush1.msra.mxu0 %v386
  %1529 = vmatprep.subr.mxu0 %v391
  %1530 = vmatpush1.msra.mxu0 %v390
  %1531 = vmatprep.subr.mxu0 %v395
  %1532 = vmatpush1.msra.mxu0 %v394
  %1533 = vmatprep.subr.mxu0 %v399
  %1534 = vmatpush1.msra.mxu0 %v398
  %1535 = vmatprep.subr.mxu0 %v403
  %1536 = vmatpush1.msra.mxu0 %v402
  %1537 = vmatprep.subr.mxu0 %v407
  %1538 = vmatpush1.msra.mxu0 %v406
  %1539 = vmatprep.subr.mxu0 %v411
  %1540 = vmatpush1.msra.mxu0 %v410
  %1541 = vmatprep.subr.mxu0 %v415
  %1542 = vmatpush1.msra.mxu0 %v414
  %1543 = vmatprep.subr.mxu0 %v419
  %1544 = vmatpush1.msra.mxu0 %v418
  %1545 = vmatprep.subr.mxu0 %v423
  %1546 = vmatpush1.msra.mxu0 %v422
  %1547 = vmatprep.subr.mxu0 0.0
  %1548 = vmatpush1.msra.mxu0 0.0
  %1549 = vmatprep.subr.mxu0 0.0
  %1550 = vmatpush1.msra.mxu0 0.0
  %1551 = vmatprep.subr.mxu0 0.0
  %1552 = vmatpush1.msra.mxu0 0.0
  %1553 = vmatprep.subr.mxu0 0.0
  %1554 = vmatpush1.msra.mxu0 0.0
  %1555 = vmatprep.subr.mxu0 0.0
  %1556 = vmatpush1.msra.mxu0 0.0
  %1557 = vmatprep.subr.mxu0 0.0
  %1558 = vmatpush1.msra.mxu0 0.0
  %1559 = vmatprep.subr.mxu0 0.0
  %1560 = vmatpush1.msra.mxu0 0.0
  %1561 = vmatprep.subr.mxu0 0.0
  %1562 = vmatpush1.msra.mxu0 0.0
  %1563 = vmatprep.subr.mxu0 0.0
  %1564 = vmatpush1.msra.mxu0 0.0
  %1565 = vmatprep.subr.mxu0 0.0
  %1566 = vmatpush1.msra.mxu0 0.0
  %1567 = vmatprep.subr.mxu0 0.0
  %1568 = vmatpush1.msra.mxu0 0.0
  %1569 = vmatprep.subr.mxu0 0.0
  %1570 = vmatpush1.msra.mxu0 0.0
  %1571 = vmatprep.subr.mxu0 0.0
  %1572 = vmatpush1.msra.mxu0 0.0
  %1573 = vmatprep.subr.mxu0 0.0
  %1574 = vmatpush1.msra.mxu0 0.0
  %1575 = vmatprep.subr.mxu0 0.0
  %1576 = vmatpush1.msra.mxu0 0.0
  %1577 = vmatprep.subr.mxu0 0.0
  %1578 = vmatpush1.msra.mxu0 0.0
  %1579 = vmatprep.mubr.f32.mxu0 0.0
  %1580 = vmatmul.mubr.f32.gmra.mrb[0].mxu0 %v1443
  %v1581 = vpop.f32.mrb[0].mxu0
  %v1582 = vadd.f32 0.0, %v1581
  %v1583 = vpop.f32.mrb[0].mxu0
  %v1584 = vadd.f32 0.0, %v1583
  %1585 = vdwg.mxu0
  %v1586 = vadd.f32 %v235, %v1511
  %v1587 = vadd.f32 %v237, %v1513
  %v1588 = vadd.f32 %v348, %v1582
  %v1589 = vadd.f32 %v350, %v1584
  %v1590 = vxor.u32 %v1586, 2147483648
  %v1591 = vmul.f32 %v1590, 1.442695
  %v1592 = vpow.pop %v1591
  %v1593 = vadd.f32 %v1592, 1.0
  %v1594 = vrcp.pop %v1593
  %v1595 = vmul.f32 1.0, %v1594
  %v1596 = vxor.u32 %v1587, 2147483648
  %v1597 = vmul.f32 %v1596, 1.442695
  %v1598 = vpow.pop %v1597
  %v1599 = vadd.f32 %v1598, 1.0
  %v1600 = vrcp.pop %v1599
  %v1601 = vmul.f32 1.0, %v1600
  %v1602 = vtanh.pop %v1588
  %v1603 = vxor.u32 %v1589, 2147483648
  %v1604 = vmul.f32 %v1603, 1.442695
  %v1605 = vpow.pop %v1604
  %v1606 = vadd.f32 %v1605, 1.0
  %v1607 = vrcp.pop %v1606
  %v1608 = vmul.f32 1.0, %v1607
  %v1609 = vmul.f32 %v1601, %v1441
  %v1610 = vmul.f32 %v1595, %v1602
  %v1611 = vadd.f32 %v1609, %v1610
  %v1612 = vtanh.pop %v1611
  %v1613 = vmul.f32 %v1608, %v1612
  %1614 = vmatprep.subr.mxu0 %v361
  %1615 = vmatpush1.msra.mxu0 %v360
  %1616 = vmatprep.subr.mxu0 %v365
  %1617 = vmatpush1.msra.mxu0 %v364
  %1618 = vmatprep.subr.mxu0 %v369
  %1619 = vmatpush1.msra.mxu0 %v368
  %1620 = vmatprep.subr.mxu0 %v373
  %1621 = vmatpush1.msra.mxu0 %v372
  %1622 = vmatprep.subr.mxu0 %v377
  %1623 = vmatpush1.msra.mxu0 %v376
  %1624 = vmatprep.subr.mxu0 %v381
  %1625 = vmatpush1.msra.mxu0 %v380
  %1626 = vmatprep.subr.mxu0 %v385
  %1627 = vmatpush1.msra.mxu0 %v384
  %1628 = vmatprep.subr.mxu0 %v389
  %1629 = vmatpush1.msra.mxu0 %v388
  %1630 = vmatprep.subr.mxu0 %v393
  %1631 = vmatpush1.msra.mxu0 %v392
  %1632 = vmatprep.subr.mxu0 %v397
  %1633 = vmatpush1.msra.mxu0 %v396
  %1634 = vmatprep.subr.mxu0 %v401
  %1635 = vmatpush1.msra.mxu0 %v400
  %1636 = vmatprep.subr.mxu0 %v405
  %1637 = vmatpush1.msra.mxu0 %v404
  %1638 = vmatprep.subr.mxu0 %v409
  %1639 = vmatpush1.msra.mxu0 %v408
  %1640 = vmatprep.subr.mxu0 %v413
  %1641 = vmatpush1.msra.mxu0 %v412
  %1642 = vmatprep.subr.mxu0 %v417
  %1643 = vmatpush1.msra.mxu0 %v416
  %1644 = vmatprep.subr.mxu0 %v421
  %1645 = vmatpush1.msra.mxu0 %v420
  %1646 = vmatprep.subr.mxu0 0.0
  %1647 = vmatpush1.msra.mxu0 0.0
  %1648 = vmatprep.subr.mxu0 0.0
  %1649 = vmatpush1.msra.mxu0 0.0
  %1650 = vmatprep.subr.mxu0 0.0
  %1651 = vmatpush1.msra.mxu0 0.0
  %1652 = vmatprep.subr.mxu0 0.0
  %1653 = vmatpush1.msra.mxu0 0.0
  %1654 = vmatprep.subr.mxu0 0.0
  %1655 = vmatpush1.msra.mxu0 0.0
  %1656 = vmatprep.subr.mxu0 0.0
  %1657 = vmatpush1.msra.mxu0 0.0
  %1658 = vmatprep.subr.mxu0 0.0
  %1659 = vmatpush1.msra.mxu0 0.0
  %1660 = vmatprep.subr.mxu0 0.0
  %1661 = vmatpush1.msra.mxu0 0.0
  %1662 = vmatprep.subr.mxu0 0.0
  %1663 = vmatpush1.msra.mxu0 0.0
  %1664 = vmatprep.subr.mxu0 0.0
  %1665 = vmatpush1.msra.mxu0 0.0
  %1666 = vmatprep.subr.mxu0 0.0
  %1667 = vmatpush1.msra.mxu0 0.0
  %1668 = vmatprep.subr.mxu0 0.0
  %1669 = vmatpush1.msra.mxu0 0.0
  %1670 = vmatprep.subr.mxu0 0.0
  %1671 = vmatpush1.msra.mxu0 0.0
  %1672 = vmatprep.subr.mxu0 0.0
  %1673 = vmatpush1.msra.mxu0 0.0
  %1674 = vmatprep.subr.mxu0 0.0
  %1675 = vmatpush1.msra.mxu0 0.0
  %1676 = vmatprep.subr.mxu0 0.0
  %1677 = vmatpush1.msra.mxu0 0.0
  %1678 = vmatprep.mubr.f32.mxu0 0.0
  %1679 = vmatmul.mubr.f32.gmra.mrb[0].mxu0 %v1613
  %v1680 = vpop.f32.mrb[0].mxu0
  %v1681 = vadd.f32 0.0, %v1680
  %v1682 = vpop.f32.mrb[0].mxu0
  %v1683 = vadd.f32 0.0, %v1682
  %1684 = vdwg.mxu0
  %1685 = vmatprep.subr.mxu0 %v363
  %1686 = vmatpush1.msra.mxu0 %v362
  %1687 = vmatprep.subr.mxu0 %v367
  %1688 = vmatpush1.msra.mxu0 %v366
  %1689 = vmatprep.subr.mxu0 %v371
  %1690 = vmatpush1.msra.mxu0 %v370
  %1691 = vmatprep.subr.mxu0 %v375
  %1692 = vmatpush1.msra.mxu0 %v374
  %1693 = vmatprep.subr.mxu0 %v379
  %1694 = vmatpush1.msra.mxu0 %v378
  %1695 = vmatprep.subr.mxu0 %v383
  %1696 = vmatpush1.msra.mxu0 %v382
  %1697 = vmatprep.subr.mxu0 %v387
  %1698 = vmatpush1.msra.mxu0 %v386
  %1699 = vmatprep.subr.mxu0 %v391
  %1700 = vmatpush1.msra.mxu0 %v390
  %1701 = vmatprep.subr.mxu0 %v395
  %1702 = vmatpush1.msra.mxu0 %v394
  %1703 = vmatprep.subr.mxu0 %v399
  %1704 = vmatpush1.msra.mxu0 %v398
  %1705 = vmatprep.subr.mxu0 %v403
  %1706 = vmatpush1.msra.mxu0 %v402
  %1707 = vmatprep.subr.mxu0 %v407
  %1708 = vmatpush1.msra.mxu0 %v406
  %1709 = vmatprep.subr.mxu0 %v411
  %1710 = vmatpush1.msra.mxu0 %v410
  %1711 = vmatprep.subr.mxu0 %v415
  %1712 = vmatpush1.msra.mxu0 %v414
  %1713 = vmatprep.subr.mxu0 %v419
  %1714 = vmatpush1.msra.mxu0 %v418
  %1715 = vmatprep.subr.mxu0 %v423
  %1716 = vmatpush1.msra.mxu0 %v422
  %1717 = vmatprep.subr.mxu0 0.0
  %1718 = vmatpush1.msra.mxu0 0.0
  %1719 = vmatprep.subr.mxu0 0.0
  %1720 = vmatpush1.msra.mxu0 0.0
  %1721 = vmatprep.subr.mxu0 0.0
  %1722 = vmatpush1.msra.mxu0 0.0
  %1723 = vmatprep.subr.mxu0 0.0
  %1724 = vmatpush1.msra.mxu0 0.0
  %1725 = vmatprep.subr.mxu0 0.0
  %1726 = vmatpush1.msra.mxu0 0.0
  %1727 = vmatprep.subr.mxu0 0.0
  %1728 = vmatpush1.msra.mxu0 0.0
  %1729 = vmatprep.subr.mxu0 0.0
  %1730 = vmatpush1.msra.mxu0 0.0
  %1731 = vmatprep.subr.mxu0 0.0
  %1732 = vmatpush1.msra.mxu0 0.0
  %1733 = vmatprep.subr.mxu0 0.0
  %1734 = vmatpush1.msra.mxu0 0.0
  %1735 = vmatprep.subr.mxu0 0.0
  %1736 = vmatpush1.msra.mxu0 0.0
  %1737 = vmatprep.subr.mxu0 0.0
  %1738 = vmatpush1.msra.mxu0 0.0
  %1739 = vmatprep.subr.mxu0 0.0
  %1740 = vmatpush1.msra.mxu0 0.0
  %1741 = vmatprep.subr.mxu0 0.0
  %1742 = vmatpush1.msra.mxu0 0.0
  %1743 = vmatprep.subr.mxu0 0.0
  %1744 = vmatpush1.msra.mxu0 0.0
  %1745 = vmatprep.subr.mxu0 0.0
  %1746 = vmatpush1.msra.mxu0 0.0
  %1747 = vmatprep.subr.mxu0 0.0
  %1748 = vmatpush1.msra.mxu0 0.0
  %1749 = vmatprep.mubr.f32.mxu0 0.0
  %1750 = vmatmul.mubr.f32.gmra.mrb[0].mxu0 %v1613
  %v1751 = vpop.f32.mrb[0].mxu0
  %v1752 = vadd.f32 0.0, %v1751
  %v1753 = vpop.f32.mrb[0].mxu0
  %v1754 = vadd.f32 0.0, %v1753
  %1755 = vdwg.mxu0
  %v1756 = vadd.f32 %v241, %v1681
  %v1757 = vadd.f32 %v243, %v1683
  %v1758 = vadd.f32 %v354, %v1752
  %v1759 = vadd.f32 %v356, %v1754
  %v1760 = vxor.u32 %v1756, 2147483648
  %v1761 = vmul.f32 %v1760, 1.442695
  %v1762 = vpow.pop %v1761
  %v1763 = vadd.f32 %v1762, 1.0
  %v1764 = vrcp.pop %v1763
  %v1765 = vmul.f32 1.0, %v1764
  %v1766 = vxor.u32 %v1757, 2147483648
  %v1767 = vmul.f32 %v1766, 1.442695
  %v1768 = vpow.pop %v1767
  %v1769 = vadd.f32 %v1768, 1.0
  %v1770 = vrcp.pop %v1769
  %v1771 = vmul.f32 1.0, %v1770
  %v1772 = vtanh.pop %v1758
  %v1773 = vxor.u32 %v1759, 2147483648
  %v1774 = vmul.f32 %v1773, 1.442695
  %v1775 = vpow.pop %v1774
  %v1776 = vadd.f32 %v1775, 1.0
  %v1777 = vrcp.pop %v1776
  %v1778 = vmul.f32 1.0, %v1777
  %v1779 = vmul.f32 %v1771, %v1611
  %v1780 = vmul.f32 %v1765, %v1772
  %v1781 = vadd.f32 %v1779, %v1780
  %v1782 = vtanh.pop %v1781
  %v1783 = vmul.f32 %v1778, %v1782
  %1784 = vst [vmem:[%s11] sm:$0xff] %v1783
  %1785 = vst [vmem:[%s12] sm:$0xff] %v1781
  %s1786 = scalar_lea.vmem %s1, 512
  %v1787 = vld [vmem:[%s1786] sm:$0xff]
  %v1788 = vld [vmem:[%s1786 + $0x8] sm:$0xff]
  %v1789 = vld [vmem:[%s1786 + $0x10] sm:$0xff]
  %v1790 = vld [vmem:[%s1786 + $0x18] sm:$0xff]
  %v1791 = vld [vmem:[%s1786 + $0x20] sm:$0xff]
  %v1792 = vld [vmem:[%s1786 + $0x28] sm:$0xff]
  %v1793 = vld [vmem:[%s1786 + $0x30] sm:$0xff]
  %v1794 = vld [vmem:[%s1786 + $0x38] sm:$0xff]
  %v1795 = vld [vmem:[%s1786 + $0x40] sm:$0xff]
  %v1796 = vld [vmem:[%s1786 + $0x48] sm:$0xff]
  %v1797 = vld [vmem:[%s1786 + $0x50] sm:$0xff]
  %v1798 = vld [vmem:[%s1786 + $0x58] sm:$0xff]
  %v1799 = vld [vmem:[%s1786 + $0x60] sm:$0xff]
  %v1800 = vld [vmem:[%s1786 + $0x68] sm:$0xff]
  %v1801 = vld [vmem:[%s1786 + $0x70] sm:$0xff]
  %v1802 = vld [vmem:[%s1786 + $0x78] sm:$0xff]
  %v1803 = vld [vmem:[%s1786 + $0x80] sm:$0xff]
  %v1804 = vld [vmem:[%s1786 + $0x88] sm:$0xff]
  %v1805 = vld [vmem:[%s1786 + $0x90] sm:$0xff]
  %v1806 = vld [vmem:[%s1786 + $0x98] sm:$0xff]
  %v1807 = vld [vmem:[%s1786 + $0xa0] sm:$0xff]
  %v1808 = vld [vmem:[%s1786 + $0xa8] sm:$0xff]
  %v1809 = vld [vmem:[%s1786 + $0xb0] sm:$0xff]
  %v1810 = vld [vmem:[%s1786 + $0xb8] sm:$0xff]
  %v1811 = vld [vmem:[%s1786 + $0xc0] sm:$0xff]
  %v1812 = vld [vmem:[%s1786 + $0xc8] sm:$0xff]
  %v1813 = vld [vmem:[%s1786 + $0xd0] sm:$0xff]
  %v1814 = vld [vmem:[%s1786 + $0xd8] sm:$0xff]
  %v1815 = vld [vmem:[%s1786 + $0xe0] sm:$0xff]
  %v1816 = vld [vmem:[%s1786 + $0xe8] sm:$0xff]
  %v1817 = vld [vmem:[%s1786 + $0xf0] sm:$0xff]
  %v1818 = vld [vmem:[%s1786 + $0xf8] sm:$0xff]
  %v1819 = vld [vmem:[%s1786 + $0x100] sm:$0xff]
  %v1820 = vld [vmem:[%s1786 + $0x108] sm:$0xff]
  %v1821 = vld [vmem:[%s1786 + $0x110] sm:$0xff]
  %v1822 = vld [vmem:[%s1786 + $0x118] sm:$0xff]
  %v1823 = vld [vmem:[%s1786 + $0x120] sm:$0xff]
  %v1824 = vld [vmem:[%s1786 + $0x128] sm:$0xff]
  %v1825 = vld [vmem:[%s1786 + $0x130] sm:$0xff]
  %v1826 = vld [vmem:[%s1786 + $0x138] sm:$0xff]
  %v1827 = vld [vmem:[%s1786 + $0x140] sm:$0xff]
  %v1828 = vld [vmem:[%s1786 + $0x148] sm:$0xff]
  %v1829 = vld [vmem:[%s1786 + $0x150] sm:$0xff]
  %v1830 = vld [vmem:[%s1786 + $0x158] sm:$0xff]
  %v1831 = vld [vmem:[%s1786 + $0x160] sm:$0xff]
  %v1832 = vld [vmem:[%s1786 + $0x168] sm:$0xff]
  %v1833 = vld [vmem:[%s1786 + $0x170] sm:$0xff]
  %v1834 = vld [vmem:[%s1786 + $0x178] sm:$0xff]
  %v1835 = vld [vmem:[%s1786 + $0x180] sm:$0xff]
  %v1836 = vld [vmem:[%s1786 + $0x188] sm:$0xff]
  %v1837 = vld [vmem:[%s1786 + $0x190] sm:$0xff]
  %v1838 = vld [vmem:[%s1786 + $0x198] sm:$0xff]
  %v1839 = vld [vmem:[%s1786 + $0x1a0] sm:$0xff]
  %v1840 = vld [vmem:[%s1786 + $0x1a8] sm:$0xff]
  %v1841 = vld [vmem:[%s1786 + $0x1b0] sm:$0xff]
  %v1842 = vld [vmem:[%s1786 + $0x1b8] sm:$0xff]
  %v1843 = vld [vmem:[%s1786 + $0x1c0] sm:$0xff]
  %v1844 = vld [vmem:[%s1786 + $0x1c8] sm:$0xff]
  %v1845 = vld [vmem:[%s1786 + $0x1d0] sm:$0xff]
  %v1846 = vld [vmem:[%s1786 + $0x1d8] sm:$0xff]
  %v1847 = vld [vmem:[%s1786 + $0x1e0] sm:$0xff]
  %v1848 = vld [vmem:[%s1786 + $0x1e8] sm:$0xff]
  %v1849 = vld [vmem:[%s1786 + $0x1f0] sm:$0xff]
  %v1850 = vld [vmem:[%s1786 + $0x1f8] sm:$0xff]
  %s1851 = scalar_lea.vmem %s3, 4
  %v1852 = vld [vmem:[%s1851] sm:$0xf]
  %v1854 = vlaneseq
  %v1855 = vshrl.u32 %v1854, 7
  %v1856 = vsub.s32 0, %v1855
  %v1857 = vrot.slane %v1852, %v1856
  %v1858 = vlaneseq
  %v1859 = vshrl.u32 %v1858, 7
  %v1860 = vsub.s32 1, %v1859
  %v1861 = vrot.slane %v1852, %v1860
  %v1862 = vlaneseq
  %v1863 = vshrl.u32 %v1862, 7
  %v1864 = vsub.s32 2, %v1863
  %v1865 = vrot.slane %v1852, %v1864
  %v1866 = vlaneseq
  %v1867 = vshrl.u32 %v1866, 7
  %v1868 = vsub.s32 3, %v1867
  %v1869 = vrot.slane %v1852, %v1868
  %1874 = vmatprep.subr.mxu0 %v1788
  %1875 = vmatpush1.msra.mxu0 %v1787
  %1876 = vmatprep.subr.mxu0 %v1792
  %1877 = vmatpush1.msra.mxu0 %v1791
  %1878 = vmatprep.subr.mxu0 %v1796
  %1879 = vmatpush1.msra.mxu0 %v1795
  %1880 = vmatprep.subr.mxu0 %v1800
  %1881 = vmatpush1.msra.mxu0 %v1799
  %1882 = vmatprep.subr.mxu0 %v1804
  %1883 = vmatpush1.msra.mxu0 %v1803
  %1884 = vmatprep.subr.mxu0 %v1808
  %1885 = vmatpush1.msra.mxu0 %v1807
  %1886 = vmatprep.subr.mxu0 %v1812
  %1887 = vmatpush1.msra.mxu0 %v1811
  %1888 = vmatprep.subr.mxu0 %v1816
  %1889 = vmatpush1.msra.mxu0 %v1815
  %1890 = vmatprep.subr.mxu0 %v1820
  %1891 = vmatpush1.msra.mxu0 %v1819
  %1892 = vmatprep.subr.mxu0 %v1824
  %1893 = vmatpush1.msra.mxu0 %v1823
  %1894 = vmatprep.subr.mxu0 %v1828
  %1895 = vmatpush1.msra.mxu0 %v1827
  %1896 = vmatprep.subr.mxu0 %v1832
  %1897 = vmatpush1.msra.mxu0 %v1831
  %1898 = vmatprep.subr.mxu0 %v1836
  %1899 = vmatpush1.msra.mxu0 %v1835
  %1900 = vmatprep.subr.mxu0 %v1840
  %1901 = vmatpush1.msra.mxu0 %v1839
  %1902 = vmatprep.subr.mxu0 %v1844
  %1903 = vmatpush1.msra.mxu0 %v1843
  %1904 = vmatprep.subr.mxu0 %v1848
  %1905 = vmatpush1.msra.mxu0 %v1847
  %1906 = vmatprep.subr.mxu0 0.0
  %1907 = vmatpush1.msra.mxu0 0.0
  %1908 = vmatprep.subr.mxu0 0.0
  %1909 = vmatpush1.msra.mxu0 0.0
  %1910 = vmatprep.subr.mxu0 0.0
  %1911 = vmatpush1.msra.mxu0 0.0
  %1912 = vmatprep.subr.mxu0 0.0
  %1913 = vmatpush1.msra.mxu0 0.0
  %1914 = vmatprep.subr.mxu0 0.0
  %1915 = vmatpush1.msra.mxu0 0.0
  %1916 = vmatprep.subr.mxu0 0.0
  %1917 = vmatpush1.msra.mxu0 0.0
  %1918 = vmatprep.subr.mxu0 0.0
  %1919 = vmatpush1.msra.mxu0 0.0
  %1920 = vmatprep.subr.mxu0 0.0
  %1921 = vmatpush1.msra.mxu0 0.0
  %1922 = vmatprep.subr.mxu0 0.0
  %1923 = vmatpush1.msra.mxu0 0.0
  %1924 = vmatprep.subr.mxu0 0.0
  %1925 = vmatpush1.msra.mxu0 0.0
  %1926 = vmatprep.subr.mxu0 0.0
  %1927 = vmatpush1.msra.mxu0 0.0
  %1928 = vmatprep.subr.mxu0 0.0
  %1929 = vmatpush1.msra.mxu0 0.0
  %1930 = vmatprep.subr.mxu0 0.0
  %1931 = vmatpush1.msra.mxu0 0.0
  %1932 = vmatprep.subr.mxu0 0.0
  %1933 = vmatpush1.msra.mxu0 0.0
  %1934 = vmatprep.subr.mxu0 0.0
  %1935 = vmatpush1.msra.mxu0 0.0
  %1936 = vmatprep.subr.mxu0 0.0
  %1937 = vmatpush1.msra.mxu0 0.0
  %1938 = vmatprep.mubr.f32.mxu0 0.0
  %1939 = vmatmul.mubr.f32.gmra.mrb[0].mxu0 %v593
  %v1940 = vpop.f32.mrb[0].mxu0
  %v1941 = vadd.f32 %v1857, %v1940
  %v1942 = vpop.f32.mrb[0].mxu0
  %v1943 = vadd.f32 %v1861, %v1942
  %1944 = vmatprep.mubr.f32.mxu0 0.0
  %1945 = vmatmul.mubr.f32.gmra.mrb[0].mxu0 %v763
  %v1946 = vpop.f32.mrb[0].mxu0
  %v1947 = vadd.f32 %v1857, %v1946
  %v1948 = vpop.f32.mrb[0].mxu0
  %v1949 = vadd.f32 %v1861, %v1948
  %1950 = vmatprep.mubr.f32.mxu0 0.0
  %1951 = vmatmul.mubr.f32.gmra.mrb[0].mxu0 %v933
  %v1952 = vpop.f32.mrb[0].mxu0
  %v1953 = vadd.f32 %v1857, %v1952
  %v1954 = vpop.f32.mrb[0].mxu0
  %v1955 = vadd.f32 %v1861, %v1954
  %1956 = vmatprep.mubr.f32.mxu0 0.0
  %1957 = vmatmul.mubr.f32.gmra.mrb[0].mxu0 %v1103
  %v1958 = vpop.f32.mrb[0].mxu0
  %v1959 = vadd.f32 %v1857, %v1958
  %v1960 = vpop.f32.mrb[0].mxu0
  %v1961 = vadd.f32 %v1861, %v1960
  %1962 = vmatprep.mubr.f32.mxu0 0.0
  %1963 = vmatmul.mubr.f32.gmra.mrb[0].mxu0 %v1273
  %v1964 = vpop.f32.mrb[0].mxu0
  %v1965 = vadd.f32 %v1857, %v1964
  %v1966 = vpop.f32.mrb[0].mxu0
  %v1967 = vadd.f32 %v1861, %v1966
  %1968 = vmatprep.mubr.f32.mxu0 0.0
  %1969 = vmatmul.mubr.f32.gmra.mrb[0].mxu0 %v1443
  %v1970 = vpop.f32.mrb[0].mxu0
  %v1971 = vadd.f32 %v1857, %v1970
  %v1972 = vpop.f32.mrb[0].mxu0
  %v1973 = vadd.f32 %v1861, %v1972
  %1974 = vmatprep.mubr.f32.mxu0 0.0
  %1975 = vmatmul.mubr.f32.gmra.mrb[0].mxu0 %v1613
  %v1976 = vpop.f32.mrb[0].mxu0
  %v1977 = vadd.f32 %v1857, %v1976
  %v1978 = vpop.f32.mrb[0].mxu0
  %v1979 = vadd.f32 %v1861, %v1978
  %1980 = vmatprep.mubr.f32.mxu0 0.0
  %1981 = vmatmul.mubr.f32.gmra.mrb[0].mxu0 %v1783
  %v1982 = vpop.f32.mrb[0].mxu0
  %v1983 = vadd.f32 %v1857, %v1982
  %v1984 = vpop.f32.mrb[0].mxu0
  %v1985 = vadd.f32 %v1861, %v1984
  %1986 = vdwg.mxu0
  %1987 = vmatprep.subr.mxu0 %v1790
  %1988 = vmatpush1.msra.mxu0 %v1789
  %1989 = vmatprep.subr.mxu0 %v1794
  %1990 = vmatpush1.msra.mxu0 %v1793
  %1991 = vmatprep.subr.mxu0 %v1798
  %1992 = vmatpush1.msra.mxu0 %v1797
  %1993 = vmatprep.subr.mxu0 %v1802
  %1994 = vmatpush1.msra.mxu0 %v1801
  %1995 = vmatprep.subr.mxu0 %v1806
  %1996 = vmatpush1.msra.mxu0 %v1805
  %1997 = vmatprep.subr.mxu0 %v1810
  %1998 = vmatpush1.msra.mxu0 %v1809
  %1999 = vmatprep.subr.mxu0 %v1814
  %2000 = vmatpush1.msra.mxu0 %v1813
  %2001 = vmatprep.subr.mxu0 %v1818
  %2002 = vmatpush1.msra.mxu0 %v1817
  %2003 = vmatprep.subr.mxu0 %v1822
  %2004 = vmatpush1.msra.mxu0 %v1821
  %2005 = vmatprep.subr.mxu0 %v1826
  %2006 = vmatpush1.msra.mxu0 %v1825
  %2007 = vmatprep.subr.mxu0 %v1830
  %2008 = vmatpush1.msra.mxu0 %v1829
  %2009 = vmatprep.subr.mxu0 %v1834
  %2010 = vmatpush1.msra.mxu0 %v1833
  %2011 = vmatprep.subr.mxu0 %v1838
  %2012 = vmatpush1.msra.mxu0 %v1837
  %2013 = vmatprep.subr.mxu0 %v1842
  %2014 = vmatpush1.msra.mxu0 %v1841
  %2015 = vmatprep.subr.mxu0 %v1846
  %2016 = vmatpush1.msra.mxu0 %v1845
  %2017 = vmatprep.subr.mxu0 %v1850
  %2018 = vmatpush1.msra.mxu0 %v1849
  %2019 = vmatprep.subr.mxu0 0.0
  %2020 = vmatpush1.msra.mxu0 0.0
  %2021 = vmatprep.subr.mxu0 0.0
  %2022 = vmatpush1.msra.mxu0 0.0
  %2023 = vmatprep.subr.mxu0 0.0
  %2024 = vmatpush1.msra.mxu0 0.0
  %2025 = vmatprep.subr.mxu0 0.0
  %2026 = vmatpush1.msra.mxu0 0.0
  %2027 = vmatprep.subr.mxu0 0.0
  %2028 = vmatpush1.msra.mxu0 0.0
  %2029 = vmatprep.subr.mxu0 0.0
  %2030 = vmatpush1.msra.mxu0 0.0
  %2031 = vmatprep.subr.mxu0 0.0
  %2032 = vmatpush1.msra.mxu0 0.0
  %2033 = vmatprep.subr.mxu0 0.0
  %2034 = vmatpush1.msra.mxu0 0.0
  %2035 = vmatprep.subr.mxu0 0.0
  %2036 = vmatpush1.msra.mxu0 0.0
  %2037 = vmatprep.subr.mxu0 0.0
  %2038 = vmatpush1.msra.mxu0 0.0
  %2039 = vmatprep.subr.mxu0 0.0
  %2040 = vmatpush1.msra.mxu0 0.0
  %2041 = vmatprep.subr.mxu0 0.0
  %2042 = vmatpush1.msra.mxu0 0.0
  %2043 = vmatprep.subr.mxu0 0.0
  %2044 = vmatpush1.msra.mxu0 0.0
  %2045 = vmatprep.subr.mxu0 0.0
  %2046 = vmatpush1.msra.mxu0 0.0
  %2047 = vmatprep.subr.mxu0 0.0
  %2048 = vmatpush1.msra.mxu0 0.0
  %2049 = vmatprep.subr.mxu0 0.0
  %2050 = vmatpush1.msra.mxu0 0.0
  %2051 = vmatprep.mubr.f32.mxu0 0.0
  %2052 = vmatmul.mubr.f32.gmra.mrb[0].mxu0 %v593
  %v2053 = vpop.f32.mrb[0].mxu0
  %v2054 = vadd.f32 %v1865, %v2053
  %v2055 = vpop.f32.mrb[0].mxu0
  %v2056 = vadd.f32 %v1869, %v2055
  %2057 = vmatprep.mubr.f32.mxu0 0.0
  %2058 = vmatmul.mubr.f32.gmra.mrb[0].mxu0 %v763
  %v2059 = vpop.f32.mrb[0].mxu0
  %v2060 = vadd.f32 %v1865, %v2059
  %v2061 = vpop.f32.mrb[0].mxu0
  %v2062 = vadd.f32 %v1869, %v2061
  %2063 = vmatprep.mubr.f32.mxu0 0.0
  %2064 = vmatmul.mubr.f32.gmra.mrb[0].mxu0 %v933
  %v2065 = vpop.f32.mrb[0].mxu0
  %v2066 = vadd.f32 %v1865, %v2065
  %v2067 = vpop.f32.mrb[0].mxu0
  %v2068 = vadd.f32 %v1869, %v2067
  %2069 = vmatprep.mubr.f32.mxu0 0.0
  %2070 = vmatmul.mubr.f32.gmra.mrb[0].mxu0 %v1103
  %v2071 = vpop.f32.mrb[0].mxu0
  %v2072 = vadd.f32 %v1865, %v2071
  %v2073 = vpop.f32.mrb[0].mxu0
  %v2074 = vadd.f32 %v1869, %v2073
  %2075 = vmatprep.mubr.f32.mxu0 0.0
  %2076 = vmatmul.mubr.f32.gmra.mrb[0].mxu0 %v1273
  %v2077 = vpop.f32.mrb[0].mxu0
  %v2078 = vadd.f32 %v1865, %v2077
  %v2079 = vpop.f32.mrb[0].mxu0
  %v2080 = vadd.f32 %v1869, %v2079
  %2081 = vmatprep.mubr.f32.mxu0 0.0
  %2082 = vmatmul.mubr.f32.gmra.mrb[0].mxu0 %v1443
  %v2083 = vpop.f32.mrb[0].mxu0
  %v2084 = vadd.f32 %v1865, %v2083
  %v2085 = vpop.f32.mrb[0].mxu0
  %v2086 = vadd.f32 %v1869, %v2085
  %2087 = vmatprep.mubr.f32.mxu0 0.0
  %2088 = vmatmul.mubr.f32.gmra.mrb[0].mxu0 %v1613
  %v2089 = vpop.f32.mrb[0].mxu0
  %v2090 = vadd.f32 %v1865, %v2089
  %v2091 = vpop.f32.mrb[0].mxu0
  %v2092 = vadd.f32 %v1869, %v2091
  %2093 = vmatprep.mubr.f32.mxu0 0.0
  %2094 = vmatmul.mubr.f32.gmra.mrb[0].mxu0 %v1783
  %v2095 = vpop.f32.mrb[0].mxu0
  %v2096 = vadd.f32 %v1865, %v2095
  %v2097 = vpop.f32.mrb[0].mxu0
  %v2098 = vadd.f32 %v1869, %v2097
  %2099 = vdwg.mxu0
  %s2100 = scalar_lea.vmem %s4, 8
  %v2101 = vld [vmem:[%s2100] sm:$0xff]
  %s2102 = scalar_lea.vmem %s5, 8
  %v2103 = vld [vmem:[%s2102] sm:$0xff]
  %s2104 = scalar_lea.vmem %s2, 512
  %v2105 = vld [vmem:[%s2104] sm:$0xff]
  %v2106 = vld [vmem:[%s2104 + $0x8] sm:$0xff]
  %v2107 = vld [vmem:[%s2104 + $0x10] sm:$0xff]
  %v2108 = vld [vmem:[%s2104 + $0x18] sm:$0xff]
  %v2109 = vld [vmem:[%s2104 + $0x20] sm:$0xff]
  %v2110 = vld [vmem:[%s2104 + $0x28] sm:$0xff]
  %v2111 = vld [vmem:[%s2104 + $0x30] sm:$0xff]
  %v2112 = vld [vmem:[%s2104 + $0x38] sm:$0xff]
  %v2113 = vld [vmem:[%s2104 + $0x40] sm:$0xff]
  %v2114 = vld [vmem:[%s2104 + $0x48] sm:$0xff]
  %v2115 = vld [vmem:[%s2104 + $0x50] sm:$0xff]
  %v2116 = vld [vmem:[%s2104 + $0x58] sm:$0xff]
  %v2117 = vld [vmem:[%s2104 + $0x60] sm:$0xff]
  %v2118 = vld [vmem:[%s2104 + $0x68] sm:$0xff]
  %v2119 = vld [vmem:[%s2104 + $0x70] sm:$0xff]
  %v2120 = vld [vmem:[%s2104 + $0x78] sm:$0xff]
  %v2121 = vld [vmem:[%s2104 + $0x80] sm:$0xff]
  %v2122 = vld [vmem:[%s2104 + $0x88] sm:$0xff]
  %v2123 = vld [vmem:[%s2104 + $0x90] sm:$0xff]
  %v2124 = vld [vmem:[%s2104 + $0x98] sm:$0xff]
  %v2125 = vld [vmem:[%s2104 + $0xa0] sm:$0xff]
  %v2126 = vld [vmem:[%s2104 + $0xa8] sm:$0xff]
  %v2127 = vld [vmem:[%s2104 + $0xb0] sm:$0xff]
  %v2128 = vld [vmem:[%s2104 + $0xb8] sm:$0xff]
  %v2129 = vld [vmem:[%s2104 + $0xc0] sm:$0xff]
  %v2130 = vld [vmem:[%s2104 + $0xc8] sm:$0xff]
  %v2131 = vld [vmem:[%s2104 + $0xd0] sm:$0xff]
  %v2132 = vld [vmem:[%s2104 + $0xd8] sm:$0xff]
  %v2133 = vld [vmem:[%s2104 + $0xe0] sm:$0xff]
  %v2134 = vld [vmem:[%s2104 + $0xe8] sm:$0xff]
  %v2135 = vld [vmem:[%s2104 + $0xf0] sm:$0xff]
  %v2136 = vld [vmem:[%s2104 + $0xf8] sm:$0xff]
  %v2137 = vld [vmem:[%s2104 + $0x100] sm:$0xff]
  %v2138 = vld [vmem:[%s2104 + $0x108] sm:$0xff]
  %v2139 = vld [vmem:[%s2104 + $0x110] sm:$0xff]
  %v2140 = vld [vmem:[%s2104 + $0x118] sm:$0xff]
  %v2141 = vld [vmem:[%s2104 + $0x120] sm:$0xff]
  %v2142 = vld [vmem:[%s2104 + $0x128] sm:$0xff]
  %v2143 = vld [vmem:[%s2104 + $0x130] sm:$0xff]
  %v2144 = vld [vmem:[%s2104 + $0x138] sm:$0xff]
  %v2145 = vld [vmem:[%s2104 + $0x140] sm:$0xff]
  %v2146 = vld [vmem:[%s2104 + $0x148] sm:$0xff]
  %v2147 = vld [vmem:[%s2104 + $0x150] sm:$0xff]
  %v2148 = vld [vmem:[%s2104 + $0x158] sm:$0xff]
  %v2149 = vld [vmem:[%s2104 + $0x160] sm:$0xff]
  %v2150 = vld [vmem:[%s2104 + $0x168] sm:$0xff]
  %v2151 = vld [vmem:[%s2104 + $0x170] sm:$0xff]
  %v2152 = vld [vmem:[%s2104 + $0x178] sm:$0xff]
  %v2153 = vld [vmem:[%s2104 + $0x180] sm:$0xff]
  %v2154 = vld [vmem:[%s2104 + $0x188] sm:$0xff]
  %v2155 = vld [vmem:[%s2104 + $0x190] sm:$0xff]
  %v2156 = vld [vmem:[%s2104 + $0x198] sm:$0xff]
  %v2157 = vld [vmem:[%s2104 + $0x1a0] sm:$0xff]
  %v2158 = vld [vmem:[%s2104 + $0x1a8] sm:$0xff]
  %v2159 = vld [vmem:[%s2104 + $0x1b0] sm:$0xff]
  %v2160 = vld [vmem:[%s2104 + $0x1b8] sm:$0xff]
  %v2161 = vld [vmem:[%s2104 + $0x1c0] sm:$0xff]
  %v2162 = vld [vmem:[%s2104 + $0x1c8] sm:$0xff]
  %v2163 = vld [vmem:[%s2104 + $0x1d0] sm:$0xff]
  %v2164 = vld [vmem:[%s2104 + $0x1d8] sm:$0xff]
  %v2165 = vld [vmem:[%s2104 + $0x1e0] sm:$0xff]
  %v2166 = vld [vmem:[%s2104 + $0x1e8] sm:$0xff]
  %v2167 = vld [vmem:[%s2104 + $0x1f0] sm:$0xff]
  %v2168 = vld [vmem:[%s2104 + $0x1f8] sm:$0xff]
  %2169 = vmatprep.subr.mxu0 %v2106
  %2170 = vmatpush1.msra.mxu0 %v2105
  %2171 = vmatprep.subr.mxu0 %v2110
  %2172 = vmatpush1.msra.mxu0 %v2109
  %2173 = vmatprep.subr.mxu0 %v2114
  %2174 = vmatpush1.msra.mxu0 %v2113
  %2175 = vmatprep.subr.mxu0 %v2118
  %2176 = vmatpush1.msra.mxu0 %v2117
  %2177 = vmatprep.subr.mxu0 %v2122
  %2178 = vmatpush1.msra.mxu0 %v2121
  %2179 = vmatprep.subr.mxu0 %v2126
  %2180 = vmatpush1.msra.mxu0 %v2125
  %2181 = vmatprep.subr.mxu0 %v2130
  %2182 = vmatpush1.msra.mxu0 %v2129
  %2183 = vmatprep.subr.mxu0 %v2134
  %2184 = vmatpush1.msra.mxu0 %v2133
  %2185 = vmatprep.subr.mxu0 %v2138
  %2186 = vmatpush1.msra.mxu0 %v2137
  %2187 = vmatprep.subr.mxu0 %v2142
  %2188 = vmatpush1.msra.mxu0 %v2141
  %2189 = vmatprep.subr.mxu0 %v2146
  %2190 = vmatpush1.msra.mxu0 %v2145
  %2191 = vmatprep.subr.mxu0 %v2150
  %2192 = vmatpush1.msra.mxu0 %v2149
  %2193 = vmatprep.subr.mxu0 %v2154
  %2194 = vmatpush1.msra.mxu0 %v2153
  %2195 = vmatprep.subr.mxu0 %v2158
  %2196 = vmatpush1.msra.mxu0 %v2157
  %2197 = vmatprep.subr.mxu0 %v2162
  %2198 = vmatpush1.msra.mxu0 %v2161
  %2199 = vmatprep.subr.mxu0 %v2166
  %2200 = vmatpush1.msra.mxu0 %v2165
  %2201 = vmatprep.subr.mxu0 0.0
  %2202 = vmatpush1.msra.mxu0 0.0
  %2203 = vmatprep.subr.mxu0 0.0
  %2204 = vmatpush1.msra.mxu0 0.0
  %2205 = vmatprep.subr.mxu0 0.0
  %2206 = vmatpush1.msra.mxu0 0.0
  %2207 = vmatprep.subr.mxu0 0.0
  %2208 = vmatpush1.msra.mxu0 0.0
  %2209 = vmatprep.subr.mxu0 0.0
  %2210 = vmatpush1.msra.mxu0 0.0
  %2211 = vmatprep.subr.mxu0 0.0
  %2212 = vmatpush1.msra.mxu0 0.0
  %2213 = vmatprep.subr.mxu0 0.0
  %2214 = vmatpush1.msra.mxu0 0.0
  %2215 = vmatprep.subr.mxu0 0.0
  %2216 = vmatpush1.msra.mxu0 0.0
  %2217 = vmatprep.subr.mxu0 0.0
  %2218 = vmatpush1.msra.mxu0 0.0
  %2219 = vmatprep.subr.mxu0 0.0
  %2220 = vmatpush1.msra.mxu0 0.0
  %2221 = vmatprep.subr.mxu0 0.0
  %2222 = vmatpush1.msra.mxu0 0.0
  %2223 = vmatprep.subr.mxu0 0.0
  %2224 = vmatpush1.msra.mxu0 0.0
  %2225 = vmatprep.subr.mxu0 0.0
  %2226 = vmatpush1.msra.mxu0 0.0
  %2227 = vmatprep.subr.mxu0 0.0
  %2228 = vmatpush1.msra.mxu0 0.0
  %2229 = vmatprep.subr.mxu0 0.0
  %2230 = vmatpush1.msra.mxu0 0.0
  %2231 = vmatprep.subr.mxu0 0.0
  %2232 = vmatpush1.msra.mxu0 0.0
  %2233 = vmatprep.mubr.f32.mxu0 0.0
  %2234 = vmatmul.mubr.f32.gmra.mrb[0].mxu0 %v2101
  %v2235 = vpop.f32.mrb[0].mxu0
  %v2236 = vadd.f32 0.0, %v2235
  %v2237 = vpop.f32.mrb[0].mxu0
  %v2238 = vadd.f32 0.0, %v2237
  %2239 = vdwg.mxu0
  %2240 = vmatprep.subr.mxu0 %v2108
  %2241 = vmatpush1.msra.mxu0 %v2107
  %2242 = vmatprep.subr.mxu0 %v2112
  %2243 = vmatpush1.msra.mxu0 %v2111
  %2244 = vmatprep.subr.mxu0 %v2116
  %2245 = vmatpush1.msra.mxu0 %v2115
  %2246 = vmatprep.subr.mxu0 %v2120
  %2247 = vmatpush1.msra.mxu0 %v2119
  %2248 = vmatprep.subr.mxu0 %v2124
  %2249 = vmatpush1.msra.mxu0 %v2123
  %2250 = vmatprep.subr.mxu0 %v2128
  %2251 = vmatpush1.msra.mxu0 %v2127
  %2252 = vmatprep.subr.mxu0 %v2132
  %2253 = vmatpush1.msra.mxu0 %v2131
  %2254 = vmatprep.subr.mxu0 %v2136
  %2255 = vmatpush1.msra.mxu0 %v2135
  %2256 = vmatprep.subr.mxu0 %v2140
  %2257 = vmatpush1.msra.mxu0 %v2139
  %2258 = vmatprep.subr.mxu0 %v2144
  %2259 = vmatpush1.msra.mxu0 %v2143
  %2260 = vmatprep.subr.mxu0 %v2148
  %2261 = vmatpush1.msra.mxu0 %v2147
  %2262 = vmatprep.subr.mxu0 %v2152
  %2263 = vmatpush1.msra.mxu0 %v2151
  %2264 = vmatprep.subr.mxu0 %v2156
  %2265 = vmatpush1.msra.mxu0 %v2155
  %2266 = vmatprep.subr.mxu0 %v2160
  %2267 = vmatpush1.msra.mxu0 %v2159
  %2268 = vmatprep.subr.mxu0 %v2164
  %2269 = vmatpush1.msra.mxu0 %v2163
  %2270 = vmatprep.subr.mxu0 %v2168
  %2271 = vmatpush1.msra.mxu0 %v2167
  %2272 = vmatprep.subr.mxu0 0.0
  %2273 = vmatpush1.msra.mxu0 0.0
  %2274 = vmatprep.subr.mxu0 0.0
  %2275 = vmatpush1.msra.mxu0 0.0
  %2276 = vmatprep.subr.mxu0 0.0
  %2277 = vmatpush1.msra.mxu0 0.0
  %2278 = vmatprep.subr.mxu0 0.0
  %2279 = vmatpush1.msra.mxu0 0.0
  %2280 = vmatprep.subr.mxu0 0.0
  %2281 = vmatpush1.msra.mxu0 0.0
  %2282 = vmatprep.subr.mxu0 0.0
  %2283 = vmatpush1.msra.mxu0 0.0
  %2284 = vmatprep.subr.mxu0 0.0
  %2285 = vmatpush1.msra.mxu0 0.0
  %2286 = vmatprep.subr.mxu0 0.0
  %2287 = vmatpush1.msra.mxu0 0.0
  %2288 = vmatprep.subr.mxu0 0.0
  %2289 = vmatpush1.msra.mxu0 0.0
  %2290 = vmatprep.subr.mxu0 0.0
  %2291 = vmatpush1.msra.mxu0 0.0
  %2292 = vmatprep.subr.mxu0 0.0
  %2293 = vmatpush1.msra.mxu0 0.0
  %2294 = vmatprep.subr.mxu0 0.0
  %2295 = vmatpush1.msra.mxu0 0.0
  %2296 = vmatprep.subr.mxu0 0.0
  %2297 = vmatpush1.msra.mxu0 0.0
  %2298 = vmatprep.subr.mxu0 0.0
  %2299 = vmatpush1.msra.mxu0 0.0
  %2300 = vmatprep.subr.mxu0 0.0
  %2301 = vmatpush1.msra.mxu0 0.0
  %2302 = vmatprep.subr.mxu0 0.0
  %2303 = vmatpush1.msra.mxu0 0.0
  %2304 = vmatprep.mubr.f32.mxu0 0.0
  %2305 = vmatmul.mubr.f32.gmra.mrb[0].mxu0 %v2101
  %v2306 = vpop.f32.mrb[0].mxu0
  %v2307 = vadd.f32 0.0, %v2306
  %v2308 = vpop.f32.mrb[0].mxu0
  %v2309 = vadd.f32 0.0, %v2308
  %2310 = vdwg.mxu0
  %v2311 = vadd.f32 %v1941, %v2236
  %v2312 = vadd.f32 %v1943, %v2238
  %v2313 = vadd.f32 %v2054, %v2307
  %v2314 = vadd.f32 %v2056, %v2309
  %v2315 = vxor.u32 %v2311, 2147483648
  %v2316 = vmul.f32 %v2315, 1.442695
  %v2317 = vpow.pop %v2316
  %v2318 = vadd.f32 %v2317, 1.0
  %v2319 = vrcp.pop %v2318
  %v2320 = vmul.f32 1.0, %v2319
  %v2321 = vxor.u32 %v2312, 2147483648
  %v2322 = vmul.f32 %v2321, 1.442695
  %v2323 = vpow.pop %v2322
  %v2324 = vadd.f32 %v2323, 1.0
  %v2325 = vrcp.pop %v2324
  %v2326 = vmul.f32 1.0, %v2325
  %v2327 = vtanh.pop %v2313
  %v2328 = vxor.u32 %v2314, 2147483648
  %v2329 = vmul.f32 %v2328, 1.442695
  %v2330 = vpow.pop %v2329
  %v2331 = vadd.f32 %v2330, 1.0
  %v2332 = vrcp.pop %v2331
  %v2333 = vmul.f32 1.0, %v2332
  %v2334 = vmul.f32 %v2326, %v2103
  %v2335 = vmul.f32 %v2320, %v2327
  %v2336 = vadd.f32 %v2334, %v2335
  %v2337 = vtanh.pop %v2336
  %v2338 = vmul.f32 %v2333, %v2337
  %2339 = vmatprep.subr.mxu0 %v2106
  %2340 = vmatpush1.msra.mxu0 %v2105
  %2341 = vmatprep.subr.mxu0 %v2110
  %2342 = vmatpush1.msra.mxu0 %v2109
  %2343 = vmatprep.subr.mxu0 %v2114
  %2344 = vmatpush1.msra.mxu0 %v2113
  %2345 = vmatprep.subr.mxu0 %v2118
  %2346 = vmatpush1.msra.mxu0 %v2117
  %2347 = vmatprep.subr.mxu0 %v2122
  %2348 = vmatpush1.msra.mxu0 %v2121
  %2349 = vmatprep.subr.mxu0 %v2126
  %2350 = vmatpush1.msra.mxu0 %v2125
  %2351 = vmatprep.subr.mxu0 %v2130
  %2352 = vmatpush1.msra.mxu0 %v2129
  %2353 = vmatprep.subr.mxu0 %v2134
  %2354 = vmatpush1.msra.mxu0 %v2133
  %2355 = vmatprep.subr.mxu0 %v2138
  %2356 = vmatpush1.msra.mxu0 %v2137
  %2357 = vmatprep.subr.mxu0 %v2142
  %2358 = vmatpush1.msra.mxu0 %v2141
  %2359 = vmatprep.subr.mxu0 %v2146
  %2360 = vmatpush1.msra.mxu0 %v2145
  %2361 = vmatprep.subr.mxu0 %v2150
  %2362 = vmatpush1.msra.mxu0 %v2149
  %2363 = vmatprep.subr.mxu0 %v2154
  %2364 = vmatpush1.msra.mxu0 %v2153
  %2365 = vmatprep.subr.mxu0 %v2158
  %2366 = vmatpush1.msra.mxu0 %v2157
  %2367 = vmatprep.subr.mxu0 %v2162
  %2368 = vmatpush1.msra.mxu0 %v2161
  %2369 = vmatprep.subr.mxu0 %v2166
  %2370 = vmatpush1.msra.mxu0 %v2165
  %2371 = vmatprep.subr.mxu0 0.0
  %2372 = vmatpush1.msra.mxu0 0.0
  %2373 = vmatprep.subr.mxu0 0.0
  %2374 = vmatpush1.msra.mxu0 0.0
  %2375 = vmatprep.subr.mxu0 0.0
  %2376 = vmatpush1.msra.mxu0 0.0
  %2377 = vmatprep.subr.mxu0 0.0
  %2378 = vmatpush1.msra.mxu0 0.0
  %2379 = vmatprep.subr.mxu0 0.0
  %2380 = vmatpush1.msra.mxu0 0.0
  %2381 = vmatprep.subr.mxu0 0.0
  %2382 = vmatpush1.msra.mxu0 0.0
  %2383 = vmatprep.subr.mxu0 0.0
  %2384 = vmatpush1.msra.mxu0 0.0
  %2385 = vmatprep.subr.mxu0 0.0
  %2386 = vmatpush1.msra.mxu0 0.0
  %2387 = vmatprep.subr.mxu0 0.0
  %2388 = vmatpush1.msra.mxu0 0.0
  %2389 = vmatprep.subr.mxu0 0.0
  %2390 = vmatpush1.msra.mxu0 0.0
  %2391 = vmatprep.subr.mxu0 0.0
  %2392 = vmatpush1.msra.mxu0 0.0
  %2393 = vmatprep.subr.mxu0 0.0
  %2394 = vmatpush1.msra.mxu0 0.0
  %2395 = vmatprep.subr.mxu0 0.0
  %2396 = vmatpush1.msra.mxu0 0.0
  %2397 = vmatprep.subr.mxu0 0.0
  %2398 = vmatpush1.msra.mxu0 0.0
  %2399 = vmatprep.subr.mxu0 0.0
  %2400 = vmatpush1.msra.mxu0 0.0
  %2401 = vmatprep.subr.mxu0 0.0
  %2402 = vmatpush1.msra.mxu0 0.0
  %2403 = vmatprep.mubr.f32.mxu0 0.0
  %2404 = vmatmul.mubr.f32.gmra.mrb[0].mxu0 %v2338
  %v2405 = vpop.f32.mrb[0].mxu0
  %v2406 = vadd.f32 0.0, %v2405
  %v2407 = vpop.f32.mrb[0].mxu0
  %v2408 = vadd.f32 0.0, %v2407
  %2409 = vdwg.mxu0
  %2410 = vmatprep.subr.mxu0 %v2108
  %2411 = vmatpush1.msra.mxu0 %v2107
  %2412 = vmatprep.subr.mxu0 %v2112
  %2413 = vmatpush1.msra.mxu0 %v2111
  %2414 = vmatprep.subr.mxu0 %v2116
  %2415 = vmatpush1.msra.mxu0 %v2115
  %2416 = vmatprep.subr.mxu0 %v2120
  %2417 = vmatpush1.msra.mxu0 %v2119
  %2418 = vmatprep.subr.mxu0 %v2124
  %2419 = vmatpush1.msra.mxu0 %v2123
  %2420 = vmatprep.subr.mxu0 %v2128
  %2421 = vmatpush1.msra.mxu0 %v2127
  %2422 = vmatprep.subr.mxu0 %v2132
  %2423 = vmatpush1.msra.mxu0 %v2131
  %2424 = vmatprep.subr.mxu0 %v2136
  %2425 = vmatpush1.msra.mxu0 %v2135
  %2426 = vmatprep.subr.mxu0 %v2140
  %2427 = vmatpush1.msra.mxu0 %v2139
  %2428 = vmatprep.subr.mxu0 %v2144
  %2429 = vmatpush1.msra.mxu0 %v2143
  %2430 = vmatprep.subr.mxu0 %v2148
  %2431 = vmatpush1.msra.mxu0 %v2147
  %2432 = vmatprep.subr.mxu0 %v2152
  %2433 = vmatpush1.msra.mxu0 %v2151
  %2434 = vmatprep.subr.mxu0 %v2156
  %2435 = vmatpush1.msra.mxu0 %v2155
  %2436 = vmatprep.subr.mxu0 %v2160
  %2437 = vmatpush1.msra.mxu0 %v2159
  %2438 = vmatprep.subr.mxu0 %v2164
  %2439 = vmatpush1.msra.mxu0 %v2163
  %2440 = vmatprep.subr.mxu0 %v2168
  %2441 = vmatpush1.msra.mxu0 %v2167
  %2442 = vmatprep.subr.mxu0 0.0
  %2443 = vmatpush1.msra.mxu0 0.0
  %2444 = vmatprep.subr.mxu0 0.0
  %2445 = vmatpush1.msra.mxu0 0.0
  %2446 = vmatprep.subr.mxu0 0.0
  %2447 = vmatpush1.msra.mxu0 0.0
  %2448 = vmatprep.subr.mxu0 0.0
  %2449 = vmatpush1.msra.mxu0 0.0
  %2450 = vmatprep.subr.mxu0 0.0
  %2451 = vmatpush1.msra.mxu0 0.0
  %2452 = vmatprep.subr.mxu0 0.0
  %2453 = vmatpush1.msra.mxu0 0.0
  %2454 = vmatprep.subr.mxu0 0.0
  %2455 = vmatpush1.msra.mxu0 0.0
  %2456 = vmatprep.subr.mxu0 0.0
  %2457 = vmatpush1.msra.mxu0 0.0
  %2458 = vmatprep.subr.mxu0 0.0
  %2459 = vmatpush1.msra.mxu0 0.0
  %2460 = vmatprep.subr.mxu0 0.0
  %2461 = vmatpush1.msra.mxu0 0.0
  %2462 = vmatprep.subr.mxu0 0.0
  %2463 = vmatpush1.msra.mxu0 0.0
  %2464 = vmatprep.subr.mxu0 0.0
  %2465 = vmatpush1.msra.mxu0 0.0
  %2466 = vmatprep.subr.mxu0 0.0
  %2467 = vmatpush1.msra.mxu0 0.0
  %2468 = vmatprep.subr.mxu0 0.0
  %2469 = vmatpush1.msra.mxu0 0.0
  %2470 = vmatprep.subr.mxu0 0.0
  %2471 = vmatpush1.msra.mxu0 0.0
  %2472 = vmatprep.subr.mxu0 0.0
  %2473 = vmatpush1.msra.mxu0 0.0
  %2474 = vmatprep.mubr.f32.mxu0 0.0
  %2475 = vmatmul.mubr.f32.gmra.mrb[0].mxu0 %v2338
  %v2476 = vpop.f32.mrb[0].mxu0
  %v2477 = vadd.f32 0.0, %v2476
  %v2478 = vpop.f32.mrb[0].mxu0
  %v2479 = vadd.f32 0.0, %v2478
  %2480 = vdwg.mxu0
  %v2481 = vadd.f32 %v1947, %v2406
  %v2482 = vadd.f32 %v1949, %v2408
  %v2483 = vadd.f32 %v2060, %v2477
  %v2484 = vadd.f32 %v2062, %v2479
  %v2485 = vxor.u32 %v2481, 2147483648
  %v2486 = vmul.f32 %v2485, 1.442695
  %v2487 = vpow.pop %v2486
  %v2488 = vadd.f32 %v2487, 1.0
  %v2489 = vrcp.pop %v2488
  %v2490 = vmul.f32 1.0, %v2489
  %v2491 = vxor.u32 %v2482, 2147483648
  %v2492 = vmul.f32 %v2491, 1.442695
  %v2493 = vpow.pop %v2492
  %v2494 = vadd.f32 %v2493, 1.0
  %v2495 = vrcp.pop %v2494
  %v2496 = vmul.f32 1.0, %v2495
  %v2497 = vtanh.pop %v2483
  %v2498 = vxor.u32 %v2484, 2147483648
  %v2499 = vmul.f32 %v2498, 1.442695
  %v2500 = vpow.pop %v2499
  %v2501 = vadd.f32 %v2500, 1.0
  %v2502 = vrcp.pop %v2501
  %v2503 = vmul.f32 1.0, %v2502
  %v2504 = vmul.f32 %v2496, %v2336
  %v2505 = vmul.f32 %v2490, %v2497
  %v2506 = vadd.f32 %v2504, %v2505
  %v2507 = vtanh.pop %v2506
  %v2508 = vmul.f32 %v2503, %v2507
  %2509 = vmatprep.subr.mxu0 %v2106
  %2510 = vmatpush1.msra.mxu0 %v2105
  %2511 = vmatprep.subr.mxu0 %v2110
  %2512 = vmatpush1.msra.mxu0 %v2109
  %2513 = vmatprep.subr.mxu0 %v2114
  %2514 = vmatpush1.msra.mxu0 %v2113
  %2515 = vmatprep.subr.mxu0 %v2118
  %2516 = vmatpush1.msra.mxu0 %v2117
  %2517 = vmatprep.subr.mxu0 %v2122
  %2518 = vmatpush1.msra.mxu0 %v2121
  %2519 = vmatprep.subr.mxu0 %v2126
  %2520 = vmatpush1.msra.mxu0 %v2125
  %2521 = vmatprep.subr.mxu0 %v2130
  %2522 = vmatpush1.msra.mxu0 %v2129
  %2523 = vmatprep.subr.mxu0 %v2134
  %2524 = vmatpush1.msra.mxu0 %v2133
  %2525 = vmatprep.subr.mxu0 %v2138
  %2526 = vmatpush1.msra.mxu0 %v2137
  %2527 = vmatprep.subr.mxu0 %v2142
  %2528 = vmatpush1.msra.mxu0 %v2141
  %2529 = vmatprep.subr.mxu0 %v2146
  %2530 = vmatpush1.msra.mxu0 %v2145
  %2531 = vmatprep.subr.mxu0 %v2150
  %2532 = vmatpush1.msra.mxu0 %v2149
  %2533 = vmatprep.subr.mxu0 %v2154
  %2534 = vmatpush1.msra.mxu0 %v2153
  %2535 = vmatprep.subr.mxu0 %v2158
  %2536 = vmatpush1.msra.mxu0 %v2157
  %2537 = vmatprep.subr.mxu0 %v2162
  %2538 = vmatpush1.msra.mxu0 %v2161
  %2539 = vmatprep.subr.mxu0 %v2166
  %2540 = vmatpush1.msra.mxu0 %v2165
  %2541 = vmatprep.subr.mxu0 0.0
  %2542 = vmatpush1.msra.mxu0 0.0
  %2543 = vmatprep.subr.mxu0 0.0
  %2544 = vmatpush1.msra.mxu0 0.0
  %2545 = vmatprep.subr.mxu0 0.0
  %2546 = vmatpush1.msra.mxu0 0.0
  %2547 = vmatprep.subr.mxu0 0.0
  %2548 = vmatpush1.msra.mxu0 0.0
  %2549 = vmatprep.subr.mxu0 0.0
  %2550 = vmatpush1.msra.mxu0 0.0
  %2551 = vmatprep.subr.mxu0 0.0
  %2552 = vmatpush1.msra.mxu0 0.0
  %2553 = vmatprep.subr.mxu0 0.0
  %2554 = vmatpush1.msra.mxu0 0.0
  %2555 = vmatprep.subr.mxu0 0.0
  %2556 = vmatpush1.msra.mxu0 0.0
  %2557 = vmatprep.subr.mxu0 0.0
  %2558 = vmatpush1.msra.mxu0 0.0
  %2559 = vmatprep.subr.mxu0 0.0
  %2560 = vmatpush1.msra.mxu0 0.0
  %2561 = vmatprep.subr.mxu0 0.0
  %2562 = vmatpush1.msra.mxu0 0.0
  %2563 = vmatprep.subr.mxu0 0.0
  %2564 = vmatpush1.msra.mxu0 0.0
  %2565 = vmatprep.subr.mxu0 0.0
  %2566 = vmatpush1.msra.mxu0 0.0
  %2567 = vmatprep.subr.mxu0 0.0
  %2568 = vmatpush1.msra.mxu0 0.0
  %2569 = vmatprep.subr.mxu0 0.0
  %2570 = vmatpush1.msra.mxu0 0.0
  %2571 = vmatprep.subr.mxu0 0.0
  %2572 = vmatpush1.msra.mxu0 0.0
  %2573 = vmatprep.mubr.f32.mxu0 0.0
  %2574 = vmatmul.mubr.f32.gmra.mrb[0].mxu0 %v2508
  %v2575 = vpop.f32.mrb[0].mxu0
  %v2576 = vadd.f32 0.0, %v2575
  %v2577 = vpop.f32.mrb[0].mxu0
  %v2578 = vadd.f32 0.0, %v2577
  %2579 = vdwg.mxu0
  %2580 = vmatprep.subr.mxu0 %v2108
  %2581 = vmatpush1.msra.mxu0 %v2107
  %2582 = vmatprep.subr.mxu0 %v2112
  %2583 = vmatpush1.msra.mxu0 %v2111
  %2584 = vmatprep.subr.mxu0 %v2116
  %2585 = vmatpush1.msra.mxu0 %v2115
  %2586 = vmatprep.subr.mxu0 %v2120
  %2587 = vmatpush1.msra.mxu0 %v2119
  %2588 = vmatprep.subr.mxu0 %v2124
  %2589 = vmatpush1.msra.mxu0 %v2123
  %2590 = vmatprep.subr.mxu0 %v2128
  %2591 = vmatpush1.msra.mxu0 %v2127
  %2592 = vmatprep.subr.mxu0 %v2132
  %2593 = vmatpush1.msra.mxu0 %v2131
  %2594 = vmatprep.subr.mxu0 %v2136
  %2595 = vmatpush1.msra.mxu0 %v2135
  %2596 = vmatprep.subr.mxu0 %v2140
  %2597 = vmatpush1.msra.mxu0 %v2139
  %2598 = vmatprep.subr.mxu0 %v2144
  %2599 = vmatpush1.msra.mxu0 %v2143
  %2600 = vmatprep.subr.mxu0 %v2148
  %2601 = vmatpush1.msra.mxu0 %v2147
  %2602 = vmatprep.subr.mxu0 %v2152
  %2603 = vmatpush1.msra.mxu0 %v2151
  %2604 = vmatprep.subr.mxu0 %v2156
  %2605 = vmatpush1.msra.mxu0 %v2155
  %2606 = vmatprep.subr.mxu0 %v2160
  %2607 = vmatpush1.msra.mxu0 %v2159
  %2608 = vmatprep.subr.mxu0 %v2164
  %2609 = vmatpush1.msra.mxu0 %v2163
  %2610 = vmatprep.subr.mxu0 %v2168
  %2611 = vmatpush1.msra.mxu0 %v2167
  %2612 = vmatprep.subr.mxu0 0.0
  %2613 = vmatpush1.msra.mxu0 0.0
  %2614 = vmatprep.subr.mxu0 0.0
  %2615 = vmatpush1.msra.mxu0 0.0
  %2616 = vmatprep.subr.mxu0 0.0
  %2617 = vmatpush1.msra.mxu0 0.0
  %2618 = vmatprep.subr.mxu0 0.0
  %2619 = vmatpush1.msra.mxu0 0.0
  %2620 = vmatprep.subr.mxu0 0.0
  %2621 = vmatpush1.msra.mxu0 0.0
  %2622 = vmatprep.subr.mxu0 0.0
  %2623 = vmatpush1.msra.mxu0 0.0
  %2624 = vmatprep.subr.mxu0 0.0
  %2625 = vmatpush1.msra.mxu0 0.0
  %2626 = vmatprep.subr.mxu0 0.0
  %2627 = vmatpush1.msra.mxu0 0.0
  %2628 = vmatprep.subr.mxu0 0.0
  %2629 = vmatpush1.msra.mxu0 0.0
  %2630 = vmatprep.subr.mxu0 0.0
  %2631 = vmatpush1.msra.mxu0 0.0
  %2632 = vmatprep.subr.mxu0 0.0
  %2633 = vmatpush1.msra.mxu0 0.0
  %2634 = vmatprep.subr.mxu0 0.0
  %2635 = vmatpush1.msra.mxu0 0.0
  %2636 = vmatprep.subr.mxu0 0.0
  %2637 = vmatpush1.msra.mxu0 0.0
  %2638 = vmatprep.subr.mxu0 0.0
  %2639 = vmatpush1.msra.mxu0 0.0
  %2640 = vmatprep.subr.mxu0 0.0
  %2641 = vmatpush1.msra.mxu0 0.0
  %2642 = vmatprep.subr.mxu0 0.0
  %2643 = vmatpush1.msra.mxu0 0.0
  %2644 = vmatprep.mubr.f32.mxu0 0.0
  %2645 = vmatmul.mubr.f32.gmra.mrb[0].mxu0 %v2508
  %v2646 = vpop.f32.mrb[0].mxu0
  %v2647 = vadd.f32 0.0, %v2646
  %v2648 = vpop.f32.mrb[0].mxu0
  %v2649 = vadd.f32 0.0, %v2648
  %2650 = vdwg.mxu0
  %v2651 = vadd.f32 %v1953, %v2576
  %v2652 = vadd.f32 %v1955, %v2578
  %v2653 = vadd.f32 %v2066, %v2647
  %v2654 = vadd.f32 %v2068, %v2649
  %v2655 = vxor.u32 %v2651, 2147483648
  %v2656 = vmul.f32 %v2655, 1.442695
  %v2657 = vpow.pop %v2656
  %v2658 = vadd.f32 %v2657, 1.0
  %v2659 = vrcp.pop %v2658
  %v2660 = vmul.f32 1.0, %v2659
  %v2661 = vxor.u32 %v2652, 2147483648
  %v2662 = vmul.f32 %v2661, 1.442695
  %v2663 = vpow.pop %v2662
  %v2664 = vadd.f32 %v2663, 1.0
  %v2665 = vrcp.pop %v2664
  %v2666 = vmul.f32 1.0, %v2665
  %v2667 = vtanh.pop %v2653
  %v2668 = vxor.u32 %v2654, 2147483648
  %v2669 = vmul.f32 %v2668, 1.442695
  %v2670 = vpow.pop %v2669
  %v2671 = vadd.f32 %v2670, 1.0
  %v2672 = vrcp.pop %v2671
  %v2673 = vmul.f32 1.0, %v2672
  %v2674 = vmul.f32 %v2666, %v2506
  %v2675 = vmul.f32 %v2660, %v2667
  %v2676 = vadd.f32 %v2674, %v2675
  %v2677 = vtanh.pop %v2676
  %v2678 = vmul.f32 %v2673, %v2677
  %2679 = vmatprep.subr.mxu0 %v2106
  %2680 = vmatpush1.msra.mxu0 %v2105
  %2681 = vmatprep.subr.mxu0 %v2110
  %2682 = vmatpush1.msra.mxu0 %v2109
  %2683 = vmatprep.subr.mxu0 %v2114
  %2684 = vmatpush1.msra.mxu0 %v2113
  %2685 = vmatprep.subr.mxu0 %v2118
  %2686 = vmatpush1.msra.mxu0 %v2117
  %2687 = vmatprep.subr.mxu0 %v2122
  %2688 = vmatpush1.msra.mxu0 %v2121
  %2689 = vmatprep.subr.mxu0 %v2126
  %2690 = vmatpush1.msra.mxu0 %v2125
  %2691 = vmatprep.subr.mxu0 %v2130
  %2692 = vmatpush1.msra.mxu0 %v2129
  %2693 = vmatprep.subr.mxu0 %v2134
  %2694 = vmatpush1.msra.mxu0 %v2133
  %2695 = vmatprep.subr.mxu0 %v2138
  %2696 = vmatpush1.msra.mxu0 %v2137
  %2697 = vmatprep.subr.mxu0 %v2142
  %2698 = vmatpush1.msra.mxu0 %v2141
  %2699 = vmatprep.subr.mxu0 %v2146
  %2700 = vmatpush1.msra.mxu0 %v2145
  %2701 = vmatprep.subr.mxu0 %v2150
  %2702 = vmatpush1.msra.mxu0 %v2149
  %2703 = vmatprep.subr.mxu0 %v2154
  %2704 = vmatpush1.msra.mxu0 %v2153
  %2705 = vmatprep.subr.mxu0 %v2158
  %2706 = vmatpush1.msra.mxu0 %v2157
  %2707 = vmatprep.subr.mxu0 %v2162
  %2708 = vmatpush1.msra.mxu0 %v2161
  %2709 = vmatprep.subr.mxu0 %v2166
  %2710 = vmatpush1.msra.mxu0 %v2165
  %2711 = vmatprep.subr.mxu0 0.0
  %2712 = vmatpush1.msra.mxu0 0.0
  %2713 = vmatprep.subr.mxu0 0.0
  %2714 = vmatpush1.msra.mxu0 0.0
  %2715 = vmatprep.subr.mxu0 0.0
  %2716 = vmatpush1.msra.mxu0 0.0
  %2717 = vmatprep.subr.mxu0 0.0
  %2718 = vmatpush1.msra.mxu0 0.0
  %2719 = vmatprep.subr.mxu0 0.0
  %2720 = vmatpush1.msra.mxu0 0.0
  %2721 = vmatprep.subr.mxu0 0.0
  %2722 = vmatpush1.msra.mxu0 0.0
  %2723 = vmatprep.subr.mxu0 0.0
  %2724 = vmatpush1.msra.mxu0 0.0
  %2725 = vmatprep.subr.mxu0 0.0
  %2726 = vmatpush1.msra.mxu0 0.0
  %2727 = vmatprep.subr.mxu0 0.0
  %2728 = vmatpush1.msra.mxu0 0.0
  %2729 = vmatprep.subr.mxu0 0.0
  %2730 = vmatpush1.msra.mxu0 0.0
  %2731 = vmatprep.subr.mxu0 0.0
  %2732 = vmatpush1.msra.mxu0 0.0
  %2733 = vmatprep.subr.mxu0 0.0
  %2734 = vmatpush1.msra.mxu0 0.0
  %2735 = vmatprep.subr.mxu0 0.0
  %2736 = vmatpush1.msra.mxu0 0.0
  %2737 = vmatprep.subr.mxu0 0.0
  %2738 = vmatpush1.msra.mxu0 0.0
  %2739 = vmatprep.subr.mxu0 0.0
  %2740 = vmatpush1.msra.mxu0 0.0
  %2741 = vmatprep.subr.mxu0 0.0
  %2742 = vmatpush1.msra.mxu0 0.0
  %2743 = vmatprep.mubr.f32.mxu0 0.0
  %2744 = vmatmul.mubr.f32.gmra.mrb[0].mxu0 %v2678
  %v2745 = vpop.f32.mrb[0].mxu0
  %v2746 = vadd.f32 0.0, %v2745
  %v2747 = vpop.f32.mrb[0].mxu0
  %v2748 = vadd.f32 0.0, %v2747
  %2749 = vdwg.mxu0
  %2750 = vmatprep.subr.mxu0 %v2108
  %2751 = vmatpush1.msra.mxu0 %v2107
  %2752 = vmatprep.subr.mxu0 %v2112
  %2753 = vmatpush1.msra.mxu0 %v2111
  %2754 = vmatprep.subr.mxu0 %v2116
  %2755 = vmatpush1.msra.mxu0 %v2115
  %2756 = vmatprep.subr.mxu0 %v2120
  %2757 = vmatpush1.msra.mxu0 %v2119
  %2758 = vmatprep.subr.mxu0 %v2124
  %2759 = vmatpush1.msra.mxu0 %v2123
  %2760 = vmatprep.subr.mxu0 %v2128
  %2761 = vmatpush1.msra.mxu0 %v2127
  %2762 = vmatprep.subr.mxu0 %v2132
  %2763 = vmatpush1.msra.mxu0 %v2131
  %2764 = vmatprep.subr.mxu0 %v2136
  %2765 = vmatpush1.msra.mxu0 %v2135
  %2766 = vmatprep.subr.mxu0 %v2140
  %2767 = vmatpush1.msra.mxu0 %v2139
  %2768 = vmatprep.subr.mxu0 %v2144
  %2769 = vmatpush1.msra.mxu0 %v2143
  %2770 = vmatprep.subr.mxu0 %v2148
  %2771 = vmatpush1.msra.mxu0 %v2147
  %2772 = vmatprep.subr.mxu0 %v2152
  %2773 = vmatpush1.msra.mxu0 %v2151
  %2774 = vmatprep.subr.mxu0 %v2156
  %2775 = vmatpush1.msra.mxu0 %v2155
  %2776 = vmatprep.subr.mxu0 %v2160
  %2777 = vmatpush1.msra.mxu0 %v2159
  %2778 = vmatprep.subr.mxu0 %v2164
  %2779 = vmatpush1.msra.mxu0 %v2163
  %2780 = vmatprep.subr.mxu0 %v2168
  %2781 = vmatpush1.msra.mxu0 %v2167
  %2782 = vmatprep.subr.mxu0 0.0
  %2783 = vmatpush1.msra.mxu0 0.0
  %2784 = vmatprep.subr.mxu0 0.0
  %2785 = vmatpush1.msra.mxu0 0.0
  %2786 = vmatprep.subr.mxu0 0.0
  %2787 = vmatpush1.msra.mxu0 0.0
  %2788 = vmatprep.subr.mxu0 0.0
  %2789 = vmatpush1.msra.mxu0 0.0
  %2790 = vmatprep.subr.mxu0 0.0
  %2791 = vmatpush1.msra.mxu0 0.0
  %2792 = vmatprep.subr.mxu0 0.0
  %2793 = vmatpush1.msra.mxu0 0.0
  %2794 = vmatprep.subr.mxu0 0.0
  %2795 = vmatpush1.msra.mxu0 0.0
  %2796 = vmatprep.subr.mxu0 0.0
  %2797 = vmatpush1.msra.mxu0 0.0
  %2798 = vmatprep.subr.mxu0 0.0
  %2799 = vmatpush1.msra.mxu0 0.0
  %2800 = vmatprep.subr.mxu0 0.0
  %2801 = vmatpush1.msra.mxu0 0.0
  %2802 = vmatprep.subr.mxu0 0.0
  %2803 = vmatpush1.msra.mxu0 0.0
  %2804 = vmatprep.subr.mxu0 0.0
  %2805 = vmatpush1.msra.mxu0 0.0
  %2806 = vmatprep.subr.mxu0 0.0
  %2807 = vmatpush1.msra.mxu0 0.0
  %2808 = vmatprep.subr.mxu0 0.0
  %2809 = vmatpush1.msra.mxu0 0.0
  %2810 = vmatprep.subr.mxu0 0.0
  %2811 = vmatpush1.msra.mxu0 0.0
  %2812 = vmatprep.subr.mxu0 0.0
  %2813 = vmatpush1.msra.mxu0 0.0
  %2814 = vmatprep.mubr.f32.mxu0 0.0
  %2815 = vmatmul.mubr.f32.gmra.mrb[0].mxu0 %v2678
  %v2816 = vpop.f32.mrb[0].mxu0
  %v2817 = vadd.f32 0.0, %v2816
  %v2818 = vpop.f32.mrb[0].mxu0
  %v2819 = vadd.f32 0.0, %v2818
  %2820 = vdwg.mxu0
  %v2821 = vadd.f32 %v1959, %v2746
  %v2822 = vadd.f32 %v1961, %v2748
  %v2823 = vadd.f32 %v2072, %v2817
  %v2824 = vadd.f32 %v2074, %v2819
  %v2825 = vxor.u32 %v2821, 2147483648
  %v2826 = vmul.f32 %v2825, 1.442695
  %v2827 = vpow.pop %v2826
  %v2828 = vadd.f32 %v2827, 1.0
  %v2829 = vrcp.pop %v2828
  %v2830 = vmul.f32 1.0, %v2829
  %v2831 = vxor.u32 %v2822, 2147483648
  %v2832 = vmul.f32 %v2831, 1.442695
  %v2833 = vpow.pop %v2832
  %v2834 = vadd.f32 %v2833, 1.0
  %v2835 = vrcp.pop %v2834
  %v2836 = vmul.f32 1.0, %v2835
  %v2837 = vtanh.pop %v2823
  %v2838 = vxor.u32 %v2824, 2147483648
  %v2839 = vmul.f32 %v2838, 1.442695
  %v2840 = vpow.pop %v2839
  %v2841 = vadd.f32 %v2840, 1.0
  %v2842 = vrcp.pop %v2841
  %v2843 = vmul.f32 1.0, %v2842
  %v2844 = vmul.f32 %v2836, %v2676
  %v2845 = vmul.f32 %v2830, %v2837
  %v2846 = vadd.f32 %v2844, %v2845
  %v2847 = vtanh.pop %v2846
  %v2848 = vmul.f32 %v2843, %v2847
  %2849 = vmatprep.subr.mxu0 %v2106
  %2850 = vmatpush1.msra.mxu0 %v2105
  %2851 = vmatprep.subr.mxu0 %v2110
  %2852 = vmatpush1.msra.mxu0 %v2109
  %2853 = vmatprep.subr.mxu0 %v2114
  %2854 = vmatpush1.msra.mxu0 %v2113
  %2855 = vmatprep.subr.mxu0 %v2118
  %2856 = vmatpush1.msra.mxu0 %v2117
  %2857 = vmatprep.subr.mxu0 %v2122
  %2858 = vmatpush1.msra.mxu0 %v2121
  %2859 = vmatprep.subr.mxu0 %v2126
  %2860 = vmatpush1.msra.mxu0 %v2125
  %2861 = vmatprep.subr.mxu0 %v2130
  %2862 = vmatpush1.msra.mxu0 %v2129
  %2863 = vmatprep.subr.mxu0 %v2134
  %2864 = vmatpush1.msra.mxu0 %v2133
  %2865 = vmatprep.subr.mxu0 %v2138
  %2866 = vmatpush1.msra.mxu0 %v2137
  %2867 = vmatprep.subr.mxu0 %v2142
  %2868 = vmatpush1.msra.mxu0 %v2141
  %2869 = vmatprep.subr.mxu0 %v2146
  %2870 = vmatpush1.msra.mxu0 %v2145
  %2871 = vmatprep.subr.mxu0 %v2150
  %2872 = vmatpush1.msra.mxu0 %v2149
  %2873 = vmatprep.subr.mxu0 %v2154
  %2874 = vmatpush1.msra.mxu0 %v2153
  %2875 = vmatprep.subr.mxu0 %v2158
  %2876 = vmatpush1.msra.mxu0 %v2157
  %2877 = vmatprep.subr.mxu0 %v2162
  %2878 = vmatpush1.msra.mxu0 %v2161
  %2879 = vmatprep.subr.mxu0 %v2166
  %2880 = vmatpush1.msra.mxu0 %v2165
  %2881 = vmatprep.subr.mxu0 0.0
  %2882 = vmatpush1.msra.mxu0 0.0
  %2883 = vmatprep.subr.mxu0 0.0
  %2884 = vmatpush1.msra.mxu0 0.0
  %2885 = vmatprep.subr.mxu0 0.0
  %2886 = vmatpush1.msra.mxu0 0.0
  %2887 = vmatprep.subr.mxu0 0.0
  %2888 = vmatpush1.msra.mxu0 0.0
  %2889 = vmatprep.subr.mxu0 0.0
  %2890 = vmatpush1.msra.mxu0 0.0
  %2891 = vmatprep.subr.mxu0 0.0
  %2892 = vmatpush1.msra.mxu0 0.0
  %2893 = vmatprep.subr.mxu0 0.0
  %2894 = vmatpush1.msra.mxu0 0.0
  %2895 = vmatprep.subr.mxu0 0.0
  %2896 = vmatpush1.msra.mxu0 0.0
  %2897 = vmatprep.subr.mxu0 0.0
  %2898 = vmatpush1.msra.mxu0 0.0
  %2899 = vmatprep.subr.mxu0 0.0
  %2900 = vmatpush1.msra.mxu0 0.0
  %2901 = vmatprep.subr.mxu0 0.0
  %2902 = vmatpush1.msra.mxu0 0.0
  %2903 = vmatprep.subr.mxu0 0.0
  %2904 = vmatpush1.msra.mxu0 0.0
  %2905 = vmatprep.subr.mxu0 0.0
  %2906 = vmatpush1.msra.mxu0 0.0
  %2907 = vmatprep.subr.mxu0 0.0
  %2908 = vmatpush1.msra.mxu0 0.0
  %2909 = vmatprep.subr.mxu0 0.0
  %2910 = vmatpush1.msra.mxu0 0.0
  %2911 = vmatprep.subr.mxu0 0.0
  %2912 = vmatpush1.msra.mxu0 0.0
  %2913 = vmatprep.mubr.f32.mxu0 0.0
  %2914 = vmatmul.mubr.f32.gmra.mrb[0].mxu0 %v2848
  %v2915 = vpop.f32.mrb[0].mxu0
  %v2916 = vadd.f32 0.0, %v2915
  %v2917 = vpop.f32.mrb[0].mxu0
  %v2918 = vadd.f32 0.0, %v2917
  %2919 = vdwg.mxu0
  %2920 = vmatprep.subr.mxu0 %v2108
  %2921 = vmatpush1.msra.mxu0 %v2107
  %2922 = vmatprep.subr.mxu0 %v2112
  %2923 = vmatpush1.msra.mxu0 %v2111
  %2924 = vmatprep.subr.mxu0 %v2116
  %2925 = vmatpush1.msra.mxu0 %v2115
  %2926 = vmatprep.subr.mxu0 %v2120
  %2927 = vmatpush1.msra.mxu0 %v2119
  %2928 = vmatprep.subr.mxu0 %v2124
  %2929 = vmatpush1.msra.mxu0 %v2123
  %2930 = vmatprep.subr.mxu0 %v2128
  %2931 = vmatpush1.msra.mxu0 %v2127
  %2932 = vmatprep.subr.mxu0 %v2132
  %2933 = vmatpush1.msra.mxu0 %v2131
  %2934 = vmatprep.subr.mxu0 %v2136
  %2935 = vmatpush1.msra.mxu0 %v2135
  %2936 = vmatprep.subr.mxu0 %v2140
  %2937 = vmatpush1.msra.mxu0 %v2139
  %2938 = vmatprep.subr.mxu0 %v2144
  %2939 = vmatpush1.msra.mxu0 %v2143
  %2940 = vmatprep.subr.mxu0 %v2148
  %2941 = vmatpush1.msra.mxu0 %v2147
  %2942 = vmatprep.subr.mxu0 %v2152
  %2943 = vmatpush1.msra.mxu0 %v2151
  %2944 = vmatprep.subr.mxu0 %v2156
  %2945 = vmatpush1.msra.mxu0 %v2155
  %2946 = vmatprep.subr.mxu0 %v2160
  %2947 = vmatpush1.msra.mxu0 %v2159
  %2948 = vmatprep.subr.mxu0 %v2164
  %2949 = vmatpush1.msra.mxu0 %v2163
  %2950 = vmatprep.subr.mxu0 %v2168
  %2951 = vmatpush1.msra.mxu0 %v2167
  %2952 = vmatprep.subr.mxu0 0.0
  %2953 = vmatpush1.msra.mxu0 0.0
  %2954 = vmatprep.subr.mxu0 0.0
  %2955 = vmatpush1.msra.mxu0 0.0
  %2956 = vmatprep.subr.mxu0 0.0
  %2957 = vmatpush1.msra.mxu0 0.0
  %2958 = vmatprep.subr.mxu0 0.0
  %2959 = vmatpush1.msra.mxu0 0.0
  %2960 = vmatprep.subr.mxu0 0.0
  %2961 = vmatpush1.msra.mxu0 0.0
  %2962 = vmatprep.subr.mxu0 0.0
  %2963 = vmatpush1.msra.mxu0 0.0
  %2964 = vmatprep.subr.mxu0 0.0
  %2965 = vmatpush1.msra.mxu0 0.0
  %2966 = vmatprep.subr.mxu0 0.0
  %2967 = vmatpush1.msra.mxu0 0.0
  %2968 = vmatprep.subr.mxu0 0.0
  %2969 = vmatpush1.msra.mxu0 0.0
  %2970 = vmatprep.subr.mxu0 0.0
  %2971 = vmatpush1.msra.mxu0 0.0
  %2972 = vmatprep.subr.mxu0 0.0
  %2973 = vmatpush1.msra.mxu0 0.0
  %2974 = vmatprep.subr.mxu0 0.0
  %2975 = vmatpush1.msra.mxu0 0.0
  %2976 = vmatprep.subr.mxu0 0.0
  %2977 = vmatpush1.msra.mxu0 0.0
  %2978 = vmatprep.subr.mxu0 0.0
  %2979 = vmatpush1.msra.mxu0 0.0
  %2980 = vmatprep.subr.mxu0 0.0
  %2981 = vmatpush1.msra.mxu0 0.0
  %2982 = vmatprep.subr.mxu0 0.0
  %2983 = vmatpush1.msra.mxu0 0.0
  %2984 = vmatprep.mubr.f32.mxu0 0.0
  %2985 = vmatmul.mubr.f32.gmra.mrb[0].mxu0 %v2848
  %v2986 = vpop.f32.mrb[0].mxu0
  %v2987 = vadd.f32 0.0, %v2986
  %v2988 = vpop.f32.mrb[0].mxu0
  %v2989 = vadd.f32 0.0, %v2988
  %2990 = vdwg.mxu0
  %v2991 = vadd.f32 %v1965, %v2916
  %v2992 = vadd.f32 %v1967, %v2918
  %v2993 = vadd.f32 %v2078, %v2987
  %v2994 = vadd.f32 %v2080, %v2989
  %v2995 = vxor.u32 %v2991, 2147483648
  %v2996 = vmul.f32 %v2995, 1.442695
  %v2997 = vpow.pop %v2996
  %v2998 = vadd.f32 %v2997, 1.0
  %v2999 = vrcp.pop %v2998
  %v3000 = vmul.f32 1.0, %v2999
  %v3001 = vxor.u32 %v2992, 2147483648
  %v3002 = vmul.f32 %v3001, 1.442695
  %v3003 = vpow.pop %v3002
  %v3004 = vadd.f32 %v3003, 1.0
  %v3005 = vrcp.pop %v3004
  %v3006 = vmul.f32 1.0, %v3005
  %v3007 = vtanh.pop %v2993
  %v3008 = vxor.u32 %v2994, 2147483648
  %v3009 = vmul.f32 %v3008, 1.442695
  %v3010 = vpow.pop %v3009
  %v3011 = vadd.f32 %v3010, 1.0
  %v3012 = vrcp.pop %v3011
  %v3013 = vmul.f32 1.0, %v3012
  %v3014 = vmul.f32 %v3006, %v2846
  %v3015 = vmul.f32 %v3000, %v3007
  %v3016 = vadd.f32 %v3014, %v3015
  %v3017 = vtanh.pop %v3016
  %v3018 = vmul.f32 %v3013, %v3017
  %3019 = vmatprep.subr.mxu0 %v2106
  %3020 = vmatpush1.msra.mxu0 %v2105
  %3021 = vmatprep.subr.mxu0 %v2110
  %3022 = vmatpush1.msra.mxu0 %v2109
  %3023 = vmatprep.subr.mxu0 %v2114
  %3024 = vmatpush1.msra.mxu0 %v2113
  %3025 = vmatprep.subr.mxu0 %v2118
  %3026 = vmatpush1.msra.mxu0 %v2117
  %3027 = vmatprep.subr.mxu0 %v2122
  %3028 = vmatpush1.msra.mxu0 %v2121
  %3029 = vmatprep.subr.mxu0 %v2126
  %3030 = vmatpush1.msra.mxu0 %v2125
  %3031 = vmatprep.subr.mxu0 %v2130
  %3032 = vmatpush1.msra.mxu0 %v2129
  %3033 = vmatprep.subr.mxu0 %v2134
  %3034 = vmatpush1.msra.mxu0 %v2133
  %3035 = vmatprep.subr.mxu0 %v2138
  %3036 = vmatpush1.msra.mxu0 %v2137
  %3037 = vmatprep.subr.mxu0 %v2142
  %3038 = vmatpush1.msra.mxu0 %v2141
  %3039 = vmatprep.subr.mxu0 %v2146
  %3040 = vmatpush1.msra.mxu0 %v2145
  %3041 = vmatprep.subr.mxu0 %v2150
  %3042 = vmatpush1.msra.mxu0 %v2149
  %3043 = vmatprep.subr.mxu0 %v2154
  %3044 = vmatpush1.msra.mxu0 %v2153
  %3045 = vmatprep.subr.mxu0 %v2158
  %3046 = vmatpush1.msra.mxu0 %v2157
  %3047 = vmatprep.subr.mxu0 %v2162
  %3048 = vmatpush1.msra.mxu0 %v2161
  %3049 = vmatprep.subr.mxu0 %v2166
  %3050 = vmatpush1.msra.mxu0 %v2165
  %3051 = vmatprep.subr.mxu0 0.0
  %3052 = vmatpush1.msra.mxu0 0.0
  %3053 = vmatprep.subr.mxu0 0.0
  %3054 = vmatpush1.msra.mxu0 0.0
  %3055 = vmatprep.subr.mxu0 0.0
  %3056 = vmatpush1.msra.mxu0 0.0
  %3057 = vmatprep.subr.mxu0 0.0
  %3058 = vmatpush1.msra.mxu0 0.0
  %3059 = vmatprep.subr.mxu0 0.0
  %3060 = vmatpush1.msra.mxu0 0.0
  %3061 = vmatprep.subr.mxu0 0.0
  %3062 = vmatpush1.msra.mxu0 0.0
  %3063 = vmatprep.subr.mxu0 0.0
  %3064 = vmatpush1.msra.mxu0 0.0
  %3065 = vmatprep.subr.mxu0 0.0
  %3066 = vmatpush1.msra.mxu0 0.0
  %3067 = vmatprep.subr.mxu0 0.0
  %3068 = vmatpush1.msra.mxu0 0.0
  %3069 = vmatprep.subr.mxu0 0.0
  %3070 = vmatpush1.msra.mxu0 0.0
  %3071 = vmatprep.subr.mxu0 0.0
  %3072 = vmatpush1.msra.mxu0 0.0
  %3073 = vmatprep.subr.mxu0 0.0
  %3074 = vmatpush1.msra.mxu0 0.0
  %3075 = vmatprep.subr.mxu0 0.0
  %3076 = vmatpush1.msra.mxu0 0.0
  %3077 = vmatprep.subr.mxu0 0.0
  %3078 = vmatpush1.msra.mxu0 0.0
  %3079 = vmatprep.subr.mxu0 0.0
  %3080 = vmatpush1.msra.mxu0 0.0
  %3081 = vmatprep.subr.mxu0 0.0
  %3082 = vmatpush1.msra.mxu0 0.0
  %3083 = vmatprep.mubr.f32.mxu0 0.0
  %3084 = vmatmul.mubr.f32.gmra.mrb[0].mxu0 %v3018
  %v3085 = vpop.f32.mrb[0].mxu0
  %v3086 = vadd.f32 0.0, %v3085
  %v3087 = vpop.f32.mrb[0].mxu0
  %v3088 = vadd.f32 0.0, %v3087
  %3089 = vdwg.mxu0
  %3090 = vmatprep.subr.mxu0 %v2108
  %3091 = vmatpush1.msra.mxu0 %v2107
  %3092 = vmatprep.subr.mxu0 %v2112
  %3093 = vmatpush1.msra.mxu0 %v2111
  %3094 = vmatprep.subr.mxu0 %v2116
  %3095 = vmatpush1.msra.mxu0 %v2115
  %3096 = vmatprep.subr.mxu0 %v2120
  %3097 = vmatpush1.msra.mxu0 %v2119
  %3098 = vmatprep.subr.mxu0 %v2124
  %3099 = vmatpush1.msra.mxu0 %v2123
  %3100 = vmatprep.subr.mxu0 %v2128
  %3101 = vmatpush1.msra.mxu0 %v2127
  %3102 = vmatprep.subr.mxu0 %v2132
  %3103 = vmatpush1.msra.mxu0 %v2131
  %3104 = vmatprep.subr.mxu0 %v2136
  %3105 = vmatpush1.msra.mxu0 %v2135
  %3106 = vmatprep.subr.mxu0 %v2140
  %3107 = vmatpush1.msra.mxu0 %v2139
  %3108 = vmatprep.subr.mxu0 %v2144
  %3109 = vmatpush1.msra.mxu0 %v2143
  %3110 = vmatprep.subr.mxu0 %v2148
  %3111 = vmatpush1.msra.mxu0 %v2147
  %3112 = vmatprep.subr.mxu0 %v2152
  %3113 = vmatpush1.msra.mxu0 %v2151
  %3114 = vmatprep.subr.mxu0 %v2156
  %3115 = vmatpush1.msra.mxu0 %v2155
  %3116 = vmatprep.subr.mxu0 %v2160
  %3117 = vmatpush1.msra.mxu0 %v2159
  %3118 = vmatprep.subr.mxu0 %v2164
  %3119 = vmatpush1.msra.mxu0 %v2163
  %3120 = vmatprep.subr.mxu0 %v2168
  %3121 = vmatpush1.msra.mxu0 %v2167
  %3122 = vmatprep.subr.mxu0 0.0
  %3123 = vmatpush1.msra.mxu0 0.0
  %3124 = vmatprep.subr.mxu0 0.0
  %3125 = vmatpush1.msra.mxu0 0.0
  %3126 = vmatprep.subr.mxu0 0.0
  %3127 = vmatpush1.msra.mxu0 0.0
  %3128 = vmatprep.subr.mxu0 0.0
  %3129 = vmatpush1.msra.mxu0 0.0
  %3130 = vmatprep.subr.mxu0 0.0
  %3131 = vmatpush1.msra.mxu0 0.0
  %3132 = vmatprep.subr.mxu0 0.0
  %3133 = vmatpush1.msra.mxu0 0.0
  %3134 = vmatprep.subr.mxu0 0.0
  %3135 = vmatpush1.msra.mxu0 0.0
  %3136 = vmatprep.subr.mxu0 0.0
  %3137 = vmatpush1.msra.mxu0 0.0
  %3138 = vmatprep.subr.mxu0 0.0
  %3139 = vmatpush1.msra.mxu0 0.0
  %3140 = vmatprep.subr.mxu0 0.0
  %3141 = vmatpush1.msra.mxu0 0.0
  %3142 = vmatprep.subr.mxu0 0.0
  %3143 = vmatpush1.msra.mxu0 0.0
  %3144 = vmatprep.subr.mxu0 0.0
  %3145 = vmatpush1.msra.mxu0 0.0
  %3146 = vmatprep.subr.mxu0 0.0
  %3147 = vmatpush1.msra.mxu0 0.0
  %3148 = vmatprep.subr.mxu0 0.0
  %3149 = vmatpush1.msra.mxu0 0.0
  %3150 = vmatprep.subr.mxu0 0.0
  %3151 = vmatpush1.msra.mxu0 0.0
  %3152 = vmatprep.subr.mxu0 0.0
  %3153 = vmatpush1.msra.mxu0 0.0
  %3154 = vmatprep.mubr.f32.mxu0 0.0
  %3155 = vmatmul.mubr.f32.gmra.mrb[0].mxu0 %v3018
  %v3156 = vpop.f32.mrb[0].mxu0
  %v3157 = vadd.f32 0.0, %v3156
  %v3158 = vpop.f32.mrb[0].mxu0
  %v3159 = vadd.f32 0.0, %v3158
  %3160 = vdwg.mxu0
  %v3161 = vadd.f32 %v1971, %v3086
  %v3162 = vadd.f32 %v1973, %v3088
  %v3163 = vadd.f32 %v2084, %v3157
  %v3164 = vadd.f32 %v2086, %v3159
  %v3165 = vxor.u32 %v3161, 2147483648
  %v3166 = vmul.f32 %v3165, 1.442695
  %v3167 = vpow.pop %v3166
  %v3168 = vadd.f32 %v3167, 1.0
  %v3169 = vrcp.pop %v3168
  %v3170 = vmul.f32 1.0, %v3169
  %v3171 = vxor.u32 %v3162, 2147483648
  %v3172 = vmul.f32 %v3171, 1.442695
  %v3173 = vpow.pop %v3172
  %v3174 = vadd.f32 %v3173, 1.0
  %v3175 = vrcp.pop %v3174
  %v3176 = vmul.f32 1.0, %v3175
  %v3177 = vtanh.pop %v3163
  %v3178 = vxor.u32 %v3164, 2147483648
  %v3179 = vmul.f32 %v3178, 1.442695
  %v3180 = vpow.pop %v3179
  %v3181 = vadd.f32 %v3180, 1.0
  %v3182 = vrcp.pop %v3181
  %v3183 = vmul.f32 1.0, %v3182
  %v3184 = vmul.f32 %v3176, %v3016
  %v3185 = vmul.f32 %v3170, %v3177
  %v3186 = vadd.f32 %v3184, %v3185
  %v3187 = vtanh.pop %v3186
  %v3188 = vmul.f32 %v3183, %v3187
  %3189 = vmatprep.subr.mxu0 %v2106
  %3190 = vmatpush1.msra.mxu0 %v2105
  %3191 = vmatprep.subr.mxu0 %v2110
  %3192 = vmatpush1.msra.mxu0 %v2109
  %3193 = vmatprep.subr.mxu0 %v2114
  %3194 = vmatpush1.msra.mxu0 %v2113
  %3195 = vmatprep.subr.mxu0 %v2118
  %3196 = vmatpush1.msra.mxu0 %v2117
  %3197 = vmatprep.subr.mxu0 %v2122
  %3198 = vmatpush1.msra.mxu0 %v2121
  %3199 = vmatprep.subr.mxu0 %v2126
  %3200 = vmatpush1.msra.mxu0 %v2125
  %3201 = vmatprep.subr.mxu0 %v2130
  %3202 = vmatpush1.msra.mxu0 %v2129
  %3203 = vmatprep.subr.mxu0 %v2134
  %3204 = vmatpush1.msra.mxu0 %v2133
  %3205 = vmatprep.subr.mxu0 %v2138
  %3206 = vmatpush1.msra.mxu0 %v2137
  %3207 = vmatprep.subr.mxu0 %v2142
  %3208 = vmatpush1.msra.mxu0 %v2141
  %3209 = vmatprep.subr.mxu0 %v2146
  %3210 = vmatpush1.msra.mxu0 %v2145
  %3211 = vmatprep.subr.mxu0 %v2150
  %3212 = vmatpush1.msra.mxu0 %v2149
  %3213 = vmatprep.subr.mxu0 %v2154
  %3214 = vmatpush1.msra.mxu0 %v2153
  %3215 = vmatprep.subr.mxu0 %v2158
  %3216 = vmatpush1.msra.mxu0 %v2157
  %3217 = vmatprep.subr.mxu0 %v2162
  %3218 = vmatpush1.msra.mxu0 %v2161
  %3219 = vmatprep.subr.mxu0 %v2166
  %3220 = vmatpush1.msra.mxu0 %v2165
  %3221 = vmatprep.subr.mxu0 0.0
  %3222 = vmatpush1.msra.mxu0 0.0
  %3223 = vmatprep.subr.mxu0 0.0
  %3224 = vmatpush1.msra.mxu0 0.0
  %3225 = vmatprep.subr.mxu0 0.0
  %3226 = vmatpush1.msra.mxu0 0.0
  %3227 = vmatprep.subr.mxu0 0.0
  %3228 = vmatpush1.msra.mxu0 0.0
  %3229 = vmatprep.subr.mxu0 0.0
  %3230 = vmatpush1.msra.mxu0 0.0
  %3231 = vmatprep.subr.mxu0 0.0
  %3232 = vmatpush1.msra.mxu0 0.0
  %3233 = vmatprep.subr.mxu0 0.0
  %3234 = vmatpush1.msra.mxu0 0.0
  %3235 = vmatprep.subr.mxu0 0.0
  %3236 = vmatpush1.msra.mxu0 0.0
  %3237 = vmatprep.subr.mxu0 0.0
  %3238 = vmatpush1.msra.mxu0 0.0
  %3239 = vmatprep.subr.mxu0 0.0
  %3240 = vmatpush1.msra.mxu0 0.0
  %3241 = vmatprep.subr.mxu0 0.0
  %3242 = vmatpush1.msra.mxu0 0.0
  %3243 = vmatprep.subr.mxu0 0.0
  %3244 = vmatpush1.msra.mxu0 0.0
  %3245 = vmatprep.subr.mxu0 0.0
  %3246 = vmatpush1.msra.mxu0 0.0
  %3247 = vmatprep.subr.mxu0 0.0
  %3248 = vmatpush1.msra.mxu0 0.0
  %3249 = vmatprep.subr.mxu0 0.0
  %3250 = vmatpush1.msra.mxu0 0.0
  %3251 = vmatprep.subr.mxu0 0.0
  %3252 = vmatpush1.msra.mxu0 0.0
  %3253 = vmatprep.mubr.f32.mxu0 0.0
  %3254 = vmatmul.mubr.f32.gmra.mrb[0].mxu0 %v3188
  %v3255 = vpop.f32.mrb[0].mxu0
  %v3256 = vadd.f32 0.0, %v3255
  %v3257 = vpop.f32.mrb[0].mxu0
  %v3258 = vadd.f32 0.0, %v3257
  %3259 = vdwg.mxu0
  %3260 = vmatprep.subr.mxu0 %v2108
  %3261 = vmatpush1.msra.mxu0 %v2107
  %3262 = vmatprep.subr.mxu0 %v2112
  %3263 = vmatpush1.msra.mxu0 %v2111
  %3264 = vmatprep.subr.mxu0 %v2116
  %3265 = vmatpush1.msra.mxu0 %v2115
  %3266 = vmatprep.subr.mxu0 %v2120
  %3267 = vmatpush1.msra.mxu0 %v2119
  %3268 = vmatprep.subr.mxu0 %v2124
  %3269 = vmatpush1.msra.mxu0 %v2123
  %3270 = vmatprep.subr.mxu0 %v2128
  %3271 = vmatpush1.msra.mxu0 %v2127
  %3272 = vmatprep.subr.mxu0 %v2132
  %3273 = vmatpush1.msra.mxu0 %v2131
  %3274 = vmatprep.subr.mxu0 %v2136
  %3275 = vmatpush1.msra.mxu0 %v2135
  %3276 = vmatprep.subr.mxu0 %v2140
  %3277 = vmatpush1.msra.mxu0 %v2139
  %3278 = vmatprep.subr.mxu0 %v2144
  %3279 = vmatpush1.msra.mxu0 %v2143
  %3280 = vmatprep.subr.mxu0 %v2148
  %3281 = vmatpush1.msra.mxu0 %v2147
  %3282 = vmatprep.subr.mxu0 %v2152
  %3283 = vmatpush1.msra.mxu0 %v2151
  %3284 = vmatprep.subr.mxu0 %v2156
  %3285 = vmatpush1.msra.mxu0 %v2155
  %3286 = vmatprep.subr.mxu0 %v2160
  %3287 = vmatpush1.msra.mxu0 %v2159
  %3288 = vmatprep.subr.mxu0 %v2164
  %3289 = vmatpush1.msra.mxu0 %v2163
  %3290 = vmatprep.subr.mxu0 %v2168
  %3291 = vmatpush1.msra.mxu0 %v2167
  %3292 = vmatprep.subr.mxu0 0.0
  %3293 = vmatpush1.msra.mxu0 0.0
  %3294 = vmatprep.subr.mxu0 0.0
  %3295 = vmatpush1.msra.mxu0 0.0
  %3296 = vmatprep.subr.mxu0 0.0
  %3297 = vmatpush1.msra.mxu0 0.0
  %3298 = vmatprep.subr.mxu0 0.0
  %3299 = vmatpush1.msra.mxu0 0.0
  %3300 = vmatprep.subr.mxu0 0.0
  %3301 = vmatpush1.msra.mxu0 0.0
  %3302 = vmatprep.subr.mxu0 0.0
  %3303 = vmatpush1.msra.mxu0 0.0
  %3304 = vmatprep.subr.mxu0 0.0
  %3305 = vmatpush1.msra.mxu0 0.0
  %3306 = vmatprep.subr.mxu0 0.0
  %3307 = vmatpush1.msra.mxu0 0.0
  %3308 = vmatprep.subr.mxu0 0.0
  %3309 = vmatpush1.msra.mxu0 0.0
  %3310 = vmatprep.subr.mxu0 0.0
  %3311 = vmatpush1.msra.mxu0 0.0
  %3312 = vmatprep.subr.mxu0 0.0
  %3313 = vmatpush1.msra.mxu0 0.0
  %3314 = vmatprep.subr.mxu0 0.0
  %3315 = vmatpush1.msra.mxu0 0.0
  %3316 = vmatprep.subr.mxu0 0.0
  %3317 = vmatpush1.msra.mxu0 0.0
  %3318 = vmatprep.subr.mxu0 0.0
  %3319 = vmatpush1.msra.mxu0 0.0
  %3320 = vmatprep.subr.mxu0 0.0
  %3321 = vmatpush1.msra.mxu0 0.0
  %3322 = vmatprep.subr.mxu0 0.0
  %3323 = vmatpush1.msra.mxu0 0.0
  %3324 = vmatprep.mubr.f32.mxu0 0.0
  %3325 = vmatmul.mubr.f32.gmra.mrb[0].mxu0 %v3188
  %v3326 = vpop.f32.mrb[0].mxu0
  %v3327 = vadd.f32 0.0, %v3326
  %v3328 = vpop.f32.mrb[0].mxu0
  %v3329 = vadd.f32 0.0, %v3328
  %3330 = vdwg.mxu0
  %v3331 = vadd.f32 %v1977, %v3256
  %v3332 = vadd.f32 %v1979, %v3258
  %v3333 = vadd.f32 %v2090, %v3327
  %v3334 = vadd.f32 %v2092, %v3329
  %v3335 = vxor.u32 %v3331, 2147483648
  %v3336 = vmul.f32 %v3335, 1.442695
  %v3337 = vpow.pop %v3336
  %v3338 = vadd.f32 %v3337, 1.0
  %v3339 = vrcp.pop %v3338
  %v3340 = vmul.f32 1.0, %v3339
  %v3341 = vxor.u32 %v3332, 2147483648
  %v3342 = vmul.f32 %v3341, 1.442695
  %v3343 = vpow.pop %v3342
  %v3344 = vadd.f32 %v3343, 1.0
  %v3345 = vrcp.pop %v3344
  %v3346 = vmul.f32 1.0, %v3345
  %v3347 = vtanh.pop %v3333
  %v3348 = vxor.u32 %v3334, 2147483648
  %v3349 = vmul.f32 %v3348, 1.442695
  %v3350 = vpow.pop %v3349
  %v3351 = vadd.f32 %v3350, 1.0
  %v3352 = vrcp.pop %v3351
  %v3353 = vmul.f32 1.0, %v3352
  %v3354 = vmul.f32 %v3346, %v3186
  %v3355 = vmul.f32 %v3340, %v3347
  %v3356 = vadd.f32 %v3354, %v3355
  %v3357 = vtanh.pop %v3356
  %v3358 = vmul.f32 %v3353, %v3357
  %3359 = vmatprep.subr.mxu0 %v2106
  %3360 = vmatpush1.msra.mxu0 %v2105
  %3361 = vmatprep.subr.mxu0 %v2110
  %3362 = vmatpush1.msra.mxu0 %v2109
  %3363 = vmatprep.subr.mxu0 %v2114
  %3364 = vmatpush1.msra.mxu0 %v2113
  %3365 = vmatprep.subr.mxu0 %v2118
  %3366 = vmatpush1.msra.mxu0 %v2117
  %3367 = vmatprep.subr.mxu0 %v2122
  %3368 = vmatpush1.msra.mxu0 %v2121
  %3369 = vmatprep.subr.mxu0 %v2126
  %3370 = vmatpush1.msra.mxu0 %v2125
  %3371 = vmatprep.subr.mxu0 %v2130
  %3372 = vmatpush1.msra.mxu0 %v2129
  %3373 = vmatprep.subr.mxu0 %v2134
  %3374 = vmatpush1.msra.mxu0 %v2133
  %3375 = vmatprep.subr.mxu0 %v2138
  %3376 = vmatpush1.msra.mxu0 %v2137
  %3377 = vmatprep.subr.mxu0 %v2142
  %3378 = vmatpush1.msra.mxu0 %v2141
  %3379 = vmatprep.subr.mxu0 %v2146
  %3380 = vmatpush1.msra.mxu0 %v2145
  %3381 = vmatprep.subr.mxu0 %v2150
  %3382 = vmatpush1.msra.mxu0 %v2149
  %3383 = vmatprep.subr.mxu0 %v2154
  %3384 = vmatpush1.msra.mxu0 %v2153
  %3385 = vmatprep.subr.mxu0 %v2158
  %3386 = vmatpush1.msra.mxu0 %v2157
  %3387 = vmatprep.subr.mxu0 %v2162
  %3388 = vmatpush1.msra.mxu0 %v2161
  %3389 = vmatprep.subr.mxu0 %v2166
  %3390 = vmatpush1.msra.mxu0 %v2165
  %3391 = vmatprep.subr.mxu0 0.0
  %3392 = vmatpush1.msra.mxu0 0.0
  %3393 = vmatprep.subr.mxu0 0.0
  %3394 = vmatpush1.msra.mxu0 0.0
  %3395 = vmatprep.subr.mxu0 0.0
  %3396 = vmatpush1.msra.mxu0 0.0
  %3397 = vmatprep.subr.mxu0 0.0
  %3398 = vmatpush1.msra.mxu0 0.0
  %3399 = vmatprep.subr.mxu0 0.0
  %3400 = vmatpush1.msra.mxu0 0.0
  %3401 = vmatprep.subr.mxu0 0.0
  %3402 = vmatpush1.msra.mxu0 0.0
  %3403 = vmatprep.subr.mxu0 0.0
  %3404 = vmatpush1.msra.mxu0 0.0
  %3405 = vmatprep.subr.mxu0 0.0
  %3406 = vmatpush1.msra.mxu0 0.0
  %3407 = vmatprep.subr.mxu0 0.0
  %3408 = vmatpush1.msra.mxu0 0.0
  %3409 = vmatprep.subr.mxu0 0.0
  %3410 = vmatpush1.msra.mxu0 0.0
  %3411 = vmatprep.subr.mxu0 0.0
  %3412 = vmatpush1.msra.mxu0 0.0
  %3413 = vmatprep.subr.mxu0 0.0
  %3414 = vmatpush1.msra.mxu0 0.0
  %3415 = vmatprep.subr.mxu0 0.0
  %3416 = vmatpush1.msra.mxu0 0.0
  %3417 = vmatprep.subr.mxu0 0.0
  %3418 = vmatpush1.msra.mxu0 0.0
  %3419 = vmatprep.subr.mxu0 0.0
  %3420 = vmatpush1.msra.mxu0 0.0
  %3421 = vmatprep.subr.mxu0 0.0
  %3422 = vmatpush1.msra.mxu0 0.0
  %3423 = vmatprep.mubr.f32.mxu0 0.0
  %3424 = vmatmul.mubr.f32.gmra.mrb[0].mxu0 %v3358
  %v3425 = vpop.f32.mrb[0].mxu0
  %v3426 = vadd.f32 0.0, %v3425
  %v3427 = vpop.f32.mrb[0].mxu0
  %v3428 = vadd.f32 0.0, %v3427
  %3429 = vdwg.mxu0
  %3430 = vmatprep.subr.mxu0 %v2108
  %3431 = vmatpush1.msra.mxu0 %v2107
  %3432 = vmatprep.subr.mxu0 %v2112
  %3433 = vmatpush1.msra.mxu0 %v2111
  %3434 = vmatprep.subr.mxu0 %v2116
  %3435 = vmatpush1.msra.mxu0 %v2115
  %3436 = vmatprep.subr.mxu0 %v2120
  %3437 = vmatpush1.msra.mxu0 %v2119
  %3438 = vmatprep.subr.mxu0 %v2124
  %3439 = vmatpush1.msra.mxu0 %v2123
  %3440 = vmatprep.subr.mxu0 %v2128
  %3441 = vmatpush1.msra.mxu0 %v2127
  %3442 = vmatprep.subr.mxu0 %v2132
  %3443 = vmatpush1.msra.mxu0 %v2131
  %3444 = vmatprep.subr.mxu0 %v2136
  %3445 = vmatpush1.msra.mxu0 %v2135
  %3446 = vmatprep.subr.mxu0 %v2140
  %3447 = vmatpush1.msra.mxu0 %v2139
  %3448 = vmatprep.subr.mxu0 %v2144
  %3449 = vmatpush1.msra.mxu0 %v2143
  %3450 = vmatprep.subr.mxu0 %v2148
  %3451 = vmatpush1.msra.mxu0 %v2147
  %3452 = vmatprep.subr.mxu0 %v2152
  %3453 = vmatpush1.msra.mxu0 %v2151
  %3454 = vmatprep.subr.mxu0 %v2156
  %3455 = vmatpush1.msra.mxu0 %v2155
  %3456 = vmatprep.subr.mxu0 %v2160
  %3457 = vmatpush1.msra.mxu0 %v2159
  %3458 = vmatprep.subr.mxu0 %v2164
  %3459 = vmatpush1.msra.mxu0 %v2163
  %3460 = vmatprep.subr.mxu0 %v2168
  %3461 = vmatpush1.msra.mxu0 %v2167
  %3462 = vmatprep.subr.mxu0 0.0
  %3463 = vmatpush1.msra.mxu0 0.0
  %3464 = vmatprep.subr.mxu0 0.0
  %3465 = vmatpush1.msra.mxu0 0.0
  %3466 = vmatprep.subr.mxu0 0.0
  %3467 = vmatpush1.msra.mxu0 0.0
  %3468 = vmatprep.subr.mxu0 0.0
  %3469 = vmatpush1.msra.mxu0 0.0
  %3470 = vmatprep.subr.mxu0 0.0
  %3471 = vmatpush1.msra.mxu0 0.0
  %3472 = vmatprep.subr.mxu0 0.0
  %3473 = vmatpush1.msra.mxu0 0.0
  %3474 = vmatprep.subr.mxu0 0.0
  %3475 = vmatpush1.msra.mxu0 0.0
  %3476 = vmatprep.subr.mxu0 0.0
  %3477 = vmatpush1.msra.mxu0 0.0
  %3478 = vmatprep.subr.mxu0 0.0
  %3479 = vmatpush1.msra.mxu0 0.0
  %3480 = vmatprep.subr.mxu0 0.0
  %3481 = vmatpush1.msra.mxu0 0.0
  %3482 = vmatprep.subr.mxu0 0.0
  %3483 = vmatpush1.msra.mxu0 0.0
  %3484 = vmatprep.subr.mxu0 0.0
  %3485 = vmatpush1.msra.mxu0 0.0
  %3486 = vmatprep.subr.mxu0 0.0
  %3487 = vmatpush1.msra.mxu0 0.0
  %3488 = vmatprep.subr.mxu0 0.0
  %3489 = vmatpush1.msra.mxu0 0.0
  %3490 = vmatprep.subr.mxu0 0.0
  %3491 = vmatpush1.msra.mxu0 0.0
  %3492 = vmatprep.subr.mxu0 0.0
  %3493 = vmatpush1.msra.mxu0 0.0
  %3494 = vmatprep.mubr.f32.mxu0 0.0
  %3495 = vmatmul.mubr.f32.gmra.mrb[0].mxu0 %v3358
  %v3496 = vpop.f32.mrb[0].mxu0
  %v3497 = vadd.f32 0.0, %v3496
  %v3498 = vpop.f32.mrb[0].mxu0
  %v3499 = vadd.f32 0.0, %v3498
  %3500 = vdwg.mxu0
  %v3501 = vadd.f32 %v1983, %v3426
  %v3502 = vadd.f32 %v1985, %v3428
  %v3503 = vadd.f32 %v2096, %v3497
  %v3504 = vadd.f32 %v2098, %v3499
  %v3505 = vxor.u32 %v3501, 2147483648
  %v3506 = vmul.f32 %v3505, 1.442695
  %v3507 = vpow.pop %v3506
  %v3508 = vadd.f32 %v3507, 1.0
  %v3509 = vrcp.pop %v3508
  %v3510 = vmul.f32 1.0, %v3509
  %v3511 = vxor.u32 %v3502, 2147483648
  %v3512 = vmul.f32 %v3511, 1.442695
  %v3513 = vpow.pop %v3512
  %v3514 = vadd.f32 %v3513, 1.0
  %v3515 = vrcp.pop %v3514
  %v3516 = vmul.f32 1.0, %v3515
  %v3517 = vtanh.pop %v3503
  %v3518 = vxor.u32 %v3504, 2147483648
  %v3519 = vmul.f32 %v3518, 1.442695
  %v3520 = vpow.pop %v3519
  %v3521 = vadd.f32 %v3520, 1.0
  %v3522 = vrcp.pop %v3521
  %v3523 = vmul.f32 1.0, %v3522
  %v3524 = vmul.f32 %v3516, %v3356
  %v3525 = vmul.f32 %v3510, %v3517
  %v3526 = vadd.f32 %v3524, %v3525
  %v3527 = vtanh.pop %v3526
  %v3528 = vmul.f32 %v3523, %v3527
  %s3529 = scalar_lea.vmem %s11, 8
  %3530 = vst [vmem:[%s3529] sm:$0xff] %v3528
  %s3531 = scalar_lea.vmem %s12, 8
  %3532 = vst [vmem:[%s3531] sm:$0xff] %v3526
  %s3533 = scalar_lea.vmem %s1, 1024
  %v3534 = vld [vmem:[%s3533] sm:$0xff]
  %v3535 = vld [vmem:[%s3533 + $0x8] sm:$0xff]
  %v3536 = vld [vmem:[%s3533 + $0x10] sm:$0xff]
  %v3537 = vld [vmem:[%s3533 + $0x18] sm:$0xff]
  %v3538 = vld [vmem:[%s3533 + $0x20] sm:$0xff]
  %v3539 = vld [vmem:[%s3533 + $0x28] sm:$0xff]
  %v3540 = vld [vmem:[%s3533 + $0x30] sm:$0xff]
  %v3541 = vld [vmem:[%s3533 + $0x38] sm:$0xff]
  %v3542 = vld [vmem:[%s3533 + $0x40] sm:$0xff]
  %v3543 = vld [vmem:[%s3533 + $0x48] sm:$0xff]
  %v3544 = vld [vmem:[%s3533 + $0x50] sm:$0xff]
  %v3545 = vld [vmem:[%s3533 + $0x58] sm:$0xff]
  %v3546 = vld [vmem:[%s3533 + $0x60] sm:$0xff]
  %v3547 = vld [vmem:[%s3533 + $0x68] sm:$0xff]
  %v3548 = vld [vmem:[%s3533 + $0x70] sm:$0xff]
  %v3549 = vld [vmem:[%s3533 + $0x78] sm:$0xff]
  %v3550 = vld [vmem:[%s3533 + $0x80] sm:$0xff]
  %v3551 = vld [vmem:[%s3533 + $0x88] sm:$0xff]
  %v3552 = vld [vmem:[%s3533 + $0x90] sm:$0xff]
  %v3553 = vld [vmem:[%s3533 + $0x98] sm:$0xff]
  %v3554 = vld [vmem:[%s3533 + $0xa0] sm:$0xff]
  %v3555 = vld [vmem:[%s3533 + $0xa8] sm:$0xff]
  %v3556 = vld [vmem:[%s3533 + $0xb0] sm:$0xff]
  %v3557 = vld [vmem:[%s3533 + $0xb8] sm:$0xff]
  %v3558 = vld [vmem:[%s3533 + $0xc0] sm:$0xff]
  %v3559 = vld [vmem:[%s3533 + $0xc8] sm:$0xff]
  %v3560 = vld [vmem:[%s3533 + $0xd0] sm:$0xff]
  %v3561 = vld [vmem:[%s3533 + $0xd8] sm:$0xff]
  %v3562 = vld [vmem:[%s3533 + $0xe0] sm:$0xff]
  %v3563 = vld [vmem:[%s3533 + $0xe8] sm:$0xff]
  %v3564 = vld [vmem:[%s3533 + $0xf0] sm:$0xff]
  %v3565 = vld [vmem:[%s3533 + $0xf8] sm:$0xff]
  %v3566 = vld [vmem:[%s3533 + $0x100] sm:$0xff]
  %v3567 = vld [vmem:[%s3533 + $0x108] sm:$0xff]
  %v3568 = vld [vmem:[%s3533 + $0x110] sm:$0xff]
  %v3569 = vld [vmem:[%s3533 + $0x118] sm:$0xff]
  %v3570 = vld [vmem:[%s3533 + $0x120] sm:$0xff]
  %v3571 = vld [vmem:[%s3533 + $0x128] sm:$0xff]
  %v3572 = vld [vmem:[%s3533 + $0x130] sm:$0xff]
  %v3573 = vld [vmem:[%s3533 + $0x138] sm:$0xff]
  %v3574 = vld [vmem:[%s3533 + $0x140] sm:$0xff]
  %v3575 = vld [vmem:[%s3533 + $0x148] sm:$0xff]
  %v3576 = vld [vmem:[%s3533 + $0x150] sm:$0xff]
  %v3577 = vld [vmem:[%s3533 + $0x158] sm:$0xff]
  %v3578 = vld [vmem:[%s3533 + $0x160] sm:$0xff]
  %v3579 = vld [vmem:[%s3533 + $0x168] sm:$0xff]
  %v3580 = vld [vmem:[%s3533 + $0x170] sm:$0xff]
  %v3581 = vld [vmem:[%s3533 + $0x178] sm:$0xff]
  %v3582 = vld [vmem:[%s3533 + $0x180] sm:$0xff]
  %v3583 = vld [vmem:[%s3533 + $0x188] sm:$0xff]
  %v3584 = vld [vmem:[%s3533 + $0x190] sm:$0xff]
  %v3585 = vld [vmem:[%s3533 + $0x198] sm:$0xff]
  %v3586 = vld [vmem:[%s3533 + $0x1a0] sm:$0xff]
  %v3587 = vld [vmem:[%s3533 + $0x1a8] sm:$0xff]
  %v3588 = vld [vmem:[%s3533 + $0x1b0] sm:$0xff]
  %v3589 = vld [vmem:[%s3533 + $0x1b8] sm:$0xff]
  %v3590 = vld [vmem:[%s3533 + $0x1c0] sm:$0xff]
  %v3591 = vld [vmem:[%s3533 + $0x1c8] sm:$0xff]
  %v3592 = vld [vmem:[%s3533 + $0x1d0] sm:$0xff]
  %v3593 = vld [vmem:[%s3533 + $0x1d8] sm:$0xff]
  %v3594 = vld [vmem:[%s3533 + $0x1e0] sm:$0xff]
  %v3595 = vld [vmem:[%s3533 + $0x1e8] sm:$0xff]
  %v3596 = vld [vmem:[%s3533 + $0x1f0] sm:$0xff]
  %v3597 = vld [vmem:[%s3533 + $0x1f8] sm:$0xff]
  %s3598 = scalar_lea.vmem %s3, 8
  %v3599 = vld [vmem:[%s3598] sm:$0xf]
  %v3601 = vlaneseq
  %v3602 = vshrl.u32 %v3601, 7
  %v3603 = vsub.s32 0, %v3602
  %v3604 = vrot.slane %v3599, %v3603
  %v3605 = vlaneseq
  %v3606 = vshrl.u32 %v3605, 7
  %v3607 = vsub.s32 1, %v3606
  %v3608 = vrot.slane %v3599, %v3607
  %v3609 = vlaneseq
  %v3610 = vshrl.u32 %v3609, 7
  %v3611 = vsub.s32 2, %v3610
  %v3612 = vrot.slane %v3599, %v3611
  %v3613 = vlaneseq
  %v3614 = vshrl.u32 %v3613, 7
  %v3615 = vsub.s32 3, %v3614
  %v3616 = vrot.slane %v3599, %v3615
  %3621 = vmatprep.subr.mxu0 %v3535
  %3622 = vmatpush1.msra.mxu0 %v3534
  %3623 = vmatprep.subr.mxu0 %v3539
  %3624 = vmatpush1.msra.mxu0 %v3538
  %3625 = vmatprep.subr.mxu0 %v3543
  %3626 = vmatpush1.msra.mxu0 %v3542
  %3627 = vmatprep.subr.mxu0 %v3547
  %3628 = vmatpush1.msra.mxu0 %v3546
  %3629 = vmatprep.subr.mxu0 %v3551
  %3630 = vmatpush1.msra.mxu0 %v3550
  %3631 = vmatprep.subr.mxu0 %v3555
  %3632 = vmatpush1.msra.mxu0 %v3554
  %3633 = vmatprep.subr.mxu0 %v3559
  %3634 = vmatpush1.msra.mxu0 %v3558
  %3635 = vmatprep.subr.mxu0 %v3563
  %3636 = vmatpush1.msra.mxu0 %v3562
  %3637 = vmatprep.subr.mxu0 %v3567
  %3638 = vmatpush1.msra.mxu0 %v3566
  %3639 = vmatprep.subr.mxu0 %v3571
  %3640 = vmatpush1.msra.mxu0 %v3570
  %3641 = vmatprep.subr.mxu0 %v3575
  %3642 = vmatpush1.msra.mxu0 %v3574
  %3643 = vmatprep.subr.mxu0 %v3579
  %3644 = vmatpush1.msra.mxu0 %v3578
  %3645 = vmatprep.subr.mxu0 %v3583
  %3646 = vmatpush1.msra.mxu0 %v3582
  %3647 = vmatprep.subr.mxu0 %v3587
  %3648 = vmatpush1.msra.mxu0 %v3586
  %3649 = vmatprep.subr.mxu0 %v3591
  %3650 = vmatpush1.msra.mxu0 %v3590
  %3651 = vmatprep.subr.mxu0 %v3595
  %3652 = vmatpush1.msra.mxu0 %v3594
  %3653 = vmatprep.subr.mxu0 0.0
  %3654 = vmatpush1.msra.mxu0 0.0
  %3655 = vmatprep.subr.mxu0 0.0
  %3656 = vmatpush1.msra.mxu0 0.0
  %3657 = vmatprep.subr.mxu0 0.0
  %3658 = vmatpush1.msra.mxu0 0.0
  %3659 = vmatprep.subr.mxu0 0.0
  %3660 = vmatpush1.msra.mxu0 0.0
  %3661 = vmatprep.subr.mxu0 0.0
  %3662 = vmatpush1.msra.mxu0 0.0
  %3663 = vmatprep.subr.mxu0 0.0
  %3664 = vmatpush1.msra.mxu0 0.0
  %3665 = vmatprep.subr.mxu0 0.0
  %3666 = vmatpush1.msra.mxu0 0.0
  %3667 = vmatprep.subr.mxu0 0.0
  %3668 = vmatpush1.msra.mxu0 0.0
  %3669 = vmatprep.subr.mxu0 0.0
  %3670 = vmatpush1.msra.mxu0 0.0
  %3671 = vmatprep.subr.mxu0 0.0
  %3672 = vmatpush1.msra.mxu0 0.0
  %3673 = vmatprep.subr.mxu0 0.0
  %3674 = vmatpush1.msra.mxu0 0.0
  %3675 = vmatprep.subr.mxu0 0.0
  %3676 = vmatpush1.msra.mxu0 0.0
  %3677 = vmatprep.subr.mxu0 0.0
  %3678 = vmatpush1.msra.mxu0 0.0
  %3679 = vmatprep.subr.mxu0 0.0
  %3680 = vmatpush1.msra.mxu0 0.0
  %3681 = vmatprep.subr.mxu0 0.0
  %3682 = vmatpush1.msra.mxu0 0.0
  %3683 = vmatprep.subr.mxu0 0.0
  %3684 = vmatpush1.msra.mxu0 0.0
  %3685 = vmatprep.mubr.f32.mxu0 0.0
  %3686 = vmatmul.mubr.f32.gmra.mrb[0].mxu0 %v2338
  %v3687 = vpop.f32.mrb[0].mxu0
  %v3688 = vadd.f32 %v3604, %v3687
  %v3689 = vpop.f32.mrb[0].mxu0
  %v3690 = vadd.f32 %v3608, %v3689
  %3691 = vmatprep.mubr.f32.mxu0 0.0
  %3692 = vmatmul.mubr.f32.gmra.mrb[0].mxu0 %v2508
  %v3693 = vpop.f32.mrb[0].mxu0
  %v3694 = vadd.f32 %v3604, %v3693
  %v3695 = vpop.f32.mrb[0].mxu0
  %v3696 = vadd.f32 %v3608, %v3695
  %3697 = vmatprep.mubr.f32.mxu0 0.0
  %3698 = vmatmul.mubr.f32.gmra.mrb[0].mxu0 %v2678
  %v3699 = vpop.f32.mrb[0].mxu0
  %v3700 = vadd.f32 %v3604, %v3699
  %v3701 = vpop.f32.mrb[0].mxu0
  %v3702 = vadd.f32 %v3608, %v3701
  %3703 = vmatprep.mubr.f32.mxu0 0.0
  %3704 = vmatmul.mubr.f32.gmra.mrb[0].mxu0 %v2848
  %v3705 = vpop.f32.mrb[0].mxu0
  %v3706 = vadd.f32 %v3604, %v3705
  %v3707 = vpop.f32.mrb[0].mxu0
  %v3708 = vadd.f32 %v3608, %v3707
  %3709 = vmatprep.mubr.f32.mxu0 0.0
  %3710 = vmatmul.mubr.f32.gmra.mrb[0].mxu0 %v3018
  %v3711 = vpop.f32.mrb[0].mxu0
  %v3712 = vadd.f32 %v3604, %v3711
  %v3713 = vpop.f32.mrb[0].mxu0
  %v3714 = vadd.f32 %v3608, %v3713
  %3715 = vmatprep.mubr.f32.mxu0 0.0
  %3716 = vmatmul.mubr.f32.gmra.mrb[0].mxu0 %v3188
  %v3717 = vpop.f32.mrb[0].mxu0
  %v3718 = vadd.f32 %v3604, %v3717
  %v3719 = vpop.f32.mrb[0].mxu0
  %v3720 = vadd.f32 %v3608, %v3719
  %3721 = vmatprep.mubr.f32.mxu0 0.0
  %3722 = vmatmul.mubr.f32.gmra.mrb[0].mxu0 %v3358
  %v3723 = vpop.f32.mrb[0].mxu0
  %v3724 = vadd.f32 %v3604, %v3723
  %v3725 = vpop.f32.mrb[0].mxu0
  %v3726 = vadd.f32 %v3608, %v3725
  %3727 = vmatprep.mubr.f32.mxu0 0.0
  %3728 = vmatmul.mubr.f32.gmra.mrb[0].mxu0 %v3528
  %v3729 = vpop.f32.mrb[0].mxu0
  %v3730 = vadd.f32 %v3604, %v3729
  %v3731 = vpop.f32.mrb[0].mxu0
  %v3732 = vadd.f32 %v3608, %v3731
  %3733 = vdwg.mxu0
  %3734 = vmatprep.subr.mxu0 %v3537
  %3735 = vmatpush1.msra.mxu0 %v3536
  %3736 = vmatprep.subr.mxu0 %v3541
  %3737 = vmatpush1.msra.mxu0 %v3540
  %3738 = vmatprep.subr.mxu0 %v3545
  %3739 = vmatpush1.msra.mxu0 %v3544
  %3740 = vmatprep.subr.mxu0 %v3549
  %3741 = vmatpush1.msra.mxu0 %v3548
  %3742 = vmatprep.subr.mxu0 %v3553
  %3743 = vmatpush1.msra.mxu0 %v3552
  %3744 = vmatprep.subr.mxu0 %v3557
  %3745 = vmatpush1.msra.mxu0 %v3556
  %3746 = vmatprep.subr.mxu0 %v3561
  %3747 = vmatpush1.msra.mxu0 %v3560
  %3748 = vmatprep.subr.mxu0 %v3565
  %3749 = vmatpush1.msra.mxu0 %v3564
  %3750 = vmatprep.subr.mxu0 %v3569
  %3751 = vmatpush1.msra.mxu0 %v3568
  %3752 = vmatprep.subr.mxu0 %v3573
  %3753 = vmatpush1.msra.mxu0 %v3572
  %3754 = vmatprep.subr.mxu0 %v3577
  %3755 = vmatpush1.msra.mxu0 %v3576
  %3756 = vmatprep.subr.mxu0 %v3581
  %3757 = vmatpush1.msra.mxu0 %v3580
  %3758 = vmatprep.subr.mxu0 %v3585
  %3759 = vmatpush1.msra.mxu0 %v3584
  %3760 = vmatprep.subr.mxu0 %v3589
  %3761 = vmatpush1.msra.mxu0 %v3588
  %3762 = vmatprep.subr.mxu0 %v3593
  %3763 = vmatpush1.msra.mxu0 %v3592
  %3764 = vmatprep.subr.mxu0 %v3597
  %3765 = vmatpush1.msra.mxu0 %v3596
  %3766 = vmatprep.subr.mxu0 0.0
  %3767 = vmatpush1.msra.mxu0 0.0
  %3768 = vmatprep.subr.mxu0 0.0
  %3769 = vmatpush1.msra.mxu0 0.0
  %3770 = vmatprep.subr.mxu0 0.0
  %3771 = vmatpush1.msra.mxu0 0.0
  %3772 = vmatprep.subr.mxu0 0.0
  %3773 = vmatpush1.msra.mxu0 0.0
  %3774 = vmatprep.subr.mxu0 0.0
  %3775 = vmatpush1.msra.mxu0 0.0
  %3776 = vmatprep.subr.mxu0 0.0
  %3777 = vmatpush1.msra.mxu0 0.0
  %3778 = vmatprep.subr.mxu0 0.0
  %3779 = vmatpush1.msra.mxu0 0.0
  %3780 = vmatprep.subr.mxu0 0.0
  %3781 = vmatpush1.msra.mxu0 0.0
  %3782 = vmatprep.subr.mxu0 0.0
  %3783 = vmatpush1.msra.mxu0 0.0
  %3784 = vmatprep.subr.mxu0 0.0
  %3785 = vmatpush1.msra.mxu0 0.0
  %3786 = vmatprep.subr.mxu0 0.0
  %3787 = vmatpush1.msra.mxu0 0.0
  %3788 = vmatprep.subr.mxu0 0.0
  %3789 = vmatpush1.msra.mxu0 0.0
  %3790 = vmatprep.subr.mxu0 0.0
  %3791 = vmatpush1.msra.mxu0 0.0
  %3792 = vmatprep.subr.mxu0 0.0
  %3793 = vmatpush1.msra.mxu0 0.0
  %3794 = vmatprep.subr.mxu0 0.0
  %3795 = vmatpush1.msra.mxu0 0.0
  %3796 = vmatprep.subr.mxu0 0.0
  %3797 = vmatpush1.msra.mxu0 0.0
  %3798 = vmatprep.mubr.f32.mxu0 0.0
  %3799 = vmatmul.mubr.f32.gmra.mrb[0].mxu0 %v2338
  %v3800 = vpop.f32.mrb[0].mxu0
  %v3801 = vadd.f32 %v3612, %v3800
  %v3802 = vpop.f32.mrb[0].mxu0
  %v3803 = vadd.f32 %v3616, %v3802
  %3804 = vmatprep.mubr.f32.mxu0 0.0
  %3805 = vmatmul.mubr.f32.gmra.mrb[0].mxu0 %v2508
  %v3806 = vpop.f32.mrb[0].mxu0
  %v3807 = vadd.f32 %v3612, %v3806
  %v3808 = vpop.f32.mrb[0].mxu0
  %v3809 = vadd.f32 %v3616, %v3808
  %3810 = vmatprep.mubr.f32.mxu0 0.0
  %3811 = vmatmul.mubr.f32.gmra.mrb[0].mxu0 %v2678
  %v3812 = vpop.f32.mrb[0].mxu0
  %v3813 = vadd.f32 %v3612, %v3812
  %v3814 = vpop.f32.mrb[0].mxu0
  %v3815 = vadd.f32 %v3616, %v3814
  %3816 = vmatprep.mubr.f32.mxu0 0.0
  %3817 = vmatmul.mubr.f32.gmra.mrb[0].mxu0 %v2848
  %v3818 = vpop.f32.mrb[0].mxu0
  %v3819 = vadd.f32 %v3612, %v3818
  %v3820 = vpop.f32.mrb[0].mxu0
  %v3821 = vadd.f32 %v3616, %v3820
  %3822 = vmatprep.mubr.f32.mxu0 0.0
  %3823 = vmatmul.mubr.f32.gmra.mrb[0].mxu0 %v3018
  %v3824 = vpop.f32.mrb[0].mxu0
  %v3825 = vadd.f32 %v3612, %v3824
  %v3826 = vpop.f32.mrb[0].mxu0
  %v3827 = vadd.f32 %v3616, %v3826
  %3828 = vmatprep.mubr.f32.mxu0 0.0
  %3829 = vmatmul.mubr.f32.gmra.mrb[0].mxu0 %v3188
  %v3830 = vpop.f32.mrb[0].mxu0
  %v3831 = vadd.f32 %v3612, %v3830
  %v3832 = vpop.f32.mrb[0].mxu0
  %v3833 = vadd.f32 %v3616, %v3832
  %3834 = vmatprep.mubr.f32.mxu0 0.0
  %3835 = vmatmul.mubr.f32.gmra.mrb[0].mxu0 %v3358
  %v3836 = vpop.f32.mrb[0].mxu0
  %v3837 = vadd.f32 %v3612, %v3836
  %v3838 = vpop.f32.mrb[0].mxu0
  %v3839 = vadd.f32 %v3616, %v3838
  %3840 = vmatprep.mubr.f32.mxu0 0.0
  %3841 = vmatmul.mubr.f32.gmra.mrb[0].mxu0 %v3528
  %v3842 = vpop.f32.mrb[0].mxu0
  %v3843 = vadd.f32 %v3612, %v3842
  %v3844 = vpop.f32.mrb[0].mxu0
  %v3845 = vadd.f32 %v3616, %v3844
  %3846 = vdwg.mxu0
  %s3847 = scalar_lea.vmem %s4, 16
  %v3848 = vld [vmem:[%s3847] sm:$0xff]
  %s3849 = scalar_lea.vmem %s5, 16
  %v3850 = vld [vmem:[%s3849] sm:$0xff]
  %s3851 = scalar_lea.vmem %s2, 1024
  %v3852 = vld [vmem:[%s3851] sm:$0xff]
  %v3853 = vld [vmem:[%s3851 + $0x8] sm:$0xff]
  %v3854 = vld [vmem:[%s3851 + $0x10] sm:$0xff]
  %v3855 = vld [vmem:[%s3851 + $0x18] sm:$0xff]
  %v3856 = vld [vmem:[%s3851 + $0x20] sm:$0xff]
  %v3857 = vld [vmem:[%s3851 + $0x28] sm:$0xff]
  %v3858 = vld [vmem:[%s3851 + $0x30] sm:$0xff]
  %v3859 = vld [vmem:[%s3851 + $0x38] sm:$0xff]
  %v3860 = vld [vmem:[%s3851 + $0x40] sm:$0xff]
  %v3861 = vld [vmem:[%s3851 + $0x48] sm:$0xff]
  %v3862 = vld [vmem:[%s3851 + $0x50] sm:$0xff]
  %v3863 = vld [vmem:[%s3851 + $0x58] sm:$0xff]
  %v3864 = vld [vmem:[%s3851 + $0x60] sm:$0xff]
  %v3865 = vld [vmem:[%s3851 + $0x68] sm:$0xff]
  %v3866 = vld [vmem:[%s3851 + $0x70] sm:$0xff]
  %v3867 = vld [vmem:[%s3851 + $0x78] sm:$0xff]
  %v3868 = vld [vmem:[%s3851 + $0x80] sm:$0xff]
  %v3869 = vld [vmem:[%s3851 + $0x88] sm:$0xff]
  %v3870 = vld [vmem:[%s3851 + $0x90] sm:$0xff]
  %v3871 = vld [vmem:[%s3851 + $0x98] sm:$0xff]
  %v3872 = vld [vmem:[%s3851 + $0xa0] sm:$0xff]
  %v3873 = vld [vmem:[%s3851 + $0xa8] sm:$0xff]
  %v3874 = vld [vmem:[%s3851 + $0xb0] sm:$0xff]
  %v3875 = vld [vmem:[%s3851 + $0xb8] sm:$0xff]
  %v3876 = vld [vmem:[%s3851 + $0xc0] sm:$0xff]
  %v3877 = vld [vmem:[%s3851 + $0xc8] sm:$0xff]
  %v3878 = vld [vmem:[%s3851 + $0xd0] sm:$0xff]
  %v3879 = vld [vmem:[%s3851 + $0xd8] sm:$0xff]
  %v3880 = vld [vmem:[%s3851 + $0xe0] sm:$0xff]
  %v3881 = vld [vmem:[%s3851 + $0xe8] sm:$0xff]
  %v3882 = vld [vmem:[%s3851 + $0xf0] sm:$0xff]
  %v3883 = vld [vmem:[%s3851 + $0xf8] sm:$0xff]
  %v3884 = vld [vmem:[%s3851 + $0x100] sm:$0xff]
  %v3885 = vld [vmem:[%s3851 + $0x108] sm:$0xff]
  %v3886 = vld [vmem:[%s3851 + $0x110] sm:$0xff]
  %v3887 = vld [vmem:[%s3851 + $0x118] sm:$0xff]
  %v3888 = vld [vmem:[%s3851 + $0x120] sm:$0xff]
  %v3889 = vld [vmem:[%s3851 + $0x128] sm:$0xff]
  %v3890 = vld [vmem:[%s3851 + $0x130] sm:$0xff]
  %v3891 = vld [vmem:[%s3851 + $0x138] sm:$0xff]
  %v3892 = vld [vmem:[%s3851 + $0x140] sm:$0xff]
  %v3893 = vld [vmem:[%s3851 + $0x148] sm:$0xff]
  %v3894 = vld [vmem:[%s3851 + $0x150] sm:$0xff]
  %v3895 = vld [vmem:[%s3851 + $0x158] sm:$0xff]
  %v3896 = vld [vmem:[%s3851 + $0x160] sm:$0xff]
  %v3897 = vld [vmem:[%s3851 + $0x168] sm:$0xff]
  %v3898 = vld [vmem:[%s3851 + $0x170] sm:$0xff]
  %v3899 = vld [vmem:[%s3851 + $0x178] sm:$0xff]
  %v3900 = vld [vmem:[%s3851 + $0x180] sm:$0xff]
  %v3901 = vld [vmem:[%s3851 + $0x188] sm:$0xff]
  %v3902 = vld [vmem:[%s3851 + $0x190] sm:$0xff]
  %v3903 = vld [vmem:[%s3851 + $0x198] sm:$0xff]
  %v3904 = vld [vmem:[%s3851 + $0x1a0] sm:$0xff]
  %v3905 = vld [vmem:[%s3851 + $0x1a8] sm:$0xff]
  %v3906 = vld [vmem:[%s3851 + $0x1b0] sm:$0xff]
  %v3907 = vld [vmem:[%s3851 + $0x1b8] sm:$0xff]
  %v3908 = vld [vmem:[%s3851 + $0x1c0] sm:$0xff]
  %v3909 = vld [vmem:[%s3851 + $0x1c8] sm:$0xff]
  %v3910 = vld [vmem:[%s3851 + $0x1d0] sm:$0xff]
  %v3911 = vld [vmem:[%s3851 + $0x1d8] sm:$0xff]
  %v3912 = vld [vmem:[%s3851 + $0x1e0] sm:$0xff]
  %v3913 = vld [vmem:[%s3851 + $0x1e8] sm:$0xff]
  %v3914 = vld [vmem:[%s3851 + $0x1f0] sm:$0xff]
  %v3915 = vld [vmem:[%s3851 + $0x1f8] sm:$0xff]
  %3916 = vmatprep.subr.mxu0 %v3853
  %3917 = vmatpush1.msra.mxu0 %v3852
  %3918 = vmatprep.subr.mxu0 %v3857
  %3919 = vmatpush1.msra.mxu0 %v3856
  %3920 = vmatprep.subr.mxu0 %v3861
  %3921 = vmatpush1.msra.mxu0 %v3860
  %3922 = vmatprep.subr.mxu0 %v3865
  %3923 = vmatpush1.msra.mxu0 %v3864
  %3924 = vmatprep.subr.mxu0 %v3869
  %3925 = vmatpush1.msra.mxu0 %v3868
  %3926 = vmatprep.subr.mxu0 %v3873
  %3927 = vmatpush1.msra.mxu0 %v3872
  %3928 = vmatprep.subr.mxu0 %v3877
  %3929 = vmatpush1.msra.mxu0 %v3876
  %3930 = vmatprep.subr.mxu0 %v3881
  %3931 = vmatpush1.msra.mxu0 %v3880
  %3932 = vmatprep.subr.mxu0 %v3885
  %3933 = vmatpush1.msra.mxu0 %v3884
  %3934 = vmatprep.subr.mxu0 %v3889
  %3935 = vmatpush1.msra.mxu0 %v3888
  %3936 = vmatprep.subr.mxu0 %v3893
  %3937 = vmatpush1.msra.mxu0 %v3892
  %3938 = vmatprep.subr.mxu0 %v3897
  %3939 = vmatpush1.msra.mxu0 %v3896
  %3940 = vmatprep.subr.mxu0 %v3901
  %3941 = vmatpush1.msra.mxu0 %v3900
  %3942 = vmatprep.subr.mxu0 %v3905
  %3943 = vmatpush1.msra.mxu0 %v3904
  %3944 = vmatprep.subr.mxu0 %v3909
  %3945 = vmatpush1.msra.mxu0 %v3908
  %3946 = vmatprep.subr.mxu0 %v3913
  %3947 = vmatpush1.msra.mxu0 %v3912
  %3948 = vmatprep.subr.mxu0 0.0
  %3949 = vmatpush1.msra.mxu0 0.0
  %3950 = vmatprep.subr.mxu0 0.0
  %3951 = vmatpush1.msra.mxu0 0.0
  %3952 = vmatprep.subr.mxu0 0.0
  %3953 = vmatpush1.msra.mxu0 0.0
  %3954 = vmatprep.subr.mxu0 0.0
  %3955 = vmatpush1.msra.mxu0 0.0
  %3956 = vmatprep.subr.mxu0 0.0
  %3957 = vmatpush1.msra.mxu0 0.0
  %3958 = vmatprep.subr.mxu0 0.0
  %3959 = vmatpush1.msra.mxu0 0.0
  %3960 = vmatprep.subr.mxu0 0.0
  %3961 = vmatpush1.msra.mxu0 0.0
  %3962 = vmatprep.subr.mxu0 0.0
  %3963 = vmatpush1.msra.mxu0 0.0
  %3964 = vmatprep.subr.mxu0 0.0
  %3965 = vmatpush1.msra.mxu0 0.0
  %3966 = vmatprep.subr.mxu0 0.0
  %3967 = vmatpush1.msra.mxu0 0.0
  %3968 = vmatprep.subr.mxu0 0.0
  %3969 = vmatpush1.msra.mxu0 0.0
  %3970 = vmatprep.subr.mxu0 0.0
  %3971 = vmatpush1.msra.mxu0 0.0
  %3972 = vmatprep.subr.mxu0 0.0
  %3973 = vmatpush1.msra.mxu0 0.0
  %3974 = vmatprep.subr.mxu0 0.0
  %3975 = vmatpush1.msra.mxu0 0.0
  %3976 = vmatprep.subr.mxu0 0.0
  %3977 = vmatpush1.msra.mxu0 0.0
  %3978 = vmatprep.subr.mxu0 0.0
  %3979 = vmatpush1.msra.mxu0 0.0
  %3980 = vmatprep.mubr.f32.mxu0 0.0
  %3981 = vmatmul.mubr.f32.gmra.mrb[0].mxu0 %v3848
  %v3982 = vpop.f32.mrb[0].mxu0
  %v3983 = vadd.f32 0.0, %v3982
  %v3984 = vpop.f32.mrb[0].mxu0
  %v3985 = vadd.f32 0.0, %v3984
  %3986 = vdwg.mxu0
  %3987 = vmatprep.subr.mxu0 %v3855
  %3988 = vmatpush1.msra.mxu0 %v3854
  %3989 = vmatprep.subr.mxu0 %v3859
  %3990 = vmatpush1.msra.mxu0 %v3858
  %3991 = vmatprep.subr.mxu0 %v3863
  %3992 = vmatpush1.msra.mxu0 %v3862
  %3993 = vmatprep.subr.mxu0 %v3867
  %3994 = vmatpush1.msra.mxu0 %v3866
  %3995 = vmatprep.subr.mxu0 %v3871
  %3996 = vmatpush1.msra.mxu0 %v3870
  %3997 = vmatprep.subr.mxu0 %v3875
  %3998 = vmatpush1.msra.mxu0 %v3874
  %3999 = vmatprep.subr.mxu0 %v3879
  %4000 = vmatpush1.msra.mxu0 %v3878
  %4001 = vmatprep.subr.mxu0 %v3883
  %4002 = vmatpush1.msra.mxu0 %v3882
  %4003 = vmatprep.subr.mxu0 %v3887
  %4004 = vmatpush1.msra.mxu0 %v3886
  %4005 = vmatprep.subr.mxu0 %v3891
  %4006 = vmatpush1.msra.mxu0 %v3890
  %4007 = vmatprep.subr.mxu0 %v3895
  %4008 = vmatpush1.msra.mxu0 %v3894
  %4009 = vmatprep.subr.mxu0 %v3899
  %4010 = vmatpush1.msra.mxu0 %v3898
  %4011 = vmatprep.subr.mxu0 %v3903
  %4012 = vmatpush1.msra.mxu0 %v3902
  %4013 = vmatprep.subr.mxu0 %v3907
  %4014 = vmatpush1.msra.mxu0 %v3906
  %4015 = vmatprep.subr.mxu0 %v3911
  %4016 = vmatpush1.msra.mxu0 %v3910
  %4017 = vmatprep.subr.mxu0 %v3915
  %4018 = vmatpush1.msra.mxu0 %v3914
  %4019 = vmatprep.subr.mxu0 0.0
  %4020 = vmatpush1.msra.mxu0 0.0
  %4021 = vmatprep.subr.mxu0 0.0
  %4022 = vmatpush1.msra.mxu0 0.0
  %4023 = vmatprep.subr.mxu0 0.0
  %4024 = vmatpush1.msra.mxu0 0.0
  %4025 = vmatprep.subr.mxu0 0.0
  %4026 = vmatpush1.msra.mxu0 0.0
  %4027 = vmatprep.subr.mxu0 0.0
  %4028 = vmatpush1.msra.mxu0 0.0
  %4029 = vmatprep.subr.mxu0 0.0
  %4030 = vmatpush1.msra.mxu0 0.0
  %4031 = vmatprep.subr.mxu0 0.0
  %4032 = vmatpush1.msra.mxu0 0.0
  %4033 = vmatprep.subr.mxu0 0.0
  %4034 = vmatpush1.msra.mxu0 0.0
  %4035 = vmatprep.subr.mxu0 0.0
  %4036 = vmatpush1.msra.mxu0 0.0
  %4037 = vmatprep.subr.mxu0 0.0
  %4038 = vmatpush1.msra.mxu0 0.0
  %4039 = vmatprep.subr.mxu0 0.0
  %4040 = vmatpush1.msra.mxu0 0.0
  %4041 = vmatprep.subr.mxu0 0.0
  %4042 = vmatpush1.msra.mxu0 0.0
  %4043 = vmatprep.subr.mxu0 0.0
  %4044 = vmatpush1.msra.mxu0 0.0
  %4045 = vmatprep.subr.mxu0 0.0
  %4046 = vmatpush1.msra.mxu0 0.0
  %4047 = vmatprep.subr.mxu0 0.0
  %4048 = vmatpush1.msra.mxu0 0.0
  %4049 = vmatprep.subr.mxu0 0.0
  %4050 = vmatpush1.msra.mxu0 0.0
  %4051 = vmatprep.mubr.f32.mxu0 0.0
  %4052 = vmatmul.mubr.f32.gmra.mrb[0].mxu0 %v3848
  %v4053 = vpop.f32.mrb[0].mxu0
  %v4054 = vadd.f32 0.0, %v4053
  %v4055 = vpop.f32.mrb[0].mxu0
  %v4056 = vadd.f32 0.0, %v4055
  %4057 = vdwg.mxu0
  %v4058 = vadd.f32 %v3688, %v3983
  %v4059 = vadd.f32 %v3690, %v3985
  %v4060 = vadd.f32 %v3801, %v4054
  %v4061 = vadd.f32 %v3803, %v4056
  %v4062 = vxor.u32 %v4058, 2147483648
  %v4063 = vmul.f32 %v4062, 1.442695
  %v4064 = vpow.pop %v4063
  %v4065 = vadd.f32 %v4064, 1.0
  %v4066 = vrcp.pop %v4065
  %v4067 = vmul.f32 1.0, %v4066
  %v4068 = vxor.u32 %v4059, 2147483648
  %v4069 = vmul.f32 %v4068, 1.442695
  %v4070 = vpow.pop %v4069
  %v4071 = vadd.f32 %v4070, 1.0
  %v4072 = vrcp.pop %v4071
  %v4073 = vmul.f32 1.0, %v4072
  %v4074 = vtanh.pop %v4060
  %v4075 = vxor.u32 %v4061, 2147483648
  %v4076 = vmul.f32 %v4075, 1.442695
  %v4077 = vpow.pop %v4076
  %v4078 = vadd.f32 %v4077, 1.0
  %v4079 = vrcp.pop %v4078
  %v4080 = vmul.f32 1.0, %v4079
  %v4081 = vmul.f32 %v4073, %v3850
  %v4082 = vmul.f32 %v4067, %v4074
  %v4083 = vadd.f32 %v4081, %v4082
  %v4084 = vtanh.pop %v4083
  %v4085 = vmul.f32 %v4080, %v4084
  %4086 = vmatprep.subr.mxu0 %v3853
  %4087 = vmatpush1.msra.mxu0 %v3852
  %4088 = vmatprep.subr.mxu0 %v3857
  %4089 = vmatpush1.msra.mxu0 %v3856
  %4090 = vmatprep.subr.mxu0 %v3861
  %4091 = vmatpush1.msra.mxu0 %v3860
  %4092 = vmatprep.subr.mxu0 %v3865
  %4093 = vmatpush1.msra.mxu0 %v3864
  %4094 = vmatprep.subr.mxu0 %v3869
  %4095 = vmatpush1.msra.mxu0 %v3868
  %4096 = vmatprep.subr.mxu0 %v3873
  %4097 = vmatpush1.msra.mxu0 %v3872
  %4098 = vmatprep.subr.mxu0 %v3877
  %4099 = vmatpush1.msra.mxu0 %v3876
  %4100 = vmatprep.subr.mxu0 %v3881
  %4101 = vmatpush1.msra.mxu0 %v3880
  %4102 = vmatprep.subr.mxu0 %v3885
  %4103 = vmatpush1.msra.mxu0 %v3884
  %4104 = vmatprep.subr.mxu0 %v3889
  %4105 = vmatpush1.msra.mxu0 %v3888
  %4106 = vmatprep.subr.mxu0 %v3893
  %4107 = vmatpush1.msra.mxu0 %v3892
  %4108 = vmatprep.subr.mxu0 %v3897
  %4109 = vmatpush1.msra.mxu0 %v3896
  %4110 = vmatprep.subr.mxu0 %v3901
  %4111 = vmatpush1.msra.mxu0 %v3900
  %4112 = vmatprep.subr.mxu0 %v3905
  %4113 = vmatpush1.msra.mxu0 %v3904
  %4114 = vmatprep.subr.mxu0 %v3909
  %4115 = vmatpush1.msra.mxu0 %v3908
  %4116 = vmatprep.subr.mxu0 %v3913
  %4117 = vmatpush1.msra.mxu0 %v3912
  %4118 = vmatprep.subr.mxu0 0.0
  %4119 = vmatpush1.msra.mxu0 0.0
  %4120 = vmatprep.subr.mxu0 0.0
  %4121 = vmatpush1.msra.mxu0 0.0
  %4122 = vmatprep.subr.mxu0 0.0
  %4123 = vmatpush1.msra.mxu0 0.0
  %4124 = vmatprep.subr.mxu0 0.0
  %4125 = vmatpush1.msra.mxu0 0.0
  %4126 = vmatprep.subr.mxu0 0.0
  %4127 = vmatpush1.msra.mxu0 0.0
  %4128 = vmatprep.subr.mxu0 0.0
  %4129 = vmatpush1.msra.mxu0 0.0
  %4130 = vmatprep.subr.mxu0 0.0
  %4131 = vmatpush1.msra.mxu0 0.0
  %4132 = vmatprep.subr.mxu0 0.0
  %4133 = vmatpush1.msra.mxu0 0.0
  %4134 = vmatprep.subr.mxu0 0.0
  %4135 = vmatpush1.msra.mxu0 0.0
  %4136 = vmatprep.subr.mxu0 0.0
  %4137 = vmatpush1.msra.mxu0 0.0
  %4138 = vmatprep.subr.mxu0 0.0
  %4139 = vmatpush1.msra.mxu0 0.0
  %4140 = vmatprep.subr.mxu0 0.0
  %4141 = vmatpush1.msra.mxu0 0.0
  %4142 = vmatprep.subr.mxu0 0.0
  %4143 = vmatpush1.msra.mxu0 0.0
  %4144 = vmatprep.subr.mxu0 0.0
  %4145 = vmatpush1.msra.mxu0 0.0
  %4146 = vmatprep.subr.mxu0 0.0
  %4147 = vmatpush1.msra.mxu0 0.0
  %4148 = vmatprep.subr.mxu0 0.0
  %4149 = vmatpush1.msra.mxu0 0.0
  %4150 = vmatprep.mubr.f32.mxu0 0.0
  %4151 = vmatmul.mubr.f32.gmra.mrb[0].mxu0 %v4085
  %v4152 = vpop.f32.mrb[0].mxu0
  %v4153 = vadd.f32 0.0, %v4152
  %v4154 = vpop.f32.mrb[0].mxu0
  %v4155 = vadd.f32 0.0, %v4154
  %4156 = vdwg.mxu0
  %4157 = vmatprep.subr.mxu0 %v3855
  %4158 = vmatpush1.msra.mxu0 %v3854
  %4159 = vmatprep.subr.mxu0 %v3859
  %4160 = vmatpush1.msra.mxu0 %v3858
  %4161 = vmatprep.subr.mxu0 %v3863
  %4162 = vmatpush1.msra.mxu0 %v3862
  %4163 = vmatprep.subr.mxu0 %v3867
  %4164 = vmatpush1.msra.mxu0 %v3866
  %4165 = vmatprep.subr.mxu0 %v3871
  %4166 = vmatpush1.msra.mxu0 %v3870
  %4167 = vmatprep.subr.mxu0 %v3875
  %4168 = vmatpush1.msra.mxu0 %v3874
  %4169 = vmatprep.subr.mxu0 %v3879
  %4170 = vmatpush1.msra.mxu0 %v3878
  %4171 = vmatprep.subr.mxu0 %v3883
  %4172 = vmatpush1.msra.mxu0 %v3882
  %4173 = vmatprep.subr.mxu0 %v3887
  %4174 = vmatpush1.msra.mxu0 %v3886
  %4175 = vmatprep.subr.mxu0 %v3891
  %4176 = vmatpush1.msra.mxu0 %v3890
  %4177 = vmatprep.subr.mxu0 %v3895
  %4178 = vmatpush1.msra.mxu0 %v3894
  %4179 = vmatprep.subr.mxu0 %v3899
  %4180 = vmatpush1.msra.mxu0 %v3898
  %4181 = vmatprep.subr.mxu0 %v3903
  %4182 = vmatpush1.msra.mxu0 %v3902
  %4183 = vmatprep.subr.mxu0 %v3907
  %4184 = vmatpush1.msra.mxu0 %v3906
  %4185 = vmatprep.subr.mxu0 %v3911
  %4186 = vmatpush1.msra.mxu0 %v3910
  %4187 = vmatprep.subr.mxu0 %v3915
  %4188 = vmatpush1.msra.mxu0 %v3914
  %4189 = vmatprep.subr.mxu0 0.0
  %4190 = vmatpush1.msra.mxu0 0.0
  %4191 = vmatprep.subr.mxu0 0.0
  %4192 = vmatpush1.msra.mxu0 0.0
  %4193 = vmatprep.subr.mxu0 0.0
  %4194 = vmatpush1.msra.mxu0 0.0
  %4195 = vmatprep.subr.mxu0 0.0
  %4196 = vmatpush1.msra.mxu0 0.0
  %4197 = vmatprep.subr.mxu0 0.0
  %4198 = vmatpush1.msra.mxu0 0.0
  %4199 = vmatprep.subr.mxu0 0.0
  %4200 = vmatpush1.msra.mxu0 0.0
  %4201 = vmatprep.subr.mxu0 0.0
  %4202 = vmatpush1.msra.mxu0 0.0
  %4203 = vmatprep.subr.mxu0 0.0
  %4204 = vmatpush1.msra.mxu0 0.0
  %4205 = vmatprep.subr.mxu0 0.0
  %4206 = vmatpush1.msra.mxu0 0.0
  %4207 = vmatprep.subr.mxu0 0.0
  %4208 = vmatpush1.msra.mxu0 0.0
  %4209 = vmatprep.subr.mxu0 0.0
  %4210 = vmatpush1.msra.mxu0 0.0
  %4211 = vmatprep.subr.mxu0 0.0
  %4212 = vmatpush1.msra.mxu0 0.0
  %4213 = vmatprep.subr.mxu0 0.0
  %4214 = vmatpush1.msra.mxu0 0.0
  %4215 = vmatprep.subr.mxu0 0.0
  %4216 = vmatpush1.msra.mxu0 0.0
  %4217 = vmatprep.subr.mxu0 0.0
  %4218 = vmatpush1.msra.mxu0 0.0
  %4219 = vmatprep.subr.mxu0 0.0
  %4220 = vmatpush1.msra.mxu0 0.0
  %4221 = vmatprep.mubr.f32.mxu0 0.0
  %4222 = vmatmul.mubr.f32.gmra.mrb[0].mxu0 %v4085
  %v4223 = vpop.f32.mrb[0].mxu0
  %v4224 = vadd.f32 0.0, %v4223
  %v4225 = vpop.f32.mrb[0].mxu0
  %v4226 = vadd.f32 0.0, %v4225
  %4227 = vdwg.mxu0
  %v4228 = vadd.f32 %v3694, %v4153
  %v4229 = vadd.f32 %v3696, %v4155
  %v4230 = vadd.f32 %v3807, %v4224
  %v4231 = vadd.f32 %v3809, %v4226
  %v4232 = vxor.u32 %v4228, 2147483648
  %v4233 = vmul.f32 %v4232, 1.442695
  %v4234 = vpow.pop %v4233
  %v4235 = vadd.f32 %v4234, 1.0
  %v4236 = vrcp.pop %v4235
  %v4237 = vmul.f32 1.0, %v4236
  %v4238 = vxor.u32 %v4229, 2147483648
  %v4239 = vmul.f32 %v4238, 1.442695
  %v4240 = vpow.pop %v4239
  %v4241 = vadd.f32 %v4240, 1.0
  %v4242 = vrcp.pop %v4241
  %v4243 = vmul.f32 1.0, %v4242
  %v4244 = vtanh.pop %v4230
  %v4245 = vxor.u32 %v4231, 2147483648
  %v4246 = vmul.f32 %v4245, 1.442695
  %v4247 = vpow.pop %v4246
  %v4248 = vadd.f32 %v4247, 1.0
  %v4249 = vrcp.pop %v4248
  %v4250 = vmul.f32 1.0, %v4249
  %v4251 = vmul.f32 %v4243, %v4083
  %v4252 = vmul.f32 %v4237, %v4244
  %v4253 = vadd.f32 %v4251, %v4252
  %v4254 = vtanh.pop %v4253
  %v4255 = vmul.f32 %v4250, %v4254
  %4256 = vmatprep.subr.mxu0 %v3853
  %4257 = vmatpush1.msra.mxu0 %v3852
  %4258 = vmatprep.subr.mxu0 %v3857
  %4259 = vmatpush1.msra.mxu0 %v3856
  %4260 = vmatprep.subr.mxu0 %v3861
  %4261 = vmatpush1.msra.mxu0 %v3860
  %4262 = vmatprep.subr.mxu0 %v3865
  %4263 = vmatpush1.msra.mxu0 %v3864
  %4264 = vmatprep.subr.mxu0 %v3869
  %4265 = vmatpush1.msra.mxu0 %v3868
  %4266 = vmatprep.subr.mxu0 %v3873
  %4267 = vmatpush1.msra.mxu0 %v3872
  %4268 = vmatprep.subr.mxu0 %v3877
  %4269 = vmatpush1.msra.mxu0 %v3876
  %4270 = vmatprep.subr.mxu0 %v3881
  %4271 = vmatpush1.msra.mxu0 %v3880
  %4272 = vmatprep.subr.mxu0 %v3885
  %4273 = vmatpush1.msra.mxu0 %v3884
  %4274 = vmatprep.subr.mxu0 %v3889
  %4275 = vmatpush1.msra.mxu0 %v3888
  %4276 = vmatprep.subr.mxu0 %v3893
  %4277 = vmatpush1.msra.mxu0 %v3892
  %4278 = vmatprep.subr.mxu0 %v3897
  %4279 = vmatpush1.msra.mxu0 %v3896
  %4280 = vmatprep.subr.mxu0 %v3901
  %4281 = vmatpush1.msra.mxu0 %v3900
  %4282 = vmatprep.subr.mxu0 %v3905
  %4283 = vmatpush1.msra.mxu0 %v3904
  %4284 = vmatprep.subr.mxu0 %v3909
  %4285 = vmatpush1.msra.mxu0 %v3908
  %4286 = vmatprep.subr.mxu0 %v3913
  %4287 = vmatpush1.msra.mxu0 %v3912
  %4288 = vmatprep.subr.mxu0 0.0
  %4289 = vmatpush1.msra.mxu0 0.0
  %4290 = vmatprep.subr.mxu0 0.0
  %4291 = vmatpush1.msra.mxu0 0.0
  %4292 = vmatprep.subr.mxu0 0.0
  %4293 = vmatpush1.msra.mxu0 0.0
  %4294 = vmatprep.subr.mxu0 0.0
  %4295 = vmatpush1.msra.mxu0 0.0
  %4296 = vmatprep.subr.mxu0 0.0
  %4297 = vmatpush1.msra.mxu0 0.0
  %4298 = vmatprep.subr.mxu0 0.0
  %4299 = vmatpush1.msra.mxu0 0.0
  %4300 = vmatprep.subr.mxu0 0.0
  %4301 = vmatpush1.msra.mxu0 0.0
  %4302 = vmatprep.subr.mxu0 0.0
  %4303 = vmatpush1.msra.mxu0 0.0
  %4304 = vmatprep.subr.mxu0 0.0
  %4305 = vmatpush1.msra.mxu0 0.0
  %4306 = vmatprep.subr.mxu0 0.0
  %4307 = vmatpush1.msra.mxu0 0.0
  %4308 = vmatprep.subr.mxu0 0.0
  %4309 = vmatpush1.msra.mxu0 0.0
  %4310 = vmatprep.subr.mxu0 0.0
  %4311 = vmatpush1.msra.mxu0 0.0
  %4312 = vmatprep.subr.mxu0 0.0
  %4313 = vmatpush1.msra.mxu0 0.0
  %4314 = vmatprep.subr.mxu0 0.0
  %4315 = vmatpush1.msra.mxu0 0.0
  %4316 = vmatprep.subr.mxu0 0.0
  %4317 = vmatpush1.msra.mxu0 0.0
  %4318 = vmatprep.subr.mxu0 0.0
  %4319 = vmatpush1.msra.mxu0 0.0
  %4320 = vmatprep.mubr.f32.mxu0 0.0
  %4321 = vmatmul.mubr.f32.gmra.mrb[0].mxu0 %v4255
  %v4322 = vpop.f32.mrb[0].mxu0
  %v4323 = vadd.f32 0.0, %v4322
  %v4324 = vpop.f32.mrb[0].mxu0
  %v4325 = vadd.f32 0.0, %v4324
  %4326 = vdwg.mxu0
  %4327 = vmatprep.subr.mxu0 %v3855
  %4328 = vmatpush1.msra.mxu0 %v3854
  %4329 = vmatprep.subr.mxu0 %v3859
  %4330 = vmatpush1.msra.mxu0 %v3858
  %4331 = vmatprep.subr.mxu0 %v3863
  %4332 = vmatpush1.msra.mxu0 %v3862
  %4333 = vmatprep.subr.mxu0 %v3867
  %4334 = vmatpush1.msra.mxu0 %v3866
  %4335 = vmatprep.subr.mxu0 %v3871
  %4336 = vmatpush1.msra.mxu0 %v3870
  %4337 = vmatprep.subr.mxu0 %v3875
  %4338 = vmatpush1.msra.mxu0 %v3874
  %4339 = vmatprep.subr.mxu0 %v3879
  %4340 = vmatpush1.msra.mxu0 %v3878
  %4341 = vmatprep.subr.mxu0 %v3883
  %4342 = vmatpush1.msra.mxu0 %v3882
  %4343 = vmatprep.subr.mxu0 %v3887
  %4344 = vmatpush1.msra.mxu0 %v3886
  %4345 = vmatprep.subr.mxu0 %v3891
  %4346 = vmatpush1.msra.mxu0 %v3890
  %4347 = vmatprep.subr.mxu0 %v3895
  %4348 = vmatpush1.msra.mxu0 %v3894
  %4349 = vmatprep.subr.mxu0 %v3899
  %4350 = vmatpush1.msra.mxu0 %v3898
  %4351 = vmatprep.subr.mxu0 %v3903
  %4352 = vmatpush1.msra.mxu0 %v3902
  %4353 = vmatprep.subr.mxu0 %v3907
  %4354 = vmatpush1.msra.mxu0 %v3906
  %4355 = vmatprep.subr.mxu0 %v3911
  %4356 = vmatpush1.msra.mxu0 %v3910
  %4357 = vmatprep.subr.mxu0 %v3915
  %4358 = vmatpush1.msra.mxu0 %v3914
  %4359 = vmatprep.subr.mxu0 0.0
  %4360 = vmatpush1.msra.mxu0 0.0
  %4361 = vmatprep.subr.mxu0 0.0
  %4362 = vmatpush1.msra.mxu0 0.0
  %4363 = vmatprep.subr.mxu0 0.0
  %4364 = vmatpush1.msra.mxu0 0.0
  %4365 = vmatprep.subr.mxu0 0.0
  %4366 = vmatpush1.msra.mxu0 0.0
  %4367 = vmatprep.subr.mxu0 0.0
  %4368 = vmatpush1.msra.mxu0 0.0
  %4369 = vmatprep.subr.mxu0 0.0
  %4370 = vmatpush1.msra.mxu0 0.0
  %4371 = vmatprep.subr.mxu0 0.0
  %4372 = vmatpush1.msra.mxu0 0.0
  %4373 = vmatprep.subr.mxu0 0.0
  %4374 = vmatpush1.msra.mxu0 0.0
  %4375 = vmatprep.subr.mxu0 0.0
  %4376 = vmatpush1.msra.mxu0 0.0
  %4377 = vmatprep.subr.mxu0 0.0
  %4378 = vmatpush1.msra.mxu0 0.0
  %4379 = vmatprep.subr.mxu0 0.0
  %4380 = vmatpush1.msra.mxu0 0.0
  %4381 = vmatprep.subr.mxu0 0.0
  %4382 = vmatpush1.msra.mxu0 0.0
  %4383 = vmatprep.subr.mxu0 0.0
  %4384 = vmatpush1.msra.mxu0 0.0
  %4385 = vmatprep.subr.mxu0 0.0
  %4386 = vmatpush1.msra.mxu0 0.0
  %4387 = vmatprep.subr.mxu0 0.0
  %4388 = vmatpush1.msra.mxu0 0.0
  %4389 = vmatprep.subr.mxu0 0.0
  %4390 = vmatpush1.msra.mxu0 0.0
  %4391 = vmatprep.mubr.f32.mxu0 0.0
  %4392 = vmatmul.mubr.f32.gmra.mrb[0].mxu0 %v4255
  %v4393 = vpop.f32.mrb[0].mxu0
  %v4394 = vadd.f32 0.0, %v4393
  %v4395 = vpop.f32.mrb[0].mxu0
  %v4396 = vadd.f32 0.0, %v4395
  %4397 = vdwg.mxu0
  %v4398 = vadd.f32 %v3700, %v4323
  %v4399 = vadd.f32 %v3702, %v4325
  %v4400 = vadd.f32 %v3813, %v4394
  %v4401 = vadd.f32 %v3815, %v4396
  %v4402 = vxor.u32 %v4398, 2147483648
  %v4403 = vmul.f32 %v4402, 1.442695
  %v4404 = vpow.pop %v4403
  %v4405 = vadd.f32 %v4404, 1.0
  %v4406 = vrcp.pop %v4405
  %v4407 = vmul.f32 1.0, %v4406
  %v4408 = vxor.u32 %v4399, 2147483648
  %v4409 = vmul.f32 %v4408, 1.442695
  %v4410 = vpow.pop %v4409
  %v4411 = vadd.f32 %v4410, 1.0
  %v4412 = vrcp.pop %v4411
  %v4413 = vmul.f32 1.0, %v4412
  %v4414 = vtanh.pop %v4400
  %v4415 = vxor.u32 %v4401, 2147483648
  %v4416 = vmul.f32 %v4415, 1.442695
  %v4417 = vpow.pop %v4416
  %v4418 = vadd.f32 %v4417, 1.0
  %v4419 = vrcp.pop %v4418
  %v4420 = vmul.f32 1.0, %v4419
  %v4421 = vmul.f32 %v4413, %v4253
  %v4422 = vmul.f32 %v4407, %v4414
  %v4423 = vadd.f32 %v4421, %v4422
  %v4424 = vtanh.pop %v4423
  %v4425 = vmul.f32 %v4420, %v4424
  %4426 = vmatprep.subr.mxu0 %v3853
  %4427 = vmatpush1.msra.mxu0 %v3852
  %4428 = vmatprep.subr.mxu0 %v3857
  %4429 = vmatpush1.msra.mxu0 %v3856
  %4430 = vmatprep.subr.mxu0 %v3861
  %4431 = vmatpush1.msra.mxu0 %v3860
  %4432 = vmatprep.subr.mxu0 %v3865
  %4433 = vmatpush1.msra.mxu0 %v3864
  %4434 = vmatprep.subr.mxu0 %v3869
  %4435 = vmatpush1.msra.mxu0 %v3868
  %4436 = vmatprep.subr.mxu0 %v3873
  %4437 = vmatpush1.msra.mxu0 %v3872
  %4438 = vmatprep.subr.mxu0 %v3877
  %4439 = vmatpush1.msra.mxu0 %v3876
  %4440 = vmatprep.subr.mxu0 %v3881
  %4441 = vmatpush1.msra.mxu0 %v3880
  %4442 = vmatprep.subr.mxu0 %v3885
  %4443 = vmatpush1.msra.mxu0 %v3884
  %4444 = vmatprep.subr.mxu0 %v3889
  %4445 = vmatpush1.msra.mxu0 %v3888
  %4446 = vmatprep.subr.mxu0 %v3893
  %4447 = vmatpush1.msra.mxu0 %v3892
  %4448 = vmatprep.subr.mxu0 %v3897
  %4449 = vmatpush1.msra.mxu0 %v3896
  %4450 = vmatprep.subr.mxu0 %v3901
  %4451 = vmatpush1.msra.mxu0 %v3900
  %4452 = vmatprep.subr.mxu0 %v3905
  %4453 = vmatpush1.msra.mxu0 %v3904
  %4454 = vmatprep.subr.mxu0 %v3909
  %4455 = vmatpush1.msra.mxu0 %v3908
  %4456 = vmatprep.subr.mxu0 %v3913
  %4457 = vmatpush1.msra.mxu0 %v3912
  %4458 = vmatprep.subr.mxu0 0.0
  %4459 = vmatpush1.msra.mxu0 0.0
  %4460 = vmatprep.subr.mxu0 0.0
  %4461 = vmatpush1.msra.mxu0 0.0
  %4462 = vmatprep.subr.mxu0 0.0
  %4463 = vmatpush1.msra.mxu0 0.0
  %4464 = vmatprep.subr.mxu0 0.0
  %4465 = vmatpush1.msra.mxu0 0.0
  %4466 = vmatprep.subr.mxu0 0.0
  %4467 = vmatpush1.msra.mxu0 0.0
  %4468 = vmatprep.subr.mxu0 0.0
  %4469 = vmatpush1.msra.mxu0 0.0
  %4470 = vmatprep.subr.mxu0 0.0
  %4471 = vmatpush1.msra.mxu0 0.0
  %4472 = vmatprep.subr.mxu0 0.0
  %4473 = vmatpush1.msra.mxu0 0.0
  %4474 = vmatprep.subr.mxu0 0.0
  %4475 = vmatpush1.msra.mxu0 0.0
  %4476 = vmatprep.subr.mxu0 0.0
  %4477 = vmatpush1.msra.mxu0 0.0
  %4478 = vmatprep.subr.mxu0 0.0
  %4479 = vmatpush1.msra.mxu0 0.0
  %4480 = vmatprep.subr.mxu0 0.0
  %4481 = vmatpush1.msra.mxu0 0.0
  %4482 = vmatprep.subr.mxu0 0.0
  %4483 = vmatpush1.msra.mxu0 0.0
  %4484 = vmatprep.subr.mxu0 0.0
  %4485 = vmatpush1.msra.mxu0 0.0
  %4486 = vmatprep.subr.mxu0 0.0
  %4487 = vmatpush1.msra.mxu0 0.0
  %4488 = vmatprep.subr.mxu0 0.0
  %4489 = vmatpush1.msra.mxu0 0.0
  %4490 = vmatprep.mubr.f32.mxu0 0.0
  %4491 = vmatmul.mubr.f32.gmra.mrb[0].mxu0 %v4425
  %v4492 = vpop.f32.mrb[0].mxu0
  %v4493 = vadd.f32 0.0, %v4492
  %v4494 = vpop.f32.mrb[0].mxu0
  %v4495 = vadd.f32 0.0, %v4494
  %4496 = vdwg.mxu0
  %4497 = vmatprep.subr.mxu0 %v3855
  %4498 = vmatpush1.msra.mxu0 %v3854
  %4499 = vmatprep.subr.mxu0 %v3859
  %4500 = vmatpush1.msra.mxu0 %v3858
  %4501 = vmatprep.subr.mxu0 %v3863
  %4502 = vmatpush1.msra.mxu0 %v3862
  %4503 = vmatprep.subr.mxu0 %v3867
  %4504 = vmatpush1.msra.mxu0 %v3866
  %4505 = vmatprep.subr.mxu0 %v3871
  %4506 = vmatpush1.msra.mxu0 %v3870
  %4507 = vmatprep.subr.mxu0 %v3875
  %4508 = vmatpush1.msra.mxu0 %v3874
  %4509 = vmatprep.subr.mxu0 %v3879
  %4510 = vmatpush1.msra.mxu0 %v3878
  %4511 = vmatprep.subr.mxu0 %v3883
  %4512 = vmatpush1.msra.mxu0 %v3882
  %4513 = vmatprep.subr.mxu0 %v3887
  %4514 = vmatpush1.msra.mxu0 %v3886
  %4515 = vmatprep.subr.mxu0 %v3891
  %4516 = vmatpush1.msra.mxu0 %v3890
  %4517 = vmatprep.subr.mxu0 %v3895
  %4518 = vmatpush1.msra.mxu0 %v3894
  %4519 = vmatprep.subr.mxu0 %v3899
  %4520 = vmatpush1.msra.mxu0 %v3898
  %4521 = vmatprep.subr.mxu0 %v3903
  %4522 = vmatpush1.msra.mxu0 %v3902
  %4523 = vmatprep.subr.mxu0 %v3907
  %4524 = vmatpush1.msra.mxu0 %v3906
  %4525 = vmatprep.subr.mxu0 %v3911
  %4526 = vmatpush1.msra.mxu0 %v3910
  %4527 = vmatprep.subr.mxu0 %v3915
  %4528 = vmatpush1.msra.mxu0 %v3914
  %4529 = vmatprep.subr.mxu0 0.0
  %4530 = vmatpush1.msra.mxu0 0.0
  %4531 = vmatprep.subr.mxu0 0.0
  %4532 = vmatpush1.msra.mxu0 0.0
  %4533 = vmatprep.subr.mxu0 0.0
  %4534 = vmatpush1.msra.mxu0 0.0
  %4535 = vmatprep.subr.mxu0 0.0
  %4536 = vmatpush1.msra.mxu0 0.0
  %4537 = vmatprep.subr.mxu0 0.0
  %4538 = vmatpush1.msra.mxu0 0.0
  %4539 = vmatprep.subr.mxu0 0.0
  %4540 = vmatpush1.msra.mxu0 0.0
  %4541 = vmatprep.subr.mxu0 0.0
  %4542 = vmatpush1.msra.mxu0 0.0
  %4543 = vmatprep.subr.mxu0 0.0
  %4544 = vmatpush1.msra.mxu0 0.0
  %4545 = vmatprep.subr.mxu0 0.0
  %4546 = vmatpush1.msra.mxu0 0.0
  %4547 = vmatprep.subr.mxu0 0.0
  %4548 = vmatpush1.msra.mxu0 0.0
  %4549 = vmatprep.subr.mxu0 0.0
  %4550 = vmatpush1.msra.mxu0 0.0
  %4551 = vmatprep.subr.mxu0 0.0
  %4552 = vmatpush1.msra.mxu0 0.0
  %4553 = vmatprep.subr.mxu0 0.0
  %4554 = vmatpush1.msra.mxu0 0.0
  %4555 = vmatprep.subr.mxu0 0.0
  %4556 = vmatpush1.msra.mxu0 0.0
  %4557 = vmatprep.subr.mxu0 0.0
  %4558 = vmatpush1.msra.mxu0 0.0
  %4559 = vmatprep.subr.mxu0 0.0
  %4560 = vmatpush1.msra.mxu0 0.0
  %4561 = vmatprep.mubr.f32.mxu0 0.0
  %4562 = vmatmul.mubr.f32.gmra.mrb[0].mxu0 %v4425
  %v4563 = vpop.f32.mrb[0].mxu0
  %v4564 = vadd.f32 0.0, %v4563
  %v4565 = vpop.f32.mrb[0].mxu0
  %v4566 = vadd.f32 0.0, %v4565
  %4567 = vdwg.mxu0
  %v4568 = vadd.f32 %v3706, %v4493
  %v4569 = vadd.f32 %v3708, %v4495
  %v4570 = vadd.f32 %v3819, %v4564
  %v4571 = vadd.f32 %v3821, %v4566
  %v4572 = vxor.u32 %v4568, 2147483648
  %v4573 = vmul.f32 %v4572, 1.442695
  %v4574 = vpow.pop %v4573
  %v4575 = vadd.f32 %v4574, 1.0
  %v4576 = vrcp.pop %v4575
  %v4577 = vmul.f32 1.0, %v4576
  %v4578 = vxor.u32 %v4569, 2147483648
  %v4579 = vmul.f32 %v4578, 1.442695
  %v4580 = vpow.pop %v4579
  %v4581 = vadd.f32 %v4580, 1.0
  %v4582 = vrcp.pop %v4581
  %v4583 = vmul.f32 1.0, %v4582
  %v4584 = vtanh.pop %v4570
  %v4585 = vxor.u32 %v4571, 2147483648
  %v4586 = vmul.f32 %v4585, 1.442695
  %v4587 = vpow.pop %v4586
  %v4588 = vadd.f32 %v4587, 1.0
  %v4589 = vrcp.pop %v4588
  %v4590 = vmul.f32 1.0, %v4589
  %v4591 = vmul.f32 %v4583, %v4423
  %v4592 = vmul.f32 %v4577, %v4584
  %v4593 = vadd.f32 %v4591, %v4592
  %v4594 = vtanh.pop %v4593
  %v4595 = vmul.f32 %v4590, %v4594
  %4596 = vmatprep.subr.mxu0 %v3853
  %4597 = vmatpush1.msra.mxu0 %v3852
  %4598 = vmatprep.subr.mxu0 %v3857
  %4599 = vmatpush1.msra.mxu0 %v3856
  %4600 = vmatprep.subr.mxu0 %v3861
  %4601 = vmatpush1.msra.mxu0 %v3860
  %4602 = vmatprep.subr.mxu0 %v3865
  %4603 = vmatpush1.msra.mxu0 %v3864
  %4604 = vmatprep.subr.mxu0 %v3869
  %4605 = vmatpush1.msra.mxu0 %v3868
  %4606 = vmatprep.subr.mxu0 %v3873
  %4607 = vmatpush1.msra.mxu0 %v3872
  %4608 = vmatprep.subr.mxu0 %v3877
  %4609 = vmatpush1.msra.mxu0 %v3876
  %4610 = vmatprep.subr.mxu0 %v3881
  %4611 = vmatpush1.msra.mxu0 %v3880
  %4612 = vmatprep.subr.mxu0 %v3885
  %4613 = vmatpush1.msra.mxu0 %v3884
  %4614 = vmatprep.subr.mxu0 %v3889
  %4615 = vmatpush1.msra.mxu0 %v3888
  %4616 = vmatprep.subr.mxu0 %v3893
  %4617 = vmatpush1.msra.mxu0 %v3892
  %4618 = vmatprep.subr.mxu0 %v3897
  %4619 = vmatpush1.msra.mxu0 %v3896
  %4620 = vmatprep.subr.mxu0 %v3901
  %4621 = vmatpush1.msra.mxu0 %v3900
  %4622 = vmatprep.subr.mxu0 %v3905
  %4623 = vmatpush1.msra.mxu0 %v3904
  %4624 = vmatprep.subr.mxu0 %v3909
  %4625 = vmatpush1.msra.mxu0 %v3908
  %4626 = vmatprep.subr.mxu0 %v3913
  %4627 = vmatpush1.msra.mxu0 %v3912
  %4628 = vmatprep.subr.mxu0 0.0
  %4629 = vmatpush1.msra.mxu0 0.0
  %4630 = vmatprep.subr.mxu0 0.0
  %4631 = vmatpush1.msra.mxu0 0.0
  %4632 = vmatprep.subr.mxu0 0.0
  %4633 = vmatpush1.msra.mxu0 0.0
  %4634 = vmatprep.subr.mxu0 0.0
  %4635 = vmatpush1.msra.mxu0 0.0
  %4636 = vmatprep.subr.mxu0 0.0
  %4637 = vmatpush1.msra.mxu0 0.0
  %4638 = vmatprep.subr.mxu0 0.0
  %4639 = vmatpush1.msra.mxu0 0.0
  %4640 = vmatprep.subr.mxu0 0.0
  %4641 = vmatpush1.msra.mxu0 0.0
  %4642 = vmatprep.subr.mxu0 0.0
  %4643 = vmatpush1.msra.mxu0 0.0
  %4644 = vmatprep.subr.mxu0 0.0
  %4645 = vmatpush1.msra.mxu0 0.0
  %4646 = vmatprep.subr.mxu0 0.0
  %4647 = vmatpush1.msra.mxu0 0.0
  %4648 = vmatprep.subr.mxu0 0.0
  %4649 = vmatpush1.msra.mxu0 0.0
  %4650 = vmatprep.subr.mxu0 0.0
  %4651 = vmatpush1.msra.mxu0 0.0
  %4652 = vmatprep.subr.mxu0 0.0
  %4653 = vmatpush1.msra.mxu0 0.0
  %4654 = vmatprep.subr.mxu0 0.0
  %4655 = vmatpush1.msra.mxu0 0.0
  %4656 = vmatprep.subr.mxu0 0.0
  %4657 = vmatpush1.msra.mxu0 0.0
  %4658 = vmatprep.subr.mxu0 0.0
  %4659 = vmatpush1.msra.mxu0 0.0
  %4660 = vmatprep.mubr.f32.mxu0 0.0
  %4661 = vmatmul.mubr.f32.gmra.mrb[0].mxu0 %v4595
  %v4662 = vpop.f32.mrb[0].mxu0
  %v4663 = vadd.f32 0.0, %v4662
  %v4664 = vpop.f32.mrb[0].mxu0
  %v4665 = vadd.f32 0.0, %v4664
  %4666 = vdwg.mxu0
  %4667 = vmatprep.subr.mxu0 %v3855
  %4668 = vmatpush1.msra.mxu0 %v3854
  %4669 = vmatprep.subr.mxu0 %v3859
  %4670 = vmatpush1.msra.mxu0 %v3858
  %4671 = vmatprep.subr.mxu0 %v3863
  %4672 = vmatpush1.msra.mxu0 %v3862
  %4673 = vmatprep.subr.mxu0 %v3867
  %4674 = vmatpush1.msra.mxu0 %v3866
  %4675 = vmatprep.subr.mxu0 %v3871
  %4676 = vmatpush1.msra.mxu0 %v3870
  %4677 = vmatprep.subr.mxu0 %v3875
  %4678 = vmatpush1.msra.mxu0 %v3874
  %4679 = vmatprep.subr.mxu0 %v3879
  %4680 = vmatpush1.msra.mxu0 %v3878
  %4681 = vmatprep.subr.mxu0 %v3883
  %4682 = vmatpush1.msra.mxu0 %v3882
  %4683 = vmatprep.subr.mxu0 %v3887
  %4684 = vmatpush1.msra.mxu0 %v3886
  %4685 = vmatprep.subr.mxu0 %v3891
  %4686 = vmatpush1.msra.mxu0 %v3890
  %4687 = vmatprep.subr.mxu0 %v3895
  %4688 = vmatpush1.msra.mxu0 %v3894
  %4689 = vmatprep.subr.mxu0 %v3899
  %4690 = vmatpush1.msra.mxu0 %v3898
  %4691 = vmatprep.subr.mxu0 %v3903
  %4692 = vmatpush1.msra.mxu0 %v3902
  %4693 = vmatprep.subr.mxu0 %v3907
  %4694 = vmatpush1.msra.mxu0 %v3906
  %4695 = vmatprep.subr.mxu0 %v3911
  %4696 = vmatpush1.msra.mxu0 %v3910
  %4697 = vmatprep.subr.mxu0 %v3915
  %4698 = vmatpush1.msra.mxu0 %v3914
  %4699 = vmatprep.subr.mxu0 0.0
  %4700 = vmatpush1.msra.mxu0 0.0
  %4701 = vmatprep.subr.mxu0 0.0
  %4702 = vmatpush1.msra.mxu0 0.0
  %4703 = vmatprep.subr.mxu0 0.0
  %4704 = vmatpush1.msra.mxu0 0.0
  %4705 = vmatprep.subr.mxu0 0.0
  %4706 = vmatpush1.msra.mxu0 0.0
  %4707 = vmatprep.subr.mxu0 0.0
  %4708 = vmatpush1.msra.mxu0 0.0
  %4709 = vmatprep.subr.mxu0 0.0
  %4710 = vmatpush1.msra.mxu0 0.0
  %4711 = vmatprep.subr.mxu0 0.0
  %4712 = vmatpush1.msra.mxu0 0.0
  %4713 = vmatprep.subr.mxu0 0.0
  %4714 = vmatpush1.msra.mxu0 0.0
  %4715 = vmatprep.subr.mxu0 0.0
  %4716 = vmatpush1.msra.mxu0 0.0
  %4717 = vmatprep.subr.mxu0 0.0
  %4718 = vmatpush1.msra.mxu0 0.0
  %4719 = vmatprep.subr.mxu0 0.0
  %4720 = vmatpush1.msra.mxu0 0.0
  %4721 = vmatprep.subr.mxu0 0.0
  %4722 = vmatpush1.msra.mxu0 0.0
  %4723 = vmatprep.subr.mxu0 0.0
  %4724 = vmatpush1.msra.mxu0 0.0
  %4725 = vmatprep.subr.mxu0 0.0
  %4726 = vmatpush1.msra.mxu0 0.0
  %4727 = vmatprep.subr.mxu0 0.0
  %4728 = vmatpush1.msra.mxu0 0.0
  %4729 = vmatprep.subr.mxu0 0.0
  %4730 = vmatpush1.msra.mxu0 0.0
  %4731 = vmatprep.mubr.f32.mxu0 0.0
  %4732 = vmatmul.mubr.f32.gmra.mrb[0].mxu0 %v4595
  %v4733 = vpop.f32.mrb[0].mxu0
  %v4734 = vadd.f32 0.0, %v4733
  %v4735 = vpop.f32.mrb[0].mxu0
  %v4736 = vadd.f32 0.0, %v4735
  %4737 = vdwg.mxu0
  %v4738 = vadd.f32 %v3712, %v4663
  %v4739 = vadd.f32 %v3714, %v4665
  %v4740 = vadd.f32 %v3825, %v4734
  %v4741 = vadd.f32 %v3827, %v4736
  %v4742 = vxor.u32 %v4738, 2147483648
  %v4743 = vmul.f32 %v4742, 1.442695
  %v4744 = vpow.pop %v4743
  %v4745 = vadd.f32 %v4744, 1.0
  %v4746 = vrcp.pop %v4745
  %v4747 = vmul.f32 1.0, %v4746
  %v4748 = vxor.u32 %v4739, 2147483648
  %v4749 = vmul.f32 %v4748, 1.442695
  %v4750 = vpow.pop %v4749
  %v4751 = vadd.f32 %v4750, 1.0
  %v4752 = vrcp.pop %v4751
  %v4753 = vmul.f32 1.0, %v4752
  %v4754 = vtanh.pop %v4740
  %v4755 = vxor.u32 %v4741, 2147483648
  %v4756 = vmul.f32 %v4755, 1.442695
  %v4757 = vpow.pop %v4756
  %v4758 = vadd.f32 %v4757, 1.0
  %v4759 = vrcp.pop %v4758
  %v4760 = vmul.f32 1.0, %v4759
  %v4761 = vmul.f32 %v4753, %v4593
  %v4762 = vmul.f32 %v4747, %v4754
  %v4763 = vadd.f32 %v4761, %v4762
  %v4764 = vtanh.pop %v4763
  %v4765 = vmul.f32 %v4760, %v4764
  %4766 = vmatprep.subr.mxu0 %v3853
  %4767 = vmatpush1.msra.mxu0 %v3852
  %4768 = vmatprep.subr.mxu0 %v3857
  %4769 = vmatpush1.msra.mxu0 %v3856
  %4770 = vmatprep.subr.mxu0 %v3861
  %4771 = vmatpush1.msra.mxu0 %v3860
  %4772 = vmatprep.subr.mxu0 %v3865
  %4773 = vmatpush1.msra.mxu0 %v3864
  %4774 = vmatprep.subr.mxu0 %v3869
  %4775 = vmatpush1.msra.mxu0 %v3868
  %4776 = vmatprep.subr.mxu0 %v3873
  %4777 = vmatpush1.msra.mxu0 %v3872
  %4778 = vmatprep.subr.mxu0 %v3877
  %4779 = vmatpush1.msra.mxu0 %v3876
  %4780 = vmatprep.subr.mxu0 %v3881
  %4781 = vmatpush1.msra.mxu0 %v3880
  %4782 = vmatprep.subr.mxu0 %v3885
  %4783 = vmatpush1.msra.mxu0 %v3884
  %4784 = vmatprep.subr.mxu0 %v3889
  %4785 = vmatpush1.msra.mxu0 %v3888
  %4786 = vmatprep.subr.mxu0 %v3893
  %4787 = vmatpush1.msra.mxu0 %v3892
  %4788 = vmatprep.subr.mxu0 %v3897
  %4789 = vmatpush1.msra.mxu0 %v3896
  %4790 = vmatprep.subr.mxu0 %v3901
  %4791 = vmatpush1.msra.mxu0 %v3900
  %4792 = vmatprep.subr.mxu0 %v3905
  %4793 = vmatpush1.msra.mxu0 %v3904
  %4794 = vmatprep.subr.mxu0 %v3909
  %4795 = vmatpush1.msra.mxu0 %v3908
  %4796 = vmatprep.subr.mxu0 %v3913
  %4797 = vmatpush1.msra.mxu0 %v3912
  %4798 = vmatprep.subr.mxu0 0.0
  %4799 = vmatpush1.msra.mxu0 0.0
  %4800 = vmatprep.subr.mxu0 0.0
  %4801 = vmatpush1.msra.mxu0 0.0
  %4802 = vmatprep.subr.mxu0 0.0
  %4803 = vmatpush1.msra.mxu0 0.0
  %4804 = vmatprep.subr.mxu0 0.0
  %4805 = vmatpush1.msra.mxu0 0.0
  %4806 = vmatprep.subr.mxu0 0.0
  %4807 = vmatpush1.msra.mxu0 0.0
  %4808 = vmatprep.subr.mxu0 0.0
  %4809 = vmatpush1.msra.mxu0 0.0
  %4810 = vmatprep.subr.mxu0 0.0
  %4811 = vmatpush1.msra.mxu0 0.0
  %4812 = vmatprep.subr.mxu0 0.0
  %4813 = vmatpush1.msra.mxu0 0.0
  %4814 = vmatprep.subr.mxu0 0.0
  %4815 = vmatpush1.msra.mxu0 0.0
  %4816 = vmatprep.subr.mxu0 0.0
  %4817 = vmatpush1.msra.mxu0 0.0
  %4818 = vmatprep.subr.mxu0 0.0
  %4819 = vmatpush1.msra.mxu0 0.0
  %4820 = vmatprep.subr.mxu0 0.0
  %4821 = vmatpush1.msra.mxu0 0.0
  %4822 = vmatprep.subr.mxu0 0.0
  %4823 = vmatpush1.msra.mxu0 0.0
  %4824 = vmatprep.subr.mxu0 0.0
  %4825 = vmatpush1.msra.mxu0 0.0
  %4826 = vmatprep.subr.mxu0 0.0
  %4827 = vmatpush1.msra.mxu0 0.0
  %4828 = vmatprep.subr.mxu0 0.0
  %4829 = vmatpush1.msra.mxu0 0.0
  %4830 = vmatprep.mubr.f32.mxu0 0.0
  %4831 = vmatmul.mubr.f32.gmra.mrb[0].mxu0 %v4765
  %v4832 = vpop.f32.mrb[0].mxu0
  %v4833 = vadd.f32 0.0, %v4832
  %v4834 = vpop.f32.mrb[0].mxu0
  %v4835 = vadd.f32 0.0, %v4834
  %4836 = vdwg.mxu0
  %4837 = vmatprep.subr.mxu0 %v3855
  %4838 = vmatpush1.msra.mxu0 %v3854
  %4839 = vmatprep.subr.mxu0 %v3859
  %4840 = vmatpush1.msra.mxu0 %v3858
  %4841 = vmatprep.subr.mxu0 %v3863
  %4842 = vmatpush1.msra.mxu0 %v3862
  %4843 = vmatprep.subr.mxu0 %v3867
  %4844 = vmatpush1.msra.mxu0 %v3866
  %4845 = vmatprep.subr.mxu0 %v3871
  %4846 = vmatpush1.msra.mxu0 %v3870
  %4847 = vmatprep.subr.mxu0 %v3875
  %4848 = vmatpush1.msra.mxu0 %v3874
  %4849 = vmatprep.subr.mxu0 %v3879
  %4850 = vmatpush1.msra.mxu0 %v3878
  %4851 = vmatprep.subr.mxu0 %v3883
  %4852 = vmatpush1.msra.mxu0 %v3882
  %4853 = vmatprep.subr.mxu0 %v3887
  %4854 = vmatpush1.msra.mxu0 %v3886
  %4855 = vmatprep.subr.mxu0 %v3891
  %4856 = vmatpush1.msra.mxu0 %v3890
  %4857 = vmatprep.subr.mxu0 %v3895
  %4858 = vmatpush1.msra.mxu0 %v3894
  %4859 = vmatprep.subr.mxu0 %v3899
  %4860 = vmatpush1.msra.mxu0 %v3898
  %4861 = vmatprep.subr.mxu0 %v3903
  %4862 = vmatpush1.msra.mxu0 %v3902
  %4863 = vmatprep.subr.mxu0 %v3907
  %4864 = vmatpush1.msra.mxu0 %v3906
  %4865 = vmatprep.subr.mxu0 %v3911
  %4866 = vmatpush1.msra.mxu0 %v3910
  %4867 = vmatprep.subr.mxu0 %v3915
  %4868 = vmatpush1.msra.mxu0 %v3914
  %4869 = vmatprep.subr.mxu0 0.0
  %4870 = vmatpush1.msra.mxu0 0.0
  %4871 = vmatprep.subr.mxu0 0.0
  %4872 = vmatpush1.msra.mxu0 0.0
  %4873 = vmatprep.subr.mxu0 0.0
  %4874 = vmatpush1.msra.mxu0 0.0
  %4875 = vmatprep.subr.mxu0 0.0
  %4876 = vmatpush1.msra.mxu0 0.0
  %4877 = vmatprep.subr.mxu0 0.0
  %4878 = vmatpush1.msra.mxu0 0.0
  %4879 = vmatprep.subr.mxu0 0.0
  %4880 = vmatpush1.msra.mxu0 0.0
  %4881 = vmatprep.subr.mxu0 0.0
  %4882 = vmatpush1.msra.mxu0 0.0
  %4883 = vmatprep.subr.mxu0 0.0
  %4884 = vmatpush1.msra.mxu0 0.0
  %4885 = vmatprep.subr.mxu0 0.0
  %4886 = vmatpush1.msra.mxu0 0.0
  %4887 = vmatprep.subr.mxu0 0.0
  %4888 = vmatpush1.msra.mxu0 0.0
  %4889 = vmatprep.subr.mxu0 0.0
  %4890 = vmatpush1.msra.mxu0 0.0
  %4891 = vmatprep.subr.mxu0 0.0
  %4892 = vmatpush1.msra.mxu0 0.0
  %4893 = vmatprep.subr.mxu0 0.0
  %4894 = vmatpush1.msra.mxu0 0.0
  %4895 = vmatprep.subr.mxu0 0.0
  %4896 = vmatpush1.msra.mxu0 0.0
  %4897 = vmatprep.subr.mxu0 0.0
  %4898 = vmatpush1.msra.mxu0 0.0
  %4899 = vmatprep.subr.mxu0 0.0
  %4900 = vmatpush1.msra.mxu0 0.0
  %4901 = vmatprep.mubr.f32.mxu0 0.0
  %4902 = vmatmul.mubr.f32.gmra.mrb[0].mxu0 %v4765
  %v4903 = vpop.f32.mrb[0].mxu0
  %v4904 = vadd.f32 0.0, %v4903
  %v4905 = vpop.f32.mrb[0].mxu0
  %v4906 = vadd.f32 0.0, %v4905
  %4907 = vdwg.mxu0
  %v4908 = vadd.f32 %v3718, %v4833
  %v4909 = vadd.f32 %v3720, %v4835
  %v4910 = vadd.f32 %v3831, %v4904
  %v4911 = vadd.f32 %v3833, %v4906
  %v4912 = vxor.u32 %v4908, 2147483648
  %v4913 = vmul.f32 %v4912, 1.442695
  %v4914 = vpow.pop %v4913
  %v4915 = vadd.f32 %v4914, 1.0
  %v4916 = vrcp.pop %v4915
  %v4917 = vmul.f32 1.0, %v4916
  %v4918 = vxor.u32 %v4909, 2147483648
  %v4919 = vmul.f32 %v4918, 1.442695
  %v4920 = vpow.pop %v4919
  %v4921 = vadd.f32 %v4920, 1.0
  %v4922 = vrcp.pop %v4921
  %v4923 = vmul.f32 1.0, %v4922
  %v4924 = vtanh.pop %v4910
  %v4925 = vxor.u32 %v4911, 2147483648
  %v4926 = vmul.f32 %v4925, 1.442695
  %v4927 = vpow.pop %v4926
  %v4928 = vadd.f32 %v4927, 1.0
  %v4929 = vrcp.pop %v4928
  %v4930 = vmul.f32 1.0, %v4929
  %v4931 = vmul.f32 %v4923, %v4763
  %v4932 = vmul.f32 %v4917, %v4924
  %v4933 = vadd.f32 %v4931, %v4932
  %v4934 = vtanh.pop %v4933
  %v4935 = vmul.f32 %v4930, %v4934
  %4936 = vmatprep.subr.mxu0 %v3853
  %4937 = vmatpush1.msra.mxu0 %v3852
  %4938 = vmatprep.subr.mxu0 %v3857
  %4939 = vmatpush1.msra.mxu0 %v3856
  %4940 = vmatprep.subr.mxu0 %v3861
  %4941 = vmatpush1.msra.mxu0 %v3860
  %4942 = vmatprep.subr.mxu0 %v3865
  %4943 = vmatpush1.msra.mxu0 %v3864
  %4944 = vmatprep.subr.mxu0 %v3869
  %4945 = vmatpush1.msra.mxu0 %v3868
  %4946 = vmatprep.subr.mxu0 %v3873
  %4947 = vmatpush1.msra.mxu0 %v3872
  %4948 = vmatprep.subr.mxu0 %v3877
  %4949 = vmatpush1.msra.mxu0 %v3876
  %4950 = vmatprep.subr.mxu0 %v3881
  %4951 = vmatpush1.msra.mxu0 %v3880
  %4952 = vmatprep.subr.mxu0 %v3885
  %4953 = vmatpush1.msra.mxu0 %v3884
  %4954 = vmatprep.subr.mxu0 %v3889
  %4955 = vmatpush1.msra.mxu0 %v3888
  %4956 = vmatprep.subr.mxu0 %v3893
  %4957 = vmatpush1.msra.mxu0 %v3892
  %4958 = vmatprep.subr.mxu0 %v3897
  %4959 = vmatpush1.msra.mxu0 %v3896
  %4960 = vmatprep.subr.mxu0 %v3901
  %4961 = vmatpush1.msra.mxu0 %v3900
  %4962 = vmatprep.subr.mxu0 %v3905
  %4963 = vmatpush1.msra.mxu0 %v3904
  %4964 = vmatprep.subr.mxu0 %v3909
  %4965 = vmatpush1.msra.mxu0 %v3908
  %4966 = vmatprep.subr.mxu0 %v3913
  %4967 = vmatpush1.msra.mxu0 %v3912
  %4968 = vmatprep.subr.mxu0 0.0
  %4969 = vmatpush1.msra.mxu0 0.0
  %4970 = vmatprep.subr.mxu0 0.0
  %4971 = vmatpush1.msra.mxu0 0.0
  %4972 = vmatprep.subr.mxu0 0.0
  %4973 = vmatpush1.msra.mxu0 0.0
  %4974 = vmatprep.subr.mxu0 0.0
  %4975 = vmatpush1.msra.mxu0 0.0
  %4976 = vmatprep.subr.mxu0 0.0
  %4977 = vmatpush1.msra.mxu0 0.0
  %4978 = vmatprep.subr.mxu0 0.0
  %4979 = vmatpush1.msra.mxu0 0.0
  %4980 = vmatprep.subr.mxu0 0.0
  %4981 = vmatpush1.msra.mxu0 0.0
  %4982 = vmatprep.subr.mxu0 0.0
  %4983 = vmatpush1.msra.mxu0 0.0
  %4984 = vmatprep.subr.mxu0 0.0
  %4985 = vmatpush1.msra.mxu0 0.0
  %4986 = vmatprep.subr.mxu0 0.0
  %4987 = vmatpush1.msra.mxu0 0.0
  %4988 = vmatprep.subr.mxu0 0.0
  %4989 = vmatpush1.msra.mxu0 0.0
  %4990 = vmatprep.subr.mxu0 0.0
  %4991 = vmatpush1.msra.mxu0 0.0
  %4992 = vmatprep.subr.mxu0 0.0
  %4993 = vmatpush1.msra.mxu0 0.0
  %4994 = vmatprep.subr.mxu0 0.0
  %4995 = vmatpush1.msra.mxu0 0.0
  %4996 = vmatprep.subr.mxu0 0.0
  %4997 = vmatpush1.msra.mxu0 0.0
  %4998 = vmatprep.subr.mxu0 0.0
  %4999 = vmatpush1.msra.mxu0 0.0
  %5000 = vmatprep.mubr.f32.mxu0 0.0
  %5001 = vmatmul.mubr.f32.gmra.mrb[0].mxu0 %v4935
  %v5002 = vpop.f32.mrb[0].mxu0
  %v5003 = vadd.f32 0.0, %v5002
  %v5004 = vpop.f32.mrb[0].mxu0
  %v5005 = vadd.f32 0.0, %v5004
  %5006 = vdwg.mxu0
  %5007 = vmatprep.subr.mxu0 %v3855
  %5008 = vmatpush1.msra.mxu0 %v3854
  %5009 = vmatprep.subr.mxu0 %v3859
  %5010 = vmatpush1.msra.mxu0 %v3858
  %5011 = vmatprep.subr.mxu0 %v3863
  %5012 = vmatpush1.msra.mxu0 %v3862
  %5013 = vmatprep.subr.mxu0 %v3867
  %5014 = vmatpush1.msra.mxu0 %v3866
  %5015 = vmatprep.subr.mxu0 %v3871
  %5016 = vmatpush1.msra.mxu0 %v3870
  %5017 = vmatprep.subr.mxu0 %v3875
  %5018 = vmatpush1.msra.mxu0 %v3874
  %5019 = vmatprep.subr.mxu0 %v3879
  %5020 = vmatpush1.msra.mxu0 %v3878
  %5021 = vmatprep.subr.mxu0 %v3883
  %5022 = vmatpush1.msra.mxu0 %v3882
  %5023 = vmatprep.subr.mxu0 %v3887
  %5024 = vmatpush1.msra.mxu0 %v3886
  %5025 = vmatprep.subr.mxu0 %v3891
  %5026 = vmatpush1.msra.mxu0 %v3890
  %5027 = vmatprep.subr.mxu0 %v3895
  %5028 = vmatpush1.msra.mxu0 %v3894
  %5029 = vmatprep.subr.mxu0 %v3899
  %5030 = vmatpush1.msra.mxu0 %v3898
  %5031 = vmatprep.subr.mxu0 %v3903
  %5032 = vmatpush1.msra.mxu0 %v3902
  %5033 = vmatprep.subr.mxu0 %v3907
  %5034 = vmatpush1.msra.mxu0 %v3906
  %5035 = vmatprep.subr.mxu0 %v3911
  %5036 = vmatpush1.msra.mxu0 %v3910
  %5037 = vmatprep.subr.mxu0 %v3915
  %5038 = vmatpush1.msra.mxu0 %v3914
  %5039 = vmatprep.subr.mxu0 0.0
  %5040 = vmatpush1.msra.mxu0 0.0
  %5041 = vmatprep.subr.mxu0 0.0
  %5042 = vmatpush1.msra.mxu0 0.0
  %5043 = vmatprep.subr.mxu0 0.0
  %5044 = vmatpush1.msra.mxu0 0.0
  %5045 = vmatprep.subr.mxu0 0.0
  %5046 = vmatpush1.msra.mxu0 0.0
  %5047 = vmatprep.subr.mxu0 0.0
  %5048 = vmatpush1.msra.mxu0 0.0
  %5049 = vmatprep.subr.mxu0 0.0
  %5050 = vmatpush1.msra.mxu0 0.0
  %5051 = vmatprep.subr.mxu0 0.0
  %5052 = vmatpush1.msra.mxu0 0.0
  %5053 = vmatprep.subr.mxu0 0.0
  %5054 = vmatpush1.msra.mxu0 0.0
  %5055 = vmatprep.subr.mxu0 0.0
  %5056 = vmatpush1.msra.mxu0 0.0
  %5057 = vmatprep.subr.mxu0 0.0
  %5058 = vmatpush1.msra.mxu0 0.0
  %5059 = vmatprep.subr.mxu0 0.0
  %5060 = vmatpush1.msra.mxu0 0.0
  %5061 = vmatprep.subr.mxu0 0.0
  %5062 = vmatpush1.msra.mxu0 0.0
  %5063 = vmatprep.subr.mxu0 0.0
  %5064 = vmatpush1.msra.mxu0 0.0
  %5065 = vmatprep.subr.mxu0 0.0
  %5066 = vmatpush1.msra.mxu0 0.0
  %5067 = vmatprep.subr.mxu0 0.0
  %5068 = vmatpush1.msra.mxu0 0.0
  %5069 = vmatprep.subr.mxu0 0.0
  %5070 = vmatpush1.msra.mxu0 0.0
  %5071 = vmatprep.mubr.f32.mxu0 0.0
  %5072 = vmatmul.mubr.f32.gmra.mrb[0].mxu0 %v4935
  %v5073 = vpop.f32.mrb[0].mxu0
  %v5074 = vadd.f32 0.0, %v5073
  %v5075 = vpop.f32.mrb[0].mxu0
  %v5076 = vadd.f32 0.0, %v5075
  %5077 = vdwg.mxu0
  %v5078 = vadd.f32 %v3724, %v5003
  %v5079 = vadd.f32 %v3726, %v5005
  %v5080 = vadd.f32 %v3837, %v5074
  %v5081 = vadd.f32 %v3839, %v5076
  %v5082 = vxor.u32 %v5078, 2147483648
  %v5083 = vmul.f32 %v5082, 1.442695
  %v5084 = vpow.pop %v5083
  %v5085 = vadd.f32 %v5084, 1.0
  %v5086 = vrcp.pop %v5085
  %v5087 = vmul.f32 1.0, %v5086
  %v5088 = vxor.u32 %v5079, 2147483648
  %v5089 = vmul.f32 %v5088, 1.442695
  %v5090 = vpow.pop %v5089
  %v5091 = vadd.f32 %v5090, 1.0
  %v5092 = vrcp.pop %v5091
  %v5093 = vmul.f32 1.0, %v5092
  %v5094 = vtanh.pop %v5080
  %v5095 = vxor.u32 %v5081, 2147483648
  %v5096 = vmul.f32 %v5095, 1.442695
  %v5097 = vpow.pop %v5096
  %v5098 = vadd.f32 %v5097, 1.0
  %v5099 = vrcp.pop %v5098
  %v5100 = vmul.f32 1.0, %v5099
  %v5101 = vmul.f32 %v5093, %v4933
  %v5102 = vmul.f32 %v5087, %v5094
  %v5103 = vadd.f32 %v5101, %v5102
  %v5104 = vtanh.pop %v5103
  %v5105 = vmul.f32 %v5100, %v5104
  %5106 = vmatprep.subr.mxu0 %v3853
  %5107 = vmatpush1.msra.mxu0 %v3852
  %5108 = vmatprep.subr.mxu0 %v3857
  %5109 = vmatpush1.msra.mxu0 %v3856
  %5110 = vmatprep.subr.mxu0 %v3861
  %5111 = vmatpush1.msra.mxu0 %v3860
  %5112 = vmatprep.subr.mxu0 %v3865
  %5113 = vmatpush1.msra.mxu0 %v3864
  %5114 = vmatprep.subr.mxu0 %v3869
  %5115 = vmatpush1.msra.mxu0 %v3868
  %5116 = vmatprep.subr.mxu0 %v3873
  %5117 = vmatpush1.msra.mxu0 %v3872
  %5118 = vmatprep.subr.mxu0 %v3877
  %5119 = vmatpush1.msra.mxu0 %v3876
  %5120 = vmatprep.subr.mxu0 %v3881
  %5121 = vmatpush1.msra.mxu0 %v3880
  %5122 = vmatprep.subr.mxu0 %v3885
  %5123 = vmatpush1.msra.mxu0 %v3884
  %5124 = vmatprep.subr.mxu0 %v3889
  %5125 = vmatpush1.msra.mxu0 %v3888
  %5126 = vmatprep.subr.mxu0 %v3893
  %5127 = vmatpush1.msra.mxu0 %v3892
  %5128 = vmatprep.subr.mxu0 %v3897
  %5129 = vmatpush1.msra.mxu0 %v3896
  %5130 = vmatprep.subr.mxu0 %v3901
  %5131 = vmatpush1.msra.mxu0 %v3900
  %5132 = vmatprep.subr.mxu0 %v3905
  %5133 = vmatpush1.msra.mxu0 %v3904
  %5134 = vmatprep.subr.mxu0 %v3909
  %5135 = vmatpush1.msra.mxu0 %v3908
  %5136 = vmatprep.subr.mxu0 %v3913
  %5137 = vmatpush1.msra.mxu0 %v3912
  %5138 = vmatprep.subr.mxu0 0.0
  %5139 = vmatpush1.msra.mxu0 0.0
  %5140 = vmatprep.subr.mxu0 0.0
  %5141 = vmatpush1.msra.mxu0 0.0
  %5142 = vmatprep.subr.mxu0 0.0
  %5143 = vmatpush1.msra.mxu0 0.0
  %5144 = vmatprep.subr.mxu0 0.0
  %5145 = vmatpush1.msra.mxu0 0.0
  %5146 = vmatprep.subr.mxu0 0.0
  %5147 = vmatpush1.msra.mxu0 0.0
  %5148 = vmatprep.subr.mxu0 0.0
  %5149 = vmatpush1.msra.mxu0 0.0
  %5150 = vmatprep.subr.mxu0 0.0
  %5151 = vmatpush1.msra.mxu0 0.0
  %5152 = vmatprep.subr.mxu0 0.0
  %5153 = vmatpush1.msra.mxu0 0.0
  %5154 = vmatprep.subr.mxu0 0.0
  %5155 = vmatpush1.msra.mxu0 0.0
  %5156 = vmatprep.subr.mxu0 0.0
  %5157 = vmatpush1.msra.mxu0 0.0
  %5158 = vmatprep.subr.mxu0 0.0
  %5159 = vmatpush1.msra.mxu0 0.0
  %5160 = vmatprep.subr.mxu0 0.0
  %5161 = vmatpush1.msra.mxu0 0.0
  %5162 = vmatprep.subr.mxu0 0.0
  %5163 = vmatpush1.msra.mxu0 0.0
  %5164 = vmatprep.subr.mxu0 0.0
  %5165 = vmatpush1.msra.mxu0 0.0
  %5166 = vmatprep.subr.mxu0 0.0
  %5167 = vmatpush1.msra.mxu0 0.0
  %5168 = vmatprep.subr.mxu0 0.0
  %5169 = vmatpush1.msra.mxu0 0.0
  %5170 = vmatprep.mubr.f32.mxu0 0.0
  %5171 = vmatmul.mubr.f32.gmra.mrb[0].mxu0 %v5105
  %v5172 = vpop.f32.mrb[0].mxu0
  %v5173 = vadd.f32 0.0, %v5172
  %v5174 = vpop.f32.mrb[0].mxu0
  %v5175 = vadd.f32 0.0, %v5174
  %5176 = vdwg.mxu0
  %5177 = vmatprep.subr.mxu0 %v3855
  %5178 = vmatpush1.msra.mxu0 %v3854
  %5179 = vmatprep.subr.mxu0 %v3859
  %5180 = vmatpush1.msra.mxu0 %v3858
  %5181 = vmatprep.subr.mxu0 %v3863
  %5182 = vmatpush1.msra.mxu0 %v3862
  %5183 = vmatprep.subr.mxu0 %v3867
  %5184 = vmatpush1.msra.mxu0 %v3866
  %5185 = vmatprep.subr.mxu0 %v3871
  %5186 = vmatpush1.msra.mxu0 %v3870
  %5187 = vmatprep.subr.mxu0 %v3875
  %5188 = vmatpush1.msra.mxu0 %v3874
  %5189 = vmatprep.subr.mxu0 %v3879
  %5190 = vmatpush1.msra.mxu0 %v3878
  %5191 = vmatprep.subr.mxu0 %v3883
  %5192 = vmatpush1.msra.mxu0 %v3882
  %5193 = vmatprep.subr.mxu0 %v3887
  %5194 = vmatpush1.msra.mxu0 %v3886
  %5195 = vmatprep.subr.mxu0 %v3891
  %5196 = vmatpush1.msra.mxu0 %v3890
  %5197 = vmatprep.subr.mxu0 %v3895
  %5198 = vmatpush1.msra.mxu0 %v3894
  %5199 = vmatprep.subr.mxu0 %v3899
  %5200 = vmatpush1.msra.mxu0 %v3898
  %5201 = vmatprep.subr.mxu0 %v3903
  %5202 = vmatpush1.msra.mxu0 %v3902
  %5203 = vmatprep.subr.mxu0 %v3907
  %5204 = vmatpush1.msra.mxu0 %v3906
  %5205 = vmatprep.subr.mxu0 %v3911
  %5206 = vmatpush1.msra.mxu0 %v3910
  %5207 = vmatprep.subr.mxu0 %v3915
  %5208 = vmatpush1.msra.mxu0 %v3914
  %5209 = vmatprep.subr.mxu0 0.0
  %5210 = vmatpush1.msra.mxu0 0.0
  %5211 = vmatprep.subr.mxu0 0.0
  %5212 = vmatpush1.msra.mxu0 0.0
  %5213 = vmatprep.subr.mxu0 0.0
  %5214 = vmatpush1.msra.mxu0 0.0
  %5215 = vmatprep.subr.mxu0 0.0
  %5216 = vmatpush1.msra.mxu0 0.0
  %5217 = vmatprep.subr.mxu0 0.0
  %5218 = vmatpush1.msra.mxu0 0.0
  %5219 = vmatprep.subr.mxu0 0.0
  %5220 = vmatpush1.msra.mxu0 0.0
  %5221 = vmatprep.subr.mxu0 0.0
  %5222 = vmatpush1.msra.mxu0 0.0
  %5223 = vmatprep.subr.mxu0 0.0
  %5224 = vmatpush1.msra.mxu0 0.0
  %5225 = vmatprep.subr.mxu0 0.0
  %5226 = vmatpush1.msra.mxu0 0.0
  %5227 = vmatprep.subr.mxu0 0.0
  %5228 = vmatpush1.msra.mxu0 0.0
  %5229 = vmatprep.subr.mxu0 0.0
  %5230 = vmatpush1.msra.mxu0 0.0
  %5231 = vmatprep.subr.mxu0 0.0
  %5232 = vmatpush1.msra.mxu0 0.0
  %5233 = vmatprep.subr.mxu0 0.0
  %5234 = vmatpush1.msra.mxu0 0.0
  %5235 = vmatprep.subr.mxu0 0.0
  %5236 = vmatpush1.msra.mxu0 0.0
  %5237 = vmatprep.subr.mxu0 0.0
  %5238 = vmatpush1.msra.mxu0 0.0
  %5239 = vmatprep.subr.mxu0 0.0
  %5240 = vmatpush1.msra.mxu0 0.0
  %5241 = vmatprep.mubr.f32.mxu0 0.0
  %5242 = vmatmul.mubr.f32.gmra.mrb[0].mxu0 %v5105
  %v5243 = vpop.f32.mrb[0].mxu0
  %v5244 = vadd.f32 0.0, %v5243
  %v5245 = vpop.f32.mrb[0].mxu0
  %v5246 = vadd.f32 0.0, %v5245
  %5247 = vdwg.mxu0
  %v5248 = vadd.f32 %v3730, %v5173
  %v5249 = vadd.f32 %v3732, %v5175
  %v5250 = vadd.f32 %v3843, %v5244
  %v5251 = vadd.f32 %v3845, %v5246
  %v5252 = vxor.u32 %v5248, 2147483648
  %v5253 = vmul.f32 %v5252, 1.442695
  %v5254 = vpow.pop %v5253
  %v5255 = vadd.f32 %v5254, 1.0
  %v5256 = vrcp.pop %v5255
  %v5257 = vmul.f32 1.0, %v5256
  %v5258 = vxor.u32 %v5249, 2147483648
  %v5259 = vmul.f32 %v5258, 1.442695
  %v5260 = vpow.pop %v5259
  %v5261 = vadd.f32 %v5260, 1.0
  %v5262 = vrcp.pop %v5261
  %v5263 = vmul.f32 1.0, %v5262
  %v5264 = vtanh.pop %v5250
  %v5265 = vxor.u32 %v5251, 2147483648
  %v5266 = vmul.f32 %v5265, 1.442695
  %v5267 = vpow.pop %v5266
  %v5268 = vadd.f32 %v5267, 1.0
  %v5269 = vrcp.pop %v5268
  %v5270 = vmul.f32 1.0, %v5269
  %v5271 = vmul.f32 %v5263, %v5103
  %v5272 = vmul.f32 %v5257, %v5264
  %v5273 = vadd.f32 %v5271, %v5272
  %v5274 = vtanh.pop %v5273
  %v5275 = vmul.f32 %v5270, %v5274
  %s5276 = scalar_lea.vmem %s11, 16
  %5277 = vst [vmem:[%s5276] sm:$0xff] %v5275
  %s5278 = scalar_lea.vmem %s12, 16
  %5279 = vst [vmem:[%s5278] sm:$0xff] %v5273
  %s5280 = scalar_lea.vmem %s1, 1536
  %v5281 = vld [vmem:[%s5280] sm:$0xff]
  %v5282 = vld [vmem:[%s5280 + $0x8] sm:$0xff]
  %v5283 = vld [vmem:[%s5280 + $0x10] sm:$0xff]
  %v5284 = vld [vmem:[%s5280 + $0x18] sm:$0xff]
  %v5285 = vld [vmem:[%s5280 + $0x20] sm:$0xff]
  %v5286 = vld [vmem:[%s5280 + $0x28] sm:$0xff]
  %v5287 = vld [vmem:[%s5280 + $0x30] sm:$0xff]
  %v5288 = vld [vmem:[%s5280 + $0x38] sm:$0xff]
  %v5289 = vld [vmem:[%s5280 + $0x40] sm:$0xff]
  %v5290 = vld [vmem:[%s5280 + $0x48] sm:$0xff]
  %v5291 = vld [vmem:[%s5280 + $0x50] sm:$0xff]
  %v5292 = vld [vmem:[%s5280 + $0x58] sm:$0xff]
  %v5293 = vld [vmem:[%s5280 + $0x60] sm:$0xff]
  %v5294 = vld [vmem:[%s5280 + $0x68] sm:$0xff]
  %v5295 = vld [vmem:[%s5280 + $0x70] sm:$0xff]
  %v5296 = vld [vmem:[%s5280 + $0x78] sm:$0xff]
  %v5297 = vld [vmem:[%s5280 + $0x80] sm:$0xff]
  %v5298 = vld [vmem:[%s5280 + $0x88] sm:$0xff]
  %v5299 = vld [vmem:[%s5280 + $0x90] sm:$0xff]
  %v5300 = vld [vmem:[%s5280 + $0x98] sm:$0xff]
  %v5301 = vld [vmem:[%s5280 + $0xa0] sm:$0xff]
  %v5302 = vld [vmem:[%s5280 + $0xa8] sm:$0xff]
  %v5303 = vld [vmem:[%s5280 + $0xb0] sm:$0xff]
  %v5304 = vld [vmem:[%s5280 + $0xb8] sm:$0xff]
  %v5305 = vld [vmem:[%s5280 + $0xc0] sm:$0xff]
  %v5306 = vld [vmem:[%s5280 + $0xc8] sm:$0xff]
  %v5307 = vld [vmem:[%s5280 + $0xd0] sm:$0xff]
  %v5308 = vld [vmem:[%s5280 + $0xd8] sm:$0xff]
  %v5309 = vld [vmem:[%s5280 + $0xe0] sm:$0xff]
  %v5310 = vld [vmem:[%s5280 + $0xe8] sm:$0xff]
  %v5311 = vld [vmem:[%s5280 + $0xf0] sm:$0xff]
  %v5312 = vld [vmem:[%s5280 + $0xf8] sm:$0xff]
  %v5313 = vld [vmem:[%s5280 + $0x100] sm:$0xff]
  %v5314 = vld [vmem:[%s5280 + $0x108] sm:$0xff]
  %v5315 = vld [vmem:[%s5280 + $0x110] sm:$0xff]
  %v5316 = vld [vmem:[%s5280 + $0x118] sm:$0xff]
  %v5317 = vld [vmem:[%s5280 + $0x120] sm:$0xff]
  %v5318 = vld [vmem:[%s5280 + $0x128] sm:$0xff]
  %v5319 = vld [vmem:[%s5280 + $0x130] sm:$0xff]
  %v5320 = vld [vmem:[%s5280 + $0x138] sm:$0xff]
  %v5321 = vld [vmem:[%s5280 + $0x140] sm:$0xff]
  %v5322 = vld [vmem:[%s5280 + $0x148] sm:$0xff]
  %v5323 = vld [vmem:[%s5280 + $0x150] sm:$0xff]
  %v5324 = vld [vmem:[%s5280 + $0x158] sm:$0xff]
  %v5325 = vld [vmem:[%s5280 + $0x160] sm:$0xff]
  %v5326 = vld [vmem:[%s5280 + $0x168] sm:$0xff]
  %v5327 = vld [vmem:[%s5280 + $0x170] sm:$0xff]
  %v5328 = vld [vmem:[%s5280 + $0x178] sm:$0xff]
  %v5329 = vld [vmem:[%s5280 + $0x180] sm:$0xff]
  %v5330 = vld [vmem:[%s5280 + $0x188] sm:$0xff]
  %v5331 = vld [vmem:[%s5280 + $0x190] sm:$0xff]
  %v5332 = vld [vmem:[%s5280 + $0x198] sm:$0xff]
  %v5333 = vld [vmem:[%s5280 + $0x1a0] sm:$0xff]
  %v5334 = vld [vmem:[%s5280 + $0x1a8] sm:$0xff]
  %v5335 = vld [vmem:[%s5280 + $0x1b0] sm:$0xff]
  %v5336 = vld [vmem:[%s5280 + $0x1b8] sm:$0xff]
  %v5337 = vld [vmem:[%s5280 + $0x1c0] sm:$0xff]
  %v5338 = vld [vmem:[%s5280 + $0x1c8] sm:$0xff]
  %v5339 = vld [vmem:[%s5280 + $0x1d0] sm:$0xff]
  %v5340 = vld [vmem:[%s5280 + $0x1d8] sm:$0xff]
  %v5341 = vld [vmem:[%s5280 + $0x1e0] sm:$0xff]
  %v5342 = vld [vmem:[%s5280 + $0x1e8] sm:$0xff]
  %v5343 = vld [vmem:[%s5280 + $0x1f0] sm:$0xff]
  %v5344 = vld [vmem:[%s5280 + $0x1f8] sm:$0xff]
  %s5345 = scalar_lea.vmem %s3, 12
  %v5346 = vld [vmem:[%s5345] sm:$0xf]
  %v5348 = vlaneseq
  %v5349 = vshrl.u32 %v5348, 7
  %v5350 = vsub.s32 0, %v5349
  %v5351 = vrot.slane %v5346, %v5350
  %v5352 = vlaneseq
  %v5353 = vshrl.u32 %v5352, 7
  %v5354 = vsub.s32 1, %v5353
  %v5355 = vrot.slane %v5346, %v5354
  %v5356 = vlaneseq
  %v5357 = vshrl.u32 %v5356, 7
  %v5358 = vsub.s32 2, %v5357
  %v5359 = vrot.slane %v5346, %v5358
  %v5360 = vlaneseq
  %v5361 = vshrl.u32 %v5360, 7
  %v5362 = vsub.s32 3, %v5361
  %v5363 = vrot.slane %v5346, %v5362
  %5368 = vmatprep.subr.mxu0 %v5282
  %5369 = vmatpush1.msra.mxu0 %v5281
  %5370 = vmatprep.subr.mxu0 %v5286
  %5371 = vmatpush1.msra.mxu0 %v5285
  %5372 = vmatprep.subr.mxu0 %v5290
  %5373 = vmatpush1.msra.mxu0 %v5289
  %5374 = vmatprep.subr.mxu0 %v5294
  %5375 = vmatpush1.msra.mxu0 %v5293
  %5376 = vmatprep.subr.mxu0 %v5298
  %5377 = vmatpush1.msra.mxu0 %v5297
  %5378 = vmatprep.subr.mxu0 %v5302
  %5379 = vmatpush1.msra.mxu0 %v5301
  %5380 = vmatprep.subr.mxu0 %v5306
  %5381 = vmatpush1.msra.mxu0 %v5305
  %5382 = vmatprep.subr.mxu0 %v5310
  %5383 = vmatpush1.msra.mxu0 %v5309
  %5384 = vmatprep.subr.mxu0 %v5314
  %5385 = vmatpush1.msra.mxu0 %v5313
  %5386 = vmatprep.subr.mxu0 %v5318
  %5387 = vmatpush1.msra.mxu0 %v5317
  %5388 = vmatprep.subr.mxu0 %v5322
  %5389 = vmatpush1.msra.mxu0 %v5321
  %5390 = vmatprep.subr.mxu0 %v5326
  %5391 = vmatpush1.msra.mxu0 %v5325
  %5392 = vmatprep.subr.mxu0 %v5330
  %5393 = vmatpush1.msra.mxu0 %v5329
  %5394 = vmatprep.subr.mxu0 %v5334
  %5395 = vmatpush1.msra.mxu0 %v5333
  %5396 = vmatprep.subr.mxu0 %v5338
  %5397 = vmatpush1.msra.mxu0 %v5337
  %5398 = vmatprep.subr.mxu0 %v5342
  %5399 = vmatpush1.msra.mxu0 %v5341
  %5400 = vmatprep.subr.mxu0 0.0
  %5401 = vmatpush1.msra.mxu0 0.0
  %5402 = vmatprep.subr.mxu0 0.0
  %5403 = vmatpush1.msra.mxu0 0.0
  %5404 = vmatprep.subr.mxu0 0.0
  %5405 = vmatpush1.msra.mxu0 0.0
  %5406 = vmatprep.subr.mxu0 0.0
  %5407 = vmatpush1.msra.mxu0 0.0
  %5408 = vmatprep.subr.mxu0 0.0
  %5409 = vmatpush1.msra.mxu0 0.0
  %5410 = vmatprep.subr.mxu0 0.0
  %5411 = vmatpush1.msra.mxu0 0.0
  %5412 = vmatprep.subr.mxu0 0.0
  %5413 = vmatpush1.msra.mxu0 0.0
  %5414 = vmatprep.subr.mxu0 0.0
  %5415 = vmatpush1.msra.mxu0 0.0
  %5416 = vmatprep.subr.mxu0 0.0
  %5417 = vmatpush1.msra.mxu0 0.0
  %5418 = vmatprep.subr.mxu0 0.0
  %5419 = vmatpush1.msra.mxu0 0.0
  %5420 = vmatprep.subr.mxu0 0.0
  %5421 = vmatpush1.msra.mxu0 0.0
  %5422 = vmatprep.subr.mxu0 0.0
  %5423 = vmatpush1.msra.mxu0 0.0
  %5424 = vmatprep.subr.mxu0 0.0
  %5425 = vmatpush1.msra.mxu0 0.0
  %5426 = vmatprep.subr.mxu0 0.0
  %5427 = vmatpush1.msra.mxu0 0.0
  %5428 = vmatprep.subr.mxu0 0.0
  %5429 = vmatpush1.msra.mxu0 0.0
  %5430 = vmatprep.subr.mxu0 0.0
  %5431 = vmatpush1.msra.mxu0 0.0
  %5432 = vmatprep.mubr.f32.mxu0 0.0
  %5433 = vmatmul.mubr.f32.gmra.mrb[0].mxu0 %v4085
  %v5434 = vpop.f32.mrb[0].mxu0
  %v5435 = vadd.f32 %v5351, %v5434
  %v5436 = vpop.f32.mrb[0].mxu0
  %v5437 = vadd.f32 %v5355, %v5436
  %5438 = vmatprep.mubr.f32.mxu0 0.0
  %5439 = vmatmul.mubr.f32.gmra.mrb[0].mxu0 %v4255
  %v5440 = vpop.f32.mrb[0].mxu0
  %v5441 = vadd.f32 %v5351, %v5440
  %v5442 = vpop.f32.mrb[0].mxu0
  %v5443 = vadd.f32 %v5355, %v5442
  %5444 = vmatprep.mubr.f32.mxu0 0.0
  %5445 = vmatmul.mubr.f32.gmra.mrb[0].mxu0 %v4425
  %v5446 = vpop.f32.mrb[0].mxu0
  %v5447 = vadd.f32 %v5351, %v5446
  %v5448 = vpop.f32.mrb[0].mxu0
  %v5449 = vadd.f32 %v5355, %v5448
  %5450 = vmatprep.mubr.f32.mxu0 0.0
  %5451 = vmatmul.mubr.f32.gmra.mrb[0].mxu0 %v4595
  %v5452 = vpop.f32.mrb[0].mxu0
  %v5453 = vadd.f32 %v5351, %v5452
  %v5454 = vpop.f32.mrb[0].mxu0
  %v5455 = vadd.f32 %v5355, %v5454
  %5456 = vmatprep.mubr.f32.mxu0 0.0
  %5457 = vmatmul.mubr.f32.gmra.mrb[0].mxu0 %v4765
  %v5458 = vpop.f32.mrb[0].mxu0
  %v5459 = vadd.f32 %v5351, %v5458
  %v5460 = vpop.f32.mrb[0].mxu0
  %v5461 = vadd.f32 %v5355, %v5460
  %5462 = vmatprep.mubr.f32.mxu0 0.0
  %5463 = vmatmul.mubr.f32.gmra.mrb[0].mxu0 %v4935
  %v5464 = vpop.f32.mrb[0].mxu0
  %v5465 = vadd.f32 %v5351, %v5464
  %v5466 = vpop.f32.mrb[0].mxu0
  %v5467 = vadd.f32 %v5355, %v5466
  %5468 = vmatprep.mubr.f32.mxu0 0.0
  %5469 = vmatmul.mubr.f32.gmra.mrb[0].mxu0 %v5105
  %v5470 = vpop.f32.mrb[0].mxu0
  %v5471 = vadd.f32 %v5351, %v5470
  %v5472 = vpop.f32.mrb[0].mxu0
  %v5473 = vadd.f32 %v5355, %v5472
  %5474 = vmatprep.mubr.f32.mxu0 0.0
  %5475 = vmatmul.mubr.f32.gmra.mrb[0].mxu0 %v5275
  %v5476 = vpop.f32.mrb[0].mxu0
  %v5477 = vadd.f32 %v5351, %v5476
  %v5478 = vpop.f32.mrb[0].mxu0
  %v5479 = vadd.f32 %v5355, %v5478
  %5480 = vdwg.mxu0
  %5481 = vmatprep.subr.mxu0 %v5284
  %5482 = vmatpush1.msra.mxu0 %v5283
  %5483 = vmatprep.subr.mxu0 %v5288
  %5484 = vmatpush1.msra.mxu0 %v5287
  %5485 = vmatprep.subr.mxu0 %v5292
  %5486 = vmatpush1.msra.mxu0 %v5291
  %5487 = vmatprep.subr.mxu0 %v5296
  %5488 = vmatpush1.msra.mxu0 %v5295
  %5489 = vmatprep.subr.mxu0 %v5300
  %5490 = vmatpush1.msra.mxu0 %v5299
  %5491 = vmatprep.subr.mxu0 %v5304
  %5492 = vmatpush1.msra.mxu0 %v5303
  %5493 = vmatprep.subr.mxu0 %v5308
  %5494 = vmatpush1.msra.mxu0 %v5307
  %5495 = vmatprep.subr.mxu0 %v5312
  %5496 = vmatpush1.msra.mxu0 %v5311
  %5497 = vmatprep.subr.mxu0 %v5316
  %5498 = vmatpush1.msra.mxu0 %v5315
  %5499 = vmatprep.subr.mxu0 %v5320
  %5500 = vmatpush1.msra.mxu0 %v5319
  %5501 = vmatprep.subr.mxu0 %v5324
  %5502 = vmatpush1.msra.mxu0 %v5323
  %5503 = vmatprep.subr.mxu0 %v5328
  %5504 = vmatpush1.msra.mxu0 %v5327
  %5505 = vmatprep.subr.mxu0 %v5332
  %5506 = vmatpush1.msra.mxu0 %v5331
  %5507 = vmatprep.subr.mxu0 %v5336
  %5508 = vmatpush1.msra.mxu0 %v5335
  %5509 = vmatprep.subr.mxu0 %v5340
  %5510 = vmatpush1.msra.mxu0 %v5339
  %5511 = vmatprep.subr.mxu0 %v5344
  %5512 = vmatpush1.msra.mxu0 %v5343
  %5513 = vmatprep.subr.mxu0 0.0
  %5514 = vmatpush1.msra.mxu0 0.0
  %5515 = vmatprep.subr.mxu0 0.0
  %5516 = vmatpush1.msra.mxu0 0.0
  %5517 = vmatprep.subr.mxu0 0.0
  %5518 = vmatpush1.msra.mxu0 0.0
  %5519 = vmatprep.subr.mxu0 0.0
  %5520 = vmatpush1.msra.mxu0 0.0
  %5521 = vmatprep.subr.mxu0 0.0
  %5522 = vmatpush1.msra.mxu0 0.0
  %5523 = vmatprep.subr.mxu0 0.0
  %5524 = vmatpush1.msra.mxu0 0.0
  %5525 = vmatprep.subr.mxu0 0.0
  %5526 = vmatpush1.msra.mxu0 0.0
  %5527 = vmatprep.subr.mxu0 0.0
  %5528 = vmatpush1.msra.mxu0 0.0
  %5529 = vmatprep.subr.mxu0 0.0
  %5530 = vmatpush1.msra.mxu0 0.0
  %5531 = vmatprep.subr.mxu0 0.0
  %5532 = vmatpush1.msra.mxu0 0.0
  %5533 = vmatprep.subr.mxu0 0.0
  %5534 = vmatpush1.msra.mxu0 0.0
  %5535 = vmatprep.subr.mxu0 0.0
  %5536 = vmatpush1.msra.mxu0 0.0
  %5537 = vmatprep.subr.mxu0 0.0
  %5538 = vmatpush1.msra.mxu0 0.0
  %5539 = vmatprep.subr.mxu0 0.0
  %5540 = vmatpush1.msra.mxu0 0.0
  %5541 = vmatprep.subr.mxu0 0.0
  %5542 = vmatpush1.msra.mxu0 0.0
  %5543 = vmatprep.subr.mxu0 0.0
  %5544 = vmatpush1.msra.mxu0 0.0
  %5545 = vmatprep.mubr.f32.mxu0 0.0
  %5546 = vmatmul.mubr.f32.gmra.mrb[0].mxu0 %v4085
  %v5547 = vpop.f32.mrb[0].mxu0
  %v5548 = vadd.f32 %v5359, %v5547
  %v5549 = vpop.f32.mrb[0].mxu0
  %v5550 = vadd.f32 %v5363, %v5549
  %5551 = vmatprep.mubr.f32.mxu0 0.0
  %5552 = vmatmul.mubr.f32.gmra.mrb[0].mxu0 %v4255
  %v5553 = vpop.f32.mrb[0].mxu0
  %v5554 = vadd.f32 %v5359, %v5553
  %v5555 = vpop.f32.mrb[0].mxu0
  %v5556 = vadd.f32 %v5363, %v5555
  %5557 = vmatprep.mubr.f32.mxu0 0.0
  %5558 = vmatmul.mubr.f32.gmra.mrb[0].mxu0 %v4425
  %v5559 = vpop.f32.mrb[0].mxu0
  %v5560 = vadd.f32 %v5359, %v5559
  %v5561 = vpop.f32.mrb[0].mxu0
  %v5562 = vadd.f32 %v5363, %v5561
  %5563 = vmatprep.mubr.f32.mxu0 0.0
  %5564 = vmatmul.mubr.f32.gmra.mrb[0].mxu0 %v4595
  %v5565 = vpop.f32.mrb[0].mxu0
  %v5566 = vadd.f32 %v5359, %v5565
  %v5567 = vpop.f32.mrb[0].mxu0
  %v5568 = vadd.f32 %v5363, %v5567
  %5569 = vmatprep.mubr.f32.mxu0 0.0
  %5570 = vmatmul.mubr.f32.gmra.mrb[0].mxu0 %v4765
  %v5571 = vpop.f32.mrb[0].mxu0
  %v5572 = vadd.f32 %v5359, %v5571
  %v5573 = vpop.f32.mrb[0].mxu0
  %v5574 = vadd.f32 %v5363, %v5573
  %5575 = vmatprep.mubr.f32.mxu0 0.0
  %5576 = vmatmul.mubr.f32.gmra.mrb[0].mxu0 %v4935
  %v5577 = vpop.f32.mrb[0].mxu0
  %v5578 = vadd.f32 %v5359, %v5577
  %v5579 = vpop.f32.mrb[0].mxu0
  %v5580 = vadd.f32 %v5363, %v5579
  %5581 = vmatprep.mubr.f32.mxu0 0.0
  %5582 = vmatmul.mubr.f32.gmra.mrb[0].mxu0 %v5105
  %v5583 = vpop.f32.mrb[0].mxu0
  %v5584 = vadd.f32 %v5359, %v5583
  %v5585 = vpop.f32.mrb[0].mxu0
  %v5586 = vadd.f32 %v5363, %v5585
  %5587 = vmatprep.mubr.f32.mxu0 0.0
  %5588 = vmatmul.mubr.f32.gmra.mrb[0].mxu0 %v5275
  %v5589 = vpop.f32.mrb[0].mxu0
  %v5590 = vadd.f32 %v5359, %v5589
  %v5591 = vpop.f32.mrb[0].mxu0
  %v5592 = vadd.f32 %v5363, %v5591
  %5593 = vdwg.mxu0
  %s5594 = scalar_lea.vmem %s4, 24
  %v5595 = vld [vmem:[%s5594] sm:$0xff]
  %s5596 = scalar_lea.vmem %s5, 24
  %v5597 = vld [vmem:[%s5596] sm:$0xff]
  %s5598 = scalar_lea.vmem %s2, 1536
  %v5599 = vld [vmem:[%s5598] sm:$0xff]
  %v5600 = vld [vmem:[%s5598 + $0x8] sm:$0xff]
  %v5601 = vld [vmem:[%s5598 + $0x10] sm:$0xff]
  %v5602 = vld [vmem:[%s5598 + $0x18] sm:$0xff]
  %v5603 = vld [vmem:[%s5598 + $0x20] sm:$0xff]
  %v5604 = vld [vmem:[%s5598 + $0x28] sm:$0xff]
  %v5605 = vld [vmem:[%s5598 + $0x30] sm:$0xff]
  %v5606 = vld [vmem:[%s5598 + $0x38] sm:$0xff]
  %v5607 = vld [vmem:[%s5598 + $0x40] sm:$0xff]
  %v5608 = vld [vmem:[%s5598 + $0x48] sm:$0xff]
  %v5609 = vld [vmem:[%s5598 + $0x50] sm:$0xff]
  %v5610 = vld [vmem:[%s5598 + $0x58] sm:$0xff]
  %v5611 = vld [vmem:[%s5598 + $0x60] sm:$0xff]
  %v5612 = vld [vmem:[%s5598 + $0x68] sm:$0xff]
  %v5613 = vld [vmem:[%s5598 + $0x70] sm:$0xff]
  %v5614 = vld [vmem:[%s5598 + $0x78] sm:$0xff]
  %v5615 = vld [vmem:[%s5598 + $0x80] sm:$0xff]
  %v5616 = vld [vmem:[%s5598 + $0x88] sm:$0xff]
  %v5617 = vld [vmem:[%s5598 + $0x90] sm:$0xff]
  %v5618 = vld [vmem:[%s5598 + $0x98] sm:$0xff]
  %v5619 = vld [vmem:[%s5598 + $0xa0] sm:$0xff]
  %v5620 = vld [vmem:[%s5598 + $0xa8] sm:$0xff]
  %v5621 = vld [vmem:[%s5598 + $0xb0] sm:$0xff]
  %v5622 = vld [vmem:[%s5598 + $0xb8] sm:$0xff]
  %v5623 = vld [vmem:[%s5598 + $0xc0] sm:$0xff]
  %v5624 = vld [vmem:[%s5598 + $0xc8] sm:$0xff]
  %v5625 = vld [vmem:[%s5598 + $0xd0] sm:$0xff]
  %v5626 = vld [vmem:[%s5598 + $0xd8] sm:$0xff]
  %v5627 = vld [vmem:[%s5598 + $0xe0] sm:$0xff]
  %v5628 = vld [vmem:[%s5598 + $0xe8] sm:$0xff]
  %v5629 = vld [vmem:[%s5598 + $0xf0] sm:$0xff]
  %v5630 = vld [vmem:[%s5598 + $0xf8] sm:$0xff]
  %v5631 = vld [vmem:[%s5598 + $0x100] sm:$0xff]
  %v5632 = vld [vmem:[%s5598 + $0x108] sm:$0xff]
  %v5633 = vld [vmem:[%s5598 + $0x110] sm:$0xff]
  %v5634 = vld [vmem:[%s5598 + $0x118] sm:$0xff]
  %v5635 = vld [vmem:[%s5598 + $0x120] sm:$0xff]
  %v5636 = vld [vmem:[%s5598 + $0x128] sm:$0xff]
  %v5637 = vld [vmem:[%s5598 + $0x130] sm:$0xff]
  %v5638 = vld [vmem:[%s5598 + $0x138] sm:$0xff]
  %v5639 = vld [vmem:[%s5598 + $0x140] sm:$0xff]
  %v5640 = vld [vmem:[%s5598 + $0x148] sm:$0xff]
  %v5641 = vld [vmem:[%s5598 + $0x150] sm:$0xff]
  %v5642 = vld [vmem:[%s5598 + $0x158] sm:$0xff]
  %v5643 = vld [vmem:[%s5598 + $0x160] sm:$0xff]
  %v5644 = vld [vmem:[%s5598 + $0x168] sm:$0xff]
  %v5645 = vld [vmem:[%s5598 + $0x170] sm:$0xff]
  %v5646 = vld [vmem:[%s5598 + $0x178] sm:$0xff]
  %v5647 = vld [vmem:[%s5598 + $0x180] sm:$0xff]
  %v5648 = vld [vmem:[%s5598 + $0x188] sm:$0xff]
  %v5649 = vld [vmem:[%s5598 + $0x190] sm:$0xff]
  %v5650 = vld [vmem:[%s5598 + $0x198] sm:$0xff]
  %v5651 = vld [vmem:[%s5598 + $0x1a0] sm:$0xff]
  %v5652 = vld [vmem:[%s5598 + $0x1a8] sm:$0xff]
  %v5653 = vld [vmem:[%s5598 + $0x1b0] sm:$0xff]
  %v5654 = vld [vmem:[%s5598 + $0x1b8] sm:$0xff]
  %v5655 = vld [vmem:[%s5598 + $0x1c0] sm:$0xff]
  %v5656 = vld [vmem:[%s5598 + $0x1c8] sm:$0xff]
  %v5657 = vld [vmem:[%s5598 + $0x1d0] sm:$0xff]
  %v5658 = vld [vmem:[%s5598 + $0x1d8] sm:$0xff]
  %v5659 = vld [vmem:[%s5598 + $0x1e0] sm:$0xff]
  %v5660 = vld [vmem:[%s5598 + $0x1e8] sm:$0xff]
  %v5661 = vld [vmem:[%s5598 + $0x1f0] sm:$0xff]
  %v5662 = vld [vmem:[%s5598 + $0x1f8] sm:$0xff]
  %5663 = vmatprep.subr.mxu0 %v5600
  %5664 = vmatpush1.msra.mxu0 %v5599
  %5665 = vmatprep.subr.mxu0 %v5604
  %5666 = vmatpush1.msra.mxu0 %v5603
  %5667 = vmatprep.subr.mxu0 %v5608
  %5668 = vmatpush1.msra.mxu0 %v5607
  %5669 = vmatprep.subr.mxu0 %v5612
  %5670 = vmatpush1.msra.mxu0 %v5611
  %5671 = vmatprep.subr.mxu0 %v5616
  %5672 = vmatpush1.msra.mxu0 %v5615
  %5673 = vmatprep.subr.mxu0 %v5620
  %5674 = vmatpush1.msra.mxu0 %v5619
  %5675 = vmatprep.subr.mxu0 %v5624
  %5676 = vmatpush1.msra.mxu0 %v5623
  %5677 = vmatprep.subr.mxu0 %v5628
  %5678 = vmatpush1.msra.mxu0 %v5627
  %5679 = vmatprep.subr.mxu0 %v5632
  %5680 = vmatpush1.msra.mxu0 %v5631
  %5681 = vmatprep.subr.mxu0 %v5636
  %5682 = vmatpush1.msra.mxu0 %v5635
  %5683 = vmatprep.subr.mxu0 %v5640
  %5684 = vmatpush1.msra.mxu0 %v5639
  %5685 = vmatprep.subr.mxu0 %v5644
  %5686 = vmatpush1.msra.mxu0 %v5643
  %5687 = vmatprep.subr.mxu0 %v5648
  %5688 = vmatpush1.msra.mxu0 %v5647
  %5689 = vmatprep.subr.mxu0 %v5652
  %5690 = vmatpush1.msra.mxu0 %v5651
  %5691 = vmatprep.subr.mxu0 %v5656
  %5692 = vmatpush1.msra.mxu0 %v5655
  %5693 = vmatprep.subr.mxu0 %v5660
  %5694 = vmatpush1.msra.mxu0 %v5659
  %5695 = vmatprep.subr.mxu0 0.0
  %5696 = vmatpush1.msra.mxu0 0.0
  %5697 = vmatprep.subr.mxu0 0.0
  %5698 = vmatpush1.msra.mxu0 0.0
  %5699 = vmatprep.subr.mxu0 0.0
  %5700 = vmatpush1.msra.mxu0 0.0
  %5701 = vmatprep.subr.mxu0 0.0
  %5702 = vmatpush1.msra.mxu0 0.0
  %5703 = vmatprep.subr.mxu0 0.0
  %5704 = vmatpush1.msra.mxu0 0.0
  %5705 = vmatprep.subr.mxu0 0.0
  %5706 = vmatpush1.msra.mxu0 0.0
  %5707 = vmatprep.subr.mxu0 0.0
  %5708 = vmatpush1.msra.mxu0 0.0
  %5709 = vmatprep.subr.mxu0 0.0
  %5710 = vmatpush1.msra.mxu0 0.0
  %5711 = vmatprep.subr.mxu0 0.0
  %5712 = vmatpush1.msra.mxu0 0.0
  %5713 = vmatprep.subr.mxu0 0.0
  %5714 = vmatpush1.msra.mxu0 0.0
  %5715 = vmatprep.subr.mxu0 0.0
  %5716 = vmatpush1.msra.mxu0 0.0
  %5717 = vmatprep.subr.mxu0 0.0
  %5718 = vmatpush1.msra.mxu0 0.0
  %5719 = vmatprep.subr.mxu0 0.0
  %5720 = vmatpush1.msra.mxu0 0.0
  %5721 = vmatprep.subr.mxu0 0.0
  %5722 = vmatpush1.msra.mxu0 0.0
  %5723 = vmatprep.subr.mxu0 0.0
  %5724 = vmatpush1.msra.mxu0 0.0
  %5725 = vmatprep.subr.mxu0 0.0
  %5726 = vmatpush1.msra.mxu0 0.0
  %5727 = vmatprep.mubr.f32.mxu0 0.0
  %5728 = vmatmul.mubr.f32.gmra.mrb[0].mxu0 %v5595
  %v5729 = vpop.f32.mrb[0].mxu0
  %v5730 = vadd.f32 0.0, %v5729
  %v5731 = vpop.f32.mrb[0].mxu0
  %v5732 = vadd.f32 0.0, %v5731
  %5733 = vdwg.mxu0
  %5734 = vmatprep.subr.mxu0 %v5602
  %5735 = vmatpush1.msra.mxu0 %v5601
  %5736 = vmatprep.subr.mxu0 %v5606
  %5737 = vmatpush1.msra.mxu0 %v5605
  %5738 = vmatprep.subr.mxu0 %v5610
  %5739 = vmatpush1.msra.mxu0 %v5609
  %5740 = vmatprep.subr.mxu0 %v5614
  %5741 = vmatpush1.msra.mxu0 %v5613
  %5742 = vmatprep.subr.mxu0 %v5618
  %5743 = vmatpush1.msra.mxu0 %v5617
  %5744 = vmatprep.subr.mxu0 %v5622
  %5745 = vmatpush1.msra.mxu0 %v5621
  %5746 = vmatprep.subr.mxu0 %v5626
  %5747 = vmatpush1.msra.mxu0 %v5625
  %5748 = vmatprep.subr.mxu0 %v5630
  %5749 = vmatpush1.msra.mxu0 %v5629
  %5750 = vmatprep.subr.mxu0 %v5634
  %5751 = vmatpush1.msra.mxu0 %v5633
  %5752 = vmatprep.subr.mxu0 %v5638
  %5753 = vmatpush1.msra.mxu0 %v5637
  %5754 = vmatprep.subr.mxu0 %v5642
  %5755 = vmatpush1.msra.mxu0 %v5641
  %5756 = vmatprep.subr.mxu0 %v5646
  %5757 = vmatpush1.msra.mxu0 %v5645
  %5758 = vmatprep.subr.mxu0 %v5650
  %5759 = vmatpush1.msra.mxu0 %v5649
  %5760 = vmatprep.subr.mxu0 %v5654
  %5761 = vmatpush1.msra.mxu0 %v5653
  %5762 = vmatprep.subr.mxu0 %v5658
  %5763 = vmatpush1.msra.mxu0 %v5657
  %5764 = vmatprep.subr.mxu0 %v5662
  %5765 = vmatpush1.msra.mxu0 %v5661
  %5766 = vmatprep.subr.mxu0 0.0
  %5767 = vmatpush1.msra.mxu0 0.0
  %5768 = vmatprep.subr.mxu0 0.0
  %5769 = vmatpush1.msra.mxu0 0.0
  %5770 = vmatprep.subr.mxu0 0.0
  %5771 = vmatpush1.msra.mxu0 0.0
  %5772 = vmatprep.subr.mxu0 0.0
  %5773 = vmatpush1.msra.mxu0 0.0
  %5774 = vmatprep.subr.mxu0 0.0
  %5775 = vmatpush1.msra.mxu0 0.0
  %5776 = vmatprep.subr.mxu0 0.0
  %5777 = vmatpush1.msra.mxu0 0.0
  %5778 = vmatprep.subr.mxu0 0.0
  %5779 = vmatpush1.msra.mxu0 0.0
  %5780 = vmatprep.subr.mxu0 0.0
  %5781 = vmatpush1.msra.mxu0 0.0
  %5782 = vmatprep.subr.mxu0 0.0
  %5783 = vmatpush1.msra.mxu0 0.0
  %5784 = vmatprep.subr.mxu0 0.0
  %5785 = vmatpush1.msra.mxu0 0.0
  %5786 = vmatprep.subr.mxu0 0.0
  %5787 = vmatpush1.msra.mxu0 0.0
  %5788 = vmatprep.subr.mxu0 0.0
  %5789 = vmatpush1.msra.mxu0 0.0
  %5790 = vmatprep.subr.mxu0 0.0
  %5791 = vmatpush1.msra.mxu0 0.0
  %5792 = vmatprep.subr.mxu0 0.0
  %5793 = vmatpush1.msra.mxu0 0.0
  %5794 = vmatprep.subr.mxu0 0.0
  %5795 = vmatpush1.msra.mxu0 0.0
  %5796 = vmatprep.subr.mxu0 0.0
  %5797 = vmatpush1.msra.mxu0 0.0
  %5798 = vmatprep.mubr.f32.mxu0 0.0
  %5799 = vmatmul.mubr.f32.gmra.mrb[0].mxu0 %v5595
  %v5800 = vpop.f32.mrb[0].mxu0
  %v5801 = vadd.f32 0.0, %v5800
  %v5802 = vpop.f32.mrb[0].mxu0
  %v5803 = vadd.f32 0.0, %v5802
  %5804 = vdwg.mxu0
  %v5805 = vadd.f32 %v5435, %v5730
  %v5806 = vadd.f32 %v5437, %v5732
  %v5807 = vadd.f32 %v5548, %v5801
  %v5808 = vadd.f32 %v5550, %v5803
  %v5809 = vxor.u32 %v5805, 2147483648
  %v5810 = vmul.f32 %v5809, 1.442695
  %v5811 = vpow.pop %v5810
  %v5812 = vadd.f32 %v5811, 1.0
  %v5813 = vrcp.pop %v5812
  %v5814 = vmul.f32 1.0, %v5813
  %v5815 = vxor.u32 %v5806, 2147483648
  %v5816 = vmul.f32 %v5815, 1.442695
  %v5817 = vpow.pop %v5816
  %v5818 = vadd.f32 %v5817, 1.0
  %v5819 = vrcp.pop %v5818
  %v5820 = vmul.f32 1.0, %v5819
  %v5821 = vtanh.pop %v5807
  %v5822 = vxor.u32 %v5808, 2147483648
  %v5823 = vmul.f32 %v5822, 1.442695
  %v5824 = vpow.pop %v5823
  %v5825 = vadd.f32 %v5824, 1.0
  %v5826 = vrcp.pop %v5825
  %v5827 = vmul.f32 1.0, %v5826
  %v5828 = vmul.f32 %v5820, %v5597
  %v5829 = vmul.f32 %v5814, %v5821
  %v5830 = vadd.f32 %v5828, %v5829
  %v5831 = vtanh.pop %v5830
  %v5832 = vmul.f32 %v5827, %v5831
  %5833 = vmatprep.subr.mxu0 %v5600
  %5834 = vmatpush1.msra.mxu0 %v5599
  %5835 = vmatprep.subr.mxu0 %v5604
  %5836 = vmatpush1.msra.mxu0 %v5603
  %5837 = vmatprep.subr.mxu0 %v5608
  %5838 = vmatpush1.msra.mxu0 %v5607
  %5839 = vmatprep.subr.mxu0 %v5612
  %5840 = vmatpush1.msra.mxu0 %v5611
  %5841 = vmatprep.subr.mxu0 %v5616
  %5842 = vmatpush1.msra.mxu0 %v5615
  %5843 = vmatprep.subr.mxu0 %v5620
  %5844 = vmatpush1.msra.mxu0 %v5619
  %5845 = vmatprep.subr.mxu0 %v5624
  %5846 = vmatpush1.msra.mxu0 %v5623
  %5847 = vmatprep.subr.mxu0 %v5628
  %5848 = vmatpush1.msra.mxu0 %v5627
  %5849 = vmatprep.subr.mxu0 %v5632
  %5850 = vmatpush1.msra.mxu0 %v5631
  %5851 = vmatprep.subr.mxu0 %v5636
  %5852 = vmatpush1.msra.mxu0 %v5635
  %5853 = vmatprep.subr.mxu0 %v5640
  %5854 = vmatpush1.msra.mxu0 %v5639
  %5855 = vmatprep.subr.mxu0 %v5644
  %5856 = vmatpush1.msra.mxu0 %v5643
  %5857 = vmatprep.subr.mxu0 %v5648
  %5858 = vmatpush1.msra.mxu0 %v5647
  %5859 = vmatprep.subr.mxu0 %v5652
  %5860 = vmatpush1.msra.mxu0 %v5651
  %5861 = vmatprep.subr.mxu0 %v5656
  %5862 = vmatpush1.msra.mxu0 %v5655
  %5863 = vmatprep.subr.mxu0 %v5660
  %5864 = vmatpush1.msra.mxu0 %v5659
  %5865 = vmatprep.subr.mxu0 0.0
  %5866 = vmatpush1.msra.mxu0 0.0
  %5867 = vmatprep.subr.mxu0 0.0
  %5868 = vmatpush1.msra.mxu0 0.0
  %5869 = vmatprep.subr.mxu0 0.0
  %5870 = vmatpush1.msra.mxu0 0.0
  %5871 = vmatprep.subr.mxu0 0.0
  %5872 = vmatpush1.msra.mxu0 0.0
  %5873 = vmatprep.subr.mxu0 0.0
  %5874 = vmatpush1.msra.mxu0 0.0
  %5875 = vmatprep.subr.mxu0 0.0
  %5876 = vmatpush1.msra.mxu0 0.0
  %5877 = vmatprep.subr.mxu0 0.0
  %5878 = vmatpush1.msra.mxu0 0.0
  %5879 = vmatprep.subr.mxu0 0.0
  %5880 = vmatpush1.msra.mxu0 0.0
  %5881 = vmatprep.subr.mxu0 0.0
  %5882 = vmatpush1.msra.mxu0 0.0
  %5883 = vmatprep.subr.mxu0 0.0
  %5884 = vmatpush1.msra.mxu0 0.0
  %5885 = vmatprep.subr.mxu0 0.0
  %5886 = vmatpush1.msra.mxu0 0.0
  %5887 = vmatprep.subr.mxu0 0.0
  %5888 = vmatpush1.msra.mxu0 0.0
  %5889 = vmatprep.subr.mxu0 0.0
  %5890 = vmatpush1.msra.mxu0 0.0
  %5891 = vmatprep.subr.mxu0 0.0
  %5892 = vmatpush1.msra.mxu0 0.0
  %5893 = vmatprep.subr.mxu0 0.0
  %5894 = vmatpush1.msra.mxu0 0.0
  %5895 = vmatprep.subr.mxu0 0.0
  %5896 = vmatpush1.msra.mxu0 0.0
  %5897 = vmatprep.mubr.f32.mxu0 0.0
  %5898 = vmatmul.mubr.f32.gmra.mrb[0].mxu0 %v5832
  %v5899 = vpop.f32.mrb[0].mxu0
  %v5900 = vadd.f32 0.0, %v5899
  %v5901 = vpop.f32.mrb[0].mxu0
  %v5902 = vadd.f32 0.0, %v5901
  %5903 = vdwg.mxu0
  %5904 = vmatprep.subr.mxu0 %v5602
  %5905 = vmatpush1.msra.mxu0 %v5601
  %5906 = vmatprep.subr.mxu0 %v5606
  %5907 = vmatpush1.msra.mxu0 %v5605
  %5908 = vmatprep.subr.mxu0 %v5610
  %5909 = vmatpush1.msra.mxu0 %v5609
  %5910 = vmatprep.subr.mxu0 %v5614
  %5911 = vmatpush1.msra.mxu0 %v5613
  %5912 = vmatprep.subr.mxu0 %v5618
  %5913 = vmatpush1.msra.mxu0 %v5617
  %5914 = vmatprep.subr.mxu0 %v5622
  %5915 = vmatpush1.msra.mxu0 %v5621
  %5916 = vmatprep.subr.mxu0 %v5626
  %5917 = vmatpush1.msra.mxu0 %v5625
  %5918 = vmatprep.subr.mxu0 %v5630
  %5919 = vmatpush1.msra.mxu0 %v5629
  %5920 = vmatprep.subr.mxu0 %v5634
  %5921 = vmatpush1.msra.mxu0 %v5633
  %5922 = vmatprep.subr.mxu0 %v5638
  %5923 = vmatpush1.msra.mxu0 %v5637
  %5924 = vmatprep.subr.mxu0 %v5642
  %5925 = vmatpush1.msra.mxu0 %v5641
  %5926 = vmatprep.subr.mxu0 %v5646
  %5927 = vmatpush1.msra.mxu0 %v5645
  %5928 = vmatprep.subr.mxu0 %v5650
  %5929 = vmatpush1.msra.mxu0 %v5649
  %5930 = vmatprep.subr.mxu0 %v5654
  %5931 = vmatpush1.msra.mxu0 %v5653
  %5932 = vmatprep.subr.mxu0 %v5658
  %5933 = vmatpush1.msra.mxu0 %v5657
  %5934 = vmatprep.subr.mxu0 %v5662
  %5935 = vmatpush1.msra.mxu0 %v5661
  %5936 = vmatprep.subr.mxu0 0.0
  %5937 = vmatpush1.msra.mxu0 0.0
  %5938 = vmatprep.subr.mxu0 0.0
  %5939 = vmatpush1.msra.mxu0 0.0
  %5940 = vmatprep.subr.mxu0 0.0
  %5941 = vmatpush1.msra.mxu0 0.0
  %5942 = vmatprep.subr.mxu0 0.0
  %5943 = vmatpush1.msra.mxu0 0.0
  %5944 = vmatprep.subr.mxu0 0.0
  %5945 = vmatpush1.msra.mxu0 0.0
  %5946 = vmatprep.subr.mxu0 0.0
  %5947 = vmatpush1.msra.mxu0 0.0
  %5948 = vmatprep.subr.mxu0 0.0
  %5949 = vmatpush1.msra.mxu0 0.0
  %5950 = vmatprep.subr.mxu0 0.0
  %5951 = vmatpush1.msra.mxu0 0.0
  %5952 = vmatprep.subr.mxu0 0.0
  %5953 = vmatpush1.msra.mxu0 0.0
  %5954 = vmatprep.subr.mxu0 0.0
  %5955 = vmatpush1.msra.mxu0 0.0
  %5956 = vmatprep.subr.mxu0 0.0
  %5957 = vmatpush1.msra.mxu0 0.0
  %5958 = vmatprep.subr.mxu0 0.0
  %5959 = vmatpush1.msra.mxu0 0.0
  %5960 = vmatprep.subr.mxu0 0.0
  %5961 = vmatpush1.msra.mxu0 0.0
  %5962 = vmatprep.subr.mxu0 0.0
  %5963 = vmatpush1.msra.mxu0 0.0
  %5964 = vmatprep.subr.mxu0 0.0
  %5965 = vmatpush1.msra.mxu0 0.0
  %5966 = vmatprep.subr.mxu0 0.0
  %5967 = vmatpush1.msra.mxu0 0.0
  %5968 = vmatprep.mubr.f32.mxu0 0.0
  %5969 = vmatmul.mubr.f32.gmra.mrb[0].mxu0 %v5832
  %v5970 = vpop.f32.mrb[0].mxu0
  %v5971 = vadd.f32 0.0, %v5970
  %v5972 = vpop.f32.mrb[0].mxu0
  %v5973 = vadd.f32 0.0, %v5972
  %5974 = vdwg.mxu0
  %v5975 = vadd.f32 %v5441, %v5900
  %v5976 = vadd.f32 %v5443, %v5902
  %v5977 = vadd.f32 %v5554, %v5971
  %v5978 = vadd.f32 %v5556, %v5973
  %v5979 = vxor.u32 %v5975, 2147483648
  %v5980 = vmul.f32 %v5979, 1.442695
  %v5981 = vpow.pop %v5980
  %v5982 = vadd.f32 %v5981, 1.0
  %v5983 = vrcp.pop %v5982
  %v5984 = vmul.f32 1.0, %v5983
  %v5985 = vxor.u32 %v5976, 2147483648
  %v5986 = vmul.f32 %v5985, 1.442695
  %v5987 = vpow.pop %v5986
  %v5988 = vadd.f32 %v5987, 1.0
  %v5989 = vrcp.pop %v5988
  %v5990 = vmul.f32 1.0, %v5989
  %v5991 = vtanh.pop %v5977
  %v5992 = vxor.u32 %v5978, 2147483648
  %v5993 = vmul.f32 %v5992, 1.442695
  %v5994 = vpow.pop %v5993
  %v5995 = vadd.f32 %v5994, 1.0
  %v5996 = vrcp.pop %v5995
  %v5997 = vmul.f32 1.0, %v5996
  %v5998 = vmul.f32 %v5990, %v5830
  %v5999 = vmul.f32 %v5984, %v5991
  %v6000 = vadd.f32 %v5998, %v5999
  %v6001 = vtanh.pop %v6000
  %v6002 = vmul.f32 %v5997, %v6001
  %6003 = vmatprep.subr.mxu0 %v5600
  %6004 = vmatpush1.msra.mxu0 %v5599
  %6005 = vmatprep.subr.mxu0 %v5604
  %6006 = vmatpush1.msra.mxu0 %v5603
  %6007 = vmatprep.subr.mxu0 %v5608
  %6008 = vmatpush1.msra.mxu0 %v5607
  %6009 = vmatprep.subr.mxu0 %v5612
  %6010 = vmatpush1.msra.mxu0 %v5611
  %6011 = vmatprep.subr.mxu0 %v5616
  %6012 = vmatpush1.msra.mxu0 %v5615
  %6013 = vmatprep.subr.mxu0 %v5620
  %6014 = vmatpush1.msra.mxu0 %v5619
  %6015 = vmatprep.subr.mxu0 %v5624
  %6016 = vmatpush1.msra.mxu0 %v5623
  %6017 = vmatprep.subr.mxu0 %v5628
  %6018 = vmatpush1.msra.mxu0 %v5627
  %6019 = vmatprep.subr.mxu0 %v5632
  %6020 = vmatpush1.msra.mxu0 %v5631
  %6021 = vmatprep.subr.mxu0 %v5636
  %6022 = vmatpush1.msra.mxu0 %v5635
  %6023 = vmatprep.subr.mxu0 %v5640
  %6024 = vmatpush1.msra.mxu0 %v5639
  %6025 = vmatprep.subr.mxu0 %v5644
  %6026 = vmatpush1.msra.mxu0 %v5643
  %6027 = vmatprep.subr.mxu0 %v5648
  %6028 = vmatpush1.msra.mxu0 %v5647
  %6029 = vmatprep.subr.mxu0 %v5652
  %6030 = vmatpush1.msra.mxu0 %v5651
  %6031 = vmatprep.subr.mxu0 %v5656
  %6032 = vmatpush1.msra.mxu0 %v5655
  %6033 = vmatprep.subr.mxu0 %v5660
  %6034 = vmatpush1.msra.mxu0 %v5659
  %6035 = vmatprep.subr.mxu0 0.0
  %6036 = vmatpush1.msra.mxu0 0.0
  %6037 = vmatprep.subr.mxu0 0.0
  %6038 = vmatpush1.msra.mxu0 0.0
  %6039 = vmatprep.subr.mxu0 0.0
  %6040 = vmatpush1.msra.mxu0 0.0
  %6041 = vmatprep.subr.mxu0 0.0
  %6042 = vmatpush1.msra.mxu0 0.0
  %6043 = vmatprep.subr.mxu0 0.0
  %6044 = vmatpush1.msra.mxu0 0.0
  %6045 = vmatprep.subr.mxu0 0.0
  %6046 = vmatpush1.msra.mxu0 0.0
  %6047 = vmatprep.subr.mxu0 0.0
  %6048 = vmatpush1.msra.mxu0 0.0
  %6049 = vmatprep.subr.mxu0 0.0
  %6050 = vmatpush1.msra.mxu0 0.0
  %6051 = vmatprep.subr.mxu0 0.0
  %6052 = vmatpush1.msra.mxu0 0.0
  %6053 = vmatprep.subr.mxu0 0.0
  %6054 = vmatpush1.msra.mxu0 0.0
  %6055 = vmatprep.subr.mxu0 0.0
  %6056 = vmatpush1.msra.mxu0 0.0
  %6057 = vmatprep.subr.mxu0 0.0
  %6058 = vmatpush1.msra.mxu0 0.0
  %6059 = vmatprep.subr.mxu0 0.0
  %6060 = vmatpush1.msra.mxu0 0.0
  %6061 = vmatprep.subr.mxu0 0.0
  %6062 = vmatpush1.msra.mxu0 0.0
  %6063 = vmatprep.subr.mxu0 0.0
  %6064 = vmatpush1.msra.mxu0 0.0
  %6065 = vmatprep.subr.mxu0 0.0
  %6066 = vmatpush1.msra.mxu0 0.0
  %6067 = vmatprep.mubr.f32.mxu0 0.0
  %6068 = vmatmul.mubr.f32.gmra.mrb[0].mxu0 %v6002
  %v6069 = vpop.f32.mrb[0].mxu0
  %v6070 = vadd.f32 0.0, %v6069
  %v6071 = vpop.f32.mrb[0].mxu0
  %v6072 = vadd.f32 0.0, %v6071
  %6073 = vdwg.mxu0
  %6074 = vmatprep.subr.mxu0 %v5602
  %6075 = vmatpush1.msra.mxu0 %v5601
  %6076 = vmatprep.subr.mxu0 %v5606
  %6077 = vmatpush1.msra.mxu0 %v5605
  %6078 = vmatprep.subr.mxu0 %v5610
  %6079 = vmatpush1.msra.mxu0 %v5609
  %6080 = vmatprep.subr.mxu0 %v5614
  %6081 = vmatpush1.msra.mxu0 %v5613
  %6082 = vmatprep.subr.mxu0 %v5618
  %6083 = vmatpush1.msra.mxu0 %v5617
  %6084 = vmatprep.subr.mxu0 %v5622
  %6085 = vmatpush1.msra.mxu0 %v5621
  %6086 = vmatprep.subr.mxu0 %v5626
  %6087 = vmatpush1.msra.mxu0 %v5625
  %6088 = vmatprep.subr.mxu0 %v5630
  %6089 = vmatpush1.msra.mxu0 %v5629
  %6090 = vmatprep.subr.mxu0 %v5634
  %6091 = vmatpush1.msra.mxu0 %v5633
  %6092 = vmatprep.subr.mxu0 %v5638
  %6093 = vmatpush1.msra.mxu0 %v5637
  %6094 = vmatprep.subr.mxu0 %v5642
  %6095 = vmatpush1.msra.mxu0 %v5641
  %6096 = vmatprep.subr.mxu0 %v5646
  %6097 = vmatpush1.msra.mxu0 %v5645
  %6098 = vmatprep.subr.mxu0 %v5650
  %6099 = vmatpush1.msra.mxu0 %v5649
  %6100 = vmatprep.subr.mxu0 %v5654
  %6101 = vmatpush1.msra.mxu0 %v5653
  %6102 = vmatprep.subr.mxu0 %v5658
  %6103 = vmatpush1.msra.mxu0 %v5657
  %6104 = vmatprep.subr.mxu0 %v5662
  %6105 = vmatpush1.msra.mxu0 %v5661
  %6106 = vmatprep.subr.mxu0 0.0
  %6107 = vmatpush1.msra.mxu0 0.0
  %6108 = vmatprep.subr.mxu0 0.0
  %6109 = vmatpush1.msra.mxu0 0.0
  %6110 = vmatprep.subr.mxu0 0.0
  %6111 = vmatpush1.msra.mxu0 0.0
  %6112 = vmatprep.subr.mxu0 0.0
  %6113 = vmatpush1.msra.mxu0 0.0
  %6114 = vmatprep.subr.mxu0 0.0
  %6115 = vmatpush1.msra.mxu0 0.0
  %6116 = vmatprep.subr.mxu0 0.0
  %6117 = vmatpush1.msra.mxu0 0.0
  %6118 = vmatprep.subr.mxu0 0.0
  %6119 = vmatpush1.msra.mxu0 0.0
  %6120 = vmatprep.subr.mxu0 0.0
  %6121 = vmatpush1.msra.mxu0 0.0
  %6122 = vmatprep.subr.mxu0 0.0
  %6123 = vmatpush1.msra.mxu0 0.0
  %6124 = vmatprep.subr.mxu0 0.0
  %6125 = vmatpush1.msra.mxu0 0.0
  %6126 = vmatprep.subr.mxu0 0.0
  %6127 = vmatpush1.msra.mxu0 0.0
  %6128 = vmatprep.subr.mxu0 0.0
  %6129 = vmatpush1.msra.mxu0 0.0
  %6130 = vmatprep.subr.mxu0 0.0
  %6131 = vmatpush1.msra.mxu0 0.0
  %6132 = vmatprep.subr.mxu0 0.0
  %6133 = vmatpush1.msra.mxu0 0.0
  %6134 = vmatprep.subr.mxu0 0.0
  %6135 = vmatpush1.msra.mxu0 0.0
  %6136 = vmatprep.subr.mxu0 0.0
  %6137 = vmatpush1.msra.mxu0 0.0
  %6138 = vmatprep.mubr.f32.mxu0 0.0
  %6139 = vmatmul.mubr.f32.gmra.mrb[0].mxu0 %v6002
  %v6140 = vpop.f32.mrb[0].mxu0
  %v6141 = vadd.f32 0.0, %v6140
  %v6142 = vpop.f32.mrb[0].mxu0
  %v6143 = vadd.f32 0.0, %v6142
  %6144 = vdwg.mxu0
  %v6145 = vadd.f32 %v5447, %v6070
  %v6146 = vadd.f32 %v5449, %v6072
  %v6147 = vadd.f32 %v5560, %v6141
  %v6148 = vadd.f32 %v5562, %v6143
  %v6149 = vxor.u32 %v6145, 2147483648
  %v6150 = vmul.f32 %v6149, 1.442695
  %v6151 = vpow.pop %v6150
  %v6152 = vadd.f32 %v6151, 1.0
  %v6153 = vrcp.pop %v6152
  %v6154 = vmul.f32 1.0, %v6153
  %v6155 = vxor.u32 %v6146, 2147483648
  %v6156 = vmul.f32 %v6155, 1.442695
  %v6157 = vpow.pop %v6156
  %v6158 = vadd.f32 %v6157, 1.0
  %v6159 = vrcp.pop %v6158
  %v6160 = vmul.f32 1.0, %v6159
  %v6161 = vtanh.pop %v6147
  %v6162 = vxor.u32 %v6148, 2147483648
  %v6163 = vmul.f32 %v6162, 1.442695
  %v6164 = vpow.pop %v6163
  %v6165 = vadd.f32 %v6164, 1.0
  %v6166 = vrcp.pop %v6165
  %v6167 = vmul.f32 1.0, %v6166
  %v6168 = vmul.f32 %v6160, %v6000
  %v6169 = vmul.f32 %v6154, %v6161
  %v6170 = vadd.f32 %v6168, %v6169
  %v6171 = vtanh.pop %v6170
  %v6172 = vmul.f32 %v6167, %v6171
  %6173 = vmatprep.subr.mxu0 %v5600
  %6174 = vmatpush1.msra.mxu0 %v5599
  %6175 = vmatprep.subr.mxu0 %v5604
  %6176 = vmatpush1.msra.mxu0 %v5603
  %6177 = vmatprep.subr.mxu0 %v5608
  %6178 = vmatpush1.msra.mxu0 %v5607
  %6179 = vmatprep.subr.mxu0 %v5612
  %6180 = vmatpush1.msra.mxu0 %v5611
  %6181 = vmatprep.subr.mxu0 %v5616
  %6182 = vmatpush1.msra.mxu0 %v5615
  %6183 = vmatprep.subr.mxu0 %v5620
  %6184 = vmatpush1.msra.mxu0 %v5619
  %6185 = vmatprep.subr.mxu0 %v5624
  %6186 = vmatpush1.msra.mxu0 %v5623
  %6187 = vmatprep.subr.mxu0 %v5628
  %6188 = vmatpush1.msra.mxu0 %v5627
  %6189 = vmatprep.subr.mxu0 %v5632
  %6190 = vmatpush1.msra.mxu0 %v5631
  %6191 = vmatprep.subr.mxu0 %v5636
  %6192 = vmatpush1.msra.mxu0 %v5635
  %6193 = vmatprep.subr.mxu0 %v5640
  %6194 = vmatpush1.msra.mxu0 %v5639
  %6195 = vmatprep.subr.mxu0 %v5644
  %6196 = vmatpush1.msra.mxu0 %v5643
  %6197 = vmatprep.subr.mxu0 %v5648
  %6198 = vmatpush1.msra.mxu0 %v5647
  %6199 = vmatprep.subr.mxu0 %v5652
  %6200 = vmatpush1.msra.mxu0 %v5651
  %6201 = vmatprep.subr.mxu0 %v5656
  %6202 = vmatpush1.msra.mxu0 %v5655
  %6203 = vmatprep.subr.mxu0 %v5660
  %6204 = vmatpush1.msra.mxu0 %v5659
  %6205 = vmatprep.subr.mxu0 0.0
  %6206 = vmatpush1.msra.mxu0 0.0
  %6207 = vmatprep.subr.mxu0 0.0
  %6208 = vmatpush1.msra.mxu0 0.0
  %6209 = vmatprep.subr.mxu0 0.0
  %6210 = vmatpush1.msra.mxu0 0.0
  %6211 = vmatprep.subr.mxu0 0.0
  %6212 = vmatpush1.msra.mxu0 0.0
  %6213 = vmatprep.subr.mxu0 0.0
  %6214 = vmatpush1.msra.mxu0 0.0
  %6215 = vmatprep.subr.mxu0 0.0
  %6216 = vmatpush1.msra.mxu0 0.0
  %6217 = vmatprep.subr.mxu0 0.0
  %6218 = vmatpush1.msra.mxu0 0.0
  %6219 = vmatprep.subr.mxu0 0.0
  %6220 = vmatpush1.msra.mxu0 0.0
  %6221 = vmatprep.subr.mxu0 0.0
  %6222 = vmatpush1.msra.mxu0 0.0
  %6223 = vmatprep.subr.mxu0 0.0
  %6224 = vmatpush1.msra.mxu0 0.0
  %6225 = vmatprep.subr.mxu0 0.0
  %6226 = vmatpush1.msra.mxu0 0.0
  %6227 = vmatprep.subr.mxu0 0.0
  %6228 = vmatpush1.msra.mxu0 0.0
  %6229 = vmatprep.subr.mxu0 0.0
  %6230 = vmatpush1.msra.mxu0 0.0
  %6231 = vmatprep.subr.mxu0 0.0
  %6232 = vmatpush1.msra.mxu0 0.0
  %6233 = vmatprep.subr.mxu0 0.0
  %6234 = vmatpush1.msra.mxu0 0.0
  %6235 = vmatprep.subr.mxu0 0.0
  %6236 = vmatpush1.msra.mxu0 0.0
  %6237 = vmatprep.mubr.f32.mxu0 0.0
  %6238 = vmatmul.mubr.f32.gmra.mrb[0].mxu0 %v6172
  %v6239 = vpop.f32.mrb[0].mxu0
  %v6240 = vadd.f32 0.0, %v6239
  %v6241 = vpop.f32.mrb[0].mxu0
  %v6242 = vadd.f32 0.0, %v6241
  %6243 = vdwg.mxu0
  %6244 = vmatprep.subr.mxu0 %v5602
  %6245 = vmatpush1.msra.mxu0 %v5601
  %6246 = vmatprep.subr.mxu0 %v5606
  %6247 = vmatpush1.msra.mxu0 %v5605
  %6248 = vmatprep.subr.mxu0 %v5610
  %6249 = vmatpush1.msra.mxu0 %v5609
  %6250 = vmatprep.subr.mxu0 %v5614
  %6251 = vmatpush1.msra.mxu0 %v5613
  %6252 = vmatprep.subr.mxu0 %v5618
  %6253 = vmatpush1.msra.mxu0 %v5617
  %6254 = vmatprep.subr.mxu0 %v5622
  %6255 = vmatpush1.msra.mxu0 %v5621
  %6256 = vmatprep.subr.mxu0 %v5626
  %6257 = vmatpush1.msra.mxu0 %v5625
  %6258 = vmatprep.subr.mxu0 %v5630
  %6259 = vmatpush1.msra.mxu0 %v5629
  %6260 = vmatprep.subr.mxu0 %v5634
  %6261 = vmatpush1.msra.mxu0 %v5633
  %6262 = vmatprep.subr.mxu0 %v5638
  %6263 = vmatpush1.msra.mxu0 %v5637
  %6264 = vmatprep.subr.mxu0 %v5642
  %6265 = vmatpush1.msra.mxu0 %v5641
  %6266 = vmatprep.subr.mxu0 %v5646
  %6267 = vmatpush1.msra.mxu0 %v5645
  %6268 = vmatprep.subr.mxu0 %v5650
  %6269 = vmatpush1.msra.mxu0 %v5649
  %6270 = vmatprep.subr.mxu0 %v5654
  %6271 = vmatpush1.msra.mxu0 %v5653
  %6272 = vmatprep.subr.mxu0 %v5658
  %6273 = vmatpush1.msra.mxu0 %v5657
  %6274 = vmatprep.subr.mxu0 %v5662
  %6275 = vmatpush1.msra.mxu0 %v5661
  %6276 = vmatprep.subr.mxu0 0.0
  %6277 = vmatpush1.msra.mxu0 0.0
  %6278 = vmatprep.subr.mxu0 0.0
  %6279 = vmatpush1.msra.mxu0 0.0
  %6280 = vmatprep.subr.mxu0 0.0
  %6281 = vmatpush1.msra.mxu0 0.0
  %6282 = vmatprep.subr.mxu0 0.0
  %6283 = vmatpush1.msra.mxu0 0.0
  %6284 = vmatprep.subr.mxu0 0.0
  %6285 = vmatpush1.msra.mxu0 0.0
  %6286 = vmatprep.subr.mxu0 0.0
  %6287 = vmatpush1.msra.mxu0 0.0
  %6288 = vmatprep.subr.mxu0 0.0
  %6289 = vmatpush1.msra.mxu0 0.0
  %6290 = vmatprep.subr.mxu0 0.0
  %6291 = vmatpush1.msra.mxu0 0.0
  %6292 = vmatprep.subr.mxu0 0.0
  %6293 = vmatpush1.msra.mxu0 0.0
  %6294 = vmatprep.subr.mxu0 0.0
  %6295 = vmatpush1.msra.mxu0 0.0
  %6296 = vmatprep.subr.mxu0 0.0
  %6297 = vmatpush1.msra.mxu0 0.0
  %6298 = vmatprep.subr.mxu0 0.0
  %6299 = vmatpush1.msra.mxu0 0.0
  %6300 = vmatprep.subr.mxu0 0.0
  %6301 = vmatpush1.msra.mxu0 0.0
  %6302 = vmatprep.subr.mxu0 0.0
  %6303 = vmatpush1.msra.mxu0 0.0
  %6304 = vmatprep.subr.mxu0 0.0
  %6305 = vmatpush1.msra.mxu0 0.0
  %6306 = vmatprep.subr.mxu0 0.0
  %6307 = vmatpush1.msra.mxu0 0.0
  %6308 = vmatprep.mubr.f32.mxu0 0.0
  %6309 = vmatmul.mubr.f32.gmra.mrb[0].mxu0 %v6172
  %v6310 = vpop.f32.mrb[0].mxu0
  %v6311 = vadd.f32 0.0, %v6310
  %v6312 = vpop.f32.mrb[0].mxu0
  %v6313 = vadd.f32 0.0, %v6312
  %6314 = vdwg.mxu0
  %v6315 = vadd.f32 %v5453, %v6240
  %v6316 = vadd.f32 %v5455, %v6242
  %v6317 = vadd.f32 %v5566, %v6311
  %v6318 = vadd.f32 %v5568, %v6313
  %v6319 = vxor.u32 %v6315, 2147483648
  %v6320 = vmul.f32 %v6319, 1.442695
  %v6321 = vpow.pop %v6320
  %v6322 = vadd.f32 %v6321, 1.0
  %v6323 = vrcp.pop %v6322
  %v6324 = vmul.f32 1.0, %v6323
  %v6325 = vxor.u32 %v6316, 2147483648
  %v6326 = vmul.f32 %v6325, 1.442695
  %v6327 = vpow.pop %v6326
  %v6328 = vadd.f32 %v6327, 1.0
  %v6329 = vrcp.pop %v6328
  %v6330 = vmul.f32 1.0, %v6329
  %v6331 = vtanh.pop %v6317
  %v6332 = vxor.u32 %v6318, 2147483648
  %v6333 = vmul.f32 %v6332, 1.442695
  %v6334 = vpow.pop %v6333
  %v6335 = vadd.f32 %v6334, 1.0
  %v6336 = vrcp.pop %v6335
  %v6337 = vmul.f32 1.0, %v6336
  %v6338 = vmul.f32 %v6330, %v6170
  %v6339 = vmul.f32 %v6324, %v6331
  %v6340 = vadd.f32 %v6338, %v6339
  %v6341 = vtanh.pop %v6340
  %v6342 = vmul.f32 %v6337, %v6341
  %6343 = vmatprep.subr.mxu0 %v5600
  %6344 = vmatpush1.msra.mxu0 %v5599
  %6345 = vmatprep.subr.mxu0 %v5604
  %6346 = vmatpush1.msra.mxu0 %v5603
  %6347 = vmatprep.subr.mxu0 %v5608
  %6348 = vmatpush1.msra.mxu0 %v5607
  %6349 = vmatprep.subr.mxu0 %v5612
  %6350 = vmatpush1.msra.mxu0 %v5611
  %6351 = vmatprep.subr.mxu0 %v5616
  %6352 = vmatpush1.msra.mxu0 %v5615
  %6353 = vmatprep.subr.mxu0 %v5620
  %6354 = vmatpush1.msra.mxu0 %v5619
  %6355 = vmatprep.subr.mxu0 %v5624
  %6356 = vmatpush1.msra.mxu0 %v5623
  %6357 = vmatprep.subr.mxu0 %v5628
  %6358 = vmatpush1.msra.mxu0 %v5627
  %6359 = vmatprep.subr.mxu0 %v5632
  %6360 = vmatpush1.msra.mxu0 %v5631
  %6361 = vmatprep.subr.mxu0 %v5636
  %6362 = vmatpush1.msra.mxu0 %v5635
  %6363 = vmatprep.subr.mxu0 %v5640
  %6364 = vmatpush1.msra.mxu0 %v5639
  %6365 = vmatprep.subr.mxu0 %v5644
  %6366 = vmatpush1.msra.mxu0 %v5643
  %6367 = vmatprep.subr.mxu0 %v5648
  %6368 = vmatpush1.msra.mxu0 %v5647
  %6369 = vmatprep.subr.mxu0 %v5652
  %6370 = vmatpush1.msra.mxu0 %v5651
  %6371 = vmatprep.subr.mxu0 %v5656
  %6372 = vmatpush1.msra.mxu0 %v5655
  %6373 = vmatprep.subr.mxu0 %v5660
  %6374 = vmatpush1.msra.mxu0 %v5659
  %6375 = vmatprep.subr.mxu0 0.0
  %6376 = vmatpush1.msra.mxu0 0.0
  %6377 = vmatprep.subr.mxu0 0.0
  %6378 = vmatpush1.msra.mxu0 0.0
  %6379 = vmatprep.subr.mxu0 0.0
  %6380 = vmatpush1.msra.mxu0 0.0
  %6381 = vmatprep.subr.mxu0 0.0
  %6382 = vmatpush1.msra.mxu0 0.0
  %6383 = vmatprep.subr.mxu0 0.0
  %6384 = vmatpush1.msra.mxu0 0.0
  %6385 = vmatprep.subr.mxu0 0.0
  %6386 = vmatpush1.msra.mxu0 0.0
  %6387 = vmatprep.subr.mxu0 0.0
  %6388 = vmatpush1.msra.mxu0 0.0
  %6389 = vmatprep.subr.mxu0 0.0
  %6390 = vmatpush1.msra.mxu0 0.0
  %6391 = vmatprep.subr.mxu0 0.0
  %6392 = vmatpush1.msra.mxu0 0.0
  %6393 = vmatprep.subr.mxu0 0.0
  %6394 = vmatpush1.msra.mxu0 0.0
  %6395 = vmatprep.subr.mxu0 0.0
  %6396 = vmatpush1.msra.mxu0 0.0
  %6397 = vmatprep.subr.mxu0 0.0
  %6398 = vmatpush1.msra.mxu0 0.0
  %6399 = vmatprep.subr.mxu0 0.0
  %6400 = vmatpush1.msra.mxu0 0.0
  %6401 = vmatprep.subr.mxu0 0.0
  %6402 = vmatpush1.msra.mxu0 0.0
  %6403 = vmatprep.subr.mxu0 0.0
  %6404 = vmatpush1.msra.mxu0 0.0
  %6405 = vmatprep.subr.mxu0 0.0
  %6406 = vmatpush1.msra.mxu0 0.0
  %6407 = vmatprep.mubr.f32.mxu0 0.0
  %6408 = vmatmul.mubr.f32.gmra.mrb[0].mxu0 %v6342
  %v6409 = vpop.f32.mrb[0].mxu0
  %v6410 = vadd.f32 0.0, %v6409
  %v6411 = vpop.f32.mrb[0].mxu0
  %v6412 = vadd.f32 0.0, %v6411
  %6413 = vdwg.mxu0
  %6414 = vmatprep.subr.mxu0 %v5602
  %6415 = vmatpush1.msra.mxu0 %v5601
  %6416 = vmatprep.subr.mxu0 %v5606
  %6417 = vmatpush1.msra.mxu0 %v5605
  %6418 = vmatprep.subr.mxu0 %v5610
  %6419 = vmatpush1.msra.mxu0 %v5609
  %6420 = vmatprep.subr.mxu0 %v5614
  %6421 = vmatpush1.msra.mxu0 %v5613
  %6422 = vmatprep.subr.mxu0 %v5618
  %6423 = vmatpush1.msra.mxu0 %v5617
  %6424 = vmatprep.subr.mxu0 %v5622
  %6425 = vmatpush1.msra.mxu0 %v5621
  %6426 = vmatprep.subr.mxu0 %v5626
  %6427 = vmatpush1.msra.mxu0 %v5625
  %6428 = vmatprep.subr.mxu0 %v5630
  %6429 = vmatpush1.msra.mxu0 %v5629
  %6430 = vmatprep.subr.mxu0 %v5634
  %6431 = vmatpush1.msra.mxu0 %v5633
  %6432 = vmatprep.subr.mxu0 %v5638
  %6433 = vmatpush1.msra.mxu0 %v5637
  %6434 = vmatprep.subr.mxu0 %v5642
  %6435 = vmatpush1.msra.mxu0 %v5641
  %6436 = vmatprep.subr.mxu0 %v5646
  %6437 = vmatpush1.msra.mxu0 %v5645
  %6438 = vmatprep.subr.mxu0 %v5650
  %6439 = vmatpush1.msra.mxu0 %v5649
  %6440 = vmatprep.subr.mxu0 %v5654
  %6441 = vmatpush1.msra.mxu0 %v5653
  %6442 = vmatprep.subr.mxu0 %v5658
  %6443 = vmatpush1.msra.mxu0 %v5657
  %6444 = vmatprep.subr.mxu0 %v5662
  %6445 = vmatpush1.msra.mxu0 %v5661
  %6446 = vmatprep.subr.mxu0 0.0
  %6447 = vmatpush1.msra.mxu0 0.0
  %6448 = vmatprep.subr.mxu0 0.0
  %6449 = vmatpush1.msra.mxu0 0.0
  %6450 = vmatprep.subr.mxu0 0.0
  %6451 = vmatpush1.msra.mxu0 0.0
  %6452 = vmatprep.subr.mxu0 0.0
  %6453 = vmatpush1.msra.mxu0 0.0
  %6454 = vmatprep.subr.mxu0 0.0
  %6455 = vmatpush1.msra.mxu0 0.0
  %6456 = vmatprep.subr.mxu0 0.0
  %6457 = vmatpush1.msra.mxu0 0.0
  %6458 = vmatprep.subr.mxu0 0.0
  %6459 = vmatpush1.msra.mxu0 0.0
  %6460 = vmatprep.subr.mxu0 0.0
  %6461 = vmatpush1.msra.mxu0 0.0
  %6462 = vmatprep.subr.mxu0 0.0
  %6463 = vmatpush1.msra.mxu0 0.0
  %6464 = vmatprep.subr.mxu0 0.0
  %6465 = vmatpush1.msra.mxu0 0.0
  %6466 = vmatprep.subr.mxu0 0.0
  %6467 = vmatpush1.msra.mxu0 0.0
  %6468 = vmatprep.subr.mxu0 0.0
  %6469 = vmatpush1.msra.mxu0 0.0
  %6470 = vmatprep.subr.mxu0 0.0
  %6471 = vmatpush1.msra.mxu0 0.0
  %6472 = vmatprep.subr.mxu0 0.0
  %6473 = vmatpush1.msra.mxu0 0.0
  %6474 = vmatprep.subr.mxu0 0.0
  %6475 = vmatpush1.msra.mxu0 0.0
  %6476 = vmatprep.subr.mxu0 0.0
  %6477 = vmatpush1.msra.mxu0 0.0
  %6478 = vmatprep.mubr.f32.mxu0 0.0
  %6479 = vmatmul.mubr.f32.gmra.mrb[0].mxu0 %v6342
  %v6480 = vpop.f32.mrb[0].mxu0
  %v6481 = vadd.f32 0.0, %v6480
  %v6482 = vpop.f32.mrb[0].mxu0
  %v6483 = vadd.f32 0.0, %v6482
  %6484 = vdwg.mxu0
  %v6485 = vadd.f32 %v5459, %v6410
  %v6486 = vadd.f32 %v5461, %v6412
  %v6487 = vadd.f32 %v5572, %v6481
  %v6488 = vadd.f32 %v5574, %v6483
  %v6489 = vxor.u32 %v6485, 2147483648
  %v6490 = vmul.f32 %v6489, 1.442695
  %v6491 = vpow.pop %v6490
  %v6492 = vadd.f32 %v6491, 1.0
  %v6493 = vrcp.pop %v6492
  %v6494 = vmul.f32 1.0, %v6493
  %v6495 = vxor.u32 %v6486, 2147483648
  %v6496 = vmul.f32 %v6495, 1.442695
  %v6497 = vpow.pop %v6496
  %v6498 = vadd.f32 %v6497, 1.0
  %v6499 = vrcp.pop %v6498
  %v6500 = vmul.f32 1.0, %v6499
  %v6501 = vtanh.pop %v6487
  %v6502 = vxor.u32 %v6488, 2147483648
  %v6503 = vmul.f32 %v6502, 1.442695
  %v6504 = vpow.pop %v6503
  %v6505 = vadd.f32 %v6504, 1.0
  %v6506 = vrcp.pop %v6505
  %v6507 = vmul.f32 1.0, %v6506
  %v6508 = vmul.f32 %v6500, %v6340
  %v6509 = vmul.f32 %v6494, %v6501
  %v6510 = vadd.f32 %v6508, %v6509
  %v6511 = vtanh.pop %v6510
  %v6512 = vmul.f32 %v6507, %v6511
  %6513 = vmatprep.subr.mxu0 %v5600
  %6514 = vmatpush1.msra.mxu0 %v5599
  %6515 = vmatprep.subr.mxu0 %v5604
  %6516 = vmatpush1.msra.mxu0 %v5603
  %6517 = vmatprep.subr.mxu0 %v5608
  %6518 = vmatpush1.msra.mxu0 %v5607
  %6519 = vmatprep.subr.mxu0 %v5612
  %6520 = vmatpush1.msra.mxu0 %v5611
  %6521 = vmatprep.subr.mxu0 %v5616
  %6522 = vmatpush1.msra.mxu0 %v5615
  %6523 = vmatprep.subr.mxu0 %v5620
  %6524 = vmatpush1.msra.mxu0 %v5619
  %6525 = vmatprep.subr.mxu0 %v5624
  %6526 = vmatpush1.msra.mxu0 %v5623
  %6527 = vmatprep.subr.mxu0 %v5628
  %6528 = vmatpush1.msra.mxu0 %v5627
  %6529 = vmatprep.subr.mxu0 %v5632
  %6530 = vmatpush1.msra.mxu0 %v5631
  %6531 = vmatprep.subr.mxu0 %v5636
  %6532 = vmatpush1.msra.mxu0 %v5635
  %6533 = vmatprep.subr.mxu0 %v5640
  %6534 = vmatpush1.msra.mxu0 %v5639
  %6535 = vmatprep.subr.mxu0 %v5644
  %6536 = vmatpush1.msra.mxu0 %v5643
  %6537 = vmatprep.subr.mxu0 %v5648
  %6538 = vmatpush1.msra.mxu0 %v5647
  %6539 = vmatprep.subr.mxu0 %v5652
  %6540 = vmatpush1.msra.mxu0 %v5651
  %6541 = vmatprep.subr.mxu0 %v5656
  %6542 = vmatpush1.msra.mxu0 %v5655
  %6543 = vmatprep.subr.mxu0 %v5660
  %6544 = vmatpush1.msra.mxu0 %v5659
  %6545 = vmatprep.subr.mxu0 0.0
  %6546 = vmatpush1.msra.mxu0 0.0
  %6547 = vmatprep.subr.mxu0 0.0
  %6548 = vmatpush1.msra.mxu0 0.0
  %6549 = vmatprep.subr.mxu0 0.0
  %6550 = vmatpush1.msra.mxu0 0.0
  %6551 = vmatprep.subr.mxu0 0.0
  %6552 = vmatpush1.msra.mxu0 0.0
  %6553 = vmatprep.subr.mxu0 0.0
  %6554 = vmatpush1.msra.mxu0 0.0
  %6555 = vmatprep.subr.mxu0 0.0
  %6556 = vmatpush1.msra.mxu0 0.0
  %6557 = vmatprep.subr.mxu0 0.0
  %6558 = vmatpush1.msra.mxu0 0.0
  %6559 = vmatprep.subr.mxu0 0.0
  %6560 = vmatpush1.msra.mxu0 0.0
  %6561 = vmatprep.subr.mxu0 0.0
  %6562 = vmatpush1.msra.mxu0 0.0
  %6563 = vmatprep.subr.mxu0 0.0
  %6564 = vmatpush1.msra.mxu0 0.0
  %6565 = vmatprep.subr.mxu0 0.0
  %6566 = vmatpush1.msra.mxu0 0.0
  %6567 = vmatprep.subr.mxu0 0.0
  %6568 = vmatpush1.msra.mxu0 0.0
  %6569 = vmatprep.subr.mxu0 0.0
  %6570 = vmatpush1.msra.mxu0 0.0
  %6571 = vmatprep.subr.mxu0 0.0
  %6572 = vmatpush1.msra.mxu0 0.0
  %6573 = vmatprep.subr.mxu0 0.0
  %6574 = vmatpush1.msra.mxu0 0.0
  %6575 = vmatprep.subr.mxu0 0.0
  %6576 = vmatpush1.msra.mxu0 0.0
  %6577 = vmatprep.mubr.f32.mxu0 0.0
  %6578 = vmatmul.mubr.f32.gmra.mrb[0].mxu0 %v6512
  %v6579 = vpop.f32.mrb[0].mxu0
  %v6580 = vadd.f32 0.0, %v6579
  %v6581 = vpop.f32.mrb[0].mxu0
  %v6582 = vadd.f32 0.0, %v6581
  %6583 = vdwg.mxu0
  %6584 = vmatprep.subr.mxu0 %v5602
  %6585 = vmatpush1.msra.mxu0 %v5601
  %6586 = vmatprep.subr.mxu0 %v5606
  %6587 = vmatpush1.msra.mxu0 %v5605
  %6588 = vmatprep.subr.mxu0 %v5610
  %6589 = vmatpush1.msra.mxu0 %v5609
  %6590 = vmatprep.subr.mxu0 %v5614
  %6591 = vmatpush1.msra.mxu0 %v5613
  %6592 = vmatprep.subr.mxu0 %v5618
  %6593 = vmatpush1.msra.mxu0 %v5617
  %6594 = vmatprep.subr.mxu0 %v5622
  %6595 = vmatpush1.msra.mxu0 %v5621
  %6596 = vmatprep.subr.mxu0 %v5626
  %6597 = vmatpush1.msra.mxu0 %v5625
  %6598 = vmatprep.subr.mxu0 %v5630
  %6599 = vmatpush1.msra.mxu0 %v5629
  %6600 = vmatprep.subr.mxu0 %v5634
  %6601 = vmatpush1.msra.mxu0 %v5633
  %6602 = vmatprep.subr.mxu0 %v5638
  %6603 = vmatpush1.msra.mxu0 %v5637
  %6604 = vmatprep.subr.mxu0 %v5642
  %6605 = vmatpush1.msra.mxu0 %v5641
  %6606 = vmatprep.subr.mxu0 %v5646
  %6607 = vmatpush1.msra.mxu0 %v5645
  %6608 = vmatprep.subr.mxu0 %v5650
  %6609 = vmatpush1.msra.mxu0 %v5649
  %6610 = vmatprep.subr.mxu0 %v5654
  %6611 = vmatpush1.msra.mxu0 %v5653
  %6612 = vmatprep.subr.mxu0 %v5658
  %6613 = vmatpush1.msra.mxu0 %v5657
  %6614 = vmatprep.subr.mxu0 %v5662
  %6615 = vmatpush1.msra.mxu0 %v5661
  %6616 = vmatprep.subr.mxu0 0.0
  %6617 = vmatpush1.msra.mxu0 0.0
  %6618 = vmatprep.subr.mxu0 0.0
  %6619 = vmatpush1.msra.mxu0 0.0
  %6620 = vmatprep.subr.mxu0 0.0
  %6621 = vmatpush1.msra.mxu0 0.0
  %6622 = vmatprep.subr.mxu0 0.0
  %6623 = vmatpush1.msra.mxu0 0.0
  %6624 = vmatprep.subr.mxu0 0.0
  %6625 = vmatpush1.msra.mxu0 0.0
  %6626 = vmatprep.subr.mxu0 0.0
  %6627 = vmatpush1.msra.mxu0 0.0
  %6628 = vmatprep.subr.mxu0 0.0
  %6629 = vmatpush1.msra.mxu0 0.0
  %6630 = vmatprep.subr.mxu0 0.0
  %6631 = vmatpush1.msra.mxu0 0.0
  %6632 = vmatprep.subr.mxu0 0.0
  %6633 = vmatpush1.msra.mxu0 0.0
  %6634 = vmatprep.subr.mxu0 0.0
  %6635 = vmatpush1.msra.mxu0 0.0
  %6636 = vmatprep.subr.mxu0 0.0
  %6637 = vmatpush1.msra.mxu0 0.0
  %6638 = vmatprep.subr.mxu0 0.0
  %6639 = vmatpush1.msra.mxu0 0.0
  %6640 = vmatprep.subr.mxu0 0.0
  %6641 = vmatpush1.msra.mxu0 0.0
  %6642 = vmatprep.subr.mxu0 0.0
  %6643 = vmatpush1.msra.mxu0 0.0
  %6644 = vmatprep.subr.mxu0 0.0
  %6645 = vmatpush1.msra.mxu0 0.0
  %6646 = vmatprep.subr.mxu0 0.0
  %6647 = vmatpush1.msra.mxu0 0.0
  %6648 = vmatprep.mubr.f32.mxu0 0.0
  %6649 = vmatmul.mubr.f32.gmra.mrb[0].mxu0 %v6512
  %v6650 = vpop.f32.mrb[0].mxu0
  %v6651 = vadd.f32 0.0, %v6650
  %v6652 = vpop.f32.mrb[0].mxu0
  %v6653 = vadd.f32 0.0, %v6652
  %6654 = vdwg.mxu0
  %v6655 = vadd.f32 %v5465, %v6580
  %v6656 = vadd.f32 %v5467, %v6582
  %v6657 = vadd.f32 %v5578, %v6651
  %v6658 = vadd.f32 %v5580, %v6653
  %v6659 = vxor.u32 %v6655, 2147483648
  %v6660 = vmul.f32 %v6659, 1.442695
  %v6661 = vpow.pop %v6660
  %v6662 = vadd.f32 %v6661, 1.0
  %v6663 = vrcp.pop %v6662
  %v6664 = vmul.f32 1.0, %v6663
  %v6665 = vxor.u32 %v6656, 2147483648
  %v6666 = vmul.f32 %v6665, 1.442695
  %v6667 = vpow.pop %v6666
  %v6668 = vadd.f32 %v6667, 1.0
  %v6669 = vrcp.pop %v6668
  %v6670 = vmul.f32 1.0, %v6669
  %v6671 = vtanh.pop %v6657
  %v6672 = vxor.u32 %v6658, 2147483648
  %v6673 = vmul.f32 %v6672, 1.442695
  %v6674 = vpow.pop %v6673
  %v6675 = vadd.f32 %v6674, 1.0
  %v6676 = vrcp.pop %v6675
  %v6677 = vmul.f32 1.0, %v6676
  %v6678 = vmul.f32 %v6670, %v6510
  %v6679 = vmul.f32 %v6664, %v6671
  %v6680 = vadd.f32 %v6678, %v6679
  %v6681 = vtanh.pop %v6680
  %v6682 = vmul.f32 %v6677, %v6681
  %6683 = vmatprep.subr.mxu0 %v5600
  %6684 = vmatpush1.msra.mxu0 %v5599
  %6685 = vmatprep.subr.mxu0 %v5604
  %6686 = vmatpush1.msra.mxu0 %v5603
  %6687 = vmatprep.subr.mxu0 %v5608
  %6688 = vmatpush1.msra.mxu0 %v5607
  %6689 = vmatprep.subr.mxu0 %v5612
  %6690 = vmatpush1.msra.mxu0 %v5611
  %6691 = vmatprep.subr.mxu0 %v5616
  %6692 = vmatpush1.msra.mxu0 %v5615
  %6693 = vmatprep.subr.mxu0 %v5620
  %6694 = vmatpush1.msra.mxu0 %v5619
  %6695 = vmatprep.subr.mxu0 %v5624
  %6696 = vmatpush1.msra.mxu0 %v5623
  %6697 = vmatprep.subr.mxu0 %v5628
  %6698 = vmatpush1.msra.mxu0 %v5627
  %6699 = vmatprep.subr.mxu0 %v5632
  %6700 = vmatpush1.msra.mxu0 %v5631
  %6701 = vmatprep.subr.mxu0 %v5636
  %6702 = vmatpush1.msra.mxu0 %v5635
  %6703 = vmatprep.subr.mxu0 %v5640
  %6704 = vmatpush1.msra.mxu0 %v5639
  %6705 = vmatprep.subr.mxu0 %v5644
  %6706 = vmatpush1.msra.mxu0 %v5643
  %6707 = vmatprep.subr.mxu0 %v5648
  %6708 = vmatpush1.msra.mxu0 %v5647
  %6709 = vmatprep.subr.mxu0 %v5652
  %6710 = vmatpush1.msra.mxu0 %v5651
  %6711 = vmatprep.subr.mxu0 %v5656
  %6712 = vmatpush1.msra.mxu0 %v5655
  %6713 = vmatprep.subr.mxu0 %v5660
  %6714 = vmatpush1.msra.mxu0 %v5659
  %6715 = vmatprep.subr.mxu0 0.0
  %6716 = vmatpush1.msra.mxu0 0.0
  %6717 = vmatprep.subr.mxu0 0.0
  %6718 = vmatpush1.msra.mxu0 0.0
  %6719 = vmatprep.subr.mxu0 0.0
  %6720 = vmatpush1.msra.mxu0 0.0
  %6721 = vmatprep.subr.mxu0 0.0
  %6722 = vmatpush1.msra.mxu0 0.0
  %6723 = vmatprep.subr.mxu0 0.0
  %6724 = vmatpush1.msra.mxu0 0.0
  %6725 = vmatprep.subr.mxu0 0.0
  %6726 = vmatpush1.msra.mxu0 0.0
  %6727 = vmatprep.subr.mxu0 0.0
  %6728 = vmatpush1.msra.mxu0 0.0
  %6729 = vmatprep.subr.mxu0 0.0
  %6730 = vmatpush1.msra.mxu0 0.0
  %6731 = vmatprep.subr.mxu0 0.0
  %6732 = vmatpush1.msra.mxu0 0.0
  %6733 = vmatprep.subr.mxu0 0.0
  %6734 = vmatpush1.msra.mxu0 0.0
  %6735 = vmatprep.subr.mxu0 0.0
  %6736 = vmatpush1.msra.mxu0 0.0
  %6737 = vmatprep.subr.mxu0 0.0
  %6738 = vmatpush1.msra.mxu0 0.0
  %6739 = vmatprep.subr.mxu0 0.0
  %6740 = vmatpush1.msra.mxu0 0.0
  %6741 = vmatprep.subr.mxu0 0.0
  %6742 = vmatpush1.msra.mxu0 0.0
  %6743 = vmatprep.subr.mxu0 0.0
  %6744 = vmatpush1.msra.mxu0 0.0
  %6745 = vmatprep.subr.mxu0 0.0
  %6746 = vmatpush1.msra.mxu0 0.0
  %6747 = vmatprep.mubr.f32.mxu0 0.0
  %6748 = vmatmul.mubr.f32.gmra.mrb[0].mxu0 %v6682
  %v6749 = vpop.f32.mrb[0].mxu0
  %v6750 = vadd.f32 0.0, %v6749
  %v6751 = vpop.f32.mrb[0].mxu0
  %v6752 = vadd.f32 0.0, %v6751
  %6753 = vdwg.mxu0
  %6754 = vmatprep.subr.mxu0 %v5602
  %6755 = vmatpush1.msra.mxu0 %v5601
  %6756 = vmatprep.subr.mxu0 %v5606
  %6757 = vmatpush1.msra.mxu0 %v5605
  %6758 = vmatprep.subr.mxu0 %v5610
  %6759 = vmatpush1.msra.mxu0 %v5609
  %6760 = vmatprep.subr.mxu0 %v5614
  %6761 = vmatpush1.msra.mxu0 %v5613
  %6762 = vmatprep.subr.mxu0 %v5618
  %6763 = vmatpush1.msra.mxu0 %v5617
  %6764 = vmatprep.subr.mxu0 %v5622
  %6765 = vmatpush1.msra.mxu0 %v5621
  %6766 = vmatprep.subr.mxu0 %v5626
  %6767 = vmatpush1.msra.mxu0 %v5625
  %6768 = vmatprep.subr.mxu0 %v5630
  %6769 = vmatpush1.msra.mxu0 %v5629
  %6770 = vmatprep.subr.mxu0 %v5634
  %6771 = vmatpush1.msra.mxu0 %v5633
  %6772 = vmatprep.subr.mxu0 %v5638
  %6773 = vmatpush1.msra.mxu0 %v5637
  %6774 = vmatprep.subr.mxu0 %v5642
  %6775 = vmatpush1.msra.mxu0 %v5641
  %6776 = vmatprep.subr.mxu0 %v5646
  %6777 = vmatpush1.msra.mxu0 %v5645
  %6778 = vmatprep.subr.mxu0 %v5650
  %6779 = vmatpush1.msra.mxu0 %v5649
  %6780 = vmatprep.subr.mxu0 %v5654
  %6781 = vmatpush1.msra.mxu0 %v5653
  %6782 = vmatprep.subr.mxu0 %v5658
  %6783 = vmatpush1.msra.mxu0 %v5657
  %6784 = vmatprep.subr.mxu0 %v5662
  %6785 = vmatpush1.msra.mxu0 %v5661
  %6786 = vmatprep.subr.mxu0 0.0
  %6787 = vmatpush1.msra.mxu0 0.0
  %6788 = vmatprep.subr.mxu0 0.0
  %6789 = vmatpush1.msra.mxu0 0.0
  %6790 = vmatprep.subr.mxu0 0.0
  %6791 = vmatpush1.msra.mxu0 0.0
  %6792 = vmatprep.subr.mxu0 0.0
  %6793 = vmatpush1.msra.mxu0 0.0
  %6794 = vmatprep.subr.mxu0 0.0
  %6795 = vmatpush1.msra.mxu0 0.0
  %6796 = vmatprep.subr.mxu0 0.0
  %6797 = vmatpush1.msra.mxu0 0.0
  %6798 = vmatprep.subr.mxu0 0.0
  %6799 = vmatpush1.msra.mxu0 0.0
  %6800 = vmatprep.subr.mxu0 0.0
  %6801 = vmatpush1.msra.mxu0 0.0
  %6802 = vmatprep.subr.mxu0 0.0
  %6803 = vmatpush1.msra.mxu0 0.0
  %6804 = vmatprep.subr.mxu0 0.0
  %6805 = vmatpush1.msra.mxu0 0.0
  %6806 = vmatprep.subr.mxu0 0.0
  %6807 = vmatpush1.msra.mxu0 0.0
  %6808 = vmatprep.subr.mxu0 0.0
  %6809 = vmatpush1.msra.mxu0 0.0
  %6810 = vmatprep.subr.mxu0 0.0
  %6811 = vmatpush1.msra.mxu0 0.0
  %6812 = vmatprep.subr.mxu0 0.0
  %6813 = vmatpush1.msra.mxu0 0.0
  %6814 = vmatprep.subr.mxu0 0.0
  %6815 = vmatpush1.msra.mxu0 0.0
  %6816 = vmatprep.subr.mxu0 0.0
  %6817 = vmatpush1.msra.mxu0 0.0
  %6818 = vmatprep.mubr.f32.mxu0 0.0
  %6819 = vmatmul.mubr.f32.gmra.mrb[0].mxu0 %v6682
  %v6820 = vpop.f32.mrb[0].mxu0
  %v6821 = vadd.f32 0.0, %v6820
  %v6822 = vpop.f32.mrb[0].mxu0
  %v6823 = vadd.f32 0.0, %v6822
  %6824 = vdwg.mxu0
  %v6825 = vadd.f32 %v5471, %v6750
  %v6826 = vadd.f32 %v5473, %v6752
  %v6827 = vadd.f32 %v5584, %v6821
  %v6828 = vadd.f32 %v5586, %v6823
  %v6829 = vxor.u32 %v6825, 2147483648
  %v6830 = vmul.f32 %v6829, 1.442695
  %v6831 = vpow.pop %v6830
  %v6832 = vadd.f32 %v6831, 1.0
  %v6833 = vrcp.pop %v6832
  %v6834 = vmul.f32 1.0, %v6833
  %v6835 = vxor.u32 %v6826, 2147483648
  %v6836 = vmul.f32 %v6835, 1.442695
  %v6837 = vpow.pop %v6836
  %v6838 = vadd.f32 %v6837, 1.0
  %v6839 = vrcp.pop %v6838
  %v6840 = vmul.f32 1.0, %v6839
  %v6841 = vtanh.pop %v6827
  %v6842 = vxor.u32 %v6828, 2147483648
  %v6843 = vmul.f32 %v6842, 1.442695
  %v6844 = vpow.pop %v6843
  %v6845 = vadd.f32 %v6844, 1.0
  %v6846 = vrcp.pop %v6845
  %v6847 = vmul.f32 1.0, %v6846
  %v6848 = vmul.f32 %v6840, %v6680
  %v6849 = vmul.f32 %v6834, %v6841
  %v6850 = vadd.f32 %v6848, %v6849
  %v6851 = vtanh.pop %v6850
  %v6852 = vmul.f32 %v6847, %v6851
  %6853 = vmatprep.subr.mxu0 %v5600
  %6854 = vmatpush1.msra.mxu0 %v5599
  %6855 = vmatprep.subr.mxu0 %v5604
  %6856 = vmatpush1.msra.mxu0 %v5603
  %6857 = vmatprep.subr.mxu0 %v5608
  %6858 = vmatpush1.msra.mxu0 %v5607
  %6859 = vmatprep.subr.mxu0 %v5612
  %6860 = vmatpush1.msra.mxu0 %v5611
  %6861 = vmatprep.subr.mxu0 %v5616
  %6862 = vmatpush1.msra.mxu0 %v5615
  %6863 = vmatprep.subr.mxu0 %v5620
  %6864 = vmatpush1.msra.mxu0 %v5619
  %6865 = vmatprep.subr.mxu0 %v5624
  %6866 = vmatpush1.msra.mxu0 %v5623
  %6867 = vmatprep.subr.mxu0 %v5628
  %6868 = vmatpush1.msra.mxu0 %v5627
  %6869 = vmatprep.subr.mxu0 %v5632
  %6870 = vmatpush1.msra.mxu0 %v5631
  %6871 = vmatprep.subr.mxu0 %v5636
  %6872 = vmatpush1.msra.mxu0 %v5635
  %6873 = vmatprep.subr.mxu0 %v5640
  %6874 = vmatpush1.msra.mxu0 %v5639
  %6875 = vmatprep.subr.mxu0 %v5644
  %6876 = vmatpush1.msra.mxu0 %v5643
  %6877 = vmatprep.subr.mxu0 %v5648
  %6878 = vmatpush1.msra.mxu0 %v5647
  %6879 = vmatprep.subr.mxu0 %v5652
  %6880 = vmatpush1.msra.mxu0 %v5651
  %6881 = vmatprep.subr.mxu0 %v5656
  %6882 = vmatpush1.msra.mxu0 %v5655
  %6883 = vmatprep.subr.mxu0 %v5660
  %6884 = vmatpush1.msra.mxu0 %v5659
  %6885 = vmatprep.subr.mxu0 0.0
  %6886 = vmatpush1.msra.mxu0 0.0
  %6887 = vmatprep.subr.mxu0 0.0
  %6888 = vmatpush1.msra.mxu0 0.0
  %6889 = vmatprep.subr.mxu0 0.0
  %6890 = vmatpush1.msra.mxu0 0.0
  %6891 = vmatprep.subr.mxu0 0.0
  %6892 = vmatpush1.msra.mxu0 0.0
  %6893 = vmatprep.subr.mxu0 0.0
  %6894 = vmatpush1.msra.mxu0 0.0
  %6895 = vmatprep.subr.mxu0 0.0
  %6896 = vmatpush1.msra.mxu0 0.0
  %6897 = vmatprep.subr.mxu0 0.0
  %6898 = vmatpush1.msra.mxu0 0.0
  %6899 = vmatprep.subr.mxu0 0.0
  %6900 = vmatpush1.msra.mxu0 0.0
  %6901 = vmatprep.subr.mxu0 0.0
  %6902 = vmatpush1.msra.mxu0 0.0
  %6903 = vmatprep.subr.mxu0 0.0
  %6904 = vmatpush1.msra.mxu0 0.0
  %6905 = vmatprep.subr.mxu0 0.0
  %6906 = vmatpush1.msra.mxu0 0.0
  %6907 = vmatprep.subr.mxu0 0.0
  %6908 = vmatpush1.msra.mxu0 0.0
  %6909 = vmatprep.subr.mxu0 0.0
  %6910 = vmatpush1.msra.mxu0 0.0
  %6911 = vmatprep.subr.mxu0 0.0
  %6912 = vmatpush1.msra.mxu0 0.0
  %6913 = vmatprep.subr.mxu0 0.0
  %6914 = vmatpush1.msra.mxu0 0.0
  %6915 = vmatprep.subr.mxu0 0.0
  %6916 = vmatpush1.msra.mxu0 0.0
  %6917 = vmatprep.mubr.f32.mxu0 0.0
  %6918 = vmatmul.mubr.f32.gmra.mrb[0].mxu0 %v6852
  %v6919 = vpop.f32.mrb[0].mxu0
  %v6920 = vadd.f32 0.0, %v6919
  %v6921 = vpop.f32.mrb[0].mxu0
  %v6922 = vadd.f32 0.0, %v6921
  %6923 = vdwg.mxu0
  %6924 = vmatprep.subr.mxu0 %v5602
  %6925 = vmatpush1.msra.mxu0 %v5601
  %6926 = vmatprep.subr.mxu0 %v5606
  %6927 = vmatpush1.msra.mxu0 %v5605
  %6928 = vmatprep.subr.mxu0 %v5610
  %6929 = vmatpush1.msra.mxu0 %v5609
  %6930 = vmatprep.subr.mxu0 %v5614
  %6931 = vmatpush1.msra.mxu0 %v5613
  %6932 = vmatprep.subr.mxu0 %v5618
  %6933 = vmatpush1.msra.mxu0 %v5617
  %6934 = vmatprep.subr.mxu0 %v5622
  %6935 = vmatpush1.msra.mxu0 %v5621
  %6936 = vmatprep.subr.mxu0 %v5626
  %6937 = vmatpush1.msra.mxu0 %v5625
  %6938 = vmatprep.subr.mxu0 %v5630
  %6939 = vmatpush1.msra.mxu0 %v5629
  %6940 = vmatprep.subr.mxu0 %v5634
  %6941 = vmatpush1.msra.mxu0 %v5633
  %6942 = vmatprep.subr.mxu0 %v5638
  %6943 = vmatpush1.msra.mxu0 %v5637
  %6944 = vmatprep.subr.mxu0 %v5642
  %6945 = vmatpush1.msra.mxu0 %v5641
  %6946 = vmatprep.subr.mxu0 %v5646
  %6947 = vmatpush1.msra.mxu0 %v5645
  %6948 = vmatprep.subr.mxu0 %v5650
  %6949 = vmatpush1.msra.mxu0 %v5649
  %6950 = vmatprep.subr.mxu0 %v5654
  %6951 = vmatpush1.msra.mxu0 %v5653
  %6952 = vmatprep.subr.mxu0 %v5658
  %6953 = vmatpush1.msra.mxu0 %v5657
  %6954 = vmatprep.subr.mxu0 %v5662
  %6955 = vmatpush1.msra.mxu0 %v5661
  %6956 = vmatprep.subr.mxu0 0.0
  %6957 = vmatpush1.msra.mxu0 0.0
  %6958 = vmatprep.subr.mxu0 0.0
  %6959 = vmatpush1.msra.mxu0 0.0
  %6960 = vmatprep.subr.mxu0 0.0
  %6961 = vmatpush1.msra.mxu0 0.0
  %6962 = vmatprep.subr.mxu0 0.0
  %6963 = vmatpush1.msra.mxu0 0.0
  %6964 = vmatprep.subr.mxu0 0.0
  %6965 = vmatpush1.msra.mxu0 0.0
  %6966 = vmatprep.subr.mxu0 0.0
  %6967 = vmatpush1.msra.mxu0 0.0
  %6968 = vmatprep.subr.mxu0 0.0
  %6969 = vmatpush1.msra.mxu0 0.0
  %6970 = vmatprep.subr.mxu0 0.0
  %6971 = vmatpush1.msra.mxu0 0.0
  %6972 = vmatprep.subr.mxu0 0.0
  %6973 = vmatpush1.msra.mxu0 0.0
  %6974 = vmatprep.subr.mxu0 0.0
  %6975 = vmatpush1.msra.mxu0 0.0
  %6976 = vmatprep.subr.mxu0 0.0
  %6977 = vmatpush1.msra.mxu0 0.0
  %6978 = vmatprep.subr.mxu0 0.0
  %6979 = vmatpush1.msra.mxu0 0.0
  %6980 = vmatprep.subr.mxu0 0.0
  %6981 = vmatpush1.msra.mxu0 0.0
  %6982 = vmatprep.subr.mxu0 0.0
  %6983 = vmatpush1.msra.mxu0 0.0
  %6984 = vmatprep.subr.mxu0 0.0
  %6985 = vmatpush1.msra.mxu0 0.0
  %6986 = vmatprep.subr.mxu0 0.0
  %6987 = vmatpush1.msra.mxu0 0.0
  %6988 = vmatprep.mubr.f32.mxu0 0.0
  %6989 = vmatmul.mubr.f32.gmra.mrb[0].mxu0 %v6852
  %v6990 = vpop.f32.mrb[0].mxu0
  %v6991 = vadd.f32 0.0, %v6990
  %v6992 = vpop.f32.mrb[0].mxu0
  %v6993 = vadd.f32 0.0, %v6992
  %6994 = vdwg.mxu0
  %v6995 = vadd.f32 %v5477, %v6920
  %v6996 = vadd.f32 %v5479, %v6922
  %v6997 = vadd.f32 %v5590, %v6991
  %v6998 = vadd.f32 %v5592, %v6993
  %v6999 = vxor.u32 %v6995, 2147483648
  %v7000 = vmul.f32 %v6999, 1.442695
  %v7001 = vpow.pop %v7000
  %v7002 = vadd.f32 %v7001, 1.0
  %v7003 = vrcp.pop %v7002
  %v7004 = vmul.f32 1.0, %v7003
  %v7005 = vxor.u32 %v6996, 2147483648
  %v7006 = vmul.f32 %v7005, 1.442695
  %v7007 = vpow.pop %v7006
  %v7008 = vadd.f32 %v7007, 1.0
  %v7009 = vrcp.pop %v7008
  %v7010 = vmul.f32 1.0, %v7009
  %v7011 = vtanh.pop %v6997
  %v7012 = vxor.u32 %v6998, 2147483648
  %v7013 = vmul.f32 %v7012, 1.442695
  %v7014 = vpow.pop %v7013
  %v7015 = vadd.f32 %v7014, 1.0
  %v7016 = vrcp.pop %v7015
  %v7017 = vmul.f32 1.0, %v7016
  %v7018 = vmul.f32 %v7010, %v6850
  %v7019 = vmul.f32 %v7004, %v7011
  %v7020 = vadd.f32 %v7018, %v7019
  %v7021 = vtanh.pop %v7020
  %v7022 = vmul.f32 %v7017, %v7021
  %s7023 = scalar_lea.vmem %s11, 24
  %7024 = vst [vmem:[%s7023] sm:$0xff] %v7022
  %s7025 = scalar_lea.vmem %s12, 24
  %7026 = vst [vmem:[%s7025] sm:$0xff] %v7020
  %s7027 = scalar_lea.vmem %s1, 2048
  %v7028 = vld [vmem:[%s7027] sm:$0xff]
  %v7029 = vld [vmem:[%s7027 + $0x8] sm:$0xff]
  %v7030 = vld [vmem:[%s7027 + $0x10] sm:$0xff]
  %v7031 = vld [vmem:[%s7027 + $0x18] sm:$0xff]
  %v7032 = vld [vmem:[%s7027 + $0x20] sm:$0xff]
  %v7033 = vld [vmem:[%s7027 + $0x28] sm:$0xff]
  %v7034 = vld [vmem:[%s7027 + $0x30] sm:$0xff]
  %v7035 = vld [vmem:[%s7027 + $0x38] sm:$0xff]
  %v7036 = vld [vmem:[%s7027 + $0x40] sm:$0xff]
  %v7037 = vld [vmem:[%s7027 + $0x48] sm:$0xff]
  %v7038 = vld [vmem:[%s7027 + $0x50] sm:$0xff]
  %v7039 = vld [vmem:[%s7027 + $0x58] sm:$0xff]
  %v7040 = vld [vmem:[%s7027 + $0x60] sm:$0xff]
  %v7041 = vld [vmem:[%s7027 + $0x68] sm:$0xff]
  %v7042 = vld [vmem:[%s7027 + $0x70] sm:$0xff]
  %v7043 = vld [vmem:[%s7027 + $0x78] sm:$0xff]
  %v7044 = vld [vmem:[%s7027 + $0x80] sm:$0xff]
  %v7045 = vld [vmem:[%s7027 + $0x88] sm:$0xff]
  %v7046 = vld [vmem:[%s7027 + $0x90] sm:$0xff]
  %v7047 = vld [vmem:[%s7027 + $0x98] sm:$0xff]
  %v7048 = vld [vmem:[%s7027 + $0xa0] sm:$0xff]
  %v7049 = vld [vmem:[%s7027 + $0xa8] sm:$0xff]
  %v7050 = vld [vmem:[%s7027 + $0xb0] sm:$0xff]
  %v7051 = vld [vmem:[%s7027 + $0xb8] sm:$0xff]
  %v7052 = vld [vmem:[%s7027 + $0xc0] sm:$0xff]
  %v7053 = vld [vmem:[%s7027 + $0xc8] sm:$0xff]
  %v7054 = vld [vmem:[%s7027 + $0xd0] sm:$0xff]
  %v7055 = vld [vmem:[%s7027 + $0xd8] sm:$0xff]
  %v7056 = vld [vmem:[%s7027 + $0xe0] sm:$0xff]
  %v7057 = vld [vmem:[%s7027 + $0xe8] sm:$0xff]
  %v7058 = vld [vmem:[%s7027 + $0xf0] sm:$0xff]
  %v7059 = vld [vmem:[%s7027 + $0xf8] sm:$0xff]
  %v7060 = vld [vmem:[%s7027 + $0x100] sm:$0xff]
  %v7061 = vld [vmem:[%s7027 + $0x108] sm:$0xff]
  %v7062 = vld [vmem:[%s7027 + $0x110] sm:$0xff]
  %v7063 = vld [vmem:[%s7027 + $0x118] sm:$0xff]
  %v7064 = vld [vmem:[%s7027 + $0x120] sm:$0xff]
  %v7065 = vld [vmem:[%s7027 + $0x128] sm:$0xff]
  %v7066 = vld [vmem:[%s7027 + $0x130] sm:$0xff]
  %v7067 = vld [vmem:[%s7027 + $0x138] sm:$0xff]
  %v7068 = vld [vmem:[%s7027 + $0x140] sm:$0xff]
  %v7069 = vld [vmem:[%s7027 + $0x148] sm:$0xff]
  %v7070 = vld [vmem:[%s7027 + $0x150] sm:$0xff]
  %v7071 = vld [vmem:[%s7027 + $0x158] sm:$0xff]
  %v7072 = vld [vmem:[%s7027 + $0x160] sm:$0xff]
  %v7073 = vld [vmem:[%s7027 + $0x168] sm:$0xff]
  %v7074 = vld [vmem:[%s7027 + $0x170] sm:$0xff]
  %v7075 = vld [vmem:[%s7027 + $0x178] sm:$0xff]
  %v7076 = vld [vmem:[%s7027 + $0x180] sm:$0xff]
  %v7077 = vld [vmem:[%s7027 + $0x188] sm:$0xff]
  %v7078 = vld [vmem:[%s7027 + $0x190] sm:$0xff]
  %v7079 = vld [vmem:[%s7027 + $0x198] sm:$0xff]
  %v7080 = vld [vmem:[%s7027 + $0x1a0] sm:$0xff]
  %v7081 = vld [vmem:[%s7027 + $0x1a8] sm:$0xff]
  %v7082 = vld [vmem:[%s7027 + $0x1b0] sm:$0xff]
  %v7083 = vld [vmem:[%s7027 + $0x1b8] sm:$0xff]
  %v7084 = vld [vmem:[%s7027 + $0x1c0] sm:$0xff]
  %v7085 = vld [vmem:[%s7027 + $0x1c8] sm:$0xff]
  %v7086 = vld [vmem:[%s7027 + $0x1d0] sm:$0xff]
  %v7087 = vld [vmem:[%s7027 + $0x1d8] sm:$0xff]
  %v7088 = vld [vmem:[%s7027 + $0x1e0] sm:$0xff]
  %v7089 = vld [vmem:[%s7027 + $0x1e8] sm:$0xff]
  %v7090 = vld [vmem:[%s7027 + $0x1f0] sm:$0xff]
  %v7091 = vld [vmem:[%s7027 + $0x1f8] sm:$0xff]
  %s7092 = scalar_lea.vmem %s3, 16
  %v7093 = vld [vmem:[%s7092] sm:$0xf]
  %v7095 = vlaneseq
  %v7096 = vshrl.u32 %v7095, 7
  %v7097 = vsub.s32 0, %v7096
  %v7098 = vrot.slane %v7093, %v7097
  %v7099 = vlaneseq
  %v7100 = vshrl.u32 %v7099, 7
  %v7101 = vsub.s32 1, %v7100
  %v7102 = vrot.slane %v7093, %v7101
  %v7103 = vlaneseq
  %v7104 = vshrl.u32 %v7103, 7
  %v7105 = vsub.s32 2, %v7104
  %v7106 = vrot.slane %v7093, %v7105
  %v7107 = vlaneseq
  %v7108 = vshrl.u32 %v7107, 7
  %v7109 = vsub.s32 3, %v7108
  %v7110 = vrot.slane %v7093, %v7109
  %7115 = vmatprep.subr.mxu0 %v7029
  %7116 = vmatpush1.msra.mxu0 %v7028
  %7117 = vmatprep.subr.mxu0 %v7033
  %7118 = vmatpush1.msra.mxu0 %v7032
  %7119 = vmatprep.subr.mxu0 %v7037
  %7120 = vmatpush1.msra.mxu0 %v7036
  %7121 = vmatprep.subr.mxu0 %v7041
  %7122 = vmatpush1.msra.mxu0 %v7040
  %7123 = vmatprep.subr.mxu0 %v7045
  %7124 = vmatpush1.msra.mxu0 %v7044
  %7125 = vmatprep.subr.mxu0 %v7049
  %7126 = vmatpush1.msra.mxu0 %v7048
  %7127 = vmatprep.subr.mxu0 %v7053
  %7128 = vmatpush1.msra.mxu0 %v7052
  %7129 = vmatprep.subr.mxu0 %v7057
  %7130 = vmatpush1.msra.mxu0 %v7056
  %7131 = vmatprep.subr.mxu0 %v7061
  %7132 = vmatpush1.msra.mxu0 %v7060
  %7133 = vmatprep.subr.mxu0 %v7065
  %7134 = vmatpush1.msra.mxu0 %v7064
  %7135 = vmatprep.subr.mxu0 %v7069
  %7136 = vmatpush1.msra.mxu0 %v7068
  %7137 = vmatprep.subr.mxu0 %v7073
  %7138 = vmatpush1.msra.mxu0 %v7072
  %7139 = vmatprep.subr.mxu0 %v7077
  %7140 = vmatpush1.msra.mxu0 %v7076
  %7141 = vmatprep.subr.mxu0 %v7081
  %7142 = vmatpush1.msra.mxu0 %v7080
  %7143 = vmatprep.subr.mxu0 %v7085
  %7144 = vmatpush1.msra.mxu0 %v7084
  %7145 = vmatprep.subr.mxu0 %v7089
  %7146 = vmatpush1.msra.mxu0 %v7088
  %7147 = vmatprep.subr.mxu0 0.0
  %7148 = vmatpush1.msra.mxu0 0.0
  %7149 = vmatprep.subr.mxu0 0.0
  %7150 = vmatpush1.msra.mxu0 0.0
  %7151 = vmatprep.subr.mxu0 0.0
  %7152 = vmatpush1.msra.mxu0 0.0
  %7153 = vmatprep.subr.mxu0 0.0
  %7154 = vmatpush1.msra.mxu0 0.0
  %7155 = vmatprep.subr.mxu0 0.0
  %7156 = vmatpush1.msra.mxu0 0.0
  %7157 = vmatprep.subr.mxu0 0.0
  %7158 = vmatpush1.msra.mxu0 0.0
  %7159 = vmatprep.subr.mxu0 0.0
  %7160 = vmatpush1.msra.mxu0 0.0
  %7161 = vmatprep.subr.mxu0 0.0
  %7162 = vmatpush1.msra.mxu0 0.0
  %7163 = vmatprep.subr.mxu0 0.0
  %7164 = vmatpush1.msra.mxu0 0.0
  %7165 = vmatprep.subr.mxu0 0.0
  %7166 = vmatpush1.msra.mxu0 0.0
  %7167 = vmatprep.subr.mxu0 0.0
  %7168 = vmatpush1.msra.mxu0 0.0
  %7169 = vmatprep.subr.mxu0 0.0
  %7170 = vmatpush1.msra.mxu0 0.0
  %7171 = vmatprep.subr.mxu0 0.0
  %7172 = vmatpush1.msra.mxu0 0.0
  %7173 = vmatprep.subr.mxu0 0.0
  %7174 = vmatpush1.msra.mxu0 0.0
  %7175 = vmatprep.subr.mxu0 0.0
  %7176 = vmatpush1.msra.mxu0 0.0
  %7177 = vmatprep.subr.mxu0 0.0
  %7178 = vmatpush1.msra.mxu0 0.0
  %7179 = vmatprep.mubr.f32.mxu0 0.0
  %7180 = vmatmul.mubr.f32.gmra.mrb[0].mxu0 %v5832
  %v7181 = vpop.f32.mrb[0].mxu0
  %v7182 = vadd.f32 %v7098, %v7181
  %v7183 = vpop.f32.mrb[0].mxu0
  %v7184 = vadd.f32 %v7102, %v7183
  %7185 = vmatprep.mubr.f32.mxu0 0.0
  %7186 = vmatmul.mubr.f32.gmra.mrb[0].mxu0 %v6002
  %v7187 = vpop.f32.mrb[0].mxu0
  %v7188 = vadd.f32 %v7098, %v7187
  %v7189 = vpop.f32.mrb[0].mxu0
  %v7190 = vadd.f32 %v7102, %v7189
  %7191 = vmatprep.mubr.f32.mxu0 0.0
  %7192 = vmatmul.mubr.f32.gmra.mrb[0].mxu0 %v6172
  %v7193 = vpop.f32.mrb[0].mxu0
  %v7194 = vadd.f32 %v7098, %v7193
  %v7195 = vpop.f32.mrb[0].mxu0
  %v7196 = vadd.f32 %v7102, %v7195
  %7197 = vmatprep.mubr.f32.mxu0 0.0
  %7198 = vmatmul.mubr.f32.gmra.mrb[0].mxu0 %v6342
  %v7199 = vpop.f32.mrb[0].mxu0
  %v7200 = vadd.f32 %v7098, %v7199
  %v7201 = vpop.f32.mrb[0].mxu0
  %v7202 = vadd.f32 %v7102, %v7201
  %7203 = vmatprep.mubr.f32.mxu0 0.0
  %7204 = vmatmul.mubr.f32.gmra.mrb[0].mxu0 %v6512
  %v7205 = vpop.f32.mrb[0].mxu0
  %v7206 = vadd.f32 %v7098, %v7205
  %v7207 = vpop.f32.mrb[0].mxu0
  %v7208 = vadd.f32 %v7102, %v7207
  %7209 = vmatprep.mubr.f32.mxu0 0.0
  %7210 = vmatmul.mubr.f32.gmra.mrb[0].mxu0 %v6682
  %v7211 = vpop.f32.mrb[0].mxu0
  %v7212 = vadd.f32 %v7098, %v7211
  %v7213 = vpop.f32.mrb[0].mxu0
  %v7214 = vadd.f32 %v7102, %v7213
  %7215 = vmatprep.mubr.f32.mxu0 0.0
  %7216 = vmatmul.mubr.f32.gmra.mrb[0].mxu0 %v6852
  %v7217 = vpop.f32.mrb[0].mxu0
  %v7218 = vadd.f32 %v7098, %v7217
  %v7219 = vpop.f32.mrb[0].mxu0
  %v7220 = vadd.f32 %v7102, %v7219
  %7221 = vmatprep.mubr.f32.mxu0 0.0
  %7222 = vmatmul.mubr.f32.gmra.mrb[0].mxu0 %v7022
  %v7223 = vpop.f32.mrb[0].mxu0
  %v7224 = vadd.f32 %v7098, %v7223
  %v7225 = vpop.f32.mrb[0].mxu0
  %v7226 = vadd.f32 %v7102, %v7225
  %7227 = vdwg.mxu0
  %7228 = vmatprep.subr.mxu0 %v7031
  %7229 = vmatpush1.msra.mxu0 %v7030
  %7230 = vmatprep.subr.mxu0 %v7035
  %7231 = vmatpush1.msra.mxu0 %v7034
  %7232 = vmatprep.subr.mxu0 %v7039
  %7233 = vmatpush1.msra.mxu0 %v7038
  %7234 = vmatprep.subr.mxu0 %v7043
  %7235 = vmatpush1.msra.mxu0 %v7042
  %7236 = vmatprep.subr.mxu0 %v7047
  %7237 = vmatpush1.msra.mxu0 %v7046
  %7238 = vmatprep.subr.mxu0 %v7051
  %7239 = vmatpush1.msra.mxu0 %v7050
  %7240 = vmatprep.subr.mxu0 %v7055
  %7241 = vmatpush1.msra.mxu0 %v7054
  %7242 = vmatprep.subr.mxu0 %v7059
  %7243 = vmatpush1.msra.mxu0 %v7058
  %7244 = vmatprep.subr.mxu0 %v7063
  %7245 = vmatpush1.msra.mxu0 %v7062
  %7246 = vmatprep.subr.mxu0 %v7067
  %7247 = vmatpush1.msra.mxu0 %v7066
  %7248 = vmatprep.subr.mxu0 %v7071
  %7249 = vmatpush1.msra.mxu0 %v7070
  %7250 = vmatprep.subr.mxu0 %v7075
  %7251 = vmatpush1.msra.mxu0 %v7074
  %7252 = vmatprep.subr.mxu0 %v7079
  %7253 = vmatpush1.msra.mxu0 %v7078
  %7254 = vmatprep.subr.mxu0 %v7083
  %7255 = vmatpush1.msra.mxu0 %v7082
  %7256 = vmatprep.subr.mxu0 %v7087
  %7257 = vmatpush1.msra.mxu0 %v7086
  %7258 = vmatprep.subr.mxu0 %v7091
  %7259 = vmatpush1.msra.mxu0 %v7090
  %7260 = vmatprep.subr.mxu0 0.0
  %7261 = vmatpush1.msra.mxu0 0.0
  %7262 = vmatprep.subr.mxu0 0.0
  %7263 = vmatpush1.msra.mxu0 0.0
  %7264 = vmatprep.subr.mxu0 0.0
  %7265 = vmatpush1.msra.mxu0 0.0
  %7266 = vmatprep.subr.mxu0 0.0
  %7267 = vmatpush1.msra.mxu0 0.0
  %7268 = vmatprep.subr.mxu0 0.0
  %7269 = vmatpush1.msra.mxu0 0.0
  %7270 = vmatprep.subr.mxu0 0.0
  %7271 = vmatpush1.msra.mxu0 0.0
  %7272 = vmatprep.subr.mxu0 0.0
  %7273 = vmatpush1.msra.mxu0 0.0
  %7274 = vmatprep.subr.mxu0 0.0
  %7275 = vmatpush1.msra.mxu0 0.0
  %7276 = vmatprep.subr.mxu0 0.0
  %7277 = vmatpush1.msra.mxu0 0.0
  %7278 = vmatprep.subr.mxu0 0.0
  %7279 = vmatpush1.msra.mxu0 0.0
  %7280 = vmatprep.subr.mxu0 0.0
  %7281 = vmatpush1.msra.mxu0 0.0
  %7282 = vmatprep.subr.mxu0 0.0
  %7283 = vmatpush1.msra.mxu0 0.0
  %7284 = vmatprep.subr.mxu0 0.0
  %7285 = vmatpush1.msra.mxu0 0.0
  %7286 = vmatprep.subr.mxu0 0.0
  %7287 = vmatpush1.msra.mxu0 0.0
  %7288 = vmatprep.subr.mxu0 0.0
  %7289 = vmatpush1.msra.mxu0 0.0
  %7290 = vmatprep.subr.mxu0 0.0
  %7291 = vmatpush1.msra.mxu0 0.0
  %7292 = vmatprep.mubr.f32.mxu0 0.0
  %7293 = vmatmul.mubr.f32.gmra.mrb[0].mxu0 %v5832
  %v7294 = vpop.f32.mrb[0].mxu0
  %v7295 = vadd.f32 %v7106, %v7294
  %v7296 = vpop.f32.mrb[0].mxu0
  %v7297 = vadd.f32 %v7110, %v7296
  %7298 = vmatprep.mubr.f32.mxu0 0.0
  %7299 = vmatmul.mubr.f32.gmra.mrb[0].mxu0 %v6002
  %v7300 = vpop.f32.mrb[0].mxu0
  %v7301 = vadd.f32 %v7106, %v7300
  %v7302 = vpop.f32.mrb[0].mxu0
  %v7303 = vadd.f32 %v7110, %v7302
  %7304 = vmatprep.mubr.f32.mxu0 0.0
  %7305 = vmatmul.mubr.f32.gmra.mrb[0].mxu0 %v6172
  %v7306 = vpop.f32.mrb[0].mxu0
  %v7307 = vadd.f32 %v7106, %v7306
  %v7308 = vpop.f32.mrb[0].mxu0
  %v7309 = vadd.f32 %v7110, %v7308
  %7310 = vmatprep.mubr.f32.mxu0 0.0
  %7311 = vmatmul.mubr.f32.gmra.mrb[0].mxu0 %v6342
  %v7312 = vpop.f32.mrb[0].mxu0
  %v7313 = vadd.f32 %v7106, %v7312
  %v7314 = vpop.f32.mrb[0].mxu0
  %v7315 = vadd.f32 %v7110, %v7314
  %7316 = vmatprep.mubr.f32.mxu0 0.0
  %7317 = vmatmul.mubr.f32.gmra.mrb[0].mxu0 %v6512
  %v7318 = vpop.f32.mrb[0].mxu0
  %v7319 = vadd.f32 %v7106, %v7318
  %v7320 = vpop.f32.mrb[0].mxu0
  %v7321 = vadd.f32 %v7110, %v7320
  %7322 = vmatprep.mubr.f32.mxu0 0.0
  %7323 = vmatmul.mubr.f32.gmra.mrb[0].mxu0 %v6682
  %v7324 = vpop.f32.mrb[0].mxu0
  %v7325 = vadd.f32 %v7106, %v7324
  %v7326 = vpop.f32.mrb[0].mxu0
  %v7327 = vadd.f32 %v7110, %v7326
  %7328 = vmatprep.mubr.f32.mxu0 0.0
  %7329 = vmatmul.mubr.f32.gmra.mrb[0].mxu0 %v6852
  %v7330 = vpop.f32.mrb[0].mxu0
  %v7331 = vadd.f32 %v7106, %v7330
  %v7332 = vpop.f32.mrb[0].mxu0
  %v7333 = vadd.f32 %v7110, %v7332
  %7334 = vmatprep.mubr.f32.mxu0 0.0
  %7335 = vmatmul.mubr.f32.gmra.mrb[0].mxu0 %v7022
  %v7336 = vpop.f32.mrb[0].mxu0
  %v7337 = vadd.f32 %v7106, %v7336
  %v7338 = vpop.f32.mrb[0].mxu0
  %v7339 = vadd.f32 %v7110, %v7338
  %7340 = vdwg.mxu0
  %s7341 = scalar_lea.vmem %s4, 32
  %v7342 = vld [vmem:[%s7341] sm:$0xff]
  %s7343 = scalar_lea.vmem %s5, 32
  %v7344 = vld [vmem:[%s7343] sm:$0xff]
  %s7345 = scalar_lea.vmem %s2, 2048
  %v7346 = vld [vmem:[%s7345] sm:$0xff]
  %v7347 = vld [vmem:[%s7345 + $0x8] sm:$0xff]
  %v7348 = vld [vmem:[%s7345 + $0x10] sm:$0xff]
  %v7349 = vld [vmem:[%s7345 + $0x18] sm:$0xff]
  %v7350 = vld [vmem:[%s7345 + $0x20] sm:$0xff]
  %v7351 = vld [vmem:[%s7345 + $0x28] sm:$0xff]
  %v7352 = vld [vmem:[%s7345 + $0x30] sm:$0xff]
  %v7353 = vld [vmem:[%s7345 + $0x38] sm:$0xff]
  %v7354 = vld [vmem:[%s7345 + $0x40] sm:$0xff]
  %v7355 = vld [vmem:[%s7345 + $0x48] sm:$0xff]
  %v7356 = vld [vmem:[%s7345 + $0x50] sm:$0xff]
  %v7357 = vld [vmem:[%s7345 + $0x58] sm:$0xff]
  %v7358 = vld [vmem:[%s7345 + $0x60] sm:$0xff]
  %v7359 = vld [vmem:[%s7345 + $0x68] sm:$0xff]
  %v7360 = vld [vmem:[%s7345 + $0x70] sm:$0xff]
  %v7361 = vld [vmem:[%s7345 + $0x78] sm:$0xff]
  %v7362 = vld [vmem:[%s7345 + $0x80] sm:$0xff]
  %v7363 = vld [vmem:[%s7345 + $0x88] sm:$0xff]
  %v7364 = vld [vmem:[%s7345 + $0x90] sm:$0xff]
  %v7365 = vld [vmem:[%s7345 + $0x98] sm:$0xff]
  %v7366 = vld [vmem:[%s7345 + $0xa0] sm:$0xff]
  %v7367 = vld [vmem:[%s7345 + $0xa8] sm:$0xff]
  %v7368 = vld [vmem:[%s7345 + $0xb0] sm:$0xff]
  %v7369 = vld [vmem:[%s7345 + $0xb8] sm:$0xff]
  %v7370 = vld [vmem:[%s7345 + $0xc0] sm:$0xff]
  %v7371 = vld [vmem:[%s7345 + $0xc8] sm:$0xff]
  %v7372 = vld [vmem:[%s7345 + $0xd0] sm:$0xff]
  %v7373 = vld [vmem:[%s7345 + $0xd8] sm:$0xff]
  %v7374 = vld [vmem:[%s7345 + $0xe0] sm:$0xff]
  %v7375 = vld [vmem:[%s7345 + $0xe8] sm:$0xff]
  %v7376 = vld [vmem:[%s7345 + $0xf0] sm:$0xff]
  %v7377 = vld [vmem:[%s7345 + $0xf8] sm:$0xff]
  %v7378 = vld [vmem:[%s7345 + $0x100] sm:$0xff]
  %v7379 = vld [vmem:[%s7345 + $0x108] sm:$0xff]
  %v7380 = vld [vmem:[%s7345 + $0x110] sm:$0xff]
  %v7381 = vld [vmem:[%s7345 + $0x118] sm:$0xff]
  %v7382 = vld [vmem:[%s7345 + $0x120] sm:$0xff]
  %v7383 = vld [vmem:[%s7345 + $0x128] sm:$0xff]
  %v7384 = vld [vmem:[%s7345 + $0x130] sm:$0xff]
  %v7385 = vld [vmem:[%s7345 + $0x138] sm:$0xff]
  %v7386 = vld [vmem:[%s7345 + $0x140] sm:$0xff]
  %v7387 = vld [vmem:[%s7345 + $0x148] sm:$0xff]
  %v7388 = vld [vmem:[%s7345 + $0x150] sm:$0xff]
  %v7389 = vld [vmem:[%s7345 + $0x158] sm:$0xff]
  %v7390 = vld [vmem:[%s7345 + $0x160] sm:$0xff]
  %v7391 = vld [vmem:[%s7345 + $0x168] sm:$0xff]
  %v7392 = vld [vmem:[%s7345 + $0x170] sm:$0xff]
  %v7393 = vld [vmem:[%s7345 + $0x178] sm:$0xff]
  %v7394 = vld [vmem:[%s7345 + $0x180] sm:$0xff]
  %v7395 = vld [vmem:[%s7345 + $0x188] sm:$0xff]
  %v7396 = vld [vmem:[%s7345 + $0x190] sm:$0xff]
  %v7397 = vld [vmem:[%s7345 + $0x198] sm:$0xff]
  %v7398 = vld [vmem:[%s7345 + $0x1a0] sm:$0xff]
  %v7399 = vld [vmem:[%s7345 + $0x1a8] sm:$0xff]
  %v7400 = vld [vmem:[%s7345 + $0x1b0] sm:$0xff]
  %v7401 = vld [vmem:[%s7345 + $0x1b8] sm:$0xff]
  %v7402 = vld [vmem:[%s7345 + $0x1c0] sm:$0xff]
  %v7403 = vld [vmem:[%s7345 + $0x1c8] sm:$0xff]
  %v7404 = vld [vmem:[%s7345 + $0x1d0] sm:$0xff]
  %v7405 = vld [vmem:[%s7345 + $0x1d8] sm:$0xff]
  %v7406 = vld [vmem:[%s7345 + $0x1e0] sm:$0xff]
  %v7407 = vld [vmem:[%s7345 + $0x1e8] sm:$0xff]
  %v7408 = vld [vmem:[%s7345 + $0x1f0] sm:$0xff]
  %v7409 = vld [vmem:[%s7345 + $0x1f8] sm:$0xff]
  %7410 = vmatprep.subr.mxu0 %v7347
  %7411 = vmatpush1.msra.mxu0 %v7346
  %7412 = vmatprep.subr.mxu0 %v7351
  %7413 = vmatpush1.msra.mxu0 %v7350
  %7414 = vmatprep.subr.mxu0 %v7355
  %7415 = vmatpush1.msra.mxu0 %v7354
  %7416 = vmatprep.subr.mxu0 %v7359
  %7417 = vmatpush1.msra.mxu0 %v7358
  %7418 = vmatprep.subr.mxu0 %v7363
  %7419 = vmatpush1.msra.mxu0 %v7362
  %7420 = vmatprep.subr.mxu0 %v7367
  %7421 = vmatpush1.msra.mxu0 %v7366
  %7422 = vmatprep.subr.mxu0 %v7371
  %7423 = vmatpush1.msra.mxu0 %v7370
  %7424 = vmatprep.subr.mxu0 %v7375
  %7425 = vmatpush1.msra.mxu0 %v7374
  %7426 = vmatprep.subr.mxu0 %v7379
  %7427 = vmatpush1.msra.mxu0 %v7378
  %7428 = vmatprep.subr.mxu0 %v7383
  %7429 = vmatpush1.msra.mxu0 %v7382
  %7430 = vmatprep.subr.mxu0 %v7387
  %7431 = vmatpush1.msra.mxu0 %v7386
  %7432 = vmatprep.subr.mxu0 %v7391
  %7433 = vmatpush1.msra.mxu0 %v7390
  %7434 = vmatprep.subr.mxu0 %v7395
  %7435 = vmatpush1.msra.mxu0 %v7394
  %7436 = vmatprep.subr.mxu0 %v7399
  %7437 = vmatpush1.msra.mxu0 %v7398
  %7438 = vmatprep.subr.mxu0 %v7403
  %7439 = vmatpush1.msra.mxu0 %v7402
  %7440 = vmatprep.subr.mxu0 %v7407
  %7441 = vmatpush1.msra.mxu0 %v7406
  %7442 = vmatprep.subr.mxu0 0.0
  %7443 = vmatpush1.msra.mxu0 0.0
  %7444 = vmatprep.subr.mxu0 0.0
  %7445 = vmatpush1.msra.mxu0 0.0
  %7446 = vmatprep.subr.mxu0 0.0
  %7447 = vmatpush1.msra.mxu0 0.0
  %7448 = vmatprep.subr.mxu0 0.0
  %7449 = vmatpush1.msra.mxu0 0.0
  %7450 = vmatprep.subr.mxu0 0.0
  %7451 = vmatpush1.msra.mxu0 0.0
  %7452 = vmatprep.subr.mxu0 0.0
  %7453 = vmatpush1.msra.mxu0 0.0
  %7454 = vmatprep.subr.mxu0 0.0
  %7455 = vmatpush1.msra.mxu0 0.0
  %7456 = vmatprep.subr.mxu0 0.0
  %7457 = vmatpush1.msra.mxu0 0.0
  %7458 = vmatprep.subr.mxu0 0.0
  %7459 = vmatpush1.msra.mxu0 0.0
  %7460 = vmatprep.subr.mxu0 0.0
  %7461 = vmatpush1.msra.mxu0 0.0
  %7462 = vmatprep.subr.mxu0 0.0
  %7463 = vmatpush1.msra.mxu0 0.0
  %7464 = vmatprep.subr.mxu0 0.0
  %7465 = vmatpush1.msra.mxu0 0.0
  %7466 = vmatprep.subr.mxu0 0.0
  %7467 = vmatpush1.msra.mxu0 0.0
  %7468 = vmatprep.subr.mxu0 0.0
  %7469 = vmatpush1.msra.mxu0 0.0
  %7470 = vmatprep.subr.mxu0 0.0
  %7471 = vmatpush1.msra.mxu0 0.0
  %7472 = vmatprep.subr.mxu0 0.0
  %7473 = vmatpush1.msra.mxu0 0.0
  %7474 = vmatprep.mubr.f32.mxu0 0.0
  %7475 = vmatmul.mubr.f32.gmra.mrb[0].mxu0 %v7342
  %v7476 = vpop.f32.mrb[0].mxu0
  %v7477 = vadd.f32 0.0, %v7476
  %v7478 = vpop.f32.mrb[0].mxu0
  %v7479 = vadd.f32 0.0, %v7478
  %7480 = vdwg.mxu0
  %7481 = vmatprep.subr.mxu0 %v7349
  %7482 = vmatpush1.msra.mxu0 %v7348
  %7483 = vmatprep.subr.mxu0 %v7353
  %7484 = vmatpush1.msra.mxu0 %v7352
  %7485 = vmatprep.subr.mxu0 %v7357
  %7486 = vmatpush1.msra.mxu0 %v7356
  %7487 = vmatprep.subr.mxu0 %v7361
  %7488 = vmatpush1.msra.mxu0 %v7360
  %7489 = vmatprep.subr.mxu0 %v7365
  %7490 = vmatpush1.msra.mxu0 %v7364
  %7491 = vmatprep.subr.mxu0 %v7369
  %7492 = vmatpush1.msra.mxu0 %v7368
  %7493 = vmatprep.subr.mxu0 %v7373
  %7494 = vmatpush1.msra.mxu0 %v7372
  %7495 = vmatprep.subr.mxu0 %v7377
  %7496 = vmatpush1.msra.mxu0 %v7376
  %7497 = vmatprep.subr.mxu0 %v7381
  %7498 = vmatpush1.msra.mxu0 %v7380
  %7499 = vmatprep.subr.mxu0 %v7385
  %7500 = vmatpush1.msra.mxu0 %v7384
  %7501 = vmatprep.subr.mxu0 %v7389
  %7502 = vmatpush1.msra.mxu0 %v7388
  %7503 = vmatprep.subr.mxu0 %v7393
  %7504 = vmatpush1.msra.mxu0 %v7392
  %7505 = vmatprep.subr.mxu0 %v7397
  %7506 = vmatpush1.msra.mxu0 %v7396
  %7507 = vmatprep.subr.mxu0 %v7401
  %7508 = vmatpush1.msra.mxu0 %v7400
  %7509 = vmatprep.subr.mxu0 %v7405
  %7510 = vmatpush1.msra.mxu0 %v7404
  %7511 = vmatprep.subr.mxu0 %v7409
  %7512 = vmatpush1.msra.mxu0 %v7408
  %7513 = vmatprep.subr.mxu0 0.0
  %7514 = vmatpush1.msra.mxu0 0.0
  %7515 = vmatprep.subr.mxu0 0.0
  %7516 = vmatpush1.msra.mxu0 0.0
  %7517 = vmatprep.subr.mxu0 0.0
  %7518 = vmatpush1.msra.mxu0 0.0
  %7519 = vmatprep.subr.mxu0 0.0
  %7520 = vmatpush1.msra.mxu0 0.0
  %7521 = vmatprep.subr.mxu0 0.0
  %7522 = vmatpush1.msra.mxu0 0.0
  %7523 = vmatprep.subr.mxu0 0.0
  %7524 = vmatpush1.msra.mxu0 0.0
  %7525 = vmatprep.subr.mxu0 0.0
  %7526 = vmatpush1.msra.mxu0 0.0
  %7527 = vmatprep.subr.mxu0 0.0
  %7528 = vmatpush1.msra.mxu0 0.0
  %7529 = vmatprep.subr.mxu0 0.0
  %7530 = vmatpush1.msra.mxu0 0.0
  %7531 = vmatprep.subr.mxu0 0.0
  %7532 = vmatpush1.msra.mxu0 0.0
  %7533 = vmatprep.subr.mxu0 0.0
  %7534 = vmatpush1.msra.mxu0 0.0
  %7535 = vmatprep.subr.mxu0 0.0
  %7536 = vmatpush1.msra.mxu0 0.0
  %7537 = vmatprep.subr.mxu0 0.0
  %7538 = vmatpush1.msra.mxu0 0.0
  %7539 = vmatprep.subr.mxu0 0.0
  %7540 = vmatpush1.msra.mxu0 0.0
  %7541 = vmatprep.subr.mxu0 0.0
  %7542 = vmatpush1.msra.mxu0 0.0
  %7543 = vmatprep.subr.mxu0 0.0
  %7544 = vmatpush1.msra.mxu0 0.0
  %7545 = vmatprep.mubr.f32.mxu0 0.0
  %7546 = vmatmul.mubr.f32.gmra.mrb[0].mxu0 %v7342
  %v7547 = vpop.f32.mrb[0].mxu0
  %v7548 = vadd.f32 0.0, %v7547
  %v7549 = vpop.f32.mrb[0].mxu0
  %v7550 = vadd.f32 0.0, %v7549
  %7551 = vdwg.mxu0
  %v7552 = vadd.f32 %v7182, %v7477
  %v7553 = vadd.f32 %v7184, %v7479
  %v7554 = vadd.f32 %v7295, %v7548
  %v7555 = vadd.f32 %v7297, %v7550
  %v7556 = vxor.u32 %v7552, 2147483648
  %v7557 = vmul.f32 %v7556, 1.442695
  %v7558 = vpow.pop %v7557
  %v7559 = vadd.f32 %v7558, 1.0
  %v7560 = vrcp.pop %v7559
  %v7561 = vmul.f32 1.0, %v7560
  %v7562 = vxor.u32 %v7553, 2147483648
  %v7563 = vmul.f32 %v7562, 1.442695
  %v7564 = vpow.pop %v7563
  %v7565 = vadd.f32 %v7564, 1.0
  %v7566 = vrcp.pop %v7565
  %v7567 = vmul.f32 1.0, %v7566
  %v7568 = vtanh.pop %v7554
  %v7569 = vxor.u32 %v7555, 2147483648
  %v7570 = vmul.f32 %v7569, 1.442695
  %v7571 = vpow.pop %v7570
  %v7572 = vadd.f32 %v7571, 1.0
  %v7573 = vrcp.pop %v7572
  %v7574 = vmul.f32 1.0, %v7573
  %v7575 = vmul.f32 %v7567, %v7344
  %v7576 = vmul.f32 %v7561, %v7568
  %v7577 = vadd.f32 %v7575, %v7576
  %v7578 = vtanh.pop %v7577
  %v7579 = vmul.f32 %v7574, %v7578
  %7580 = vmatprep.subr.mxu0 %v7347
  %7581 = vmatpush1.msra.mxu0 %v7346
  %7582 = vmatprep.subr.mxu0 %v7351
  %7583 = vmatpush1.msra.mxu0 %v7350
  %7584 = vmatprep.subr.mxu0 %v7355
  %7585 = vmatpush1.msra.mxu0 %v7354
  %7586 = vmatprep.subr.mxu0 %v7359
  %7587 = vmatpush1.msra.mxu0 %v7358
  %7588 = vmatprep.subr.mxu0 %v7363
  %7589 = vmatpush1.msra.mxu0 %v7362
  %7590 = vmatprep.subr.mxu0 %v7367
  %7591 = vmatpush1.msra.mxu0 %v7366
  %7592 = vmatprep.subr.mxu0 %v7371
  %7593 = vmatpush1.msra.mxu0 %v7370
  %7594 = vmatprep.subr.mxu0 %v7375
  %7595 = vmatpush1.msra.mxu0 %v7374
  %7596 = vmatprep.subr.mxu0 %v7379
  %7597 = vmatpush1.msra.mxu0 %v7378
  %7598 = vmatprep.subr.mxu0 %v7383
  %7599 = vmatpush1.msra.mxu0 %v7382
  %7600 = vmatprep.subr.mxu0 %v7387
  %7601 = vmatpush1.msra.mxu0 %v7386
  %7602 = vmatprep.subr.mxu0 %v7391
  %7603 = vmatpush1.msra.mxu0 %v7390
  %7604 = vmatprep.subr.mxu0 %v7395
  %7605 = vmatpush1.msra.mxu0 %v7394
  %7606 = vmatprep.subr.mxu0 %v7399
  %7607 = vmatpush1.msra.mxu0 %v7398
  %7608 = vmatprep.subr.mxu0 %v7403
  %7609 = vmatpush1.msra.mxu0 %v7402
  %7610 = vmatprep.subr.mxu0 %v7407
  %7611 = vmatpush1.msra.mxu0 %v7406
  %7612 = vmatprep.subr.mxu0 0.0
  %7613 = vmatpush1.msra.mxu0 0.0
  %7614 = vmatprep.subr.mxu0 0.0
  %7615 = vmatpush1.msra.mxu0 0.0
  %7616 = vmatprep.subr.mxu0 0.0
  %7617 = vmatpush1.msra.mxu0 0.0
  %7618 = vmatprep.subr.mxu0 0.0
  %7619 = vmatpush1.msra.mxu0 0.0
  %7620 = vmatprep.subr.mxu0 0.0
  %7621 = vmatpush1.msra.mxu0 0.0
  %7622 = vmatprep.subr.mxu0 0.0
  %7623 = vmatpush1.msra.mxu0 0.0
  %7624 = vmatprep.subr.mxu0 0.0
  %7625 = vmatpush1.msra.mxu0 0.0
  %7626 = vmatprep.subr.mxu0 0.0
  %7627 = vmatpush1.msra.mxu0 0.0
  %7628 = vmatprep.subr.mxu0 0.0
  %7629 = vmatpush1.msra.mxu0 0.0
  %7630 = vmatprep.subr.mxu0 0.0
  %7631 = vmatpush1.msra.mxu0 0.0
  %7632 = vmatprep.subr.mxu0 0.0
  %7633 = vmatpush1.msra.mxu0 0.0
  %7634 = vmatprep.subr.mxu0 0.0
  %7635 = vmatpush1.msra.mxu0 0.0
  %7636 = vmatprep.subr.mxu0 0.0
  %7637 = vmatpush1.msra.mxu0 0.0
  %7638 = vmatprep.subr.mxu0 0.0
  %7639 = vmatpush1.msra.mxu0 0.0
  %7640 = vmatprep.subr.mxu0 0.0
  %7641 = vmatpush1.msra.mxu0 0.0
  %7642 = vmatprep.subr.mxu0 0.0
  %7643 = vmatpush1.msra.mxu0 0.0
  %7644 = vmatprep.mubr.f32.mxu0 0.0
  %7645 = vmatmul.mubr.f32.gmra.mrb[0].mxu0 %v7579
  %v7646 = vpop.f32.mrb[0].mxu0
  %v7647 = vadd.f32 0.0, %v7646
  %v7648 = vpop.f32.mrb[0].mxu0
  %v7649 = vadd.f32 0.0, %v7648
  %7650 = vdwg.mxu0
  %7651 = vmatprep.subr.mxu0 %v7349
  %7652 = vmatpush1.msra.mxu0 %v7348
  %7653 = vmatprep.subr.mxu0 %v7353
  %7654 = vmatpush1.msra.mxu0 %v7352
  %7655 = vmatprep.subr.mxu0 %v7357
  %7656 = vmatpush1.msra.mxu0 %v7356
  %7657 = vmatprep.subr.mxu0 %v7361
  %7658 = vmatpush1.msra.mxu0 %v7360
  %7659 = vmatprep.subr.mxu0 %v7365
  %7660 = vmatpush1.msra.mxu0 %v7364
  %7661 = vmatprep.subr.mxu0 %v7369
  %7662 = vmatpush1.msra.mxu0 %v7368
  %7663 = vmatprep.subr.mxu0 %v7373
  %7664 = vmatpush1.msra.mxu0 %v7372
  %7665 = vmatprep.subr.mxu0 %v7377
  %7666 = vmatpush1.msra.mxu0 %v7376
  %7667 = vmatprep.subr.mxu0 %v7381
  %7668 = vmatpush1.msra.mxu0 %v7380
  %7669 = vmatprep.subr.mxu0 %v7385
  %7670 = vmatpush1.msra.mxu0 %v7384
  %7671 = vmatprep.subr.mxu0 %v7389
  %7672 = vmatpush1.msra.mxu0 %v7388
  %7673 = vmatprep.subr.mxu0 %v7393
  %7674 = vmatpush1.msra.mxu0 %v7392
  %7675 = vmatprep.subr.mxu0 %v7397
  %7676 = vmatpush1.msra.mxu0 %v7396
  %7677 = vmatprep.subr.mxu0 %v7401
  %7678 = vmatpush1.msra.mxu0 %v7400
  %7679 = vmatprep.subr.mxu0 %v7405
  %7680 = vmatpush1.msra.mxu0 %v7404
  %7681 = vmatprep.subr.mxu0 %v7409
  %7682 = vmatpush1.msra.mxu0 %v7408
  %7683 = vmatprep.subr.mxu0 0.0
  %7684 = vmatpush1.msra.mxu0 0.0
  %7685 = vmatprep.subr.mxu0 0.0
  %7686 = vmatpush1.msra.mxu0 0.0
  %7687 = vmatprep.subr.mxu0 0.0
  %7688 = vmatpush1.msra.mxu0 0.0
  %7689 = vmatprep.subr.mxu0 0.0
  %7690 = vmatpush1.msra.mxu0 0.0
  %7691 = vmatprep.subr.mxu0 0.0
  %7692 = vmatpush1.msra.mxu0 0.0
  %7693 = vmatprep.subr.mxu0 0.0
  %7694 = vmatpush1.msra.mxu0 0.0
  %7695 = vmatprep.subr.mxu0 0.0
  %7696 = vmatpush1.msra.mxu0 0.0
  %7697 = vmatprep.subr.mxu0 0.0
  %7698 = vmatpush1.msra.mxu0 0.0
  %7699 = vmatprep.subr.mxu0 0.0
  %7700 = vmatpush1.msra.mxu0 0.0
  %7701 = vmatprep.subr.mxu0 0.0
  %7702 = vmatpush1.msra.mxu0 0.0
  %7703 = vmatprep.subr.mxu0 0.0
  %7704 = vmatpush1.msra.mxu0 0.0
  %7705 = vmatprep.subr.mxu0 0.0
  %7706 = vmatpush1.msra.mxu0 0.0
  %7707 = vmatprep.subr.mxu0 0.0
  %7708 = vmatpush1.msra.mxu0 0.0
  %7709 = vmatprep.subr.mxu0 0.0
  %7710 = vmatpush1.msra.mxu0 0.0
  %7711 = vmatprep.subr.mxu0 0.0
  %7712 = vmatpush1.msra.mxu0 0.0
  %7713 = vmatprep.subr.mxu0 0.0
  %7714 = vmatpush1.msra.mxu0 0.0
  %7715 = vmatprep.mubr.f32.mxu0 0.0
  %7716 = vmatmul.mubr.f32.gmra.mrb[0].mxu0 %v7579
  %v7717 = vpop.f32.mrb[0].mxu0
  %v7718 = vadd.f32 0.0, %v7717
  %v7719 = vpop.f32.mrb[0].mxu0
  %v7720 = vadd.f32 0.0, %v7719
  %7721 = vdwg.mxu0
  %v7722 = vadd.f32 %v7188, %v7647
  %v7723 = vadd.f32 %v7190, %v7649
  %v7724 = vadd.f32 %v7301, %v7718
  %v7725 = vadd.f32 %v7303, %v7720
  %v7726 = vxor.u32 %v7722, 2147483648
  %v7727 = vmul.f32 %v7726, 1.442695
  %v7728 = vpow.pop %v7727
  %v7729 = vadd.f32 %v7728, 1.0
  %v7730 = vrcp.pop %v7729
  %v7731 = vmul.f32 1.0, %v7730
  %v7732 = vxor.u32 %v7723, 2147483648
  %v7733 = vmul.f32 %v7732, 1.442695
  %v7734 = vpow.pop %v7733
  %v7735 = vadd.f32 %v7734, 1.0
  %v7736 = vrcp.pop %v7735
  %v7737 = vmul.f32 1.0, %v7736
  %v7738 = vtanh.pop %v7724
  %v7739 = vxor.u32 %v7725, 2147483648
  %v7740 = vmul.f32 %v7739, 1.442695
  %v7741 = vpow.pop %v7740
  %v7742 = vadd.f32 %v7741, 1.0
  %v7743 = vrcp.pop %v7742
  %v7744 = vmul.f32 1.0, %v7743
  %v7745 = vmul.f32 %v7737, %v7577
  %v7746 = vmul.f32 %v7731, %v7738
  %v7747 = vadd.f32 %v7745, %v7746
  %v7748 = vtanh.pop %v7747
  %v7749 = vmul.f32 %v7744, %v7748
  %7750 = vmatprep.subr.mxu0 %v7347
  %7751 = vmatpush1.msra.mxu0 %v7346
  %7752 = vmatprep.subr.mxu0 %v7351
  %7753 = vmatpush1.msra.mxu0 %v7350
  %7754 = vmatprep.subr.mxu0 %v7355
  %7755 = vmatpush1.msra.mxu0 %v7354
  %7756 = vmatprep.subr.mxu0 %v7359
  %7757 = vmatpush1.msra.mxu0 %v7358
  %7758 = vmatprep.subr.mxu0 %v7363
  %7759 = vmatpush1.msra.mxu0 %v7362
  %7760 = vmatprep.subr.mxu0 %v7367
  %7761 = vmatpush1.msra.mxu0 %v7366
  %7762 = vmatprep.subr.mxu0 %v7371
  %7763 = vmatpush1.msra.mxu0 %v7370
  %7764 = vmatprep.subr.mxu0 %v7375
  %7765 = vmatpush1.msra.mxu0 %v7374
  %7766 = vmatprep.subr.mxu0 %v7379
  %7767 = vmatpush1.msra.mxu0 %v7378
  %7768 = vmatprep.subr.mxu0 %v7383
  %7769 = vmatpush1.msra.mxu0 %v7382
  %7770 = vmatprep.subr.mxu0 %v7387
  %7771 = vmatpush1.msra.mxu0 %v7386
  %7772 = vmatprep.subr.mxu0 %v7391
  %7773 = vmatpush1.msra.mxu0 %v7390
  %7774 = vmatprep.subr.mxu0 %v7395
  %7775 = vmatpush1.msra.mxu0 %v7394
  %7776 = vmatprep.subr.mxu0 %v7399
  %7777 = vmatpush1.msra.mxu0 %v7398
  %7778 = vmatprep.subr.mxu0 %v7403
  %7779 = vmatpush1.msra.mxu0 %v7402
  %7780 = vmatprep.subr.mxu0 %v7407
  %7781 = vmatpush1.msra.mxu0 %v7406
  %7782 = vmatprep.subr.mxu0 0.0
  %7783 = vmatpush1.msra.mxu0 0.0
  %7784 = vmatprep.subr.mxu0 0.0
  %7785 = vmatpush1.msra.mxu0 0.0
  %7786 = vmatprep.subr.mxu0 0.0
  %7787 = vmatpush1.msra.mxu0 0.0
  %7788 = vmatprep.subr.mxu0 0.0
  %7789 = vmatpush1.msra.mxu0 0.0
  %7790 = vmatprep.subr.mxu0 0.0
  %7791 = vmatpush1.msra.mxu0 0.0
  %7792 = vmatprep.subr.mxu0 0.0
  %7793 = vmatpush1.msra.mxu0 0.0
  %7794 = vmatprep.subr.mxu0 0.0
  %7795 = vmatpush1.msra.mxu0 0.0
  %7796 = vmatprep.subr.mxu0 0.0
  %7797 = vmatpush1.msra.mxu0 0.0
  %7798 = vmatprep.subr.mxu0 0.0
  %7799 = vmatpush1.msra.mxu0 0.0
  %7800 = vmatprep.subr.mxu0 0.0
  %7801 = vmatpush1.msra.mxu0 0.0
  %7802 = vmatprep.subr.mxu0 0.0
  %7803 = vmatpush1.msra.mxu0 0.0
  %7804 = vmatprep.subr.mxu0 0.0
  %7805 = vmatpush1.msra.mxu0 0.0
  %7806 = vmatprep.subr.mxu0 0.0
  %7807 = vmatpush1.msra.mxu0 0.0
  %7808 = vmatprep.subr.mxu0 0.0
  %7809 = vmatpush1.msra.mxu0 0.0
  %7810 = vmatprep.subr.mxu0 0.0
  %7811 = vmatpush1.msra.mxu0 0.0
  %7812 = vmatprep.subr.mxu0 0.0
  %7813 = vmatpush1.msra.mxu0 0.0
  %7814 = vmatprep.mubr.f32.mxu0 0.0
  %7815 = vmatmul.mubr.f32.gmra.mrb[0].mxu0 %v7749
  %v7816 = vpop.f32.mrb[0].mxu0
  %v7817 = vadd.f32 0.0, %v7816
  %v7818 = vpop.f32.mrb[0].mxu0
  %v7819 = vadd.f32 0.0, %v7818
  %7820 = vdwg.mxu0
  %7821 = vmatprep.subr.mxu0 %v7349
  %7822 = vmatpush1.msra.mxu0 %v7348
  %7823 = vmatprep.subr.mxu0 %v7353
  %7824 = vmatpush1.msra.mxu0 %v7352
  %7825 = vmatprep.subr.mxu0 %v7357
  %7826 = vmatpush1.msra.mxu0 %v7356
  %7827 = vmatprep.subr.mxu0 %v7361
  %7828 = vmatpush1.msra.mxu0 %v7360
  %7829 = vmatprep.subr.mxu0 %v7365
  %7830 = vmatpush1.msra.mxu0 %v7364
  %7831 = vmatprep.subr.mxu0 %v7369
  %7832 = vmatpush1.msra.mxu0 %v7368
  %7833 = vmatprep.subr.mxu0 %v7373
  %7834 = vmatpush1.msra.mxu0 %v7372
  %7835 = vmatprep.subr.mxu0 %v7377
  %7836 = vmatpush1.msra.mxu0 %v7376
  %7837 = vmatprep.subr.mxu0 %v7381
  %7838 = vmatpush1.msra.mxu0 %v7380
  %7839 = vmatprep.subr.mxu0 %v7385
  %7840 = vmatpush1.msra.mxu0 %v7384
  %7841 = vmatprep.subr.mxu0 %v7389
  %7842 = vmatpush1.msra.mxu0 %v7388
  %7843 = vmatprep.subr.mxu0 %v7393
  %7844 = vmatpush1.msra.mxu0 %v7392
  %7845 = vmatprep.subr.mxu0 %v7397
  %7846 = vmatpush1.msra.mxu0 %v7396
  %7847 = vmatprep.subr.mxu0 %v7401
  %7848 = vmatpush1.msra.mxu0 %v7400
  %7849 = vmatprep.subr.mxu0 %v7405
  %7850 = vmatpush1.msra.mxu0 %v7404
  %7851 = vmatprep.subr.mxu0 %v7409
  %7852 = vmatpush1.msra.mxu0 %v7408
  %7853 = vmatprep.subr.mxu0 0.0
  %7854 = vmatpush1.msra.mxu0 0.0
  %7855 = vmatprep.subr.mxu0 0.0
  %7856 = vmatpush1.msra.mxu0 0.0
  %7857 = vmatprep.subr.mxu0 0.0
  %7858 = vmatpush1.msra.mxu0 0.0
  %7859 = vmatprep.subr.mxu0 0.0
  %7860 = vmatpush1.msra.mxu0 0.0
  %7861 = vmatprep.subr.mxu0 0.0
  %7862 = vmatpush1.msra.mxu0 0.0
  %7863 = vmatprep.subr.mxu0 0.0
  %7864 = vmatpush1.msra.mxu0 0.0
  %7865 = vmatprep.subr.mxu0 0.0
  %7866 = vmatpush1.msra.mxu0 0.0
  %7867 = vmatprep.subr.mxu0 0.0
  %7868 = vmatpush1.msra.mxu0 0.0
  %7869 = vmatprep.subr.mxu0 0.0
  %7870 = vmatpush1.msra.mxu0 0.0
  %7871 = vmatprep.subr.mxu0 0.0
  %7872 = vmatpush1.msra.mxu0 0.0
  %7873 = vmatprep.subr.mxu0 0.0
  %7874 = vmatpush1.msra.mxu0 0.0
  %7875 = vmatprep.subr.mxu0 0.0
  %7876 = vmatpush1.msra.mxu0 0.0
  %7877 = vmatprep.subr.mxu0 0.0
  %7878 = vmatpush1.msra.mxu0 0.0
  %7879 = vmatprep.subr.mxu0 0.0
  %7880 = vmatpush1.msra.mxu0 0.0
  %7881 = vmatprep.subr.mxu0 0.0
  %7882 = vmatpush1.msra.mxu0 0.0
  %7883 = vmatprep.subr.mxu0 0.0
  %7884 = vmatpush1.msra.mxu0 0.0
  %7885 = vmatprep.mubr.f32.mxu0 0.0
  %7886 = vmatmul.mubr.f32.gmra.mrb[0].mxu0 %v7749
  %v7887 = vpop.f32.mrb[0].mxu0
  %v7888 = vadd.f32 0.0, %v7887
  %v7889 = vpop.f32.mrb[0].mxu0
  %v7890 = vadd.f32 0.0, %v7889
  %7891 = vdwg.mxu0
  %v7892 = vadd.f32 %v7194, %v7817
  %v7893 = vadd.f32 %v7196, %v7819
  %v7894 = vadd.f32 %v7307, %v7888
  %v7895 = vadd.f32 %v7309, %v7890
  %v7896 = vxor.u32 %v7892, 2147483648
  %v7897 = vmul.f32 %v7896, 1.442695
  %v7898 = vpow.pop %v7897
  %v7899 = vadd.f32 %v7898, 1.0
  %v7900 = vrcp.pop %v7899
  %v7901 = vmul.f32 1.0, %v7900
  %v7902 = vxor.u32 %v7893, 2147483648
  %v7903 = vmul.f32 %v7902, 1.442695
  %v7904 = vpow.pop %v7903
  %v7905 = vadd.f32 %v7904, 1.0
  %v7906 = vrcp.pop %v7905
  %v7907 = vmul.f32 1.0, %v7906
  %v7908 = vtanh.pop %v7894
  %v7909 = vxor.u32 %v7895, 2147483648
  %v7910 = vmul.f32 %v7909, 1.442695
  %v7911 = vpow.pop %v7910
  %v7912 = vadd.f32 %v7911, 1.0
  %v7913 = vrcp.pop %v7912
  %v7914 = vmul.f32 1.0, %v7913
  %v7915 = vmul.f32 %v7907, %v7747
  %v7916 = vmul.f32 %v7901, %v7908
  %v7917 = vadd.f32 %v7915, %v7916
  %v7918 = vtanh.pop %v7917
  %v7919 = vmul.f32 %v7914, %v7918
  %7920 = vmatprep.subr.mxu0 %v7347
  %7921 = vmatpush1.msra.mxu0 %v7346
  %7922 = vmatprep.subr.mxu0 %v7351
  %7923 = vmatpush1.msra.mxu0 %v7350
  %7924 = vmatprep.subr.mxu0 %v7355
  %7925 = vmatpush1.msra.mxu0 %v7354
  %7926 = vmatprep.subr.mxu0 %v7359
  %7927 = vmatpush1.msra.mxu0 %v7358
  %7928 = vmatprep.subr.mxu0 %v7363
  %7929 = vmatpush1.msra.mxu0 %v7362
  %7930 = vmatprep.subr.mxu0 %v7367
  %7931 = vmatpush1.msra.mxu0 %v7366
  %7932 = vmatprep.subr.mxu0 %v7371
  %7933 = vmatpush1.msra.mxu0 %v7370
  %7934 = vmatprep.subr.mxu0 %v7375
  %7935 = vmatpush1.msra.mxu0 %v7374
  %7936 = vmatprep.subr.mxu0 %v7379
  %7937 = vmatpush1.msra.mxu0 %v7378
  %7938 = vmatprep.subr.mxu0 %v7383
  %7939 = vmatpush1.msra.mxu0 %v7382
  %7940 = vmatprep.subr.mxu0 %v7387
  %7941 = vmatpush1.msra.mxu0 %v7386
  %7942 = vmatprep.subr.mxu0 %v7391
  %7943 = vmatpush1.msra.mxu0 %v7390
  %7944 = vmatprep.subr.mxu0 %v7395
  %7945 = vmatpush1.msra.mxu0 %v7394
  %7946 = vmatprep.subr.mxu0 %v7399
  %7947 = vmatpush1.msra.mxu0 %v7398
  %7948 = vmatprep.subr.mxu0 %v7403
  %7949 = vmatpush1.msra.mxu0 %v7402
  %7950 = vmatprep.subr.mxu0 %v7407
  %7951 = vmatpush1.msra.mxu0 %v7406
  %7952 = vmatprep.subr.mxu0 0.0
  %7953 = vmatpush1.msra.mxu0 0.0
  %7954 = vmatprep.subr.mxu0 0.0
  %7955 = vmatpush1.msra.mxu0 0.0
  %7956 = vmatprep.subr.mxu0 0.0
  %7957 = vmatpush1.msra.mxu0 0.0
  %7958 = vmatprep.subr.mxu0 0.0
  %7959 = vmatpush1.msra.mxu0 0.0
  %7960 = vmatprep.subr.mxu0 0.0
  %7961 = vmatpush1.msra.mxu0 0.0
  %7962 = vmatprep.subr.mxu0 0.0
  %7963 = vmatpush1.msra.mxu0 0.0
  %7964 = vmatprep.subr.mxu0 0.0
  %7965 = vmatpush1.msra.mxu0 0.0
  %7966 = vmatprep.subr.mxu0 0.0
  %7967 = vmatpush1.msra.mxu0 0.0
  %7968 = vmatprep.subr.mxu0 0.0
  %7969 = vmatpush1.msra.mxu0 0.0
  %7970 = vmatprep.subr.mxu0 0.0
  %7971 = vmatpush1.msra.mxu0 0.0
  %7972 = vmatprep.subr.mxu0 0.0
  %7973 = vmatpush1.msra.mxu0 0.0
  %7974 = vmatprep.subr.mxu0 0.0
  %7975 = vmatpush1.msra.mxu0 0.0
  %7976 = vmatprep.subr.mxu0 0.0
  %7977 = vmatpush1.msra.mxu0 0.0
  %7978 = vmatprep.subr.mxu0 0.0
  %7979 = vmatpush1.msra.mxu0 0.0
  %7980 = vmatprep.subr.mxu0 0.0
  %7981 = vmatpush1.msra.mxu0 0.0
  %7982 = vmatprep.subr.mxu0 0.0
  %7983 = vmatpush1.msra.mxu0 0.0
  %7984 = vmatprep.mubr.f32.mxu0 0.0
  %7985 = vmatmul.mubr.f32.gmra.mrb[0].mxu0 %v7919
  %v7986 = vpop.f32.mrb[0].mxu0
  %v7987 = vadd.f32 0.0, %v7986
  %v7988 = vpop.f32.mrb[0].mxu0
  %v7989 = vadd.f32 0.0, %v7988
  %7990 = vdwg.mxu0
  %7991 = vmatprep.subr.mxu0 %v7349
  %7992 = vmatpush1.msra.mxu0 %v7348
  %7993 = vmatprep.subr.mxu0 %v7353
  %7994 = vmatpush1.msra.mxu0 %v7352
  %7995 = vmatprep.subr.mxu0 %v7357
  %7996 = vmatpush1.msra.mxu0 %v7356
  %7997 = vmatprep.subr.mxu0 %v7361
  %7998 = vmatpush1.msra.mxu0 %v7360
  %7999 = vmatprep.subr.mxu0 %v7365
  %8000 = vmatpush1.msra.mxu0 %v7364
  %8001 = vmatprep.subr.mxu0 %v7369
  %8002 = vmatpush1.msra.mxu0 %v7368
  %8003 = vmatprep.subr.mxu0 %v7373
  %8004 = vmatpush1.msra.mxu0 %v7372
  %8005 = vmatprep.subr.mxu0 %v7377
  %8006 = vmatpush1.msra.mxu0 %v7376
  %8007 = vmatprep.subr.mxu0 %v7381
  %8008 = vmatpush1.msra.mxu0 %v7380
  %8009 = vmatprep.subr.mxu0 %v7385
  %8010 = vmatpush1.msra.mxu0 %v7384
  %8011 = vmatprep.subr.mxu0 %v7389
  %8012 = vmatpush1.msra.mxu0 %v7388
  %8013 = vmatprep.subr.mxu0 %v7393
  %8014 = vmatpush1.msra.mxu0 %v7392
  %8015 = vmatprep.subr.mxu0 %v7397
  %8016 = vmatpush1.msra.mxu0 %v7396
  %8017 = vmatprep.subr.mxu0 %v7401
  %8018 = vmatpush1.msra.mxu0 %v7400
  %8019 = vmatprep.subr.mxu0 %v7405
  %8020 = vmatpush1.msra.mxu0 %v7404
  %8021 = vmatprep.subr.mxu0 %v7409
  %8022 = vmatpush1.msra.mxu0 %v7408
  %8023 = vmatprep.subr.mxu0 0.0
  %8024 = vmatpush1.msra.mxu0 0.0
  %8025 = vmatprep.subr.mxu0 0.0
  %8026 = vmatpush1.msra.mxu0 0.0
  %8027 = vmatprep.subr.mxu0 0.0
  %8028 = vmatpush1.msra.mxu0 0.0
  %8029 = vmatprep.subr.mxu0 0.0
  %8030 = vmatpush1.msra.mxu0 0.0
  %8031 = vmatprep.subr.mxu0 0.0
  %8032 = vmatpush1.msra.mxu0 0.0
  %8033 = vmatprep.subr.mxu0 0.0
  %8034 = vmatpush1.msra.mxu0 0.0
  %8035 = vmatprep.subr.mxu0 0.0
  %8036 = vmatpush1.msra.mxu0 0.0
  %8037 = vmatprep.subr.mxu0 0.0
  %8038 = vmatpush1.msra.mxu0 0.0
  %8039 = vmatprep.subr.mxu0 0.0
  %8040 = vmatpush1.msra.mxu0 0.0
  %8041 = vmatprep.subr.mxu0 0.0
  %8042 = vmatpush1.msra.mxu0 0.0
  %8043 = vmatprep.subr.mxu0 0.0
  %8044 = vmatpush1.msra.mxu0 0.0
  %8045 = vmatprep.subr.mxu0 0.0
  %8046 = vmatpush1.msra.mxu0 0.0
  %8047 = vmatprep.subr.mxu0 0.0
  %8048 = vmatpush1.msra.mxu0 0.0
  %8049 = vmatprep.subr.mxu0 0.0
  %8050 = vmatpush1.msra.mxu0 0.0
  %8051 = vmatprep.subr.mxu0 0.0
  %8052 = vmatpush1.msra.mxu0 0.0
  %8053 = vmatprep.subr.mxu0 0.0
  %8054 = vmatpush1.msra.mxu0 0.0
  %8055 = vmatprep.mubr.f32.mxu0 0.0
  %8056 = vmatmul.mubr.f32.gmra.mrb[0].mxu0 %v7919
  %v8057 = vpop.f32.mrb[0].mxu0
  %v8058 = vadd.f32 0.0, %v8057
  %v8059 = vpop.f32.mrb[0].mxu0
  %v8060 = vadd.f32 0.0, %v8059
  %8061 = vdwg.mxu0
  %v8062 = vadd.f32 %v7200, %v7987
  %v8063 = vadd.f32 %v7202, %v7989
  %v8064 = vadd.f32 %v7313, %v8058
  %v8065 = vadd.f32 %v7315, %v8060
  %v8066 = vxor.u32 %v8062, 2147483648
  %v8067 = vmul.f32 %v8066, 1.442695
  %v8068 = vpow.pop %v8067
  %v8069 = vadd.f32 %v8068, 1.0
  %v8070 = vrcp.pop %v8069
  %v8071 = vmul.f32 1.0, %v8070
  %v8072 = vxor.u32 %v8063, 2147483648
  %v8073 = vmul.f32 %v8072, 1.442695
  %v8074 = vpow.pop %v8073
  %v8075 = vadd.f32 %v8074, 1.0
  %v8076 = vrcp.pop %v8075
  %v8077 = vmul.f32 1.0, %v8076
  %v8078 = vtanh.pop %v8064
  %v8079 = vxor.u32 %v8065, 2147483648
  %v8080 = vmul.f32 %v8079, 1.442695
  %v8081 = vpow.pop %v8080
  %v8082 = vadd.f32 %v8081, 1.0
  %v8083 = vrcp.pop %v8082
  %v8084 = vmul.f32 1.0, %v8083
  %v8085 = vmul.f32 %v8077, %v7917
  %v8086 = vmul.f32 %v8071, %v8078
  %v8087 = vadd.f32 %v8085, %v8086
  %v8088 = vtanh.pop %v8087
  %v8089 = vmul.f32 %v8084, %v8088
  %8090 = vmatprep.subr.mxu0 %v7347
  %8091 = vmatpush1.msra.mxu0 %v7346
  %8092 = vmatprep.subr.mxu0 %v7351
  %8093 = vmatpush1.msra.mxu0 %v7350
  %8094 = vmatprep.subr.mxu0 %v7355
  %8095 = vmatpush1.msra.mxu0 %v7354
  %8096 = vmatprep.subr.mxu0 %v7359
  %8097 = vmatpush1.msra.mxu0 %v7358
  %8098 = vmatprep.subr.mxu0 %v7363
  %8099 = vmatpush1.msra.mxu0 %v7362
  %8100 = vmatprep.subr.mxu0 %v7367
  %8101 = vmatpush1.msra.mxu0 %v7366
  %8102 = vmatprep.subr.mxu0 %v7371
  %8103 = vmatpush1.msra.mxu0 %v7370
  %8104 = vmatprep.subr.mxu0 %v7375
  %8105 = vmatpush1.msra.mxu0 %v7374
  %8106 = vmatprep.subr.mxu0 %v7379
  %8107 = vmatpush1.msra.mxu0 %v7378
  %8108 = vmatprep.subr.mxu0 %v7383
  %8109 = vmatpush1.msra.mxu0 %v7382
  %8110 = vmatprep.subr.mxu0 %v7387
  %8111 = vmatpush1.msra.mxu0 %v7386
  %8112 = vmatprep.subr.mxu0 %v7391
  %8113 = vmatpush1.msra.mxu0 %v7390
  %8114 = vmatprep.subr.mxu0 %v7395
  %8115 = vmatpush1.msra.mxu0 %v7394
  %8116 = vmatprep.subr.mxu0 %v7399
  %8117 = vmatpush1.msra.mxu0 %v7398
  %8118 = vmatprep.subr.mxu0 %v7403
  %8119 = vmatpush1.msra.mxu0 %v7402
  %8120 = vmatprep.subr.mxu0 %v7407
  %8121 = vmatpush1.msra.mxu0 %v7406
  %8122 = vmatprep.subr.mxu0 0.0
  %8123 = vmatpush1.msra.mxu0 0.0
  %8124 = vmatprep.subr.mxu0 0.0
  %8125 = vmatpush1.msra.mxu0 0.0
  %8126 = vmatprep.subr.mxu0 0.0
  %8127 = vmatpush1.msra.mxu0 0.0
  %8128 = vmatprep.subr.mxu0 0.0
  %8129 = vmatpush1.msra.mxu0 0.0
  %8130 = vmatprep.subr.mxu0 0.0
  %8131 = vmatpush1.msra.mxu0 0.0
  %8132 = vmatprep.subr.mxu0 0.0
  %8133 = vmatpush1.msra.mxu0 0.0
  %8134 = vmatprep.subr.mxu0 0.0
  %8135 = vmatpush1.msra.mxu0 0.0
  %8136 = vmatprep.subr.mxu0 0.0
  %8137 = vmatpush1.msra.mxu0 0.0
  %8138 = vmatprep.subr.mxu0 0.0
  %8139 = vmatpush1.msra.mxu0 0.0
  %8140 = vmatprep.subr.mxu0 0.0
  %8141 = vmatpush1.msra.mxu0 0.0
  %8142 = vmatprep.subr.mxu0 0.0
  %8143 = vmatpush1.msra.mxu0 0.0
  %8144 = vmatprep.subr.mxu0 0.0
  %8145 = vmatpush1.msra.mxu0 0.0
  %8146 = vmatprep.subr.mxu0 0.0
  %8147 = vmatpush1.msra.mxu0 0.0
  %8148 = vmatprep.subr.mxu0 0.0
  %8149 = vmatpush1.msra.mxu0 0.0
  %8150 = vmatprep.subr.mxu0 0.0
  %8151 = vmatpush1.msra.mxu0 0.0
  %8152 = vmatprep.subr.mxu0 0.0
  %8153 = vmatpush1.msra.mxu0 0.0
  %8154 = vmatprep.mubr.f32.mxu0 0.0
  %8155 = vmatmul.mubr.f32.gmra.mrb[0].mxu0 %v8089
  %v8156 = vpop.f32.mrb[0].mxu0
  %v8157 = vadd.f32 0.0, %v8156
  %v8158 = vpop.f32.mrb[0].mxu0
  %v8159 = vadd.f32 0.0, %v8158
  %8160 = vdwg.mxu0
  %8161 = vmatprep.subr.mxu0 %v7349
  %8162 = vmatpush1.msra.mxu0 %v7348
  %8163 = vmatprep.subr.mxu0 %v7353
  %8164 = vmatpush1.msra.mxu0 %v7352
  %8165 = vmatprep.subr.mxu0 %v7357
  %8166 = vmatpush1.msra.mxu0 %v7356
  %8167 = vmatprep.subr.mxu0 %v7361
  %8168 = vmatpush1.msra.mxu0 %v7360
  %8169 = vmatprep.subr.mxu0 %v7365
  %8170 = vmatpush1.msra.mxu0 %v7364
  %8171 = vmatprep.subr.mxu0 %v7369
  %8172 = vmatpush1.msra.mxu0 %v7368
  %8173 = vmatprep.subr.mxu0 %v7373
  %8174 = vmatpush1.msra.mxu0 %v7372
  %8175 = vmatprep.subr.mxu0 %v7377
  %8176 = vmatpush1.msra.mxu0 %v7376
  %8177 = vmatprep.subr.mxu0 %v7381
  %8178 = vmatpush1.msra.mxu0 %v7380
  %8179 = vmatprep.subr.mxu0 %v7385
  %8180 = vmatpush1.msra.mxu0 %v7384
  %8181 = vmatprep.subr.mxu0 %v7389
  %8182 = vmatpush1.msra.mxu0 %v7388
  %8183 = vmatprep.subr.mxu0 %v7393
  %8184 = vmatpush1.msra.mxu0 %v7392
  %8185 = vmatprep.subr.mxu0 %v7397
  %8186 = vmatpush1.msra.mxu0 %v7396
  %8187 = vmatprep.subr.mxu0 %v7401
  %8188 = vmatpush1.msra.mxu0 %v7400
  %8189 = vmatprep.subr.mxu0 %v7405
  %8190 = vmatpush1.msra.mxu0 %v7404
  %8191 = vmatprep.subr.mxu0 %v7409
  %8192 = vmatpush1.msra.mxu0 %v7408
  %8193 = vmatprep.subr.mxu0 0.0
  %8194 = vmatpush1.msra.mxu0 0.0
  %8195 = vmatprep.subr.mxu0 0.0
  %8196 = vmatpush1.msra.mxu0 0.0
  %8197 = vmatprep.subr.mxu0 0.0
  %8198 = vmatpush1.msra.mxu0 0.0
  %8199 = vmatprep.subr.mxu0 0.0
  %8200 = vmatpush1.msra.mxu0 0.0
  %8201 = vmatprep.subr.mxu0 0.0
  %8202 = vmatpush1.msra.mxu0 0.0
  %8203 = vmatprep.subr.mxu0 0.0
  %8204 = vmatpush1.msra.mxu0 0.0
  %8205 = vmatprep.subr.mxu0 0.0
  %8206 = vmatpush1.msra.mxu0 0.0
  %8207 = vmatprep.subr.mxu0 0.0
  %8208 = vmatpush1.msra.mxu0 0.0
  %8209 = vmatprep.subr.mxu0 0.0
  %8210 = vmatpush1.msra.mxu0 0.0
  %8211 = vmatprep.subr.mxu0 0.0
  %8212 = vmatpush1.msra.mxu0 0.0
  %8213 = vmatprep.subr.mxu0 0.0
  %8214 = vmatpush1.msra.mxu0 0.0
  %8215 = vmatprep.subr.mxu0 0.0
  %8216 = vmatpush1.msra.mxu0 0.0
  %8217 = vmatprep.subr.mxu0 0.0
  %8218 = vmatpush1.msra.mxu0 0.0
  %8219 = vmatprep.subr.mxu0 0.0
  %8220 = vmatpush1.msra.mxu0 0.0
  %8221 = vmatprep.subr.mxu0 0.0
  %8222 = vmatpush1.msra.mxu0 0.0
  %8223 = vmatprep.subr.mxu0 0.0
  %8224 = vmatpush1.msra.mxu0 0.0
  %8225 = vmatprep.mubr.f32.mxu0 0.0
  %8226 = vmatmul.mubr.f32.gmra.mrb[0].mxu0 %v8089
  %v8227 = vpop.f32.mrb[0].mxu0
  %v8228 = vadd.f32 0.0, %v8227
  %v8229 = vpop.f32.mrb[0].mxu0
  %v8230 = vadd.f32 0.0, %v8229
  %8231 = vdwg.mxu0
  %v8232 = vadd.f32 %v7206, %v8157
  %v8233 = vadd.f32 %v7208, %v8159
  %v8234 = vadd.f32 %v7319, %v8228
  %v8235 = vadd.f32 %v7321, %v8230
  %v8236 = vxor.u32 %v8232, 2147483648
  %v8237 = vmul.f32 %v8236, 1.442695
  %v8238 = vpow.pop %v8237
  %v8239 = vadd.f32 %v8238, 1.0
  %v8240 = vrcp.pop %v8239
  %v8241 = vmul.f32 1.0, %v8240
  %v8242 = vxor.u32 %v8233, 2147483648
  %v8243 = vmul.f32 %v8242, 1.442695
  %v8244 = vpow.pop %v8243
  %v8245 = vadd.f32 %v8244, 1.0
  %v8246 = vrcp.pop %v8245
  %v8247 = vmul.f32 1.0, %v8246
  %v8248 = vtanh.pop %v8234
  %v8249 = vxor.u32 %v8235, 2147483648
  %v8250 = vmul.f32 %v8249, 1.442695
  %v8251 = vpow.pop %v8250
  %v8252 = vadd.f32 %v8251, 1.0
  %v8253 = vrcp.pop %v8252
  %v8254 = vmul.f32 1.0, %v8253
  %v8255 = vmul.f32 %v8247, %v8087
  %v8256 = vmul.f32 %v8241, %v8248
  %v8257 = vadd.f32 %v8255, %v8256
  %v8258 = vtanh.pop %v8257
  %v8259 = vmul.f32 %v8254, %v8258
  %8260 = vmatprep.subr.mxu0 %v7347
  %8261 = vmatpush1.msra.mxu0 %v7346
  %8262 = vmatprep.subr.mxu0 %v7351
  %8263 = vmatpush1.msra.mxu0 %v7350
  %8264 = vmatprep.subr.mxu0 %v7355
  %8265 = vmatpush1.msra.mxu0 %v7354
  %8266 = vmatprep.subr.mxu0 %v7359
  %8267 = vmatpush1.msra.mxu0 %v7358
  %8268 = vmatprep.subr.mxu0 %v7363
  %8269 = vmatpush1.msra.mxu0 %v7362
  %8270 = vmatprep.subr.mxu0 %v7367
  %8271 = vmatpush1.msra.mxu0 %v7366
  %8272 = vmatprep.subr.mxu0 %v7371
  %8273 = vmatpush1.msra.mxu0 %v7370
  %8274 = vmatprep.subr.mxu0 %v7375
  %8275 = vmatpush1.msra.mxu0 %v7374
  %8276 = vmatprep.subr.mxu0 %v7379
  %8277 = vmatpush1.msra.mxu0 %v7378
  %8278 = vmatprep.subr.mxu0 %v7383
  %8279 = vmatpush1.msra.mxu0 %v7382
  %8280 = vmatprep.subr.mxu0 %v7387
  %8281 = vmatpush1.msra.mxu0 %v7386
  %8282 = vmatprep.subr.mxu0 %v7391
  %8283 = vmatpush1.msra.mxu0 %v7390
  %8284 = vmatprep.subr.mxu0 %v7395
  %8285 = vmatpush1.msra.mxu0 %v7394
  %8286 = vmatprep.subr.mxu0 %v7399
  %8287 = vmatpush1.msra.mxu0 %v7398
  %8288 = vmatprep.subr.mxu0 %v7403
  %8289 = vmatpush1.msra.mxu0 %v7402
  %8290 = vmatprep.subr.mxu0 %v7407
  %8291 = vmatpush1.msra.mxu0 %v7406
  %8292 = vmatprep.subr.mxu0 0.0
  %8293 = vmatpush1.msra.mxu0 0.0
  %8294 = vmatprep.subr.mxu0 0.0
  %8295 = vmatpush1.msra.mxu0 0.0
  %8296 = vmatprep.subr.mxu0 0.0
  %8297 = vmatpush1.msra.mxu0 0.0
  %8298 = vmatprep.subr.mxu0 0.0
  %8299 = vmatpush1.msra.mxu0 0.0
  %8300 = vmatprep.subr.mxu0 0.0
  %8301 = vmatpush1.msra.mxu0 0.0
  %8302 = vmatprep.subr.mxu0 0.0
  %8303 = vmatpush1.msra.mxu0 0.0
  %8304 = vmatprep.subr.mxu0 0.0
  %8305 = vmatpush1.msra.mxu0 0.0
  %8306 = vmatprep.subr.mxu0 0.0
  %8307 = vmatpush1.msra.mxu0 0.0
  %8308 = vmatprep.subr.mxu0 0.0
  %8309 = vmatpush1.msra.mxu0 0.0
  %8310 = vmatprep.subr.mxu0 0.0
  %8311 = vmatpush1.msra.mxu0 0.0
  %8312 = vmatprep.subr.mxu0 0.0
  %8313 = vmatpush1.msra.mxu0 0.0
  %8314 = vmatprep.subr.mxu0 0.0
  %8315 = vmatpush1.msra.mxu0 0.0
  %8316 = vmatprep.subr.mxu0 0.0
  %8317 = vmatpush1.msra.mxu0 0.0
  %8318 = vmatprep.subr.mxu0 0.0
  %8319 = vmatpush1.msra.mxu0 0.0
  %8320 = vmatprep.subr.mxu0 0.0
  %8321 = vmatpush1.msra.mxu0 0.0
  %8322 = vmatprep.subr.mxu0 0.0
  %8323 = vmatpush1.msra.mxu0 0.0
  %8324 = vmatprep.mubr.f32.mxu0 0.0
  %8325 = vmatmul.mubr.f32.gmra.mrb[0].mxu0 %v8259
  %v8326 = vpop.f32.mrb[0].mxu0
  %v8327 = vadd.f32 0.0, %v8326
  %v8328 = vpop.f32.mrb[0].mxu0
  %v8329 = vadd.f32 0.0, %v8328
  %8330 = vdwg.mxu0
  %8331 = vmatprep.subr.mxu0 %v7349
  %8332 = vmatpush1.msra.mxu0 %v7348
  %8333 = vmatprep.subr.mxu0 %v7353
  %8334 = vmatpush1.msra.mxu0 %v7352
  %8335 = vmatprep.subr.mxu0 %v7357
  %8336 = vmatpush1.msra.mxu0 %v7356
  %8337 = vmatprep.subr.mxu0 %v7361
  %8338 = vmatpush1.msra.mxu0 %v7360
  %8339 = vmatprep.subr.mxu0 %v7365
  %8340 = vmatpush1.msra.mxu0 %v7364
  %8341 = vmatprep.subr.mxu0 %v7369
  %8342 = vmatpush1.msra.mxu0 %v7368
  %8343 = vmatprep.subr.mxu0 %v7373
  %8344 = vmatpush1.msra.mxu0 %v7372
  %8345 = vmatprep.subr.mxu0 %v7377
  %8346 = vmatpush1.msra.mxu0 %v7376
  %8347 = vmatprep.subr.mxu0 %v7381
  %8348 = vmatpush1.msra.mxu0 %v7380
  %8349 = vmatprep.subr.mxu0 %v7385
  %8350 = vmatpush1.msra.mxu0 %v7384
  %8351 = vmatprep.subr.mxu0 %v7389
  %8352 = vmatpush1.msra.mxu0 %v7388
  %8353 = vmatprep.subr.mxu0 %v7393
  %8354 = vmatpush1.msra.mxu0 %v7392
  %8355 = vmatprep.subr.mxu0 %v7397
  %8356 = vmatpush1.msra.mxu0 %v7396
  %8357 = vmatprep.subr.mxu0 %v7401
  %8358 = vmatpush1.msra.mxu0 %v7400
  %8359 = vmatprep.subr.mxu0 %v7405
  %8360 = vmatpush1.msra.mxu0 %v7404
  %8361 = vmatprep.subr.mxu0 %v7409
  %8362 = vmatpush1.msra.mxu0 %v7408
  %8363 = vmatprep.subr.mxu0 0.0
  %8364 = vmatpush1.msra.mxu0 0.0
  %8365 = vmatprep.subr.mxu0 0.0
  %8366 = vmatpush1.msra.mxu0 0.0
  %8367 = vmatprep.subr.mxu0 0.0
  %8368 = vmatpush1.msra.mxu0 0.0
  %8369 = vmatprep.subr.mxu0 0.0
  %8370 = vmatpush1.msra.mxu0 0.0
  %8371 = vmatprep.subr.mxu0 0.0
  %8372 = vmatpush1.msra.mxu0 0.0
  %8373 = vmatprep.subr.mxu0 0.0
  %8374 = vmatpush1.msra.mxu0 0.0
  %8375 = vmatprep.subr.mxu0 0.0
  %8376 = vmatpush1.msra.mxu0 0.0
  %8377 = vmatprep.subr.mxu0 0.0
  %8378 = vmatpush1.msra.mxu0 0.0
  %8379 = vmatprep.subr.mxu0 0.0
  %8380 = vmatpush1.msra.mxu0 0.0
  %8381 = vmatprep.subr.mxu0 0.0
  %8382 = vmatpush1.msra.mxu0 0.0
  %8383 = vmatprep.subr.mxu0 0.0
  %8384 = vmatpush1.msra.mxu0 0.0
  %8385 = vmatprep.subr.mxu0 0.0
  %8386 = vmatpush1.msra.mxu0 0.0
  %8387 = vmatprep.subr.mxu0 0.0
  %8388 = vmatpush1.msra.mxu0 0.0
  %8389 = vmatprep.subr.mxu0 0.0
  %8390 = vmatpush1.msra.mxu0 0.0
  %8391 = vmatprep.subr.mxu0 0.0
  %8392 = vmatpush1.msra.mxu0 0.0
  %8393 = vmatprep.subr.mxu0 0.0
  %8394 = vmatpush1.msra.mxu0 0.0
  %8395 = vmatprep.mubr.f32.mxu0 0.0
  %8396 = vmatmul.mubr.f32.gmra.mrb[0].mxu0 %v8259
  %v8397 = vpop.f32.mrb[0].mxu0
  %v8398 = vadd.f32 0.0, %v8397
  %v8399 = vpop.f32.mrb[0].mxu0
  %v8400 = vadd.f32 0.0, %v8399
  %8401 = vdwg.mxu0
  %v8402 = vadd.f32 %v7212, %v8327
  %v8403 = vadd.f32 %v7214, %v8329
  %v8404 = vadd.f32 %v7325, %v8398
  %v8405 = vadd.f32 %v7327, %v8400
  %v8406 = vxor.u32 %v8402, 2147483648
  %v8407 = vmul.f32 %v8406, 1.442695
  %v8408 = vpow.pop %v8407
  %v8409 = vadd.f32 %v8408, 1.0
  %v8410 = vrcp.pop %v8409
  %v8411 = vmul.f32 1.0, %v8410
  %v8412 = vxor.u32 %v8403, 2147483648
  %v8413 = vmul.f32 %v8412, 1.442695
  %v8414 = vpow.pop %v8413
  %v8415 = vadd.f32 %v8414, 1.0
  %v8416 = vrcp.pop %v8415
  %v8417 = vmul.f32 1.0, %v8416
  %v8418 = vtanh.pop %v8404
  %v8419 = vxor.u32 %v8405, 2147483648
  %v8420 = vmul.f32 %v8419, 1.442695
  %v8421 = vpow.pop %v8420
  %v8422 = vadd.f32 %v8421, 1.0
  %v8423 = vrcp.pop %v8422
  %v8424 = vmul.f32 1.0, %v8423
  %v8425 = vmul.f32 %v8417, %v8257
  %v8426 = vmul.f32 %v8411, %v8418
  %v8427 = vadd.f32 %v8425, %v8426
  %v8428 = vtanh.pop %v8427
  %v8429 = vmul.f32 %v8424, %v8428
  %8430 = vmatprep.subr.mxu0 %v7347
  %8431 = vmatpush1.msra.mxu0 %v7346
  %8432 = vmatprep.subr.mxu0 %v7351
  %8433 = vmatpush1.msra.mxu0 %v7350
  %8434 = vmatprep.subr.mxu0 %v7355
  %8435 = vmatpush1.msra.mxu0 %v7354
  %8436 = vmatprep.subr.mxu0 %v7359
  %8437 = vmatpush1.msra.mxu0 %v7358
  %8438 = vmatprep.subr.mxu0 %v7363
  %8439 = vmatpush1.msra.mxu0 %v7362
  %8440 = vmatprep.subr.mxu0 %v7367
  %8441 = vmatpush1.msra.mxu0 %v7366
  %8442 = vmatprep.subr.mxu0 %v7371
  %8443 = vmatpush1.msra.mxu0 %v7370
  %8444 = vmatprep.subr.mxu0 %v7375
  %8445 = vmatpush1.msra.mxu0 %v7374
  %8446 = vmatprep.subr.mxu0 %v7379
  %8447 = vmatpush1.msra.mxu0 %v7378
  %8448 = vmatprep.subr.mxu0 %v7383
  %8449 = vmatpush1.msra.mxu0 %v7382
  %8450 = vmatprep.subr.mxu0 %v7387
  %8451 = vmatpush1.msra.mxu0 %v7386
  %8452 = vmatprep.subr.mxu0 %v7391
  %8453 = vmatpush1.msra.mxu0 %v7390
  %8454 = vmatprep.subr.mxu0 %v7395
  %8455 = vmatpush1.msra.mxu0 %v7394
  %8456 = vmatprep.subr.mxu0 %v7399
  %8457 = vmatpush1.msra.mxu0 %v7398
  %8458 = vmatprep.subr.mxu0 %v7403
  %8459 = vmatpush1.msra.mxu0 %v7402
  %8460 = vmatprep.subr.mxu0 %v7407
  %8461 = vmatpush1.msra.mxu0 %v7406
  %8462 = vmatprep.subr.mxu0 0.0
  %8463 = vmatpush1.msra.mxu0 0.0
  %8464 = vmatprep.subr.mxu0 0.0
  %8465 = vmatpush1.msra.mxu0 0.0
  %8466 = vmatprep.subr.mxu0 0.0
  %8467 = vmatpush1.msra.mxu0 0.0
  %8468 = vmatprep.subr.mxu0 0.0
  %8469 = vmatpush1.msra.mxu0 0.0
  %8470 = vmatprep.subr.mxu0 0.0
  %8471 = vmatpush1.msra.mxu0 0.0
  %8472 = vmatprep.subr.mxu0 0.0
  %8473 = vmatpush1.msra.mxu0 0.0
  %8474 = vmatprep.subr.mxu0 0.0
  %8475 = vmatpush1.msra.mxu0 0.0
  %8476 = vmatprep.subr.mxu0 0.0
  %8477 = vmatpush1.msra.mxu0 0.0
  %8478 = vmatprep.subr.mxu0 0.0
  %8479 = vmatpush1.msra.mxu0 0.0
  %8480 = vmatprep.subr.mxu0 0.0
  %8481 = vmatpush1.msra.mxu0 0.0
  %8482 = vmatprep.subr.mxu0 0.0
  %8483 = vmatpush1.msra.mxu0 0.0
  %8484 = vmatprep.subr.mxu0 0.0
  %8485 = vmatpush1.msra.mxu0 0.0
  %8486 = vmatprep.subr.mxu0 0.0
  %8487 = vmatpush1.msra.mxu0 0.0
  %8488 = vmatprep.subr.mxu0 0.0
  %8489 = vmatpush1.msra.mxu0 0.0
  %8490 = vmatprep.subr.mxu0 0.0
  %8491 = vmatpush1.msra.mxu0 0.0
  %8492 = vmatprep.subr.mxu0 0.0
  %8493 = vmatpush1.msra.mxu0 0.0
  %8494 = vmatprep.mubr.f32.mxu0 0.0
  %8495 = vmatmul.mubr.f32.gmra.mrb[0].mxu0 %v8429
  %v8496 = vpop.f32.mrb[0].mxu0
  %v8497 = vadd.f32 0.0, %v8496
  %v8498 = vpop.f32.mrb[0].mxu0
  %v8499 = vadd.f32 0.0, %v8498
  %8500 = vdwg.mxu0
  %8501 = vmatprep.subr.mxu0 %v7349
  %8502 = vmatpush1.msra.mxu0 %v7348
  %8503 = vmatprep.subr.mxu0 %v7353
  %8504 = vmatpush1.msra.mxu0 %v7352
  %8505 = vmatprep.subr.mxu0 %v7357
  %8506 = vmatpush1.msra.mxu0 %v7356
  %8507 = vmatprep.subr.mxu0 %v7361
  %8508 = vmatpush1.msra.mxu0 %v7360
  %8509 = vmatprep.subr.mxu0 %v7365
  %8510 = vmatpush1.msra.mxu0 %v7364
  %8511 = vmatprep.subr.mxu0 %v7369
  %8512 = vmatpush1.msra.mxu0 %v7368
  %8513 = vmatprep.subr.mxu0 %v7373
  %8514 = vmatpush1.msra.mxu0 %v7372
  %8515 = vmatprep.subr.mxu0 %v7377
  %8516 = vmatpush1.msra.mxu0 %v7376
  %8517 = vmatprep.subr.mxu0 %v7381
  %8518 = vmatpush1.msra.mxu0 %v7380
  %8519 = vmatprep.subr.mxu0 %v7385
  %8520 = vmatpush1.msra.mxu0 %v7384
  %8521 = vmatprep.subr.mxu0 %v7389
  %8522 = vmatpush1.msra.mxu0 %v7388
  %8523 = vmatprep.subr.mxu0 %v7393
  %8524 = vmatpush1.msra.mxu0 %v7392
  %8525 = vmatprep.subr.mxu0 %v7397
  %8526 = vmatpush1.msra.mxu0 %v7396
  %8527 = vmatprep.subr.mxu0 %v7401
  %8528 = vmatpush1.msra.mxu0 %v7400
  %8529 = vmatprep.subr.mxu0 %v7405
  %8530 = vmatpush1.msra.mxu0 %v7404
  %8531 = vmatprep.subr.mxu0 %v7409
  %8532 = vmatpush1.msra.mxu0 %v7408
  %8533 = vmatprep.subr.mxu0 0.0
  %8534 = vmatpush1.msra.mxu0 0.0
  %8535 = vmatprep.subr.mxu0 0.0
  %8536 = vmatpush1.msra.mxu0 0.0
  %8537 = vmatprep.subr.mxu0 0.0
  %8538 = vmatpush1.msra.mxu0 0.0
  %8539 = vmatprep.subr.mxu0 0.0
  %8540 = vmatpush1.msra.mxu0 0.0
  %8541 = vmatprep.subr.mxu0 0.0
  %8542 = vmatpush1.msra.mxu0 0.0
  %8543 = vmatprep.subr.mxu0 0.0
  %8544 = vmatpush1.msra.mxu0 0.0
  %8545 = vmatprep.subr.mxu0 0.0
  %8546 = vmatpush1.msra.mxu0 0.0
  %8547 = vmatprep.subr.mxu0 0.0
  %8548 = vmatpush1.msra.mxu0 0.0
  %8549 = vmatprep.subr.mxu0 0.0
  %8550 = vmatpush1.msra.mxu0 0.0
  %8551 = vmatprep.subr.mxu0 0.0
  %8552 = vmatpush1.msra.mxu0 0.0
  %8553 = vmatprep.subr.mxu0 0.0
  %8554 = vmatpush1.msra.mxu0 0.0
  %8555 = vmatprep.subr.mxu0 0.0
  %8556 = vmatpush1.msra.mxu0 0.0
  %8557 = vmatprep.subr.mxu0 0.0
  %8558 = vmatpush1.msra.mxu0 0.0
  %8559 = vmatprep.subr.mxu0 0.0
  %8560 = vmatpush1.msra.mxu0 0.0
  %8561 = vmatprep.subr.mxu0 0.0
  %8562 = vmatpush1.msra.mxu0 0.0
  %8563 = vmatprep.subr.mxu0 0.0
  %8564 = vmatpush1.msra.mxu0 0.0
  %8565 = vmatprep.mubr.f32.mxu0 0.0
  %8566 = vmatmul.mubr.f32.gmra.mrb[0].mxu0 %v8429
  %v8567 = vpop.f32.mrb[0].mxu0
  %v8568 = vadd.f32 0.0, %v8567
  %v8569 = vpop.f32.mrb[0].mxu0
  %v8570 = vadd.f32 0.0, %v8569
  %8571 = vdwg.mxu0
  %v8572 = vadd.f32 %v7218, %v8497
  %v8573 = vadd.f32 %v7220, %v8499
  %v8574 = vadd.f32 %v7331, %v8568
  %v8575 = vadd.f32 %v7333, %v8570
  %v8576 = vxor.u32 %v8572, 2147483648
  %v8577 = vmul.f32 %v8576, 1.442695
  %v8578 = vpow.pop %v8577
  %v8579 = vadd.f32 %v8578, 1.0
  %v8580 = vrcp.pop %v8579
  %v8581 = vmul.f32 1.0, %v8580
  %v8582 = vxor.u32 %v8573, 2147483648
  %v8583 = vmul.f32 %v8582, 1.442695
  %v8584 = vpow.pop %v8583
  %v8585 = vadd.f32 %v8584, 1.0
  %v8586 = vrcp.pop %v8585
  %v8587 = vmul.f32 1.0, %v8586
  %v8588 = vtanh.pop %v8574
  %v8589 = vxor.u32 %v8575, 2147483648
  %v8590 = vmul.f32 %v8589, 1.442695
  %v8591 = vpow.pop %v8590
  %v8592 = vadd.f32 %v8591, 1.0
  %v8593 = vrcp.pop %v8592
  %v8594 = vmul.f32 1.0, %v8593
  %v8595 = vmul.f32 %v8587, %v8427
  %v8596 = vmul.f32 %v8581, %v8588
  %v8597 = vadd.f32 %v8595, %v8596
  %v8598 = vtanh.pop %v8597
  %v8599 = vmul.f32 %v8594, %v8598
  %8600 = vmatprep.subr.mxu0 %v7347
  %8601 = vmatpush1.msra.mxu0 %v7346
  %8602 = vmatprep.subr.mxu0 %v7351
  %8603 = vmatpush1.msra.mxu0 %v7350
  %8604 = vmatprep.subr.mxu0 %v7355
  %8605 = vmatpush1.msra.mxu0 %v7354
  %8606 = vmatprep.subr.mxu0 %v7359
  %8607 = vmatpush1.msra.mxu0 %v7358
  %8608 = vmatprep.subr.mxu0 %v7363
  %8609 = vmatpush1.msra.mxu0 %v7362
  %8610 = vmatprep.subr.mxu0 %v7367
  %8611 = vmatpush1.msra.mxu0 %v7366
  %8612 = vmatprep.subr.mxu0 %v7371
  %8613 = vmatpush1.msra.mxu0 %v7370
  %8614 = vmatprep.subr.mxu0 %v7375
  %8615 = vmatpush1.msra.mxu0 %v7374
  %8616 = vmatprep.subr.mxu0 %v7379
  %8617 = vmatpush1.msra.mxu0 %v7378
  %8618 = vmatprep.subr.mxu0 %v7383
  %8619 = vmatpush1.msra.mxu0 %v7382
  %8620 = vmatprep.subr.mxu0 %v7387
  %8621 = vmatpush1.msra.mxu0 %v7386
  %8622 = vmatprep.subr.mxu0 %v7391
  %8623 = vmatpush1.msra.mxu0 %v7390
  %8624 = vmatprep.subr.mxu0 %v7395
  %8625 = vmatpush1.msra.mxu0 %v7394
  %8626 = vmatprep.subr.mxu0 %v7399
  %8627 = vmatpush1.msra.mxu0 %v7398
  %8628 = vmatprep.subr.mxu0 %v7403
  %8629 = vmatpush1.msra.mxu0 %v7402
  %8630 = vmatprep.subr.mxu0 %v7407
  %8631 = vmatpush1.msra.mxu0 %v7406
  %8632 = vmatprep.subr.mxu0 0.0
  %8633 = vmatpush1.msra.mxu0 0.0
  %8634 = vmatprep.subr.mxu0 0.0
  %8635 = vmatpush1.msra.mxu0 0.0
  %8636 = vmatprep.subr.mxu0 0.0
  %8637 = vmatpush1.msra.mxu0 0.0
  %8638 = vmatprep.subr.mxu0 0.0
  %8639 = vmatpush1.msra.mxu0 0.0
  %8640 = vmatprep.subr.mxu0 0.0
  %8641 = vmatpush1.msra.mxu0 0.0
  %8642 = vmatprep.subr.mxu0 0.0
  %8643 = vmatpush1.msra.mxu0 0.0
  %8644 = vmatprep.subr.mxu0 0.0
  %8645 = vmatpush1.msra.mxu0 0.0
  %8646 = vmatprep.subr.mxu0 0.0
  %8647 = vmatpush1.msra.mxu0 0.0
  %8648 = vmatprep.subr.mxu0 0.0
  %8649 = vmatpush1.msra.mxu0 0.0
  %8650 = vmatprep.subr.mxu0 0.0
  %8651 = vmatpush1.msra.mxu0 0.0
  %8652 = vmatprep.subr.mxu0 0.0
  %8653 = vmatpush1.msra.mxu0 0.0
  %8654 = vmatprep.subr.mxu0 0.0
  %8655 = vmatpush1.msra.mxu0 0.0
  %8656 = vmatprep.subr.mxu0 0.0
  %8657 = vmatpush1.msra.mxu0 0.0
  %8658 = vmatprep.subr.mxu0 0.0
  %8659 = vmatpush1.msra.mxu0 0.0
  %8660 = vmatprep.subr.mxu0 0.0
  %8661 = vmatpush1.msra.mxu0 0.0
  %8662 = vmatprep.subr.mxu0 0.0
  %8663 = vmatpush1.msra.mxu0 0.0
  %8664 = vmatprep.mubr.f32.mxu0 0.0
  %8665 = vmatmul.mubr.f32.gmra.mrb[0].mxu0 %v8599
  %v8666 = vpop.f32.mrb[0].mxu0
  %v8667 = vadd.f32 0.0, %v8666
  %v8668 = vpop.f32.mrb[0].mxu0
  %v8669 = vadd.f32 0.0, %v8668
  %8670 = vdwg.mxu0
  %8671 = vmatprep.subr.mxu0 %v7349
  %8672 = vmatpush1.msra.mxu0 %v7348
  %8673 = vmatprep.subr.mxu0 %v7353
  %8674 = vmatpush1.msra.mxu0 %v7352
  %8675 = vmatprep.subr.mxu0 %v7357
  %8676 = vmatpush1.msra.mxu0 %v7356
  %8677 = vmatprep.subr.mxu0 %v7361
  %8678 = vmatpush1.msra.mxu0 %v7360
  %8679 = vmatprep.subr.mxu0 %v7365
  %8680 = vmatpush1.msra.mxu0 %v7364
  %8681 = vmatprep.subr.mxu0 %v7369
  %8682 = vmatpush1.msra.mxu0 %v7368
  %8683 = vmatprep.subr.mxu0 %v7373
  %8684 = vmatpush1.msra.mxu0 %v7372
  %8685 = vmatprep.subr.mxu0 %v7377
  %8686 = vmatpush1.msra.mxu0 %v7376
  %8687 = vmatprep.subr.mxu0 %v7381
  %8688 = vmatpush1.msra.mxu0 %v7380
  %8689 = vmatprep.subr.mxu0 %v7385
  %8690 = vmatpush1.msra.mxu0 %v7384
  %8691 = vmatprep.subr.mxu0 %v7389
  %8692 = vmatpush1.msra.mxu0 %v7388
  %8693 = vmatprep.subr.mxu0 %v7393
  %8694 = vmatpush1.msra.mxu0 %v7392
  %8695 = vmatprep.subr.mxu0 %v7397
  %8696 = vmatpush1.msra.mxu0 %v7396
  %8697 = vmatprep.subr.mxu0 %v7401
  %8698 = vmatpush1.msra.mxu0 %v7400
  %8699 = vmatprep.subr.mxu0 %v7405
  %8700 = vmatpush1.msra.mxu0 %v7404
  %8701 = vmatprep.subr.mxu0 %v7409
  %8702 = vmatpush1.msra.mxu0 %v7408
  %8703 = vmatprep.subr.mxu0 0.0
  %8704 = vmatpush1.msra.mxu0 0.0
  %8705 = vmatprep.subr.mxu0 0.0
  %8706 = vmatpush1.msra.mxu0 0.0
  %8707 = vmatprep.subr.mxu0 0.0
  %8708 = vmatpush1.msra.mxu0 0.0
  %8709 = vmatprep.subr.mxu0 0.0
  %8710 = vmatpush1.msra.mxu0 0.0
  %8711 = vmatprep.subr.mxu0 0.0
  %8712 = vmatpush1.msra.mxu0 0.0
  %8713 = vmatprep.subr.mxu0 0.0
  %8714 = vmatpush1.msra.mxu0 0.0
  %8715 = vmatprep.subr.mxu0 0.0
  %8716 = vmatpush1.msra.mxu0 0.0
  %8717 = vmatprep.subr.mxu0 0.0
  %8718 = vmatpush1.msra.mxu0 0.0
  %8719 = vmatprep.subr.mxu0 0.0
  %8720 = vmatpush1.msra.mxu0 0.0
  %8721 = vmatprep.subr.mxu0 0.0
  %8722 = vmatpush1.msra.mxu0 0.0
  %8723 = vmatprep.subr.mxu0 0.0
  %8724 = vmatpush1.msra.mxu0 0.0
  %8725 = vmatprep.subr.mxu0 0.0
  %8726 = vmatpush1.msra.mxu0 0.0
  %8727 = vmatprep.subr.mxu0 0.0
  %8728 = vmatpush1.msra.mxu0 0.0
  %8729 = vmatprep.subr.mxu0 0.0
  %8730 = vmatpush1.msra.mxu0 0.0
  %8731 = vmatprep.subr.mxu0 0.0
  %8732 = vmatpush1.msra.mxu0 0.0
  %8733 = vmatprep.subr.mxu0 0.0
  %8734 = vmatpush1.msra.mxu0 0.0
  %8735 = vmatprep.mubr.f32.mxu0 0.0
  %8736 = vmatmul.mubr.f32.gmra.mrb[0].mxu0 %v8599
  %v8737 = vpop.f32.mrb[0].mxu0
  %v8738 = vadd.f32 0.0, %v8737
  %v8739 = vpop.f32.mrb[0].mxu0
  %v8740 = vadd.f32 0.0, %v8739
  %8741 = vdwg.mxu0
  %v8742 = vadd.f32 %v7224, %v8667
  %v8743 = vadd.f32 %v7226, %v8669
  %v8744 = vadd.f32 %v7337, %v8738
  %v8745 = vadd.f32 %v7339, %v8740
  %v8746 = vxor.u32 %v8742, 2147483648
  %v8747 = vmul.f32 %v8746, 1.442695
  %v8748 = vpow.pop %v8747
  %v8749 = vadd.f32 %v8748, 1.0
  %v8750 = vrcp.pop %v8749
  %v8751 = vmul.f32 1.0, %v8750
  %v8752 = vxor.u32 %v8743, 2147483648
  %v8753 = vmul.f32 %v8752, 1.442695
  %v8754 = vpow.pop %v8753
  %v8755 = vadd.f32 %v8754, 1.0
  %v8756 = vrcp.pop %v8755
  %v8757 = vmul.f32 1.0, %v8756
  %v8758 = vtanh.pop %v8744
  %v8759 = vxor.u32 %v8745, 2147483648
  %v8760 = vmul.f32 %v8759, 1.442695
  %v8761 = vpow.pop %v8760
  %v8762 = vadd.f32 %v8761, 1.0
  %v8763 = vrcp.pop %v8762
  %v8764 = vmul.f32 1.0, %v8763
  %v8765 = vmul.f32 %v8757, %v8597
  %v8766 = vmul.f32 %v8751, %v8758
  %v8767 = vadd.f32 %v8765, %v8766
  %v8768 = vtanh.pop %v8767
  %v8769 = vmul.f32 %v8764, %v8768
  %s8770 = scalar_lea.vmem %s11, 32
  %8771 = vst [vmem:[%s8770] sm:$0xff] %v8769
  %s8772 = scalar_lea.vmem %s12, 32
  %8773 = vst [vmem:[%s8772] sm:$0xff] %v8767
  %v8774 = vtanh.pop %v8769
  %v8775 = vld [vmem:[%s6] sm:$0xff]
  %v8776 = vld [vmem:[%s6 + $0x8] sm:$0xff]
  %v8777 = vld [vmem:[%s6 + $0x10] sm:$0xff]
  %v8778 = vld [vmem:[%s6 + $0x18] sm:$0xff]
  %v8779 = vld [vmem:[%s6 + $0x20] sm:$0xff]
  %v8780 = vld [vmem:[%s6 + $0x28] sm:$0xff]
  %v8781 = vld [vmem:[%s6 + $0x30] sm:$0xff]
  %v8782 = vld [vmem:[%s6 + $0x38] sm:$0xff]
  %v8783 = vld [vmem:[%s6 + $0x40] sm:$0xff]
  %v8784 = vld [vmem:[%s6 + $0x48] sm:$0xff]
  %v8785 = vld [vmem:[%s6 + $0x50] sm:$0xff]
  %v8786 = vld [vmem:[%s6 + $0x58] sm:$0xff]
  %v8787 = vld [vmem:[%s6 + $0x60] sm:$0xff]
  %v8788 = vld [vmem:[%s6 + $0x68] sm:$0xff]
  %v8789 = vld [vmem:[%s6 + $0x70] sm:$0xff]
  %v8790 = vld [vmem:[%s6 + $0x78] sm:$0xff]
  %v8791 = vld [vmem:[%s7] sm:$0x1]
  %v8793 = vlaneseq
  %v8794 = vshrl.u32 %v8793, 7
  %v8795 = vsub.s32 0, %v8794
  %v8796 = vrot.slane %v8791, %v8795
  %8798 = vmatprep.subr.mxu0 0.0
  %8799 = vmatpush1.msra.mxu0 %v8775
  %8800 = vmatprep.subr.mxu0 0.0
  %8801 = vmatpush1.msra.mxu0 %v8776
  %8802 = vmatprep.subr.mxu0 0.0
  %8803 = vmatpush1.msra.mxu0 %v8777
  %8804 = vmatprep.subr.mxu0 0.0
  %8805 = vmatpush1.msra.mxu0 %v8778
  %8806 = vmatprep.subr.mxu0 0.0
  %8807 = vmatpush1.msra.mxu0 %v8779
  %8808 = vmatprep.subr.mxu0 0.0
  %8809 = vmatpush1.msra.mxu0 %v8780
  %8810 = vmatprep.subr.mxu0 0.0
  %8811 = vmatpush1.msra.mxu0 %v8781
  %8812 = vmatprep.subr.mxu0 0.0
  %8813 = vmatpush1.msra.mxu0 %v8782
  %8814 = vmatprep.subr.mxu0 0.0
  %8815 = vmatpush1.msra.mxu0 %v8783
  %8816 = vmatprep.subr.mxu0 0.0
  %8817 = vmatpush1.msra.mxu0 %v8784
  %8818 = vmatprep.subr.mxu0 0.0
  %8819 = vmatpush1.msra.mxu0 %v8785
  %8820 = vmatprep.subr.mxu0 0.0
  %8821 = vmatpush1.msra.mxu0 %v8786
  %8822 = vmatprep.subr.mxu0 0.0
  %8823 = vmatpush1.msra.mxu0 %v8787
  %8824 = vmatprep.subr.mxu0 0.0
  %8825 = vmatpush1.msra.mxu0 %v8788
  %8826 = vmatprep.subr.mxu0 0.0
  %8827 = vmatpush1.msra.mxu0 %v8789
  %8828 = vmatprep.subr.mxu0 0.0
  %8829 = vmatpush1.msra.mxu0 %v8790
  %8830 = vmatprep.subr.mxu0 0.0
  %8831 = vmatpush1.msra.mxu0 0.0
  %8832 = vmatprep.subr.mxu0 0.0
  %8833 = vmatpush1.msra.mxu0 0.0
  %8834 = vmatprep.subr.mxu0 0.0
  %8835 = vmatpush1.msra.mxu0 0.0
  %8836 = vmatprep.subr.mxu0 0.0
  %8837 = vmatpush1.msra.mxu0 0.0
  %8838 = vmatprep.subr.mxu0 0.0
  %8839 = vmatpush1.msra.mxu0 0.0
  %8840 = vmatprep.subr.mxu0 0.0
  %8841 = vmatpush1.msra.mxu0 0.0
  %8842 = vmatprep.subr.mxu0 0.0
  %8843 = vmatpush1.msra.mxu0 0.0
  %8844 = vmatprep.subr.mxu0 0.0
  %8845 = vmatpush1.msra.mxu0 0.0
  %8846 = vmatprep.subr.mxu0 0.0
  %8847 = vmatpush1.msra.mxu0 0.0
  %8848 = vmatprep.subr.mxu0 0.0
  %8849 = vmatpush1.msra.mxu0 0.0
  %8850 = vmatprep.subr.mxu0 0.0
  %8851 = vmatpush1.msra.mxu0 0.0
  %8852 = vmatprep.subr.mxu0 0.0
  %8853 = vmatpush1.msra.mxu0 0.0
  %8854 = vmatprep.subr.mxu0 0.0
  %8855 = vmatpush1.msra.mxu0 0.0
  %8856 = vmatprep.subr.mxu0 0.0
  %8857 = vmatpush1.msra.mxu0 0.0
  %8858 = vmatprep.subr.mxu0 0.0
  %8859 = vmatpush1.msra.mxu0 0.0
  %8860 = vmatprep.subr.mxu0 0.0
  %8861 = vmatpush1.msra.mxu0 0.0
  %8862 = vmatprep.mubr.f32.mxu0 0.0
  %8863 = vmatmul.mubr.f32.gmra.mrb[0].mxu0 %v8774
  %v8864 = vpop.f32.mrb[0].mxu0
  %v8865 = vadd.f32 %v8796, %v8864
  %v8866 = vpop.f32.mrb[0].mxu0
  %8867 = vdwg.mxu0
  %v8868 = vmax.f32 %v8865, 0.0
  %v8869 = vld [vmem:[%s8] sm:$0xff]
  %v8870 = vld [vmem:[%s8 + $0x8] sm:$0xff]
  %v8871 = vld [vmem:[%s8 + $0x10] sm:$0xff]
  %v8872 = vld [vmem:[%s8 + $0x18] sm:$0xff]
  %v8873 = vld [vmem:[%s9] sm:$0x1]
  %v8875 = vlaneseq
  %v8876 = vshrl.u32 %v8875, 7
  %v8877 = vsub.s32 0, %v8876
  %v8878 = vrot.slane %v8873, %v8877
  %vm8880 = vcmask 261120
  %v8882 = vsel %vm8880, %v8868, 0
  %8884 = vmatprep.subr.mxu0 0.0
  %8885 = vmatpush1.msra.mxu0 %v8869
  %8886 = vmatprep.subr.mxu0 0.0
  %8887 = vmatpush1.msra.mxu0 %v8870
  %8888 = vmatprep.subr.mxu0 0.0
  %8889 = vmatpush1.msra.mxu0 %v8871
  %8890 = vmatprep.subr.mxu0 0.0
  %8891 = vmatpush1.msra.mxu0 %v8872
  %8892 = vmatprep.subr.mxu0 0.0
  %8893 = vmatpush1.msra.mxu0 0.0
  %8894 = vmatprep.subr.mxu0 0.0
  %8895 = vmatpush1.msra.mxu0 0.0
  %8896 = vmatprep.subr.mxu0 0.0
  %8897 = vmatpush1.msra.mxu0 0.0
  %8898 = vmatprep.subr.mxu0 0.0
  %8899 = vmatpush1.msra.mxu0 0.0
  %8900 = vmatprep.subr.mxu0 0.0
  %8901 = vmatpush1.msra.mxu0 0.0
  %8902 = vmatprep.subr.mxu0 0.0
  %8903 = vmatpush1.msra.mxu0 0.0
  %8904 = vmatprep.subr.mxu0 0.0
  %8905 = vmatpush1.msra.mxu0 0.0
  %8906 = vmatprep.subr.mxu0 0.0
  %8907 = vmatpush1.msra.mxu0 0.0
  %8908 = vmatprep.subr.mxu0 0.0
  %8909 = vmatpush1.msra.mxu0 0.0
  %8910 = vmatprep.subr.mxu0 0.0
  %8911 = vmatpush1.msra.mxu0 0.0
  %8912 = vmatprep.subr.mxu0 0.0
  %8913 = vmatpush1.msra.mxu0 0.0
  %8914 = vmatprep.subr.mxu0 0.0
  %8915 = vmatpush1.msra.mxu0 0.0
  %8916 = vmatprep.subr.mxu0 0.0
  %8917 = vmatpush1.msra.mxu0 0.0
  %8918 = vmatprep.subr.mxu0 0.0
  %8919 = vmatpush1.msra.mxu0 0.0
  %8920 = vmatprep.subr.mxu0 0.0
  %8921 = vmatpush1.msra.mxu0 0.0
  %8922 = vmatprep.subr.mxu0 0.0
  %8923 = vmatpush1.msra.mxu0 0.0
  %8924 = vmatprep.subr.mxu0 0.0
  %8925 = vmatpush1.msra.mxu0 0.0
  %8926 = vmatprep.subr.mxu0 0.0
  %8927 = vmatpush1.msra.mxu0 0.0
  %8928 = vmatprep.subr.mxu0 0.0
  %8929 = vmatpush1.msra.mxu0 0.0
  %8930 = vmatprep.subr.mxu0 0.0
  %8931 = vmatpush1.msra.mxu0 0.0
  %8932 = vmatprep.subr.mxu0 0.0
  %8933 = vmatpush1.msra.mxu0 0.0
  %8934 = vmatprep.subr.mxu0 0.0
  %8935 = vmatpush1.msra.mxu0 0.0
  %8936 = vmatprep.subr.mxu0 0.0
  %8937 = vmatpush1.msra.mxu0 0.0
  %8938 = vmatprep.subr.mxu0 0.0
  %8939 = vmatpush1.msra.mxu0 0.0
  %8940 = vmatprep.subr.mxu0 0.0
  %8941 = vmatpush1.msra.mxu0 0.0
  %8942 = vmatprep.subr.mxu0 0.0
  %8943 = vmatpush1.msra.mxu0 0.0
  %8944 = vmatprep.subr.mxu0 0.0
  %8945 = vmatpush1.msra.mxu0 0.0
  %8946 = vmatprep.subr.mxu0 0.0
  %8947 = vmatpush1.msra.mxu0 0.0
  %8948 = vmatprep.mubr.f32.mxu0 0.0
  %8949 = vmatmul.mubr.f32.gmra.mrb[0].mxu0 %v8882
  %v8950 = vpop.f32.mrb[0].mxu0
  %v8951 = vadd.f32 %v8878, %v8950
  %v8952 = vpop.f32.mrb[0].mxu0
  %8953 = vdwg.mxu0
  %vm8954 = vcmask 15360
  %8955 = vst.msk [vmem:[%s10] sm:$0xff] %vm8954, %v8951
  // Predicated region
  $region42: #{my_module_forward.1} parent=0 // pred_check
    _
  $region43: #{my_module_forward.1} parent=0 // pred_check_branch
    %8957 = sbr.rel (0) target = $region45
  $region44: #{my_module_forward.1} parent=0 // pred_region
    _
  $region45: #{my_module_forward.1} parent=0 // pred_fallthru
    _
  // Predicated region
  $region46: #{my_module_forward.1} parent=0 // pred_check
    _
  $region47: #{my_module_forward.1} parent=0 // pred_check_branch
    %8959 = sbr.rel (0) target = $region49
  $region48: #{my_module_forward.1} parent=0 // pred_region
    _
  $region49: #{my_module_forward.1} parent=0 // pred_fallthru
    _
  // Predicated region
  $region50: #{my_module_forward.1} parent=0 // pred_check
    _
  $region51: #{my_module_forward.1} parent=0 // pred_check_branch
    %8961 = sbr.rel (0) target = $region53
  $region52: #{my_module_forward.1} parent=0 // pred_region
    _
  $region53: #{my_module_forward.1} parent=0 // pred_fallthru
    _
  // Predicated region
  $region54: #{my_module_forward.1} parent=0 // pred_check
    _
  $region55: #{my_module_forward.1} parent=0 // pred_check_branch
    %8963 = sbr.rel (0) target = $region57
  $region56: #{my_module_forward.1} parent=0 // pred_region
    _
  $region57: #{my_module_forward.1} parent=0 // pred_fallthru
    _
  // Predicated region
  $region58: #{my_module_forward.1} parent=0 // pred_check
    _
  $region59: #{my_module_forward.1} parent=0 // pred_check_branch
    %8965 = sbr.rel (0) target = $region61
  $region60: #{my_module_forward.1} parent=0 // pred_region
    _
  $region61: #{my_module_forward.1} parent=0 // pred_fallthru
    _
  // Predicated region
  $region62: #{my_module_forward.1} parent=0 // pred_check
    _
  $region63: #{my_module_forward.1} parent=0 // pred_check_branch
    %8967 = sbr.rel (0) target = $region65
  $region64: #{my_module_forward.1} parent=0 // pred_region
    _
  $region65: #{my_module_forward.1} parent=0 // pred_fallthru
    _

</llo_original>
